<compile_context>
chip_gen: v7x
topology: tpu7x:2x2x1
jax: 0.10.0
libtpu: 0.0.40
codegen_flags: <defaults>
</compile_context>

<pallas_src>
import functools
import math

import jax
import jax.numpy as jnp
from jax.experimental import pallas as pl
from jax.experimental.pallas import tpu as pltpu

# Use full-f32 matmul precision everywhere so kernel and reference agree.
jax.config.update("jax_default_matmul_precision", "highest")


# ----------------------------------------------------------------------------
# Fused MAB kernel: one batch element per grid step.
# ----------------------------------------------------------------------------
def _mab_kernel(num_heads,
                q_ref, k_ref,
                wq_ref, bq_ref, wkv_ref, bkv_ref, wo_ref, bo_ref,
                wf1_ref, bf1_ref, wf2_ref, bf2_ref,
                out_ref):
    Q = q_ref[0].astype(jnp.float32)            # (N, D)
    K = k_ref[0].astype(jnp.float32)            # (M, D)
    D = Q.shape[-1]
    ds = D // num_heads
    scale = 1.0 / math.sqrt(D)                  # torch divides by sqrt(latent_size)

    # Projections. Weights are pre-transposed (in, out) in the wrapper, so no
    # in-kernel .T on grid-resident blocks; W_k|W_v are stacked -> one matmul.
    q = jnp.dot(Q, wq_ref[...], preferred_element_type=jnp.float32) + bq_ref[...]      # (N, D)
    kv = jnp.dot(K, wkv_ref[...], preferred_element_type=jnp.float32) + bkv_ref[...]   # (M, 2D)
    k = kv[:, :D]
    v = kv[:, D:]

    # Multi-head scaled-dot-product attention, statically unrolled over heads.
    heads_out = []
    for h in range(num_heads):
        qh = q[:, h * ds:(h + 1) * ds]          # (N, ds)
        kh = k[:, h * ds:(h + 1) * ds]          # (M, ds)
        vh = v[:, h * ds:(h + 1) * ds]          # (M, ds)
        e = jnp.einsum('nd,md->nm', qh, kh,
                       preferred_element_type=jnp.float32) * scale                     # (N, M)
        e = e - jnp.max(e, axis=-1, keepdims=True)
        p = jnp.exp(e)
        a = p / jnp.sum(p, axis=-1, keepdims=True)
        heads_out.append(jnp.dot(a, vh, preferred_element_type=jnp.float32))           # (N, ds)
    o = jnp.concatenate(heads_out, axis=-1)     # (N, D)

    attn = jnp.dot(o, wo_ref[...], preferred_element_type=jnp.float32) + bo_ref[...]

    # Residual + feed-forward residual (dropout = identity, no LayerNorm).
    x = Q + attn
    h1 = jnp.maximum(
        jnp.dot(x, wf1_ref[...], preferred_element_type=jnp.float32) + bf1_ref[...], 0.0)
    y = x + jnp.dot(h1, wf2_ref[...], preferred_element_type=jnp.float32) + bf2_ref[...]
    out_ref[0] = y.astype(out_ref.dtype)


def mab_forward(params, Q, K, num_heads):
    """MAB forward: Q (B, N, D), K (B, M, D) -> (B, N, D)."""
    B, N, D = Q.shape
    M = K.shape[1]
    H = params["wf1"].shape[0]

    # Host-side weight prep: transpose to (in, out), stack W_k / W_v.
    wq_t = params["wq"].T                                               # (D, D)
    wkv_t = jnp.concatenate([params["wk"].T, params["wv"].T], axis=1)   # (D, 2D)
    bkv = jnp.concatenate([params["bk"], params["bv"]], axis=0)         # (2D,)
    wo_t = params["wo"].T                                               # (D, D)
    wf1_t = params["wf1"].T                                             # (D, H)
    wf2_t = params["wf2"].T                                             # (H, D)

    full2 = lambda b: (0, 0)
    io_map = lambda b: (b, 0, 0)

    flops = int(B * (2 * N * D * D            # Q projection
                     + 2 * M * D * (2 * D)    # K/V projection (stacked)
                     + 4 * N * M * D          # attention scores + A@V
                     + 2 * N * D * D          # output projection
                     + 4 * N * D * H))        # feed-forward
    bytes_accessed = int(4 * (Q.size + K.size + Q.size
                              + wq_t.size + wkv_t.size + wo_t.size
                              + wf1_t.size + wf2_t.size
                              + 4 * D + 2 * D + H))
    cost = pl.CostEstimate(flops=flops,
                           transcendentals=int(B * num_heads * N * M),
                           bytes_accessed=bytes_accessed)

    return pl.pallas_call(
        functools.partial(_mab_kernel, num_heads),
        out_shape=jax.ShapeDtypeStruct((B, N, D), jnp.float32),
        grid=(B,),
        in_specs=[
            pl.BlockSpec((1, N, D), io_map),        # Q
            pl.BlockSpec((1, M, D), io_map),        # K
            pl.BlockSpec((D, D), full2),            # wq^T
            pl.BlockSpec((1, D), full2),            # bq
            pl.BlockSpec((D, 2 * D), full2),        # [wk^T | wv^T]
            pl.BlockSpec((1, 2 * D), full2),        # [bk | bv]
            pl.BlockSpec((D, D), full2),            # wo^T
            pl.BlockSpec((1, D), full2),            # bo
            pl.BlockSpec((D, H), full2),            # wf1^T
            pl.BlockSpec((1, H), full2),            # bf1
            pl.BlockSpec((H, D), full2),            # wf2^T
            pl.BlockSpec((1, D), full2),            # bf2
        ],
        out_specs=pl.BlockSpec((1, N, D), io_map),
        compiler_params=pltpu.CompilerParams(dimension_semantics=("parallel",)),
        cost_estimate=cost,
    )(Q, K,
      wq_t, params["bq"].reshape(1, D),
      wkv_t, bkv.reshape(1, 2 * D),
      wo_t, params["bo"].reshape(1, D),
      wf1_t, params["bf1"].reshape(1, H),
      wf2_t, params["bf2"].reshape(1, D))


# ----------------------------------------------------------------------------
# Deterministic parameter construction (PyTorch nn.Linear-style init).
# ----------------------------------------------------------------------------
def _linear_params(key, out_dim, in_dim):
    kw, kb = jax.random.split(key)
    s = 1.0 / math.sqrt(in_dim)
    w = jax.random.uniform(kw, (out_dim, in_dim), jnp.float32, -s, s)
    b = jax.random.uniform(kb, (out_dim,), jnp.float32, -s, s)
    return w, b


def make_mab_params(key, input_size, latent_size, hidden_size):
    ks = jax.random.split(key, 6)
    wq, bq = _linear_params(ks[0], latent_size, input_size)
    wk, bk = _linear_params(ks[1], latent_size, input_size)   # attn_size = input_size
    wv, bv = _linear_params(ks[2], latent_size, input_size)
    wo, bo = _linear_params(ks[3], latent_size, latent_size)
    wf1, bf1 = _linear_params(ks[4], hidden_size, latent_size)
    wf2, bf2 = _linear_params(ks[5], latent_size, hidden_size)
    return dict(wq=wq, bq=bq, wk=wk, bk=bk, wv=wv, bv=bv, wo=wo, bo=bo,
                wf1=wf1, bf1=bf1, wf2=wf2, bf2=bf2)


# ----------------------------------------------------------------------------
# Pure-JAX reference (direct translation of the PyTorch MAB/MHA semantics).
# ----------------------------------------------------------------------------
def _mab_ref(params, Q, K, num_heads):
    D = params["wq"].shape[0]
    q = Q @ params["wq"].T + params["bq"]
    k = K @ params["wk"].T + params["bk"]
    v = K @ params["wv"].T + params["bv"]
    qh = jnp.stack(jnp.split(q, num_heads, axis=2), axis=0)    # (h, B, N, ds)
    kh = jnp.stack(jnp.split(k, num_heads, axis=2), axis=0)
    vh = jnp.stack(jnp.split(v, num_heads, axis=2), axis=0)
    E = jnp.matmul(qh, jnp.swapaxes(kh, 2, 3)) / math.sqrt(D)
    A = jax.nn.softmax(E, axis=3)
    O = jnp.concatenate(jnp.split(jnp.matmul(A, vh), num_heads, axis=0), axis=3)[0]
    attn = O @ params["wo"].T + params["bo"]
    X = Q + attn                                               # dropout = identity, no ln0
    h = jax.nn.relu(X @ params["wf1"].T + params["bf1"])
    return X + (h @ params["wf2"].T + params["bf2"])           # dropout = identity, no ln1


if __name__ == "__main__":
    B, N, M = 2, 16, 8
    INPUT = LATENT = 128      # residual Q + attn(Q,K) requires input == latent
    HIDDEN = 128
    HEADS = 4

    key = jax.random.PRNGKey(0)
    kq, kk, kp = jax.random.split(key, 3)
    Q = jax.random.normal(kq, (B, N, INPUT), dtype=jnp.float32)
    K = jax.random.normal(kk, (B, M, INPUT), dtype=jnp.float32)
    params = make_mab_params(kp, INPUT, LATENT, HIDDEN)

    out = jax.jit(lambda p, q, k: mab_forward(p, q, k, HEADS))(params, Q, K)
    jax.block_until_ready(out)

    ref = _mab_ref(params, Q, K, HEADS)
    assert out.shape == (B, N, LATENT)
    # Tolerance allows for MXU f32 multi-pass vs XLA f32 dot rounding paths.
    assert jnp.allclose(out, ref, atol=1e-3, rtol=1e-3), "MAB output mismatch"
    print("KERNEL_OK")
</pallas_src>

<mosaic_0001>
module attributes {stable_mosaic.version = 11 : i64} {
  func.func @_mab_kernel(%arg0: i32, %arg1: memref<1x16x128xf32, #tpu.memory_space<vmem>>, %arg2: memref<1x8x128xf32, #tpu.memory_space<vmem>>, %arg3: memref<128x128xf32, #tpu.memory_space<vmem>>, %arg4: memref<1x128xf32, #tpu.memory_space<vmem>>, %arg5: memref<128x256xf32, #tpu.memory_space<vmem>>, %arg6: memref<1x256xf32, #tpu.memory_space<vmem>>, %arg7: memref<128x128xf32, #tpu.memory_space<vmem>>, %arg8: memref<1x128xf32, #tpu.memory_space<vmem>>, %arg9: memref<128x128xf32, #tpu.memory_space<vmem>>, %arg10: memref<1x128xf32, #tpu.memory_space<vmem>>, %arg11: memref<128x128xf32, #tpu.memory_space<vmem>>, %arg12: memref<1x128xf32, #tpu.memory_space<vmem>>, %arg13: memref<1x16x128xf32, #tpu.memory_space<vmem>>) attributes {dimension_semantics = [#tpu.dimension_semantics<parallel>], iteration_bounds = array<i64: 2>, scalar_prefetch = 0 : i64, scratch_operands = 0 : i64, tpu.core_type = #tpu.core_type<tc>, window_params = [{transform_indices = @transform_0, window_bounds = array<i64: 1, 16, 128>}, {transform_indices = @transform_1, window_bounds = array<i64: 1, 8, 128>}, {pipeline_mode = #tpu.pipeline_mode<synchronous>, transform_indices = @transform_2, window_bounds = array<i64: 128, 128>}, {pipeline_mode = #tpu.pipeline_mode<synchronous>, transform_indices = @transform_3, window_bounds = array<i64: 1, 128>}, {pipeline_mode = #tpu.pipeline_mode<synchronous>, transform_indices = @transform_4, window_bounds = array<i64: 128, 256>}, {pipeline_mode = #tpu.pipeline_mode<synchronous>, transform_indices = @transform_5, window_bounds = array<i64: 1, 256>}, {pipeline_mode = #tpu.pipeline_mode<synchronous>, transform_indices = @transform_6, window_bounds = array<i64: 128, 128>}, {pipeline_mode = #tpu.pipeline_mode<synchronous>, transform_indices = @transform_7, window_bounds = array<i64: 1, 128>}, {pipeline_mode = #tpu.pipeline_mode<synchronous>, transform_indices = @transform_8, window_bounds = array<i64: 128, 128>}, {pipeline_mode = #tpu.pipeline_mode<synchronous>, transform_indices = @transform_9, window_bounds = array<i64: 1, 128>}, {pipeline_mode = #tpu.pipeline_mode<synchronous>, transform_indices = @transform_10, window_bounds = array<i64: 128, 128>}, {pipeline_mode = #tpu.pipeline_mode<synchronous>, transform_indices = @transform_11, window_bounds = array<i64: 1, 128>}, {transform_indices = @transform_12, window_bounds = array<i64: 1, 16, 128>}]} {
    %c0 = arith.constant 0 : index
    %c0_0 = arith.constant 0 : index
    %c0_1 = arith.constant 0 : index
    %0 = vector.load %arg1[%c0, %c0_0, %c0_1] : memref<1x16x128xf32, #tpu.memory_space<vmem>>, vector<1x16x128xf32>
    %1 = vector.shape_cast %0 : vector<1x16x128xf32> to vector<16x128xf32>
    %c0_2 = arith.constant 0 : index
    %c0_3 = arith.constant 0 : index
    %c0_4 = arith.constant 0 : index
    %2 = vector.load %arg2[%c0_2, %c0_3, %c0_4] : memref<1x8x128xf32, #tpu.memory_space<vmem>>, vector<1x8x128xf32>
    %3 = vector.shape_cast %2 : vector<1x8x128xf32> to vector<8x128xf32>
    %c0_5 = arith.constant 0 : index
    %c0_6 = arith.constant 0 : index
    %4 = vector.load %arg3[%c0_5, %c0_6] : memref<128x128xf32, #tpu.memory_space<vmem>>, vector<128x128xf32>
    %cst = arith.constant dense<0.000000e+00> : vector<16x128xf32>
    %5 = tpu.matmul %1, %4, %cst {dimension_numbers = #tpu.dot_dimension_numbers<[1], [0], [0], [1], [0, 0, 1, 1], [], []>, precision = #tpu.contract_precision<fp32>} : vector<16x128xf32>, vector<128x128xf32>, vector<16x128xf32> -> vector<16x128xf32>
    %c0_7 = arith.constant 0 : index
    %c0_8 = arith.constant 0 : index
    %6 = vector.load %arg4[%c0_7, %c0_8] : memref<1x128xf32, #tpu.memory_space<vmem>>, vector<1x128xf32>
    %7 = vector.broadcast %6 : vector<1x128xf32> to vector<16x128xf32>
    %8 = arith.addf %5, %7 : vector<16x128xf32>
    %c0_9 = arith.constant 0 : index
    %c0_10 = arith.constant 0 : index
    %9 = vector.load %arg5[%c0_9, %c0_10] : memref<128x256xf32, #tpu.memory_space<vmem>>, vector<128x256xf32>
    %cst_11 = arith.constant dense<0.000000e+00> : vector<8x256xf32>
    %10 = tpu.matmul %3, %9, %cst_11 {dimension_numbers = #tpu.dot_dimension_numbers<[1], [0], [0], [1], [0, 0, 1, 1], [], []>, precision = #tpu.contract_precision<fp32>} : vector<8x128xf32>, vector<128x256xf32>, vector<8x256xf32> -> vector<8x256xf32>
    %c0_12 = arith.constant 0 : index
    %c0_13 = arith.constant 0 : index
    %11 = vector.load %arg6[%c0_12, %c0_13] : memref<1x256xf32, #tpu.memory_space<vmem>>, vector<1x256xf32>
    %12 = vector.broadcast %11 : vector<1x256xf32> to vector<8x256xf32>
    %13 = arith.addf %10, %12 : vector<8x256xf32>
    %14 = vector.extract_strided_slice %13 {offsets = [0, 0], sizes = [8, 128], strides = [1, 1]} : vector<8x256xf32> to vector<8x128xf32>
    %15 = vector.extract_strided_slice %13 {offsets = [0, 128], sizes = [8, 128], strides = [1, 1]} : vector<8x256xf32> to vector<8x128xf32>
    %16 = vector.extract_strided_slice %8 {offsets = [0, 0], sizes = [16, 32], strides = [1, 1]} : vector<16x128xf32> to vector<16x32xf32>
    %17 = vector.extract_strided_slice %14 {offsets = [0, 0], sizes = [8, 32], strides = [1, 1]} : vector<8x128xf32> to vector<8x32xf32>
    %18 = vector.extract_strided_slice %15 {offsets = [0, 0], sizes = [8, 32], strides = [1, 1]} : vector<8x128xf32> to vector<8x32xf32>
    "tpu.trace_start"() <{level = 10 : i32, message = "nd,md->nm"}> : () -> ()
    %cst_14 = arith.constant dense<0.000000e+00> : vector<16x8xf32>
    %19 = tpu.matmul %16, %17, %cst_14 {dimension_numbers = #tpu.dot_dimension_numbers<[1], [1], [0], [0], [0, 0, 1, 0], [], []>, precision = #tpu.contract_precision<fp32>} : vector<16x32xf32>, vector<8x32xf32>, vector<16x8xf32> -> vector<16x8xf32>
    "tpu.trace_stop"() : () -> ()
    %cst_15 = arith.constant 0.0883883461 : f32
    %20 = vector.broadcast %cst_15 : f32 to vector<16x8xf32>
    %21 = arith.mulf %19, %20 : vector<16x8xf32>
    %cst_16 = arith.constant dense<0xFF800000> : vector<16xf32>
    %22 = vector.multi_reduction <maximumf>, %21, %cst_16 [1] : vector<16x8xf32> to vector<16xf32>
    %23 = vector.shape_cast %22 : vector<16xf32> to vector<16x1xf32>
    %24 = vector.broadcast %23 : vector<16x1xf32> to vector<16x8xf32>
    %25 = arith.subf %21, %24 : vector<16x8xf32>
    %26 = math.exp %25 : vector<16x8xf32>
    %cst_17 = arith.constant dense<0.000000e+00> : vector<16xf32>
    %27 = vector.multi_reduction <add>, %26, %cst_17 [1] : vector<16x8xf32> to vector<16xf32>
    %28 = vector.shape_cast %27 : vector<16xf32> to vector<16x1xf32>
    %29 = vector.broadcast %28 : vector<16x1xf32> to vector<16x8xf32>
    %30 = arith.divf %26, %29 : vector<16x8xf32>
    %cst_18 = arith.constant dense<0.000000e+00> : vector<16x32xf32>
    %31 = tpu.matmul %30, %18, %cst_18 {dimension_numbers = #tpu.dot_dimension_numbers<[1], [0], [0], [1], [0, 0, 1, 1], [], []>, precision = #tpu.contract_precision<fp32>} : vector<16x8xf32>, vector<8x32xf32>, vector<16x32xf32> -> vector<16x32xf32>
    %32 = vector.extract_strided_slice %8 {offsets = [0, 32], sizes = [16, 32], strides = [1, 1]} : vector<16x128xf32> to vector<16x32xf32>
    %33 = vector.extract_strided_slice %14 {offsets = [0, 32], sizes = [8, 32], strides = [1, 1]} : vector<8x128xf32> to vector<8x32xf32>
    %34 = vector.extract_strided_slice %15 {offsets = [0, 32], sizes = [8, 32], strides = [1, 1]} : vector<8x128xf32> to vector<8x32xf32>
    "tpu.trace_start"() <{level = 10 : i32, message = "nd,md->nm"}> : () -> ()
    %cst_19 = arith.constant dense<0.000000e+00> : vector<16x8xf32>
    %35 = tpu.matmul %32, %33, %cst_19 {dimension_numbers = #tpu.dot_dimension_numbers<[1], [1], [0], [0], [0, 0, 1, 0], [], []>, precision = #tpu.contract_precision<fp32>} : vector<16x32xf32>, vector<8x32xf32>, vector<16x8xf32> -> vector<16x8xf32>
    "tpu.trace_stop"() : () -> ()
    %cst_20 = arith.constant 0.0883883461 : f32
    %36 = vector.broadcast %cst_20 : f32 to vector<16x8xf32>
    %37 = arith.mulf %35, %36 : vector<16x8xf32>
    %cst_21 = arith.constant dense<0xFF800000> : vector<16xf32>
    %38 = vector.multi_reduction <maximumf>, %37, %cst_21 [1] : vector<16x8xf32> to vector<16xf32>
    %39 = vector.shape_cast %38 : vector<16xf32> to vector<16x1xf32>
    %40 = vector.broadcast %39 : vector<16x1xf32> to vector<16x8xf32>
    %41 = arith.subf %37, %40 : vector<16x8xf32>
    %42 = math.exp %41 : vector<16x8xf32>
    %cst_22 = arith.constant dense<0.000000e+00> : vector<16xf32>
    %43 = vector.multi_reduction <add>, %42, %cst_22 [1] : vector<16x8xf32> to vector<16xf32>
    %44 = vector.shape_cast %43 : vector<16xf32> to vector<16x1xf32>
    %45 = vector.broadcast %44 : vector<16x1xf32> to vector<16x8xf32>
    %46 = arith.divf %42, %45 : vector<16x8xf32>
    %cst_23 = arith.constant dense<0.000000e+00> : vector<16x32xf32>
    %47 = tpu.matmul %46, %34, %cst_23 {dimension_numbers = #tpu.dot_dimension_numbers<[1], [0], [0], [1], [0, 0, 1, 1], [], []>, precision = #tpu.contract_precision<fp32>} : vector<16x8xf32>, vector<8x32xf32>, vector<16x32xf32> -> vector<16x32xf32>
    %48 = vector.extract_strided_slice %8 {offsets = [0, 64], sizes = [16, 32], strides = [1, 1]} : vector<16x128xf32> to vector<16x32xf32>
    %49 = vector.extract_strided_slice %14 {offsets = [0, 64], sizes = [8, 32], strides = [1, 1]} : vector<8x128xf32> to vector<8x32xf32>
    %50 = vector.extract_strided_slice %15 {offsets = [0, 64], sizes = [8, 32], strides = [1, 1]} : vector<8x128xf32> to vector<8x32xf32>
    "tpu.trace_start"() <{level = 10 : i32, message = "nd,md->nm"}> : () -> ()
    %cst_24 = arith.constant dense<0.000000e+00> : vector<16x8xf32>
    %51 = tpu.matmul %48, %49, %cst_24 {dimension_numbers = #tpu.dot_dimension_numbers<[1], [1], [0], [0], [0, 0, 1, 0], [], []>, precision = #tpu.contract_precision<fp32>} : vector<16x32xf32>, vector<8x32xf32>, vector<16x8xf32> -> vector<16x8xf32>
    "tpu.trace_stop"() : () -> ()
    %cst_25 = arith.constant 0.0883883461 : f32
    %52 = vector.broadcast %cst_25 : f32 to vector<16x8xf32>
    %53 = arith.mulf %51, %52 : vector<16x8xf32>
    %cst_26 = arith.constant dense<0xFF800000> : vector<16xf32>
    %54 = vector.multi_reduction <maximumf>, %53, %cst_26 [1] : vector<16x8xf32> to vector<16xf32>
    %55 = vector.shape_cast %54 : vector<16xf32> to vector<16x1xf32>
    %56 = vector.broadcast %55 : vector<16x1xf32> to vector<16x8xf32>
    %57 = arith.subf %53, %56 : vector<16x8xf32>
    %58 = math.exp %57 : vector<16x8xf32>
    %cst_27 = arith.constant dense<0.000000e+00> : vector<16xf32>
    %59 = vector.multi_reduction <add>, %58, %cst_27 [1] : vector<16x8xf32> to vector<16xf32>
    %60 = vector.shape_cast %59 : vector<16xf32> to vector<16x1xf32>
    %61 = vector.broadcast %60 : vector<16x1xf32> to vector<16x8xf32>
    %62 = arith.divf %58, %61 : vector<16x8xf32>
    %cst_28 = arith.constant dense<0.000000e+00> : vector<16x32xf32>
    %63 = tpu.matmul %62, %50, %cst_28 {dimension_numbers = #tpu.dot_dimension_numbers<[1], [0], [0], [1], [0, 0, 1, 1], [], []>, precision = #tpu.contract_precision<fp32>} : vector<16x8xf32>, vector<8x32xf32>, vector<16x32xf32> -> vector<16x32xf32>
    %64 = vector.extract_strided_slice %8 {offsets = [0, 96], sizes = [16, 32], strides = [1, 1]} : vector<16x128xf32> to vector<16x32xf32>
    %65 = vector.extract_strided_slice %14 {offsets = [0, 96], sizes = [8, 32], strides = [1, 1]} : vector<8x128xf32> to vector<8x32xf32>
    %66 = vector.extract_strided_slice %15 {offsets = [0, 96], sizes = [8, 32], strides = [1, 1]} : vector<8x128xf32> to vector<8x32xf32>
    "tpu.trace_start"() <{level = 10 : i32, message = "nd,md->nm"}> : () -> ()
    %cst_29 = arith.constant dense<0.000000e+00> : vector<16x8xf32>
    %67 = tpu.matmul %64, %65, %cst_29 {dimension_numbers = #tpu.dot_dimension_numbers<[1], [1], [0], [0], [0, 0, 1, 0], [], []>, precision = #tpu.contract_precision<fp32>} : vector<16x32xf32>, vector<8x32xf32>, vector<16x8xf32> -> vector<16x8xf32>
    "tpu.trace_stop"() : () -> ()
    %cst_30 = arith.constant 0.0883883461 : f32
    %68 = vector.broadcast %cst_30 : f32 to vector<16x8xf32>
    %69 = arith.mulf %67, %68 : vector<16x8xf32>
    %cst_31 = arith.constant dense<0xFF800000> : vector<16xf32>
    %70 = vector.multi_reduction <maximumf>, %69, %cst_31 [1] : vector<16x8xf32> to vector<16xf32>
    %71 = vector.shape_cast %70 : vector<16xf32> to vector<16x1xf32>
    %72 = vector.broadcast %71 : vector<16x1xf32> to vector<16x8xf32>
    %73 = arith.subf %69, %72 : vector<16x8xf32>
    %74 = math.exp %73 : vector<16x8xf32>
    %cst_32 = arith.constant dense<0.000000e+00> : vector<16xf32>
    %75 = vector.multi_reduction <add>, %74, %cst_32 [1] : vector<16x8xf32> to vector<16xf32>
    %76 = vector.shape_cast %75 : vector<16xf32> to vector<16x1xf32>
    %77 = vector.broadcast %76 : vector<16x1xf32> to vector<16x8xf32>
    %78 = arith.divf %74, %77 : vector<16x8xf32>
    %cst_33 = arith.constant dense<0.000000e+00> : vector<16x32xf32>
    %79 = tpu.matmul %78, %66, %cst_33 {dimension_numbers = #tpu.dot_dimension_numbers<[1], [0], [0], [1], [0, 0, 1, 1], [], []>, precision = #tpu.contract_precision<fp32>} : vector<16x8xf32>, vector<8x32xf32>, vector<16x32xf32> -> vector<16x32xf32>
    %80 = tpu.concatenate %31, %47, %63, %79 in 1 : vector<16x32xf32>, vector<16x32xf32>, vector<16x32xf32>, vector<16x32xf32> -> vector<16x128xf32>
    %c0_34 = arith.constant 0 : index
    %c0_35 = arith.constant 0 : index
    %81 = vector.load %arg7[%c0_34, %c0_35] : memref<128x128xf32, #tpu.memory_space<vmem>>, vector<128x128xf32>
    %cst_36 = arith.constant dense<0.000000e+00> : vector<16x128xf32>
    %82 = tpu.matmul %80, %81, %cst_36 {dimension_numbers = #tpu.dot_dimension_numbers<[1], [0], [0], [1], [0, 0, 1, 1], [], []>, precision = #tpu.contract_precision<fp32>} : vector<16x128xf32>, vector<128x128xf32>, vector<16x128xf32> -> vector<16x128xf32>
    %c0_37 = arith.constant 0 : index
    %c0_38 = arith.constant 0 : index
    %83 = vector.load %arg8[%c0_37, %c0_38] : memref<1x128xf32, #tpu.memory_space<vmem>>, vector<1x128xf32>
    %84 = vector.broadcast %83 : vector<1x128xf32> to vector<16x128xf32>
    %85 = arith.addf %82, %84 : vector<16x128xf32>
    %86 = arith.addf %1, %85 : vector<16x128xf32>
    %c0_39 = arith.constant 0 : index
    %c0_40 = arith.constant 0 : index
    %87 = vector.load %arg9[%c0_39, %c0_40] : memref<128x128xf32, #tpu.memory_space<vmem>>, vector<128x128xf32>
    %cst_41 = arith.constant dense<0.000000e+00> : vector<16x128xf32>
    %88 = tpu.matmul %86, %87, %cst_41 {dimension_numbers = #tpu.dot_dimension_numbers<[1], [0], [0], [1], [0, 0, 1, 1], [], []>, precision = #tpu.contract_precision<fp32>} : vector<16x128xf32>, vector<128x128xf32>, vector<16x128xf32> -> vector<16x128xf32>
    %c0_42 = arith.constant 0 : index
    %c0_43 = arith.constant 0 : index
    %89 = vector.load %arg10[%c0_42, %c0_43] : memref<1x128xf32, #tpu.memory_space<vmem>>, vector<1x128xf32>
    %90 = vector.broadcast %89 : vector<1x128xf32> to vector<16x128xf32>
    %91 = arith.addf %88, %90 : vector<16x128xf32>
    %cst_44 = arith.constant 0.000000e+00 : f32
    %92 = vector.broadcast %cst_44 : f32 to vector<16x128xf32>
    %93 = arith.maximumf %91, %92 : vector<16x128xf32>
    %c0_45 = arith.constant 0 : index
    %c0_46 = arith.constant 0 : index
    %94 = vector.load %arg11[%c0_45, %c0_46] : memref<128x128xf32, #tpu.memory_space<vmem>>, vector<128x128xf32>
    %cst_47 = arith.constant dense<0.000000e+00> : vector<16x128xf32>
    %95 = tpu.matmul %93, %94, %cst_47 {dimension_numbers = #tpu.dot_dimension_numbers<[1], [0], [0], [1], [0, 0, 1, 1], [], []>, precision = #tpu.contract_precision<fp32>} : vector<16x128xf32>, vector<128x128xf32>, vector<16x128xf32> -> vector<16x128xf32>
    %96 = arith.addf %86, %95 : vector<16x128xf32>
    %c0_48 = arith.constant 0 : index
    %c0_49 = arith.constant 0 : index
    %97 = vector.load %arg12[%c0_48, %c0_49] : memref<1x128xf32, #tpu.memory_space<vmem>>, vector<1x128xf32>
    %98 = vector.broadcast %97 : vector<1x128xf32> to vector<16x128xf32>
    %99 = arith.addf %96, %98 : vector<16x128xf32>
    %c0_50 = arith.constant 0 : index
    %c0_51 = arith.constant 0 : index
    %c0_52 = arith.constant 0 : index
    %100 = vector.load %arg13[%c0_50, %c0_51, %c0_52] : memref<1x16x128xf32, #tpu.memory_space<vmem>>, vector<1x16x128xf32>
    %101 = vector.shape_cast %100 : vector<1x16x128xf32> to vector<16x128xf32>
    %102 = vector.shape_cast %99 : vector<16x128xf32> to vector<1x16x128xf32>
    tpu.vector_store %arg13[%c0_50, %c0_51, %c0_52], %102 {strides = array<i32>} : memref<1x16x128xf32, #tpu.memory_space<vmem>>, vector<1x16x128xf32>,
    return
  }
  func.func @transform_0(%arg0: i32) -> (i32, i32, i32) {
    %c0_i32 = arith.constant 0 : i32
    %c0_i32_0 = arith.constant 0 : i32
    %c0_i32_1 = arith.constant 0 : i32
    return %arg0, %c0_i32, %c0_i32_0 : i32, i32, i32
  }
  func.func @transform_1(%arg0: i32) -> (i32, i32, i32) {
    %c0_i32 = arith.constant 0 : i32
    %c0_i32_0 = arith.constant 0 : i32
    %c0_i32_1 = arith.constant 0 : i32
    return %arg0, %c0_i32, %c0_i32_0 : i32, i32, i32
  }
  func.func @transform_2(%arg0: i32) -> (i32, i32) {
    %c0_i32 = arith.constant 0 : i32
    %c0_i32_0 = arith.constant 0 : i32
    %c0_i32_1 = arith.constant 0 : i32
    return %c0_i32, %c0_i32_0 : i32, i32
  }
  func.func @transform_3(%arg0: i32) -> (i32, i32) {
    %c0_i32 = arith.constant 0 : i32
    %c0_i32_0 = arith.constant 0 : i32
    %c0_i32_1 = arith.constant 0 : i32
    return %c0_i32, %c0_i32_0 : i32, i32
  }
  func.func @transform_4(%arg0: i32) -> (i32, i32) {
    %c0_i32 = arith.constant 0 : i32
    %c0_i32_0 = arith.constant 0 : i32
    %c0_i32_1 = arith.constant 0 : i32
    return %c0_i32, %c0_i32_0 : i32, i32
  }
  func.func @transform_5(%arg0: i32) -> (i32, i32) {
    %c0_i32 = arith.constant 0 : i32
    %c0_i32_0 = arith.constant 0 : i32
    %c0_i32_1 = arith.constant 0 : i32
    return %c0_i32, %c0_i32_0 : i32, i32
  }
  func.func @transform_6(%arg0: i32) -> (i32, i32) {
    %c0_i32 = arith.constant 0 : i32
    %c0_i32_0 = arith.constant 0 : i32
    %c0_i32_1 = arith.constant 0 : i32
    return %c0_i32, %c0_i32_0 : i32, i32
  }
  func.func @transform_7(%arg0: i32) -> (i32, i32) {
    %c0_i32 = arith.constant 0 : i32
    %c0_i32_0 = arith.constant 0 : i32
    %c0_i32_1 = arith.constant 0 : i32
    return %c0_i32, %c0_i32_0 : i32, i32
  }
  func.func @transform_8(%arg0: i32) -> (i32, i32) {
    %c0_i32 = arith.constant 0 : i32
    %c0_i32_0 = arith.constant 0 : i32
    %c0_i32_1 = arith.constant 0 : i32
    return %c0_i32, %c0_i32_0 : i32, i32
  }
  func.func @transform_9(%arg0: i32) -> (i32, i32) {
    %c0_i32 = arith.constant 0 : i32
    %c0_i32_0 = arith.constant 0 : i32
    %c0_i32_1 = arith.constant 0 : i32
    return %c0_i32, %c0_i32_0 : i32, i32
  }
  func.func @transform_10(%arg0: i32) -> (i32, i32) {
    %c0_i32 = arith.constant 0 : i32
    %c0_i32_0 = arith.constant 0 : i32
    %c0_i32_1 = arith.constant 0 : i32
    return %c0_i32, %c0_i32_0 : i32, i32
  }
  func.func @transform_11(%arg0: i32) -> (i32, i32) {
    %c0_i32 = arith.constant 0 : i32
    %c0_i32_0 = arith.constant 0 : i32
    %c0_i32_1 = arith.constant 0 : i32
    return %c0_i32, %c0_i32_0 : i32, i32
  }
  func.func @transform_12(%arg0: i32) -> (i32, i32, i32) {
    %c0_i32 = arith.constant 0 : i32
    %c0_i32_0 = arith.constant 0 : i32
    %c0_i32_1 = arith.constant 0 : i32
    return %arg0, %c0_i32, %c0_i32_0 : i32, i32, i32
  }
}

</mosaic_0001>

<llo_original>
// kernel: _lambda_.1
$region0: #{_lambda_.1}
  #allocation0 [shape = 'u32[]', space=smem, size = 0x4, offset = 0x4, fixed_abs, tag = 'smem constant byte address 0x4 - core index']
  #allocation1 [shape = 'u32[144,128]{1,0:T(1,128)}', space=vmem, size = 0x12000, scoped, tag = 'internal scratch']
  %s0 = inlined_call_operand.vmem [shape: f32[2,16,128], index: 0, kind: input, shape index: {}]
  %s1 = inlined_call_operand.vmem [shape: f32[2,8,128], index: 1, kind: input, shape index: {}]
  %s2 = inlined_call_operand.vmem [shape: f32[128,128], index: 2, kind: input, shape index: {}]
  %s3 = inlined_call_operand.vmem [shape: f32[1,128], index: 3, kind: input, shape index: {}]
  %s4 = inlined_call_operand.vmem [shape: f32[128,256], index: 4, kind: input, shape index: {}]
  %s5 = inlined_call_operand.vmem [shape: f32[1,256], index: 5, kind: input, shape index: {}]
  %s6 = inlined_call_operand.vmem [shape: f32[128,128], index: 6, kind: input, shape index: {}]
  %s7 = inlined_call_operand.vmem [shape: f32[1,128], index: 7, kind: input, shape index: {}]
  %s8 = inlined_call_operand.vmem [shape: f32[128,128], index: 8, kind: input, shape index: {}]
  %s9 = inlined_call_operand.vmem [shape: f32[1,128], index: 9, kind: input, shape index: {}]
  %s10 = inlined_call_operand.vmem [shape: f32[128,128], index: 10, kind: input, shape index: {}]
  %s11 = inlined_call_operand.vmem [shape: f32[1,128], index: 11, kind: input, shape index: {}]
  %s12 = inlined_call_operand.hbm [shape: f32[2,16,128], index: 12, kind: output, shape index: {}]
  %s13 = sld [smem:[#allocation0]]
  $region81: #{_lambda_.1} parent=0
    _
  %s15 = ssub.s32 1, %s13
  %s16 = scalar_select 0, %s15, %s13
  $region1: #{_lambda_.1} parent=0
    #allocation2 [shape = 'u8[16384]{0}', space=vmem, size = 0x4000, scoped, tag = 'output window, operand 0']
    #allocation3 [shape = 's32[2]{0}', space=sflag, size = 0x8, scoped, tag = 'scoped memory for _lambda_.1']
    %17 = vsyncpa [#allocation3], 0
    %s18 = scalar_lea.sflag [#allocation3], 1
    %19 = vsyncpa %s18, 0
    loop: start=0, step=1, limit=4
    $region2: #{_lambda_.1} parent=1 // loop_pre_header
      _
    $region3: #{_lambda_.1} parent=1 // loop_header
      %s21 = sphi 0, %s25
      %p22 = scmp.ge.s32.totalorder %s21, 4
      %s31 = sphi 0, %s33
      %s34 = sphi 0, %s31
      %s35 = sphi 0, %s34
      %s51 = sphi 0, %s35
      %s57 = sphi 0, %s59
      %s60 = sphi 0, %s57
      %s61 = sphi 0, %s60
      %s77 = sphi 0, %s61
      %s81 = sphi 0, %s81
      %s83 = sphi 0, %s81
      %s84 = sphi 0, %s83
      %s98 = sphi 0, %s84
      %s102 = sphi 0, %s102
      %s104 = sphi 0, %s102
      %s105 = sphi 0, %s104
      %s119 = sphi 0, %s105
      %s123 = sphi 0, %s123
      %s125 = sphi 0, %s123
      %s126 = sphi 0, %s125
      %s140 = sphi 0, %s126
      %s144 = sphi 0, %s144
      %s146 = sphi 0, %s144
      %s147 = sphi 0, %s146
      %s161 = sphi 0, %s147
      %s165 = sphi 0, %s165
      %s167 = sphi 0, %s165
      %s168 = sphi 0, %s167
      %s182 = sphi 0, %s168
      %s186 = sphi 0, %s186
      %s188 = sphi 0, %s186
      %s189 = sphi 0, %s188
      %s203 = sphi 0, %s189
      %s207 = sphi 0, %s207
      %s209 = sphi 0, %s207
      %s210 = sphi 0, %s209
      %s224 = sphi 0, %s210
      %s228 = sphi 0, %s228
      %s230 = sphi 0, %s228
      %s231 = sphi 0, %s230
      %s245 = sphi 0, %s231
      %s249 = sphi 0, %s249
      %s251 = sphi 0, %s249
      %s252 = sphi 0, %s251
      %s266 = sphi 0, %s252
      %s270 = sphi 0, %s270
      %s272 = sphi 0, %s270
      %s273 = sphi 0, %s272
      %s287 = sphi 0, %s273
      %s293 = sphi 0, %s295
      %s296 = sphi 0, %s293
      %s297 = sphi 0, %s296
      %s313 = sphi 0, %s297
    $region4: #{_lambda_.1} parent=1 // loop_header_branch
      %24 = sbr.rel (%p22) target = $region8
    $region5: #{_lambda_.1} parent=1 // loop_body
      %s26 = ssub.s32 %s21, 1
      %s27 = ssub.s32 %s21, 2
      %s28 = sadd.s32 %s21, 1
      %s29 = ssub.s32 %s21, %s28
      %p30 = scmp.eq.s32.totalorder %s29, 0
      %s32 = sadd.s32 %s31, 1
      %s33 = scalar_select %p30, %s31, %s32
      %p36 = pneg %p30
      %p37 = scmp.eq.s32.totalorder %s21, 1
      %p38 = por %p36, %p37
      %p39 = scmp.ne.s32.totalorder %s31, %s34
      %p40 = scmp.eq.s32.totalorder %s21, 0
      %p41 = por %p39, %p40
      %p42 = scmp.ne.s32.totalorder %s31, %s34
      %p43 = scmp.eq.s32.totalorder %s26, 1
      %p44 = por %p42, %p43
      %p45 = scmp.ne.s32.totalorder %s34, %s35
      %p46 = scmp.eq.s32.totalorder %s26, 0
      %p47 = por %p45, %p46
      %p48 = scmp.ne.s32.totalorder %s34, %s35
      %p49 = scmp.eq.s32.totalorder %s27, 1
      %p50 = por %p48, %p49
      %p52 = scmp.ne.s32.totalorder %s35, %s51
      %p53 = scmp.eq.s32.totalorder %s27, 0
      %p54 = por %p52, %p53
      %s55 = ssub.s32 %s21, %s28
      %p56 = scmp.eq.s32.totalorder %s55, 0
      %s58 = sadd.s32 %s57, 1
      %s59 = scalar_select %p56, %s57, %s58
      %p62 = pneg %p56
      %p63 = scmp.eq.s32.totalorder %s21, 1
      %p64 = por %p62, %p63
      %p65 = scmp.ne.s32.totalorder %s57, %s60
      %p66 = scmp.eq.s32.totalorder %s21, 0
      %p67 = por %p65, %p66
      %p68 = scmp.ne.s32.totalorder %s57, %s60
      %p69 = scmp.eq.s32.totalorder %s26, 1
      %p70 = por %p68, %p69
      %p71 = scmp.ne.s32.totalorder %s60, %s61
      %p72 = scmp.eq.s32.totalorder %s26, 0
      %p73 = por %p71, %p72
      %p74 = scmp.ne.s32.totalorder %s60, %s61
      %p75 = scmp.eq.s32.totalorder %s27, 1
      %p76 = por %p74, %p75
      %p78 = scmp.ne.s32.totalorder %s61, %s77
      %p79 = scmp.eq.s32.totalorder %s27, 0
      %p80 = por %p78, %p79
      %s82 = sadd.s32 %s81, 1
      %p85 = scmp.eq.s32.totalorder %s21, 1
      %p86 = scmp.ne.s32.totalorder %s81, %s83
      %p87 = scmp.eq.s32.totalorder %s21, 0
      %p88 = por %p86, %p87
      %p89 = scmp.ne.s32.totalorder %s81, %s83
      %p90 = scmp.eq.s32.totalorder %s26, 1
      %p91 = por %p89, %p90
      %p92 = scmp.ne.s32.totalorder %s83, %s84
      %p93 = scmp.eq.s32.totalorder %s26, 0
      %p94 = por %p92, %p93
      %p95 = scmp.ne.s32.totalorder %s83, %s84
      %p96 = scmp.eq.s32.totalorder %s27, 1
      %p97 = por %p95, %p96
      %p99 = scmp.ne.s32.totalorder %s84, %s98
      %p100 = scmp.eq.s32.totalorder %s27, 0
      %p101 = por %p99, %p100
      %s103 = sadd.s32 %s102, 1
      %p106 = scmp.eq.s32.totalorder %s21, 1
      %p107 = scmp.ne.s32.totalorder %s102, %s104
      %p108 = scmp.eq.s32.totalorder %s21, 0
      %p109 = por %p107, %p108
      %p110 = scmp.ne.s32.totalorder %s102, %s104
      %p111 = scmp.eq.s32.totalorder %s26, 1
      %p112 = por %p110, %p111
      %p113 = scmp.ne.s32.totalorder %s104, %s105
      %p114 = scmp.eq.s32.totalorder %s26, 0
      %p115 = por %p113, %p114
      %p116 = scmp.ne.s32.totalorder %s104, %s105
      %p117 = scmp.eq.s32.totalorder %s27, 1
      %p118 = por %p116, %p117
      %p120 = scmp.ne.s32.totalorder %s105, %s119
      %p121 = scmp.eq.s32.totalorder %s27, 0
      %p122 = por %p120, %p121
      %s124 = sadd.s32 %s123, 1
      %p127 = scmp.eq.s32.totalorder %s21, 1
      %p128 = scmp.ne.s32.totalorder %s123, %s125
      %p129 = scmp.eq.s32.totalorder %s21, 0
      %p130 = por %p128, %p129
      %p131 = scmp.ne.s32.totalorder %s123, %s125
      %p132 = scmp.eq.s32.totalorder %s26, 1
      %p133 = por %p131, %p132
      %p134 = scmp.ne.s32.totalorder %s125, %s126
      %p135 = scmp.eq.s32.totalorder %s26, 0
      %p136 = por %p134, %p135
      %p137 = scmp.ne.s32.totalorder %s125, %s126
      %p138 = scmp.eq.s32.totalorder %s27, 1
      %p139 = por %p137, %p138
      %p141 = scmp.ne.s32.totalorder %s126, %s140
      %p142 = scmp.eq.s32.totalorder %s27, 0
      %p143 = por %p141, %p142
      %s145 = sadd.s32 %s144, 1
      %p148 = scmp.eq.s32.totalorder %s21, 1
      %p149 = scmp.ne.s32.totalorder %s144, %s146
      %p150 = scmp.eq.s32.totalorder %s21, 0
      %p151 = por %p149, %p150
      %p152 = scmp.ne.s32.totalorder %s144, %s146
      %p153 = scmp.eq.s32.totalorder %s26, 1
      %p154 = por %p152, %p153
      %p155 = scmp.ne.s32.totalorder %s146, %s147
      %p156 = scmp.eq.s32.totalorder %s26, 0
      %p157 = por %p155, %p156
      %p158 = scmp.ne.s32.totalorder %s146, %s147
      %p159 = scmp.eq.s32.totalorder %s27, 1
      %p160 = por %p158, %p159
      %p162 = scmp.ne.s32.totalorder %s147, %s161
      %p163 = scmp.eq.s32.totalorder %s27, 0
      %p164 = por %p162, %p163
      %s166 = sadd.s32 %s165, 1
      %p169 = scmp.eq.s32.totalorder %s21, 1
      %p170 = scmp.ne.s32.totalorder %s165, %s167
      %p171 = scmp.eq.s32.totalorder %s21, 0
      %p172 = por %p170, %p171
      %p173 = scmp.ne.s32.totalorder %s165, %s167
      %p174 = scmp.eq.s32.totalorder %s26, 1
      %p175 = por %p173, %p174
      %p176 = scmp.ne.s32.totalorder %s167, %s168
      %p177 = scmp.eq.s32.totalorder %s26, 0
      %p178 = por %p176, %p177
      %p179 = scmp.ne.s32.totalorder %s167, %s168
      %p180 = scmp.eq.s32.totalorder %s27, 1
      %p181 = por %p179, %p180
      %p183 = scmp.ne.s32.totalorder %s168, %s182
      %p184 = scmp.eq.s32.totalorder %s27, 0
      %p185 = por %p183, %p184
      %s187 = sadd.s32 %s186, 1
      %p190 = scmp.eq.s32.totalorder %s21, 1
      %p191 = scmp.ne.s32.totalorder %s186, %s188
      %p192 = scmp.eq.s32.totalorder %s21, 0
      %p193 = por %p191, %p192
      %p194 = scmp.ne.s32.totalorder %s186, %s188
      %p195 = scmp.eq.s32.totalorder %s26, 1
      %p196 = por %p194, %p195
      %p197 = scmp.ne.s32.totalorder %s188, %s189
      %p198 = scmp.eq.s32.totalorder %s26, 0
      %p199 = por %p197, %p198
      %p200 = scmp.ne.s32.totalorder %s188, %s189
      %p201 = scmp.eq.s32.totalorder %s27, 1
      %p202 = por %p200, %p201
      %p204 = scmp.ne.s32.totalorder %s189, %s203
      %p205 = scmp.eq.s32.totalorder %s27, 0
      %p206 = por %p204, %p205
      %s208 = sadd.s32 %s207, 1
      %p211 = scmp.eq.s32.totalorder %s21, 1
      %p212 = scmp.ne.s32.totalorder %s207, %s209
      %p213 = scmp.eq.s32.totalorder %s21, 0
      %p214 = por %p212, %p213
      %p215 = scmp.ne.s32.totalorder %s207, %s209
      %p216 = scmp.eq.s32.totalorder %s26, 1
      %p217 = por %p215, %p216
      %p218 = scmp.ne.s32.totalorder %s209, %s210
      %p219 = scmp.eq.s32.totalorder %s26, 0
      %p220 = por %p218, %p219
      %p221 = scmp.ne.s32.totalorder %s209, %s210
      %p222 = scmp.eq.s32.totalorder %s27, 1
      %p223 = por %p221, %p222
      %p225 = scmp.ne.s32.totalorder %s210, %s224
      %p226 = scmp.eq.s32.totalorder %s27, 0
      %p227 = por %p225, %p226
      %s229 = sadd.s32 %s228, 1
      %p232 = scmp.eq.s32.totalorder %s21, 1
      %p233 = scmp.ne.s32.totalorder %s228, %s230
      %p234 = scmp.eq.s32.totalorder %s21, 0
      %p235 = por %p233, %p234
      %p236 = scmp.ne.s32.totalorder %s228, %s230
      %p237 = scmp.eq.s32.totalorder %s26, 1
      %p238 = por %p236, %p237
      %p239 = scmp.ne.s32.totalorder %s230, %s231
      %p240 = scmp.eq.s32.totalorder %s26, 0
      %p241 = por %p239, %p240
      %p242 = scmp.ne.s32.totalorder %s230, %s231
      %p243 = scmp.eq.s32.totalorder %s27, 1
      %p244 = por %p242, %p243
      %p246 = scmp.ne.s32.totalorder %s231, %s245
      %p247 = scmp.eq.s32.totalorder %s27, 0
      %p248 = por %p246, %p247
      %s250 = sadd.s32 %s249, 1
      %p253 = scmp.eq.s32.totalorder %s21, 1
      %p254 = scmp.ne.s32.totalorder %s249, %s251
      %p255 = scmp.eq.s32.totalorder %s21, 0
      %p256 = por %p254, %p255
      %p257 = scmp.ne.s32.totalorder %s249, %s251
      %p258 = scmp.eq.s32.totalorder %s26, 1
      %p259 = por %p257, %p258
      %p260 = scmp.ne.s32.totalorder %s251, %s252
      %p261 = scmp.eq.s32.totalorder %s26, 0
      %p262 = por %p260, %p261
      %p263 = scmp.ne.s32.totalorder %s251, %s252
      %p264 = scmp.eq.s32.totalorder %s27, 1
      %p265 = por %p263, %p264
      %p267 = scmp.ne.s32.totalorder %s252, %s266
      %p268 = scmp.eq.s32.totalorder %s27, 0
      %p269 = por %p267, %p268
      %s271 = sadd.s32 %s270, 1
      %p274 = scmp.eq.s32.totalorder %s21, 1
      %p275 = scmp.ne.s32.totalorder %s270, %s272
      %p276 = scmp.eq.s32.totalorder %s21, 0
      %p277 = por %p275, %p276
      %p278 = scmp.ne.s32.totalorder %s270, %s272
      %p279 = scmp.eq.s32.totalorder %s26, 1
      %p280 = por %p278, %p279
      %p281 = scmp.ne.s32.totalorder %s272, %s273
      %p282 = scmp.eq.s32.totalorder %s26, 0
      %p283 = por %p281, %p282
      %p284 = scmp.ne.s32.totalorder %s272, %s273
      %p285 = scmp.eq.s32.totalorder %s27, 1
      %p286 = por %p284, %p285
      %p288 = scmp.ne.s32.totalorder %s273, %s287
      %p289 = scmp.eq.s32.totalorder %s27, 0
      %p290 = por %p288, %p289
      %s291 = ssub.s32 %s21, %s28
      %p292 = scmp.eq.s32.totalorder %s291, 0
      %s294 = sadd.s32 %s293, 1
      %s295 = scalar_select %p292, %s293, %s294
      %p298 = pneg %p292
      %p299 = scmp.eq.s32.totalorder %s21, 1
      %p300 = por %p298, %p299
      %p301 = scmp.ne.s32.totalorder %s293, %s296
      %p302 = scmp.eq.s32.totalorder %s21, 0
      %p303 = por %p301, %p302
      %p304 = scmp.ne.s32.totalorder %s293, %s296
      %p305 = scmp.eq.s32.totalorder %s26, 1
      %p306 = por %p304, %p305
      %p307 = scmp.ne.s32.totalorder %s296, %s297
      %p308 = scmp.eq.s32.totalorder %s26, 0
      %p309 = por %p307, %p308
      %p310 = scmp.ne.s32.totalorder %s296, %s297
      %p311 = scmp.eq.s32.totalorder %s27, 1
      %p312 = por %p310, %p311
      %p314 = scmp.ne.s32.totalorder %s297, %s313
      %p315 = scmp.eq.s32.totalorder %s27, 0
      %p316 = por %p314, %p315
      %p317 = scmp.le.s32.totalorder 1, %s21
      %p318 = scmp.lt.s32.totalorder %s21, 3
      %p319 = pnand %p317, %p318
      %p320 = pneg %p319
      // Predicated region
      $region9: #{_lambda_.1} parent=5 // pred_check
        _
      $region10: #{_lambda_.1} parent=5 // pred_check_branch
        %322 = sbr.rel (%p319) target = $region12
      $region11: #{_lambda_.1} parent=5 // pred_region
        %s323 = ssub.s32 %s21, 1
        // Predicated region
        $region13: #{_lambda_.1} parent=11 // pred_check
          %p324 = pneg %p94
        $region14: #{_lambda_.1} parent=11 // pred_check_branch
          %326 = sbr.rel (%p324) target = $region16
        $region15: #{_lambda_.1} parent=11 // pred_region
          _
        $region16: #{_lambda_.1} parent=11 // pred_fallthru
          _
        // Predicated region
        $region17: #{_lambda_.1} parent=11 // pred_check
          %p327 = pneg %p115
        $region18: #{_lambda_.1} parent=11 // pred_check_branch
          %329 = sbr.rel (%p327) target = $region20
        $region19: #{_lambda_.1} parent=11 // pred_region
          _
        $region20: #{_lambda_.1} parent=11 // pred_fallthru
          _
        // Predicated region
        $region21: #{_lambda_.1} parent=11 // pred_check
          %p330 = pneg %p136
        $region22: #{_lambda_.1} parent=11 // pred_check_branch
          %332 = sbr.rel (%p330) target = $region24
        $region23: #{_lambda_.1} parent=11 // pred_region
          _
        $region24: #{_lambda_.1} parent=11 // pred_fallthru
          _
        // Predicated region
        $region25: #{_lambda_.1} parent=11 // pred_check
          %p333 = pneg %p157
        $region26: #{_lambda_.1} parent=11 // pred_check_branch
          %335 = sbr.rel (%p333) target = $region28
        $region27: #{_lambda_.1} parent=11 // pred_region
          _
        $region28: #{_lambda_.1} parent=11 // pred_fallthru
          _
        // Predicated region
        $region29: #{_lambda_.1} parent=11 // pred_check
          %p336 = pneg %p178
        $region30: #{_lambda_.1} parent=11 // pred_check_branch
          %338 = sbr.rel (%p336) target = $region32
        $region31: #{_lambda_.1} parent=11 // pred_region
          _
        $region32: #{_lambda_.1} parent=11 // pred_fallthru
          _
        // Predicated region
        $region33: #{_lambda_.1} parent=11 // pred_check
          %p339 = pneg %p199
        $region34: #{_lambda_.1} parent=11 // pred_check_branch
          %341 = sbr.rel (%p339) target = $region36
        $region35: #{_lambda_.1} parent=11 // pred_region
          _
        $region36: #{_lambda_.1} parent=11 // pred_fallthru
          _
        // Predicated region
        $region37: #{_lambda_.1} parent=11 // pred_check
          %p342 = pneg %p220
        $region38: #{_lambda_.1} parent=11 // pred_check_branch
          %344 = sbr.rel (%p342) target = $region40
        $region39: #{_lambda_.1} parent=11 // pred_region
          _
        $region40: #{_lambda_.1} parent=11 // pred_fallthru
          _
        // Predicated region
        $region41: #{_lambda_.1} parent=11 // pred_check
          %p345 = pneg %p241
        $region42: #{_lambda_.1} parent=11 // pred_check_branch
          %347 = sbr.rel (%p345) target = $region44
        $region43: #{_lambda_.1} parent=11 // pred_region
          _
        $region44: #{_lambda_.1} parent=11 // pred_fallthru
          _
        // Predicated region
        $region45: #{_lambda_.1} parent=11 // pred_check
          %p348 = pneg %p262
        $region46: #{_lambda_.1} parent=11 // pred_check_branch
          %350 = sbr.rel (%p348) target = $region48
        $region47: #{_lambda_.1} parent=11 // pred_region
          _
        $region48: #{_lambda_.1} parent=11 // pred_fallthru
          _
        // Predicated region
        $region49: #{_lambda_.1} parent=11 // pred_check
          %p351 = pneg %p283
        $region50: #{_lambda_.1} parent=11 // pred_check_branch
          %353 = sbr.rel (%p351) target = $region52
        $region51: #{_lambda_.1} parent=11 // pred_region
          _
        $region52: #{_lambda_.1} parent=11 // pred_fallthru
          _
      $region12: #{_lambda_.1} parent=5 // pred_fallthru
        _
      %p354 = scmp.lt.s32.totalorder %s21, 2
      // Predicated region
      $region53: #{_lambda_.1} parent=5 // pred_check
        %p355 = pneg %p354
      $region54: #{_lambda_.1} parent=5 // pred_check_branch
        %357 = sbr.rel (%p355) target = $region56
      $region55: #{_lambda_.1} parent=5 // pred_region
        // Predicated region
        $region57: #{_lambda_.1} parent=55 // pred_check
          %p358 = pneg %p41
        $region58: #{_lambda_.1} parent=55 // pred_check_branch
          %360 = sbr.rel (%p358) target = $region60
        $region59: #{_lambda_.1} parent=55 // pred_region
          %p361 = scmp.lt.s32.totalorder %s21, 1
          %s362 = scalar_select %p361, %s21, 1
          %s363 = smul.addr %s362, 2
          %s364 = smul.addr %s363, 8
          %s365 = scalar_lea.vmem %s0, %s364
        $region60: #{_lambda_.1} parent=55 // pred_fallthru
          _
        // Predicated region
        $region61: #{_lambda_.1} parent=55 // pred_check
          %p366 = pneg %p67
        $region62: #{_lambda_.1} parent=55 // pred_check_branch
          %368 = sbr.rel (%p366) target = $region64
        $region63: #{_lambda_.1} parent=55 // pred_region
          %p369 = scmp.lt.s32.totalorder %s21, 1
          %s370 = scalar_select %p369, %s21, 1
          %s371 = smul.addr %s370, 8
          %s372 = scalar_lea.vmem %s1, %s371
        $region64: #{_lambda_.1} parent=55 // pred_fallthru
          _
      $region56: #{_lambda_.1} parent=5 // pred_fallthru
        _
      %p373 = scmp.le.s32.totalorder 1, %s21
      %p374 = scmp.lt.s32.totalorder %s21, 3
      %p375 = pnand %p373, %p374
      %p376 = pneg %p375
      // Predicated region
      $region65: #{_lambda_.1} parent=5 // pred_check
        _
      $region66: #{_lambda_.1} parent=5 // pred_check_branch
        %378 = sbr.rel (%p375) target = $region68
      $region67: #{_lambda_.1} parent=5 // pred_region
        %s379 = ssub.s32 %s21, 1
        %p380 = scmp.lt.s32.totalorder %s26, 1
        %s381 = scalar_select %p380, %s26, 1
        %s382 = smul.addr %s381, 2
        %s383 = smul.addr %s382, 8
        %s384 = scalar_lea.vmem %s0, %s383
        %p385 = pneg %p47
        %p386 = pneg %p44
        %p387 = scmp.lt.s32.totalorder %s26, 1
        %s388 = scalar_select %p387, %s26, 1
        %s389 = smul.addr %s388, 8
        %s390 = scalar_lea.vmem %s1, %s389
        %p391 = pneg %p73
        %p392 = pneg %p70
        %p393 = pneg %p94
        %p394 = pneg %p91
        %p395 = pneg %p115
        %p396 = pneg %p112
        %p397 = pneg %p136
        %p398 = pneg %p133
        %p399 = pneg %p157
        %p400 = pneg %p154
        %p401 = pneg %p178
        %p402 = pneg %p175
        %p403 = pneg %p199
        %p404 = pneg %p196
        %p405 = pneg %p220
        %p406 = pneg %p217
        %p407 = pneg %p241
        %p408 = pneg %p238
        %p409 = pneg %p262
        %p410 = pneg %p259
        %p411 = pneg %p283
        %p412 = pneg %p280
        %p413 = pneg %p309
        %p414 = pneg %p306
        %s415 = sand.u32 %s296, 1
        %s416 = scalar_lea.sflag [#allocation3], %s415
        %s417 = sand.u32 %s296, 1
        %s418 = smul.addr %s417, 16
        %s419 = scalar_lea.vmem [#allocation2], %s418
        %p420 = scmp.lt.s32.totalorder %s26, 1
        %s421 = scalar_select %p420, %s26, 1
        %s422 = smul.addr %s421, 2
        %s423 = smul.addr %s422, 8
        %s424 = scalar_lea.vmem %s0, %s423
        %p425 = scmp.lt.s32.totalorder %s26, 1
        %s426 = scalar_select %p425, %s26, 1
        %s427 = smul.addr %s426, 8
        %s428 = scalar_lea.vmem %s1, %s427
        %v429 = vld [vmem:[%s424] sm:$0xff]
        %v430 = vld [vmem:[%s424 + $0x8] sm:$0xff]
        %v431 = vld [vmem:[%s428] sm:$0xff]
        %v432 = vld [vmem:[%s2] sm:$0xff]
        %v433 = vld [vmem:[%s2 + $0x8] sm:$0xff]
        %v434 = vld [vmem:[%s2 + $0x10] sm:$0xff]
        %v435 = vld [vmem:[%s2 + $0x18] sm:$0xff]
        %v436 = vld [vmem:[%s2 + $0x20] sm:$0xff]
        %v437 = vld [vmem:[%s2 + $0x28] sm:$0xff]
        %v438 = vld [vmem:[%s2 + $0x30] sm:$0xff]
        %v439 = vld [vmem:[%s2 + $0x38] sm:$0xff]
        %v440 = vld [vmem:[%s2 + $0x40] sm:$0xff]
        %v441 = vld [vmem:[%s2 + $0x48] sm:$0xff]
        %v442 = vld [vmem:[%s2 + $0x50] sm:$0xff]
        %v443 = vld [vmem:[%s2 + $0x58] sm:$0xff]
        %v444 = vld [vmem:[%s2 + $0x60] sm:$0xff]
        %v445 = vld [vmem:[%s2 + $0x68] sm:$0xff]
        %v446 = vld [vmem:[%s2 + $0x70] sm:$0xff]
        %v447 = vld [vmem:[%s2 + $0x78] sm:$0xff]
        %v448 = vld [vmem:[%s3] sm:$0x1]
        %v450 = vlaneseq
        %v451 = vshrl.u32 %v450, 7
        %v452 = vsub.s32 0, %v451
        %v453 = vrot.slane %v448, %v452
        %455 = vmatprep.subr.mxu0 0.0
        %v456 = vand.u32 %v432, 4294901760
        %457 = vmatpush1.msra.mxu0 %v456
        %458 = vmatprep.subr.mxu0 0.0
        %v459 = vand.u32 %v433, 4294901760
        %460 = vmatpush1.msra.mxu0 %v459
        %461 = vmatprep.subr.mxu0 0.0
        %v462 = vand.u32 %v434, 4294901760
        %463 = vmatpush1.msra.mxu0 %v462
        %464 = vmatprep.subr.mxu0 0.0
        %v465 = vand.u32 %v435, 4294901760
        %466 = vmatpush1.msra.mxu0 %v465
        %467 = vmatprep.subr.mxu0 0.0
        %v468 = vand.u32 %v436, 4294901760
        %469 = vmatpush1.msra.mxu0 %v468
        %470 = vmatprep.subr.mxu0 0.0
        %v471 = vand.u32 %v437, 4294901760
        %472 = vmatpush1.msra.mxu0 %v471
        %473 = vmatprep.subr.mxu0 0.0
        %v474 = vand.u32 %v438, 4294901760
        %475 = vmatpush1.msra.mxu0 %v474
        %476 = vmatprep.subr.mxu0 0.0
        %v477 = vand.u32 %v439, 4294901760
        %478 = vmatpush1.msra.mxu0 %v477
        %479 = vmatprep.subr.mxu0 0.0
        %v480 = vand.u32 %v440, 4294901760
        %481 = vmatpush1.msra.mxu0 %v480
        %482 = vmatprep.subr.mxu0 0.0
        %v483 = vand.u32 %v441, 4294901760
        %484 = vmatpush1.msra.mxu0 %v483
        %485 = vmatprep.subr.mxu0 0.0
        %v486 = vand.u32 %v442, 4294901760
        %487 = vmatpush1.msra.mxu0 %v486
        %488 = vmatprep.subr.mxu0 0.0
        %v489 = vand.u32 %v443, 4294901760
        %490 = vmatpush1.msra.mxu0 %v489
        %491 = vmatprep.subr.mxu0 0.0
        %v492 = vand.u32 %v444, 4294901760
        %493 = vmatpush1.msra.mxu0 %v492
        %494 = vmatprep.subr.mxu0 0.0
        %v495 = vand.u32 %v445, 4294901760
        %496 = vmatpush1.msra.mxu0 %v495
        %497 = vmatprep.subr.mxu0 0.0
        %v498 = vand.u32 %v446, 4294901760
        %499 = vmatpush1.msra.mxu0 %v498
        %500 = vmatprep.subr.mxu0 0.0
        %v501 = vand.u32 %v447, 4294901760
        %502 = vmatpush1.msra.mxu0 %v501
        %503 = vmatprep.subr.mxu0 0.0
        %504 = vmatpush1.msra.mxu0 0.0
        %505 = vmatprep.subr.mxu0 0.0
        %506 = vmatpush1.msra.mxu0 0.0
        %507 = vmatprep.subr.mxu0 0.0
        %508 = vmatpush1.msra.mxu0 0.0
        %509 = vmatprep.subr.mxu0 0.0
        %510 = vmatpush1.msra.mxu0 0.0
        %511 = vmatprep.subr.mxu0 0.0
        %512 = vmatpush1.msra.mxu0 0.0
        %513 = vmatprep.subr.mxu0 0.0
        %514 = vmatpush1.msra.mxu0 0.0
        %515 = vmatprep.subr.mxu0 0.0
        %516 = vmatpush1.msra.mxu0 0.0
        %517 = vmatprep.subr.mxu0 0.0
        %518 = vmatpush1.msra.mxu0 0.0
        %519 = vmatprep.subr.mxu0 0.0
        %520 = vmatpush1.msra.mxu0 0.0
        %521 = vmatprep.subr.mxu0 0.0
        %522 = vmatpush1.msra.mxu0 0.0
        %523 = vmatprep.subr.mxu0 0.0
        %524 = vmatpush1.msra.mxu0 0.0
        %525 = vmatprep.subr.mxu0 0.0
        %526 = vmatpush1.msra.mxu0 0.0
        %527 = vmatprep.subr.mxu0 0.0
        %528 = vmatpush1.msra.mxu0 0.0
        %529 = vmatprep.subr.mxu0 0.0
        %530 = vmatpush1.msra.mxu0 0.0
        %531 = vmatprep.subr.mxu0 0.0
        %532 = vmatpush1.msra.mxu0 0.0
        %533 = vmatprep.subr.mxu0 0.0
        %534 = vmatpush1.msra.mxu0 0.0
        %535 = vmatprep.mubr.f32.mxu0 0.0
        %v536 = vand.u32 %v429, 4294901760
        %v537 = vsub.f32 %v429, %v536
        %v538 = vand.u32 %v537, 4294901760
        %v539 = vsub.f32 %v537, %v538
        %v540 = vand.u32 %v539, 4294901760
        %541 = vmatmul.mubr.f32.gmra.mrb[0].mxu0 %v540
        %v542 = vpop.f32.mrb[0].mxu0
        %v543 = vadd.f32 %v453, %v542
        %v544 = vpop.f32.mrb[0].mxu0
        %545 = vmatprep.mubr.f32.mxu0 0.0
        %v546 = vand.u32 %v430, 4294901760
        %v547 = vsub.f32 %v430, %v546
        %v548 = vand.u32 %v547, 4294901760
        %v549 = vsub.f32 %v547, %v548
        %v550 = vand.u32 %v549, 4294901760
        %551 = vmatmul.mubr.f32.gmra.mrb[0].mxu0 %v550
        %v552 = vpop.f32.mrb[0].mxu0
        %v553 = vadd.f32 %v453, %v552
        %v554 = vpop.f32.mrb[0].mxu0
        %555 = vdwg.mxu0
        %556 = vmatprep.subr.mxu0 0.0
        %v557 = vand.u32 %v432, 4294901760
        %v558 = vsub.f32 %v432, %v557
        %v559 = vand.u32 %v558, 4294901760
        %v560 = vsub.f32 %v558, %v559
        %v561 = vand.u32 %v560, 4294901760
        %562 = vmatpush1.msra.mxu0 %v561
        %563 = vmatprep.subr.mxu0 0.0
        %v564 = vand.u32 %v433, 4294901760
        %v565 = vsub.f32 %v433, %v564
        %v566 = vand.u32 %v565, 4294901760
        %v567 = vsub.f32 %v565, %v566
        %v568 = vand.u32 %v567, 4294901760
        %569 = vmatpush1.msra.mxu0 %v568
        %570 = vmatprep.subr.mxu0 0.0
        %v571 = vand.u32 %v434, 4294901760
        %v572 = vsub.f32 %v434, %v571
        %v573 = vand.u32 %v572, 4294901760
        %v574 = vsub.f32 %v572, %v573
        %v575 = vand.u32 %v574, 4294901760
        %576 = vmatpush1.msra.mxu0 %v575
        %577 = vmatprep.subr.mxu0 0.0
        %v578 = vand.u32 %v435, 4294901760
        %v579 = vsub.f32 %v435, %v578
        %v580 = vand.u32 %v579, 4294901760
        %v581 = vsub.f32 %v579, %v580
        %v582 = vand.u32 %v581, 4294901760
        %583 = vmatpush1.msra.mxu0 %v582
        %584 = vmatprep.subr.mxu0 0.0
        %v585 = vand.u32 %v436, 4294901760
        %v586 = vsub.f32 %v436, %v585
        %v587 = vand.u32 %v586, 4294901760
        %v588 = vsub.f32 %v586, %v587
        %v589 = vand.u32 %v588, 4294901760
        %590 = vmatpush1.msra.mxu0 %v589
        %591 = vmatprep.subr.mxu0 0.0
        %v592 = vand.u32 %v437, 4294901760
        %v593 = vsub.f32 %v437, %v592
        %v594 = vand.u32 %v593, 4294901760
        %v595 = vsub.f32 %v593, %v594
        %v596 = vand.u32 %v595, 4294901760
        %597 = vmatpush1.msra.mxu0 %v596
        %598 = vmatprep.subr.mxu0 0.0
        %v599 = vand.u32 %v438, 4294901760
        %v600 = vsub.f32 %v438, %v599
        %v601 = vand.u32 %v600, 4294901760
        %v602 = vsub.f32 %v600, %v601
        %v603 = vand.u32 %v602, 4294901760
        %604 = vmatpush1.msra.mxu0 %v603
        %605 = vmatprep.subr.mxu0 0.0
        %v606 = vand.u32 %v439, 4294901760
        %v607 = vsub.f32 %v439, %v606
        %v608 = vand.u32 %v607, 4294901760
        %v609 = vsub.f32 %v607, %v608
        %v610 = vand.u32 %v609, 4294901760
        %611 = vmatpush1.msra.mxu0 %v610
        %612 = vmatprep.subr.mxu0 0.0
        %v613 = vand.u32 %v440, 4294901760
        %v614 = vsub.f32 %v440, %v613
        %v615 = vand.u32 %v614, 4294901760
        %v616 = vsub.f32 %v614, %v615
        %v617 = vand.u32 %v616, 4294901760
        %618 = vmatpush1.msra.mxu0 %v617
        %619 = vmatprep.subr.mxu0 0.0
        %v620 = vand.u32 %v441, 4294901760
        %v621 = vsub.f32 %v441, %v620
        %v622 = vand.u32 %v621, 4294901760
        %v623 = vsub.f32 %v621, %v622
        %v624 = vand.u32 %v623, 4294901760
        %625 = vmatpush1.msra.mxu0 %v624
        %626 = vmatprep.subr.mxu0 0.0
        %v627 = vand.u32 %v442, 4294901760
        %v628 = vsub.f32 %v442, %v627
        %v629 = vand.u32 %v628, 4294901760
        %v630 = vsub.f32 %v628, %v629
        %v631 = vand.u32 %v630, 4294901760
        %632 = vmatpush1.msra.mxu0 %v631
        %633 = vmatprep.subr.mxu0 0.0
        %v634 = vand.u32 %v443, 4294901760
        %v635 = vsub.f32 %v443, %v634
        %v636 = vand.u32 %v635, 4294901760
        %v637 = vsub.f32 %v635, %v636
        %v638 = vand.u32 %v637, 4294901760
        %639 = vmatpush1.msra.mxu0 %v638
        %640 = vmatprep.subr.mxu0 0.0
        %v641 = vand.u32 %v444, 4294901760
        %v642 = vsub.f32 %v444, %v641
        %v643 = vand.u32 %v642, 4294901760
        %v644 = vsub.f32 %v642, %v643
        %v645 = vand.u32 %v644, 4294901760
        %646 = vmatpush1.msra.mxu0 %v645
        %647 = vmatprep.subr.mxu0 0.0
        %v648 = vand.u32 %v445, 4294901760
        %v649 = vsub.f32 %v445, %v648
        %v650 = vand.u32 %v649, 4294901760
        %v651 = vsub.f32 %v649, %v650
        %v652 = vand.u32 %v651, 4294901760
        %653 = vmatpush1.msra.mxu0 %v652
        %654 = vmatprep.subr.mxu0 0.0
        %v655 = vand.u32 %v446, 4294901760
        %v656 = vsub.f32 %v446, %v655
        %v657 = vand.u32 %v656, 4294901760
        %v658 = vsub.f32 %v656, %v657
        %v659 = vand.u32 %v658, 4294901760
        %660 = vmatpush1.msra.mxu0 %v659
        %661 = vmatprep.subr.mxu0 0.0
        %v662 = vand.u32 %v447, 4294901760
        %v663 = vsub.f32 %v447, %v662
        %v664 = vand.u32 %v663, 4294901760
        %v665 = vsub.f32 %v663, %v664
        %v666 = vand.u32 %v665, 4294901760
        %667 = vmatpush1.msra.mxu0 %v666
        %668 = vmatprep.subr.mxu0 0.0
        %669 = vmatpush1.msra.mxu0 0.0
        %670 = vmatprep.subr.mxu0 0.0
        %671 = vmatpush1.msra.mxu0 0.0
        %672 = vmatprep.subr.mxu0 0.0
        %673 = vmatpush1.msra.mxu0 0.0
        %674 = vmatprep.subr.mxu0 0.0
        %675 = vmatpush1.msra.mxu0 0.0
        %676 = vmatprep.subr.mxu0 0.0
        %677 = vmatpush1.msra.mxu0 0.0
        %678 = vmatprep.subr.mxu0 0.0
        %679 = vmatpush1.msra.mxu0 0.0
        %680 = vmatprep.subr.mxu0 0.0
        %681 = vmatpush1.msra.mxu0 0.0
        %682 = vmatprep.subr.mxu0 0.0
        %683 = vmatpush1.msra.mxu0 0.0
        %684 = vmatprep.subr.mxu0 0.0
        %685 = vmatpush1.msra.mxu0 0.0
        %686 = vmatprep.subr.mxu0 0.0
        %687 = vmatpush1.msra.mxu0 0.0
        %688 = vmatprep.subr.mxu0 0.0
        %689 = vmatpush1.msra.mxu0 0.0
        %690 = vmatprep.subr.mxu0 0.0
        %691 = vmatpush1.msra.mxu0 0.0
        %692 = vmatprep.subr.mxu0 0.0
        %693 = vmatpush1.msra.mxu0 0.0
        %694 = vmatprep.subr.mxu0 0.0
        %695 = vmatpush1.msra.mxu0 0.0
        %696 = vmatprep.subr.mxu0 0.0
        %697 = vmatpush1.msra.mxu0 0.0
        %698 = vmatprep.subr.mxu0 0.0
        %699 = vmatpush1.msra.mxu0 0.0
        %700 = vmatprep.mubr.f32.mxu0 0.0
        %v701 = vand.u32 %v429, 4294901760
        %702 = vmatmul.mubr.f32.gmra.mrb[0].mxu0 %v701
        %v703 = vpop.f32.mrb[0].mxu0
        %v704 = vadd.f32 %v543, %v703
        %v705 = vpop.f32.mrb[0].mxu0
        %706 = vmatprep.mubr.f32.mxu0 0.0
        %v707 = vand.u32 %v430, 4294901760
        %708 = vmatmul.mubr.f32.gmra.mrb[0].mxu0 %v707
        %v709 = vpop.f32.mrb[0].mxu0
        %v710 = vadd.f32 %v553, %v709
        %v711 = vpop.f32.mrb[0].mxu0
        %712 = vdwg.mxu0
        %713 = vmatprep.subr.mxu0 0.0
        %v714 = vand.u32 %v432, 4294901760
        %v715 = vsub.f32 %v432, %v714
        %716 = vmatpush1.msra.mxu0 %v715
        %717 = vmatprep.subr.mxu0 0.0
        %v718 = vand.u32 %v433, 4294901760
        %v719 = vsub.f32 %v433, %v718
        %720 = vmatpush1.msra.mxu0 %v719
        %721 = vmatprep.subr.mxu0 0.0
        %v722 = vand.u32 %v434, 4294901760
        %v723 = vsub.f32 %v434, %v722
        %724 = vmatpush1.msra.mxu0 %v723
        %725 = vmatprep.subr.mxu0 0.0
        %v726 = vand.u32 %v435, 4294901760
        %v727 = vsub.f32 %v435, %v726
        %728 = vmatpush1.msra.mxu0 %v727
        %729 = vmatprep.subr.mxu0 0.0
        %v730 = vand.u32 %v436, 4294901760
        %v731 = vsub.f32 %v436, %v730
        %732 = vmatpush1.msra.mxu0 %v731
        %733 = vmatprep.subr.mxu0 0.0
        %v734 = vand.u32 %v437, 4294901760
        %v735 = vsub.f32 %v437, %v734
        %736 = vmatpush1.msra.mxu0 %v735
        %737 = vmatprep.subr.mxu0 0.0
        %v738 = vand.u32 %v438, 4294901760
        %v739 = vsub.f32 %v438, %v738
        %740 = vmatpush1.msra.mxu0 %v739
        %741 = vmatprep.subr.mxu0 0.0
        %v742 = vand.u32 %v439, 4294901760
        %v743 = vsub.f32 %v439, %v742
        %744 = vmatpush1.msra.mxu0 %v743
        %745 = vmatprep.subr.mxu0 0.0
        %v746 = vand.u32 %v440, 4294901760
        %v747 = vsub.f32 %v440, %v746
        %748 = vmatpush1.msra.mxu0 %v747
        %749 = vmatprep.subr.mxu0 0.0
        %v750 = vand.u32 %v441, 4294901760
        %v751 = vsub.f32 %v441, %v750
        %752 = vmatpush1.msra.mxu0 %v751
        %753 = vmatprep.subr.mxu0 0.0
        %v754 = vand.u32 %v442, 4294901760
        %v755 = vsub.f32 %v442, %v754
        %756 = vmatpush1.msra.mxu0 %v755
        %757 = vmatprep.subr.mxu0 0.0
        %v758 = vand.u32 %v443, 4294901760
        %v759 = vsub.f32 %v443, %v758
        %760 = vmatpush1.msra.mxu0 %v759
        %761 = vmatprep.subr.mxu0 0.0
        %v762 = vand.u32 %v444, 4294901760
        %v763 = vsub.f32 %v444, %v762
        %764 = vmatpush1.msra.mxu0 %v763
        %765 = vmatprep.subr.mxu0 0.0
        %v766 = vand.u32 %v445, 4294901760
        %v767 = vsub.f32 %v445, %v766
        %768 = vmatpush1.msra.mxu0 %v767
        %769 = vmatprep.subr.mxu0 0.0
        %v770 = vand.u32 %v446, 4294901760
        %v771 = vsub.f32 %v446, %v770
        %772 = vmatpush1.msra.mxu0 %v771
        %773 = vmatprep.subr.mxu0 0.0
        %v774 = vand.u32 %v447, 4294901760
        %v775 = vsub.f32 %v447, %v774
        %776 = vmatpush1.msra.mxu0 %v775
        %777 = vmatprep.subr.mxu0 0.0
        %778 = vmatpush1.msra.mxu0 0.0
        %779 = vmatprep.subr.mxu0 0.0
        %780 = vmatpush1.msra.mxu0 0.0
        %781 = vmatprep.subr.mxu0 0.0
        %782 = vmatpush1.msra.mxu0 0.0
        %783 = vmatprep.subr.mxu0 0.0
        %784 = vmatpush1.msra.mxu0 0.0
        %785 = vmatprep.subr.mxu0 0.0
        %786 = vmatpush1.msra.mxu0 0.0
        %787 = vmatprep.subr.mxu0 0.0
        %788 = vmatpush1.msra.mxu0 0.0
        %789 = vmatprep.subr.mxu0 0.0
        %790 = vmatpush1.msra.mxu0 0.0
        %791 = vmatprep.subr.mxu0 0.0
        %792 = vmatpush1.msra.mxu0 0.0
        %793 = vmatprep.subr.mxu0 0.0
        %794 = vmatpush1.msra.mxu0 0.0
        %795 = vmatprep.subr.mxu0 0.0
        %796 = vmatpush1.msra.mxu0 0.0
        %797 = vmatprep.subr.mxu0 0.0
        %798 = vmatpush1.msra.mxu0 0.0
        %799 = vmatprep.subr.mxu0 0.0
        %800 = vmatpush1.msra.mxu0 0.0
        %801 = vmatprep.subr.mxu0 0.0
        %802 = vmatpush1.msra.mxu0 0.0
        %803 = vmatprep.subr.mxu0 0.0
        %804 = vmatpush1.msra.mxu0 0.0
        %805 = vmatprep.subr.mxu0 0.0
        %806 = vmatpush1.msra.mxu0 0.0
        %807 = vmatprep.subr.mxu0 0.0
        %808 = vmatpush1.msra.mxu0 0.0
        %809 = vmatprep.mubr.f32.mxu0 0.0
        %v810 = vand.u32 %v429, 4294901760
        %v811 = vsub.f32 %v429, %v810
        %812 = vmatmul.mubr.f32.gmra.mrb[0].mxu0 %v811
        %v813 = vpop.f32.mrb[0].mxu0
        %v814 = vadd.f32 %v704, %v813
        %v815 = vpop.f32.mrb[0].mxu0
        %816 = vmatprep.mubr.f32.mxu0 0.0
        %v817 = vand.u32 %v430, 4294901760
        %v818 = vsub.f32 %v430, %v817
        %819 = vmatmul.mubr.f32.gmra.mrb[0].mxu0 %v818
        %v820 = vpop.f32.mrb[0].mxu0
        %v821 = vadd.f32 %v710, %v820
        %v822 = vpop.f32.mrb[0].mxu0
        %823 = vdwg.mxu0
        %824 = vmatprep.subr.mxu0 0.0
        %v825 = vand.u32 %v432, 4294901760
        %826 = vmatpush1.msra.mxu0 %v825
        %827 = vmatprep.subr.mxu0 0.0
        %v828 = vand.u32 %v433, 4294901760
        %829 = vmatpush1.msra.mxu0 %v828
        %830 = vmatprep.subr.mxu0 0.0
        %v831 = vand.u32 %v434, 4294901760
        %832 = vmatpush1.msra.mxu0 %v831
        %833 = vmatprep.subr.mxu0 0.0
        %v834 = vand.u32 %v435, 4294901760
        %835 = vmatpush1.msra.mxu0 %v834
        %836 = vmatprep.subr.mxu0 0.0
        %v837 = vand.u32 %v436, 4294901760
        %838 = vmatpush1.msra.mxu0 %v837
        %839 = vmatprep.subr.mxu0 0.0
        %v840 = vand.u32 %v437, 4294901760
        %841 = vmatpush1.msra.mxu0 %v840
        %842 = vmatprep.subr.mxu0 0.0
        %v843 = vand.u32 %v438, 4294901760
        %844 = vmatpush1.msra.mxu0 %v843
        %845 = vmatprep.subr.mxu0 0.0
        %v846 = vand.u32 %v439, 4294901760
        %847 = vmatpush1.msra.mxu0 %v846
        %848 = vmatprep.subr.mxu0 0.0
        %v849 = vand.u32 %v440, 4294901760
        %850 = vmatpush1.msra.mxu0 %v849
        %851 = vmatprep.subr.mxu0 0.0
        %v852 = vand.u32 %v441, 4294901760
        %853 = vmatpush1.msra.mxu0 %v852
        %854 = vmatprep.subr.mxu0 0.0
        %v855 = vand.u32 %v442, 4294901760
        %856 = vmatpush1.msra.mxu0 %v855
        %857 = vmatprep.subr.mxu0 0.0
        %v858 = vand.u32 %v443, 4294901760
        %859 = vmatpush1.msra.mxu0 %v858
        %860 = vmatprep.subr.mxu0 0.0
        %v861 = vand.u32 %v444, 4294901760
        %862 = vmatpush1.msra.mxu0 %v861
        %863 = vmatprep.subr.mxu0 0.0
        %v864 = vand.u32 %v445, 4294901760
        %865 = vmatpush1.msra.mxu0 %v864
        %866 = vmatprep.subr.mxu0 0.0
        %v867 = vand.u32 %v446, 4294901760
        %868 = vmatpush1.msra.mxu0 %v867
        %869 = vmatprep.subr.mxu0 0.0
        %v870 = vand.u32 %v447, 4294901760
        %871 = vmatpush1.msra.mxu0 %v870
        %872 = vmatprep.subr.mxu0 0.0
        %873 = vmatpush1.msra.mxu0 0.0
        %874 = vmatprep.subr.mxu0 0.0
        %875 = vmatpush1.msra.mxu0 0.0
        %876 = vmatprep.subr.mxu0 0.0
        %877 = vmatpush1.msra.mxu0 0.0
        %878 = vmatprep.subr.mxu0 0.0
        %879 = vmatpush1.msra.mxu0 0.0
        %880 = vmatprep.subr.mxu0 0.0
        %881 = vmatpush1.msra.mxu0 0.0
        %882 = vmatprep.subr.mxu0 0.0
        %883 = vmatpush1.msra.mxu0 0.0
        %884 = vmatprep.subr.mxu0 0.0
        %885 = vmatpush1.msra.mxu0 0.0
        %886 = vmatprep.subr.mxu0 0.0
        %887 = vmatpush1.msra.mxu0 0.0
        %888 = vmatprep.subr.mxu0 0.0
        %889 = vmatpush1.msra.mxu0 0.0
        %890 = vmatprep.subr.mxu0 0.0
        %891 = vmatpush1.msra.mxu0 0.0
        %892 = vmatprep.subr.mxu0 0.0
        %893 = vmatpush1.msra.mxu0 0.0
        %894 = vmatprep.subr.mxu0 0.0
        %895 = vmatpush1.msra.mxu0 0.0
        %896 = vmatprep.subr.mxu0 0.0
        %897 = vmatpush1.msra.mxu0 0.0
        %898 = vmatprep.subr.mxu0 0.0
        %899 = vmatpush1.msra.mxu0 0.0
        %900 = vmatprep.subr.mxu0 0.0
        %901 = vmatpush1.msra.mxu0 0.0
        %902 = vmatprep.subr.mxu0 0.0
        %903 = vmatpush1.msra.mxu0 0.0
        %904 = vmatprep.mubr.f32.mxu0 0.0
        %v905 = vand.u32 %v429, 4294901760
        %v906 = vsub.f32 %v429, %v905
        %v907 = vand.u32 %v906, 4294901760
        %908 = vmatmul.mubr.f32.gmra.mrb[0].mxu0 %v907
        %v909 = vpop.f32.mrb[0].mxu0
        %v910 = vadd.f32 %v814, %v909
        %v911 = vpop.f32.mrb[0].mxu0
        %912 = vmatprep.mubr.f32.mxu0 0.0
        %v913 = vand.u32 %v430, 4294901760
        %v914 = vsub.f32 %v430, %v913
        %v915 = vand.u32 %v914, 4294901760
        %916 = vmatmul.mubr.f32.gmra.mrb[0].mxu0 %v915
        %v917 = vpop.f32.mrb[0].mxu0
        %v918 = vadd.f32 %v821, %v917
        %v919 = vpop.f32.mrb[0].mxu0
        %920 = vdwg.mxu0
        %921 = vmatprep.subr.mxu0 0.0
        %v922 = vand.u32 %v432, 4294901760
        %v923 = vsub.f32 %v432, %v922
        %v924 = vand.u32 %v923, 4294901760
        %925 = vmatpush1.msra.mxu0 %v924
        %926 = vmatprep.subr.mxu0 0.0
        %v927 = vand.u32 %v433, 4294901760
        %v928 = vsub.f32 %v433, %v927
        %v929 = vand.u32 %v928, 4294901760
        %930 = vmatpush1.msra.mxu0 %v929
        %931 = vmatprep.subr.mxu0 0.0
        %v932 = vand.u32 %v434, 4294901760
        %v933 = vsub.f32 %v434, %v932
        %v934 = vand.u32 %v933, 4294901760
        %935 = vmatpush1.msra.mxu0 %v934
        %936 = vmatprep.subr.mxu0 0.0
        %v937 = vand.u32 %v435, 4294901760
        %v938 = vsub.f32 %v435, %v937
        %v939 = vand.u32 %v938, 4294901760
        %940 = vmatpush1.msra.mxu0 %v939
        %941 = vmatprep.subr.mxu0 0.0
        %v942 = vand.u32 %v436, 4294901760
        %v943 = vsub.f32 %v436, %v942
        %v944 = vand.u32 %v943, 4294901760
        %945 = vmatpush1.msra.mxu0 %v944
        %946 = vmatprep.subr.mxu0 0.0
        %v947 = vand.u32 %v437, 4294901760
        %v948 = vsub.f32 %v437, %v947
        %v949 = vand.u32 %v948, 4294901760
        %950 = vmatpush1.msra.mxu0 %v949
        %951 = vmatprep.subr.mxu0 0.0
        %v952 = vand.u32 %v438, 4294901760
        %v953 = vsub.f32 %v438, %v952
        %v954 = vand.u32 %v953, 4294901760
        %955 = vmatpush1.msra.mxu0 %v954
        %956 = vmatprep.subr.mxu0 0.0
        %v957 = vand.u32 %v439, 4294901760
        %v958 = vsub.f32 %v439, %v957
        %v959 = vand.u32 %v958, 4294901760
        %960 = vmatpush1.msra.mxu0 %v959
        %961 = vmatprep.subr.mxu0 0.0
        %v962 = vand.u32 %v440, 4294901760
        %v963 = vsub.f32 %v440, %v962
        %v964 = vand.u32 %v963, 4294901760
        %965 = vmatpush1.msra.mxu0 %v964
        %966 = vmatprep.subr.mxu0 0.0
        %v967 = vand.u32 %v441, 4294901760
        %v968 = vsub.f32 %v441, %v967
        %v969 = vand.u32 %v968, 4294901760
        %970 = vmatpush1.msra.mxu0 %v969
        %971 = vmatprep.subr.mxu0 0.0
        %v972 = vand.u32 %v442, 4294901760
        %v973 = vsub.f32 %v442, %v972
        %v974 = vand.u32 %v973, 4294901760
        %975 = vmatpush1.msra.mxu0 %v974
        %976 = vmatprep.subr.mxu0 0.0
        %v977 = vand.u32 %v443, 4294901760
        %v978 = vsub.f32 %v443, %v977
        %v979 = vand.u32 %v978, 4294901760
        %980 = vmatpush1.msra.mxu0 %v979
        %981 = vmatprep.subr.mxu0 0.0
        %v982 = vand.u32 %v444, 4294901760
        %v983 = vsub.f32 %v444, %v982
        %v984 = vand.u32 %v983, 4294901760
        %985 = vmatpush1.msra.mxu0 %v984
        %986 = vmatprep.subr.mxu0 0.0
        %v987 = vand.u32 %v445, 4294901760
        %v988 = vsub.f32 %v445, %v987
        %v989 = vand.u32 %v988, 4294901760
        %990 = vmatpush1.msra.mxu0 %v989
        %991 = vmatprep.subr.mxu0 0.0
        %v992 = vand.u32 %v446, 4294901760
        %v993 = vsub.f32 %v446, %v992
        %v994 = vand.u32 %v993, 4294901760
        %995 = vmatpush1.msra.mxu0 %v994
        %996 = vmatprep.subr.mxu0 0.0
        %v997 = vand.u32 %v447, 4294901760
        %v998 = vsub.f32 %v447, %v997
        %v999 = vand.u32 %v998, 4294901760
        %1000 = vmatpush1.msra.mxu0 %v999
        %1001 = vmatprep.subr.mxu0 0.0
        %1002 = vmatpush1.msra.mxu0 0.0
        %1003 = vmatprep.subr.mxu0 0.0
        %1004 = vmatpush1.msra.mxu0 0.0
        %1005 = vmatprep.subr.mxu0 0.0
        %1006 = vmatpush1.msra.mxu0 0.0
        %1007 = vmatprep.subr.mxu0 0.0
        %1008 = vmatpush1.msra.mxu0 0.0
        %1009 = vmatprep.subr.mxu0 0.0
        %1010 = vmatpush1.msra.mxu0 0.0
        %1011 = vmatprep.subr.mxu0 0.0
        %1012 = vmatpush1.msra.mxu0 0.0
        %1013 = vmatprep.subr.mxu0 0.0
        %1014 = vmatpush1.msra.mxu0 0.0
        %1015 = vmatprep.subr.mxu0 0.0
        %1016 = vmatpush1.msra.mxu0 0.0
        %1017 = vmatprep.subr.mxu0 0.0
        %1018 = vmatpush1.msra.mxu0 0.0
        %1019 = vmatprep.subr.mxu0 0.0
        %1020 = vmatpush1.msra.mxu0 0.0
        %1021 = vmatprep.subr.mxu0 0.0
        %1022 = vmatpush1.msra.mxu0 0.0
        %1023 = vmatprep.subr.mxu0 0.0
        %1024 = vmatpush1.msra.mxu0 0.0
        %1025 = vmatprep.subr.mxu0 0.0
        %1026 = vmatpush1.msra.mxu0 0.0
        %1027 = vmatprep.subr.mxu0 0.0
        %1028 = vmatpush1.msra.mxu0 0.0
        %1029 = vmatprep.subr.mxu0 0.0
        %1030 = vmatpush1.msra.mxu0 0.0
        %1031 = vmatprep.subr.mxu0 0.0
        %1032 = vmatpush1.msra.mxu0 0.0
        %1033 = vmatprep.mubr.f32.mxu0 0.0
        %v1034 = vand.u32 %v429, 4294901760
        %1035 = vmatmul.mubr.f32.gmra.mrb[0].mxu0 %v1034
        %v1036 = vpop.f32.mrb[0].mxu0
        %v1037 = vadd.f32 %v910, %v1036
        %v1038 = vpop.f32.mrb[0].mxu0
        %1039 = vmatprep.mubr.f32.mxu0 0.0
        %v1040 = vand.u32 %v430, 4294901760
        %1041 = vmatmul.mubr.f32.gmra.mrb[0].mxu0 %v1040
        %v1042 = vpop.f32.mrb[0].mxu0
        %v1043 = vadd.f32 %v918, %v1042
        %v1044 = vpop.f32.mrb[0].mxu0
        %1045 = vdwg.mxu0
        %1046 = vmatprep.subr.mxu0 0.0
        %v1047 = vand.u32 %v432, 4294901760
        %1048 = vmatpush1.msra.mxu0 %v1047
        %1049 = vmatprep.subr.mxu0 0.0
        %v1050 = vand.u32 %v433, 4294901760
        %1051 = vmatpush1.msra.mxu0 %v1050
        %1052 = vmatprep.subr.mxu0 0.0
        %v1053 = vand.u32 %v434, 4294901760
        %1054 = vmatpush1.msra.mxu0 %v1053
        %1055 = vmatprep.subr.mxu0 0.0
        %v1056 = vand.u32 %v435, 4294901760
        %1057 = vmatpush1.msra.mxu0 %v1056
        %1058 = vmatprep.subr.mxu0 0.0
        %v1059 = vand.u32 %v436, 4294901760
        %1060 = vmatpush1.msra.mxu0 %v1059
        %1061 = vmatprep.subr.mxu0 0.0
        %v1062 = vand.u32 %v437, 4294901760
        %1063 = vmatpush1.msra.mxu0 %v1062
        %1064 = vmatprep.subr.mxu0 0.0
        %v1065 = vand.u32 %v438, 4294901760
        %1066 = vmatpush1.msra.mxu0 %v1065
        %1067 = vmatprep.subr.mxu0 0.0
        %v1068 = vand.u32 %v439, 4294901760
        %1069 = vmatpush1.msra.mxu0 %v1068
        %1070 = vmatprep.subr.mxu0 0.0
        %v1071 = vand.u32 %v440, 4294901760
        %1072 = vmatpush1.msra.mxu0 %v1071
        %1073 = vmatprep.subr.mxu0 0.0
        %v1074 = vand.u32 %v441, 4294901760
        %1075 = vmatpush1.msra.mxu0 %v1074
        %1076 = vmatprep.subr.mxu0 0.0
        %v1077 = vand.u32 %v442, 4294901760
        %1078 = vmatpush1.msra.mxu0 %v1077
        %1079 = vmatprep.subr.mxu0 0.0
        %v1080 = vand.u32 %v443, 4294901760
        %1081 = vmatpush1.msra.mxu0 %v1080
        %1082 = vmatprep.subr.mxu0 0.0
        %v1083 = vand.u32 %v444, 4294901760
        %1084 = vmatpush1.msra.mxu0 %v1083
        %1085 = vmatprep.subr.mxu0 0.0
        %v1086 = vand.u32 %v445, 4294901760
        %1087 = vmatpush1.msra.mxu0 %v1086
        %1088 = vmatprep.subr.mxu0 0.0
        %v1089 = vand.u32 %v446, 4294901760
        %1090 = vmatpush1.msra.mxu0 %v1089
        %1091 = vmatprep.subr.mxu0 0.0
        %v1092 = vand.u32 %v447, 4294901760
        %1093 = vmatpush1.msra.mxu0 %v1092
        %1094 = vmatprep.subr.mxu0 0.0
        %1095 = vmatpush1.msra.mxu0 0.0
        %1096 = vmatprep.subr.mxu0 0.0
        %1097 = vmatpush1.msra.mxu0 0.0
        %1098 = vmatprep.subr.mxu0 0.0
        %1099 = vmatpush1.msra.mxu0 0.0
        %1100 = vmatprep.subr.mxu0 0.0
        %1101 = vmatpush1.msra.mxu0 0.0
        %1102 = vmatprep.subr.mxu0 0.0
        %1103 = vmatpush1.msra.mxu0 0.0
        %1104 = vmatprep.subr.mxu0 0.0
        %1105 = vmatpush1.msra.mxu0 0.0
        %1106 = vmatprep.subr.mxu0 0.0
        %1107 = vmatpush1.msra.mxu0 0.0
        %1108 = vmatprep.subr.mxu0 0.0
        %1109 = vmatpush1.msra.mxu0 0.0
        %1110 = vmatprep.subr.mxu0 0.0
        %1111 = vmatpush1.msra.mxu0 0.0
        %1112 = vmatprep.subr.mxu0 0.0
        %1113 = vmatpush1.msra.mxu0 0.0
        %1114 = vmatprep.subr.mxu0 0.0
        %1115 = vmatpush1.msra.mxu0 0.0
        %1116 = vmatprep.subr.mxu0 0.0
        %1117 = vmatpush1.msra.mxu0 0.0
        %1118 = vmatprep.subr.mxu0 0.0
        %1119 = vmatpush1.msra.mxu0 0.0
        %1120 = vmatprep.subr.mxu0 0.0
        %1121 = vmatpush1.msra.mxu0 0.0
        %1122 = vmatprep.subr.mxu0 0.0
        %1123 = vmatpush1.msra.mxu0 0.0
        %1124 = vmatprep.subr.mxu0 0.0
        %1125 = vmatpush1.msra.mxu0 0.0
        %1126 = vmatprep.mubr.f32.mxu0 0.0
        %v1127 = vand.u32 %v429, 4294901760
        %1128 = vmatmul.mubr.f32.gmra.mrb[0].mxu0 %v1127
        %v1129 = vpop.f32.mrb[0].mxu0
        %v1130 = vadd.f32 %v1037, %v1129
        %v1131 = vpop.f32.mrb[0].mxu0
        %1132 = vmatprep.mubr.f32.mxu0 0.0
        %v1133 = vand.u32 %v430, 4294901760
        %1134 = vmatmul.mubr.f32.gmra.mrb[0].mxu0 %v1133
        %v1135 = vpop.f32.mrb[0].mxu0
        %v1136 = vadd.f32 %v1043, %v1135
        %v1137 = vpop.f32.mrb[0].mxu0
        %1138 = vdwg.mxu0
        %v1139 = vld [vmem:[%s4] sm:$0xff]
        %v1140 = vld [vmem:[%s4 + $0x8] sm:$0xff]
        %v1141 = vld [vmem:[%s4 + $0x10] sm:$0xff]
        %v1142 = vld [vmem:[%s4 + $0x18] sm:$0xff]
        %v1143 = vld [vmem:[%s4 + $0x20] sm:$0xff]
        %v1144 = vld [vmem:[%s4 + $0x28] sm:$0xff]
        %v1145 = vld [vmem:[%s4 + $0x30] sm:$0xff]
        %v1146 = vld [vmem:[%s4 + $0x38] sm:$0xff]
        %v1147 = vld [vmem:[%s4 + $0x40] sm:$0xff]
        %v1148 = vld [vmem:[%s4 + $0x48] sm:$0xff]
        %v1149 = vld [vmem:[%s4 + $0x50] sm:$0xff]
        %v1150 = vld [vmem:[%s4 + $0x58] sm:$0xff]
        %v1151 = vld [vmem:[%s4 + $0x60] sm:$0xff]
        %v1152 = vld [vmem:[%s4 + $0x68] sm:$0xff]
        %v1153 = vld [vmem:[%s4 + $0x70] sm:$0xff]
        %v1154 = vld [vmem:[%s4 + $0x78] sm:$0xff]
        %v1155 = vld [vmem:[%s4 + $0x80] sm:$0xff]
        %v1156 = vld [vmem:[%s4 + $0x88] sm:$0xff]
        %v1157 = vld [vmem:[%s4 + $0x90] sm:$0xff]
        %v1158 = vld [vmem:[%s4 + $0x98] sm:$0xff]
        %v1159 = vld [vmem:[%s4 + $0xa0] sm:$0xff]
        %v1160 = vld [vmem:[%s4 + $0xa8] sm:$0xff]
        %v1161 = vld [vmem:[%s4 + $0xb0] sm:$0xff]
        %v1162 = vld [vmem:[%s4 + $0xb8] sm:$0xff]
        %v1163 = vld [vmem:[%s4 + $0xc0] sm:$0xff]
        %v1164 = vld [vmem:[%s4 + $0xc8] sm:$0xff]
        %v1165 = vld [vmem:[%s4 + $0xd0] sm:$0xff]
        %v1166 = vld [vmem:[%s4 + $0xd8] sm:$0xff]
        %v1167 = vld [vmem:[%s4 + $0xe0] sm:$0xff]
        %v1168 = vld [vmem:[%s4 + $0xe8] sm:$0xff]
        %v1169 = vld [vmem:[%s4 + $0xf0] sm:$0xff]
        %v1170 = vld [vmem:[%s4 + $0xf8] sm:$0xff]
        %v1171 = vld [vmem:[%s5] sm:$0x3]
        %v1173 = vlaneseq
        %v1174 = vshrl.u32 %v1173, 7
        %v1175 = vsub.s32 0, %v1174
        %v1176 = vrot.slane %v1171, %v1175
        %v1177 = vlaneseq
        %v1178 = vshrl.u32 %v1177, 7
        %v1179 = vsub.s32 1, %v1178
        %v1180 = vrot.slane %v1171, %v1179
        %v1183 = vand.u32 %v1140, 4294901760
        %1184 = vmatprep.subr.mxu0 %v1183
        %v1185 = vand.u32 %v1139, 4294901760
        %1186 = vmatpush1.msra.mxu0 %v1185
        %v1187 = vand.u32 %v1142, 4294901760
        %1188 = vmatprep.subr.mxu0 %v1187
        %v1189 = vand.u32 %v1141, 4294901760
        %1190 = vmatpush1.msra.mxu0 %v1189
        %v1191 = vand.u32 %v1144, 4294901760
        %1192 = vmatprep.subr.mxu0 %v1191
        %v1193 = vand.u32 %v1143, 4294901760
        %1194 = vmatpush1.msra.mxu0 %v1193
        %v1195 = vand.u32 %v1146, 4294901760
        %1196 = vmatprep.subr.mxu0 %v1195
        %v1197 = vand.u32 %v1145, 4294901760
        %1198 = vmatpush1.msra.mxu0 %v1197
        %v1199 = vand.u32 %v1148, 4294901760
        %1200 = vmatprep.subr.mxu0 %v1199
        %v1201 = vand.u32 %v1147, 4294901760
        %1202 = vmatpush1.msra.mxu0 %v1201
        %v1203 = vand.u32 %v1150, 4294901760
        %1204 = vmatprep.subr.mxu0 %v1203
        %v1205 = vand.u32 %v1149, 4294901760
        %1206 = vmatpush1.msra.mxu0 %v1205
        %v1207 = vand.u32 %v1152, 4294901760
        %1208 = vmatprep.subr.mxu0 %v1207
        %v1209 = vand.u32 %v1151, 4294901760
        %1210 = vmatpush1.msra.mxu0 %v1209
        %v1211 = vand.u32 %v1154, 4294901760
        %1212 = vmatprep.subr.mxu0 %v1211
        %v1213 = vand.u32 %v1153, 4294901760
        %1214 = vmatpush1.msra.mxu0 %v1213
        %v1215 = vand.u32 %v1156, 4294901760
        %1216 = vmatprep.subr.mxu0 %v1215
        %v1217 = vand.u32 %v1155, 4294901760
        %1218 = vmatpush1.msra.mxu0 %v1217
        %v1219 = vand.u32 %v1158, 4294901760
        %1220 = vmatprep.subr.mxu0 %v1219
        %v1221 = vand.u32 %v1157, 4294901760
        %1222 = vmatpush1.msra.mxu0 %v1221
        %v1223 = vand.u32 %v1160, 4294901760
        %1224 = vmatprep.subr.mxu0 %v1223
        %v1225 = vand.u32 %v1159, 4294901760
        %1226 = vmatpush1.msra.mxu0 %v1225
        %v1227 = vand.u32 %v1162, 4294901760
        %1228 = vmatprep.subr.mxu0 %v1227
        %v1229 = vand.u32 %v1161, 4294901760
        %1230 = vmatpush1.msra.mxu0 %v1229
        %v1231 = vand.u32 %v1164, 4294901760
        %1232 = vmatprep.subr.mxu0 %v1231
        %v1233 = vand.u32 %v1163, 4294901760
        %1234 = vmatpush1.msra.mxu0 %v1233
        %v1235 = vand.u32 %v1166, 4294901760
        %1236 = vmatprep.subr.mxu0 %v1235
        %v1237 = vand.u32 %v1165, 4294901760
        %1238 = vmatpush1.msra.mxu0 %v1237
        %v1239 = vand.u32 %v1168, 4294901760
        %1240 = vmatprep.subr.mxu0 %v1239
        %v1241 = vand.u32 %v1167, 4294901760
        %1242 = vmatpush1.msra.mxu0 %v1241
        %v1243 = vand.u32 %v1170, 4294901760
        %1244 = vmatprep.subr.mxu0 %v1243
        %v1245 = vand.u32 %v1169, 4294901760
        %1246 = vmatpush1.msra.mxu0 %v1245
        %1247 = vmatprep.subr.mxu0 0.0
        %1248 = vmatpush1.msra.mxu0 0.0
        %1249 = vmatprep.subr.mxu0 0.0
        %1250 = vmatpush1.msra.mxu0 0.0
        %1251 = vmatprep.subr.mxu0 0.0
        %1252 = vmatpush1.msra.mxu0 0.0
        %1253 = vmatprep.subr.mxu0 0.0
        %1254 = vmatpush1.msra.mxu0 0.0
        %1255 = vmatprep.subr.mxu0 0.0
        %1256 = vmatpush1.msra.mxu0 0.0
        %1257 = vmatprep.subr.mxu0 0.0
        %1258 = vmatpush1.msra.mxu0 0.0
        %1259 = vmatprep.subr.mxu0 0.0
        %1260 = vmatpush1.msra.mxu0 0.0
        %1261 = vmatprep.subr.mxu0 0.0
        %1262 = vmatpush1.msra.mxu0 0.0
        %1263 = vmatprep.subr.mxu0 0.0
        %1264 = vmatpush1.msra.mxu0 0.0
        %1265 = vmatprep.subr.mxu0 0.0
        %1266 = vmatpush1.msra.mxu0 0.0
        %1267 = vmatprep.subr.mxu0 0.0
        %1268 = vmatpush1.msra.mxu0 0.0
        %1269 = vmatprep.subr.mxu0 0.0
        %1270 = vmatpush1.msra.mxu0 0.0
        %1271 = vmatprep.subr.mxu0 0.0
        %1272 = vmatpush1.msra.mxu0 0.0
        %1273 = vmatprep.subr.mxu0 0.0
        %1274 = vmatpush1.msra.mxu0 0.0
        %1275 = vmatprep.subr.mxu0 0.0
        %1276 = vmatpush1.msra.mxu0 0.0
        %1277 = vmatprep.subr.mxu0 0.0
        %1278 = vmatpush1.msra.mxu0 0.0
        %1279 = vmatprep.mubr.f32.mxu0 0.0
        %v1280 = vand.u32 %v431, 4294901760
        %v1281 = vsub.f32 %v431, %v1280
        %v1282 = vand.u32 %v1281, 4294901760
        %v1283 = vsub.f32 %v1281, %v1282
        %v1284 = vand.u32 %v1283, 4294901760
        %1285 = vmatmul.mubr.f32.gmra.mrb[0].mxu0 %v1284
        %v1286 = vpop.f32.mrb[0].mxu0
        %v1287 = vadd.f32 %v1176, %v1286
        %v1288 = vpop.f32.mrb[0].mxu0
        %v1289 = vadd.f32 %v1180, %v1288
        %1290 = vdwg.mxu0
        %v1291 = vand.u32 %v1140, 4294901760
        %v1292 = vsub.f32 %v1140, %v1291
        %v1293 = vand.u32 %v1292, 4294901760
        %v1294 = vsub.f32 %v1292, %v1293
        %v1295 = vand.u32 %v1294, 4294901760
        %1296 = vmatprep.subr.mxu0 %v1295
        %v1297 = vand.u32 %v1139, 4294901760
        %v1298 = vsub.f32 %v1139, %v1297
        %v1299 = vand.u32 %v1298, 4294901760
        %v1300 = vsub.f32 %v1298, %v1299
        %v1301 = vand.u32 %v1300, 4294901760
        %1302 = vmatpush1.msra.mxu0 %v1301
        %v1303 = vand.u32 %v1142, 4294901760
        %v1304 = vsub.f32 %v1142, %v1303
        %v1305 = vand.u32 %v1304, 4294901760
        %v1306 = vsub.f32 %v1304, %v1305
        %v1307 = vand.u32 %v1306, 4294901760
        %1308 = vmatprep.subr.mxu0 %v1307
        %v1309 = vand.u32 %v1141, 4294901760
        %v1310 = vsub.f32 %v1141, %v1309
        %v1311 = vand.u32 %v1310, 4294901760
        %v1312 = vsub.f32 %v1310, %v1311
        %v1313 = vand.u32 %v1312, 4294901760
        %1314 = vmatpush1.msra.mxu0 %v1313
        %v1315 = vand.u32 %v1144, 4294901760
        %v1316 = vsub.f32 %v1144, %v1315
        %v1317 = vand.u32 %v1316, 4294901760
        %v1318 = vsub.f32 %v1316, %v1317
        %v1319 = vand.u32 %v1318, 4294901760
        %1320 = vmatprep.subr.mxu0 %v1319
        %v1321 = vand.u32 %v1143, 4294901760
        %v1322 = vsub.f32 %v1143, %v1321
        %v1323 = vand.u32 %v1322, 4294901760
        %v1324 = vsub.f32 %v1322, %v1323
        %v1325 = vand.u32 %v1324, 4294901760
        %1326 = vmatpush1.msra.mxu0 %v1325
        %v1327 = vand.u32 %v1146, 4294901760
        %v1328 = vsub.f32 %v1146, %v1327
        %v1329 = vand.u32 %v1328, 4294901760
        %v1330 = vsub.f32 %v1328, %v1329
        %v1331 = vand.u32 %v1330, 4294901760
        %1332 = vmatprep.subr.mxu0 %v1331
        %v1333 = vand.u32 %v1145, 4294901760
        %v1334 = vsub.f32 %v1145, %v1333
        %v1335 = vand.u32 %v1334, 4294901760
        %v1336 = vsub.f32 %v1334, %v1335
        %v1337 = vand.u32 %v1336, 4294901760
        %1338 = vmatpush1.msra.mxu0 %v1337
        %v1339 = vand.u32 %v1148, 4294901760
        %v1340 = vsub.f32 %v1148, %v1339
        %v1341 = vand.u32 %v1340, 4294901760
        %v1342 = vsub.f32 %v1340, %v1341
        %v1343 = vand.u32 %v1342, 4294901760
        %1344 = vmatprep.subr.mxu0 %v1343
        %v1345 = vand.u32 %v1147, 4294901760
        %v1346 = vsub.f32 %v1147, %v1345
        %v1347 = vand.u32 %v1346, 4294901760
        %v1348 = vsub.f32 %v1346, %v1347
        %v1349 = vand.u32 %v1348, 4294901760
        %1350 = vmatpush1.msra.mxu0 %v1349
        %v1351 = vand.u32 %v1150, 4294901760
        %v1352 = vsub.f32 %v1150, %v1351
        %v1353 = vand.u32 %v1352, 4294901760
        %v1354 = vsub.f32 %v1352, %v1353
        %v1355 = vand.u32 %v1354, 4294901760
        %1356 = vmatprep.subr.mxu0 %v1355
        %v1357 = vand.u32 %v1149, 4294901760
        %v1358 = vsub.f32 %v1149, %v1357
        %v1359 = vand.u32 %v1358, 4294901760
        %v1360 = vsub.f32 %v1358, %v1359
        %v1361 = vand.u32 %v1360, 4294901760
        %1362 = vmatpush1.msra.mxu0 %v1361
        %v1363 = vand.u32 %v1152, 4294901760
        %v1364 = vsub.f32 %v1152, %v1363
        %v1365 = vand.u32 %v1364, 4294901760
        %v1366 = vsub.f32 %v1364, %v1365
        %v1367 = vand.u32 %v1366, 4294901760
        %1368 = vmatprep.subr.mxu0 %v1367
        %v1369 = vand.u32 %v1151, 4294901760
        %v1370 = vsub.f32 %v1151, %v1369
        %v1371 = vand.u32 %v1370, 4294901760
        %v1372 = vsub.f32 %v1370, %v1371
        %v1373 = vand.u32 %v1372, 4294901760
        %1374 = vmatpush1.msra.mxu0 %v1373
        %v1375 = vand.u32 %v1154, 4294901760
        %v1376 = vsub.f32 %v1154, %v1375
        %v1377 = vand.u32 %v1376, 4294901760
        %v1378 = vsub.f32 %v1376, %v1377
        %v1379 = vand.u32 %v1378, 4294901760
        %1380 = vmatprep.subr.mxu0 %v1379
        %v1381 = vand.u32 %v1153, 4294901760
        %v1382 = vsub.f32 %v1153, %v1381
        %v1383 = vand.u32 %v1382, 4294901760
        %v1384 = vsub.f32 %v1382, %v1383
        %v1385 = vand.u32 %v1384, 4294901760
        %1386 = vmatpush1.msra.mxu0 %v1385
        %v1387 = vand.u32 %v1156, 4294901760
        %v1388 = vsub.f32 %v1156, %v1387
        %v1389 = vand.u32 %v1388, 4294901760
        %v1390 = vsub.f32 %v1388, %v1389
        %v1391 = vand.u32 %v1390, 4294901760
        %1392 = vmatprep.subr.mxu0 %v1391
        %v1393 = vand.u32 %v1155, 4294901760
        %v1394 = vsub.f32 %v1155, %v1393
        %v1395 = vand.u32 %v1394, 4294901760
        %v1396 = vsub.f32 %v1394, %v1395
        %v1397 = vand.u32 %v1396, 4294901760
        %1398 = vmatpush1.msra.mxu0 %v1397
        %v1399 = vand.u32 %v1158, 4294901760
        %v1400 = vsub.f32 %v1158, %v1399
        %v1401 = vand.u32 %v1400, 4294901760
        %v1402 = vsub.f32 %v1400, %v1401
        %v1403 = vand.u32 %v1402, 4294901760
        %1404 = vmatprep.subr.mxu0 %v1403
        %v1405 = vand.u32 %v1157, 4294901760
        %v1406 = vsub.f32 %v1157, %v1405
        %v1407 = vand.u32 %v1406, 4294901760
        %v1408 = vsub.f32 %v1406, %v1407
        %v1409 = vand.u32 %v1408, 4294901760
        %1410 = vmatpush1.msra.mxu0 %v1409
        %v1411 = vand.u32 %v1160, 4294901760
        %v1412 = vsub.f32 %v1160, %v1411
        %v1413 = vand.u32 %v1412, 4294901760
        %v1414 = vsub.f32 %v1412, %v1413
        %v1415 = vand.u32 %v1414, 4294901760
        %1416 = vmatprep.subr.mxu0 %v1415
        %v1417 = vand.u32 %v1159, 4294901760
        %v1418 = vsub.f32 %v1159, %v1417
        %v1419 = vand.u32 %v1418, 4294901760
        %v1420 = vsub.f32 %v1418, %v1419
        %v1421 = vand.u32 %v1420, 4294901760
        %1422 = vmatpush1.msra.mxu0 %v1421
        %v1423 = vand.u32 %v1162, 4294901760
        %v1424 = vsub.f32 %v1162, %v1423
        %v1425 = vand.u32 %v1424, 4294901760
        %v1426 = vsub.f32 %v1424, %v1425
        %v1427 = vand.u32 %v1426, 4294901760
        %1428 = vmatprep.subr.mxu0 %v1427
        %v1429 = vand.u32 %v1161, 4294901760
        %v1430 = vsub.f32 %v1161, %v1429
        %v1431 = vand.u32 %v1430, 4294901760
        %v1432 = vsub.f32 %v1430, %v1431
        %v1433 = vand.u32 %v1432, 4294901760
        %1434 = vmatpush1.msra.mxu0 %v1433
        %v1435 = vand.u32 %v1164, 4294901760
        %v1436 = vsub.f32 %v1164, %v1435
        %v1437 = vand.u32 %v1436, 4294901760
        %v1438 = vsub.f32 %v1436, %v1437
        %v1439 = vand.u32 %v1438, 4294901760
        %1440 = vmatprep.subr.mxu0 %v1439
        %v1441 = vand.u32 %v1163, 4294901760
        %v1442 = vsub.f32 %v1163, %v1441
        %v1443 = vand.u32 %v1442, 4294901760
        %v1444 = vsub.f32 %v1442, %v1443
        %v1445 = vand.u32 %v1444, 4294901760
        %1446 = vmatpush1.msra.mxu0 %v1445
        %v1447 = vand.u32 %v1166, 4294901760
        %v1448 = vsub.f32 %v1166, %v1447
        %v1449 = vand.u32 %v1448, 4294901760
        %v1450 = vsub.f32 %v1448, %v1449
        %v1451 = vand.u32 %v1450, 4294901760
        %1452 = vmatprep.subr.mxu0 %v1451
        %v1453 = vand.u32 %v1165, 4294901760
        %v1454 = vsub.f32 %v1165, %v1453
        %v1455 = vand.u32 %v1454, 4294901760
        %v1456 = vsub.f32 %v1454, %v1455
        %v1457 = vand.u32 %v1456, 4294901760
        %1458 = vmatpush1.msra.mxu0 %v1457
        %v1459 = vand.u32 %v1168, 4294901760
        %v1460 = vsub.f32 %v1168, %v1459
        %v1461 = vand.u32 %v1460, 4294901760
        %v1462 = vsub.f32 %v1460, %v1461
        %v1463 = vand.u32 %v1462, 4294901760
        %1464 = vmatprep.subr.mxu0 %v1463
        %v1465 = vand.u32 %v1167, 4294901760
        %v1466 = vsub.f32 %v1167, %v1465
        %v1467 = vand.u32 %v1466, 4294901760
        %v1468 = vsub.f32 %v1466, %v1467
        %v1469 = vand.u32 %v1468, 4294901760
        %1470 = vmatpush1.msra.mxu0 %v1469
        %v1471 = vand.u32 %v1170, 4294901760
        %v1472 = vsub.f32 %v1170, %v1471
        %v1473 = vand.u32 %v1472, 4294901760
        %v1474 = vsub.f32 %v1472, %v1473
        %v1475 = vand.u32 %v1474, 4294901760
        %1476 = vmatprep.subr.mxu0 %v1475
        %v1477 = vand.u32 %v1169, 4294901760
        %v1478 = vsub.f32 %v1169, %v1477
        %v1479 = vand.u32 %v1478, 4294901760
        %v1480 = vsub.f32 %v1478, %v1479
        %v1481 = vand.u32 %v1480, 4294901760
        %1482 = vmatpush1.msra.mxu0 %v1481
        %1483 = vmatprep.subr.mxu0 0.0
        %1484 = vmatpush1.msra.mxu0 0.0
        %1485 = vmatprep.subr.mxu0 0.0
        %1486 = vmatpush1.msra.mxu0 0.0
        %1487 = vmatprep.subr.mxu0 0.0
        %1488 = vmatpush1.msra.mxu0 0.0
        %1489 = vmatprep.subr.mxu0 0.0
        %1490 = vmatpush1.msra.mxu0 0.0
        %1491 = vmatprep.subr.mxu0 0.0
        %1492 = vmatpush1.msra.mxu0 0.0
        %1493 = vmatprep.subr.mxu0 0.0
        %1494 = vmatpush1.msra.mxu0 0.0
        %1495 = vmatprep.subr.mxu0 0.0
        %1496 = vmatpush1.msra.mxu0 0.0
        %1497 = vmatprep.subr.mxu0 0.0
        %1498 = vmatpush1.msra.mxu0 0.0
        %1499 = vmatprep.subr.mxu0 0.0
        %1500 = vmatpush1.msra.mxu0 0.0
        %1501 = vmatprep.subr.mxu0 0.0
        %1502 = vmatpush1.msra.mxu0 0.0
        %1503 = vmatprep.subr.mxu0 0.0
        %1504 = vmatpush1.msra.mxu0 0.0
        %1505 = vmatprep.subr.mxu0 0.0
        %1506 = vmatpush1.msra.mxu0 0.0
        %1507 = vmatprep.subr.mxu0 0.0
        %1508 = vmatpush1.msra.mxu0 0.0
        %1509 = vmatprep.subr.mxu0 0.0
        %1510 = vmatpush1.msra.mxu0 0.0
        %1511 = vmatprep.subr.mxu0 0.0
        %1512 = vmatpush1.msra.mxu0 0.0
        %1513 = vmatprep.subr.mxu0 0.0
        %1514 = vmatpush1.msra.mxu0 0.0
        %1515 = vmatprep.mubr.f32.mxu0 0.0
        %v1516 = vand.u32 %v431, 4294901760
        %1517 = vmatmul.mubr.f32.gmra.mrb[0].mxu0 %v1516
        %v1518 = vpop.f32.mrb[0].mxu0
        %v1519 = vadd.f32 %v1287, %v1518
        %v1520 = vpop.f32.mrb[0].mxu0
        %v1521 = vadd.f32 %v1289, %v1520
        %1522 = vdwg.mxu0
        %v1523 = vand.u32 %v1140, 4294901760
        %v1524 = vsub.f32 %v1140, %v1523
        %1525 = vmatprep.subr.mxu0 %v1524
        %v1526 = vand.u32 %v1139, 4294901760
        %v1527 = vsub.f32 %v1139, %v1526
        %1528 = vmatpush1.msra.mxu0 %v1527
        %v1529 = vand.u32 %v1142, 4294901760
        %v1530 = vsub.f32 %v1142, %v1529
        %1531 = vmatprep.subr.mxu0 %v1530
        %v1532 = vand.u32 %v1141, 4294901760
        %v1533 = vsub.f32 %v1141, %v1532
        %1534 = vmatpush1.msra.mxu0 %v1533
        %v1535 = vand.u32 %v1144, 4294901760
        %v1536 = vsub.f32 %v1144, %v1535
        %1537 = vmatprep.subr.mxu0 %v1536
        %v1538 = vand.u32 %v1143, 4294901760
        %v1539 = vsub.f32 %v1143, %v1538
        %1540 = vmatpush1.msra.mxu0 %v1539
        %v1541 = vand.u32 %v1146, 4294901760
        %v1542 = vsub.f32 %v1146, %v1541
        %1543 = vmatprep.subr.mxu0 %v1542
        %v1544 = vand.u32 %v1145, 4294901760
        %v1545 = vsub.f32 %v1145, %v1544
        %1546 = vmatpush1.msra.mxu0 %v1545
        %v1547 = vand.u32 %v1148, 4294901760
        %v1548 = vsub.f32 %v1148, %v1547
        %1549 = vmatprep.subr.mxu0 %v1548
        %v1550 = vand.u32 %v1147, 4294901760
        %v1551 = vsub.f32 %v1147, %v1550
        %1552 = vmatpush1.msra.mxu0 %v1551
        %v1553 = vand.u32 %v1150, 4294901760
        %v1554 = vsub.f32 %v1150, %v1553
        %1555 = vmatprep.subr.mxu0 %v1554
        %v1556 = vand.u32 %v1149, 4294901760
        %v1557 = vsub.f32 %v1149, %v1556
        %1558 = vmatpush1.msra.mxu0 %v1557
        %v1559 = vand.u32 %v1152, 4294901760
        %v1560 = vsub.f32 %v1152, %v1559
        %1561 = vmatprep.subr.mxu0 %v1560
        %v1562 = vand.u32 %v1151, 4294901760
        %v1563 = vsub.f32 %v1151, %v1562
        %1564 = vmatpush1.msra.mxu0 %v1563
        %v1565 = vand.u32 %v1154, 4294901760
        %v1566 = vsub.f32 %v1154, %v1565
        %1567 = vmatprep.subr.mxu0 %v1566
        %v1568 = vand.u32 %v1153, 4294901760
        %v1569 = vsub.f32 %v1153, %v1568
        %1570 = vmatpush1.msra.mxu0 %v1569
        %v1571 = vand.u32 %v1156, 4294901760
        %v1572 = vsub.f32 %v1156, %v1571
        %1573 = vmatprep.subr.mxu0 %v1572
        %v1574 = vand.u32 %v1155, 4294901760
        %v1575 = vsub.f32 %v1155, %v1574
        %1576 = vmatpush1.msra.mxu0 %v1575
        %v1577 = vand.u32 %v1158, 4294901760
        %v1578 = vsub.f32 %v1158, %v1577
        %1579 = vmatprep.subr.mxu0 %v1578
        %v1580 = vand.u32 %v1157, 4294901760
        %v1581 = vsub.f32 %v1157, %v1580
        %1582 = vmatpush1.msra.mxu0 %v1581
        %v1583 = vand.u32 %v1160, 4294901760
        %v1584 = vsub.f32 %v1160, %v1583
        %1585 = vmatprep.subr.mxu0 %v1584
        %v1586 = vand.u32 %v1159, 4294901760
        %v1587 = vsub.f32 %v1159, %v1586
        %1588 = vmatpush1.msra.mxu0 %v1587
        %v1589 = vand.u32 %v1162, 4294901760
        %v1590 = vsub.f32 %v1162, %v1589
        %1591 = vmatprep.subr.mxu0 %v1590
        %v1592 = vand.u32 %v1161, 4294901760
        %v1593 = vsub.f32 %v1161, %v1592
        %1594 = vmatpush1.msra.mxu0 %v1593
        %v1595 = vand.u32 %v1164, 4294901760
        %v1596 = vsub.f32 %v1164, %v1595
        %1597 = vmatprep.subr.mxu0 %v1596
        %v1598 = vand.u32 %v1163, 4294901760
        %v1599 = vsub.f32 %v1163, %v1598
        %1600 = vmatpush1.msra.mxu0 %v1599
        %v1601 = vand.u32 %v1166, 4294901760
        %v1602 = vsub.f32 %v1166, %v1601
        %1603 = vmatprep.subr.mxu0 %v1602
        %v1604 = vand.u32 %v1165, 4294901760
        %v1605 = vsub.f32 %v1165, %v1604
        %1606 = vmatpush1.msra.mxu0 %v1605
        %v1607 = vand.u32 %v1168, 4294901760
        %v1608 = vsub.f32 %v1168, %v1607
        %1609 = vmatprep.subr.mxu0 %v1608
        %v1610 = vand.u32 %v1167, 4294901760
        %v1611 = vsub.f32 %v1167, %v1610
        %1612 = vmatpush1.msra.mxu0 %v1611
        %v1613 = vand.u32 %v1170, 4294901760
        %v1614 = vsub.f32 %v1170, %v1613
        %1615 = vmatprep.subr.mxu0 %v1614
        %v1616 = vand.u32 %v1169, 4294901760
        %v1617 = vsub.f32 %v1169, %v1616
        %1618 = vmatpush1.msra.mxu0 %v1617
        %1619 = vmatprep.subr.mxu0 0.0
        %1620 = vmatpush1.msra.mxu0 0.0
        %1621 = vmatprep.subr.mxu0 0.0
        %1622 = vmatpush1.msra.mxu0 0.0
        %1623 = vmatprep.subr.mxu0 0.0
        %1624 = vmatpush1.msra.mxu0 0.0
        %1625 = vmatprep.subr.mxu0 0.0
        %1626 = vmatpush1.msra.mxu0 0.0
        %1627 = vmatprep.subr.mxu0 0.0
        %1628 = vmatpush1.msra.mxu0 0.0
        %1629 = vmatprep.subr.mxu0 0.0
        %1630 = vmatpush1.msra.mxu0 0.0
        %1631 = vmatprep.subr.mxu0 0.0
        %1632 = vmatpush1.msra.mxu0 0.0
        %1633 = vmatprep.subr.mxu0 0.0
        %1634 = vmatpush1.msra.mxu0 0.0
        %1635 = vmatprep.subr.mxu0 0.0
        %1636 = vmatpush1.msra.mxu0 0.0
        %1637 = vmatprep.subr.mxu0 0.0
        %1638 = vmatpush1.msra.mxu0 0.0
        %1639 = vmatprep.subr.mxu0 0.0
        %1640 = vmatpush1.msra.mxu0 0.0
        %1641 = vmatprep.subr.mxu0 0.0
        %1642 = vmatpush1.msra.mxu0 0.0
        %1643 = vmatprep.subr.mxu0 0.0
        %1644 = vmatpush1.msra.mxu0 0.0
        %1645 = vmatprep.subr.mxu0 0.0
        %1646 = vmatpush1.msra.mxu0 0.0
        %1647 = vmatprep.subr.mxu0 0.0
        %1648 = vmatpush1.msra.mxu0 0.0
        %1649 = vmatprep.subr.mxu0 0.0
        %1650 = vmatpush1.msra.mxu0 0.0
        %1651 = vmatprep.mubr.f32.mxu0 0.0
        %v1652 = vand.u32 %v431, 4294901760
        %v1653 = vsub.f32 %v431, %v1652
        %1654 = vmatmul.mubr.f32.gmra.mrb[0].mxu0 %v1653
        %v1655 = vpop.f32.mrb[0].mxu0
        %v1656 = vadd.f32 %v1519, %v1655
        %v1657 = vpop.f32.mrb[0].mxu0
        %v1658 = vadd.f32 %v1521, %v1657
        %1659 = vdwg.mxu0
        %v1660 = vand.u32 %v1140, 4294901760
        %1661 = vmatprep.subr.mxu0 %v1660
        %v1662 = vand.u32 %v1139, 4294901760
        %1663 = vmatpush1.msra.mxu0 %v1662
        %v1664 = vand.u32 %v1142, 4294901760
        %1665 = vmatprep.subr.mxu0 %v1664
        %v1666 = vand.u32 %v1141, 4294901760
        %1667 = vmatpush1.msra.mxu0 %v1666
        %v1668 = vand.u32 %v1144, 4294901760
        %1669 = vmatprep.subr.mxu0 %v1668
        %v1670 = vand.u32 %v1143, 4294901760
        %1671 = vmatpush1.msra.mxu0 %v1670
        %v1672 = vand.u32 %v1146, 4294901760
        %1673 = vmatprep.subr.mxu0 %v1672
        %v1674 = vand.u32 %v1145, 4294901760
        %1675 = vmatpush1.msra.mxu0 %v1674
        %v1676 = vand.u32 %v1148, 4294901760
        %1677 = vmatprep.subr.mxu0 %v1676
        %v1678 = vand.u32 %v1147, 4294901760
        %1679 = vmatpush1.msra.mxu0 %v1678
        %v1680 = vand.u32 %v1150, 4294901760
        %1681 = vmatprep.subr.mxu0 %v1680
        %v1682 = vand.u32 %v1149, 4294901760
        %1683 = vmatpush1.msra.mxu0 %v1682
        %v1684 = vand.u32 %v1152, 4294901760
        %1685 = vmatprep.subr.mxu0 %v1684
        %v1686 = vand.u32 %v1151, 4294901760
        %1687 = vmatpush1.msra.mxu0 %v1686
        %v1688 = vand.u32 %v1154, 4294901760
        %1689 = vmatprep.subr.mxu0 %v1688
        %v1690 = vand.u32 %v1153, 4294901760
        %1691 = vmatpush1.msra.mxu0 %v1690
        %v1692 = vand.u32 %v1156, 4294901760
        %1693 = vmatprep.subr.mxu0 %v1692
        %v1694 = vand.u32 %v1155, 4294901760
        %1695 = vmatpush1.msra.mxu0 %v1694
        %v1696 = vand.u32 %v1158, 4294901760
        %1697 = vmatprep.subr.mxu0 %v1696
        %v1698 = vand.u32 %v1157, 4294901760
        %1699 = vmatpush1.msra.mxu0 %v1698
        %v1700 = vand.u32 %v1160, 4294901760
        %1701 = vmatprep.subr.mxu0 %v1700
        %v1702 = vand.u32 %v1159, 4294901760
        %1703 = vmatpush1.msra.mxu0 %v1702
        %v1704 = vand.u32 %v1162, 4294901760
        %1705 = vmatprep.subr.mxu0 %v1704
        %v1706 = vand.u32 %v1161, 4294901760
        %1707 = vmatpush1.msra.mxu0 %v1706
        %v1708 = vand.u32 %v1164, 4294901760
        %1709 = vmatprep.subr.mxu0 %v1708
        %v1710 = vand.u32 %v1163, 4294901760
        %1711 = vmatpush1.msra.mxu0 %v1710
        %v1712 = vand.u32 %v1166, 4294901760
        %1713 = vmatprep.subr.mxu0 %v1712
        %v1714 = vand.u32 %v1165, 4294901760
        %1715 = vmatpush1.msra.mxu0 %v1714
        %v1716 = vand.u32 %v1168, 4294901760
        %1717 = vmatprep.subr.mxu0 %v1716
        %v1718 = vand.u32 %v1167, 4294901760
        %1719 = vmatpush1.msra.mxu0 %v1718
        %v1720 = vand.u32 %v1170, 4294901760
        %1721 = vmatprep.subr.mxu0 %v1720
        %v1722 = vand.u32 %v1169, 4294901760
        %1723 = vmatpush1.msra.mxu0 %v1722
        %1724 = vmatprep.subr.mxu0 0.0
        %1725 = vmatpush1.msra.mxu0 0.0
        %1726 = vmatprep.subr.mxu0 0.0
        %1727 = vmatpush1.msra.mxu0 0.0
        %1728 = vmatprep.subr.mxu0 0.0
        %1729 = vmatpush1.msra.mxu0 0.0
        %1730 = vmatprep.subr.mxu0 0.0
        %1731 = vmatpush1.msra.mxu0 0.0
        %1732 = vmatprep.subr.mxu0 0.0
        %1733 = vmatpush1.msra.mxu0 0.0
        %1734 = vmatprep.subr.mxu0 0.0
        %1735 = vmatpush1.msra.mxu0 0.0
        %1736 = vmatprep.subr.mxu0 0.0
        %1737 = vmatpush1.msra.mxu0 0.0
        %1738 = vmatprep.subr.mxu0 0.0
        %1739 = vmatpush1.msra.mxu0 0.0
        %1740 = vmatprep.subr.mxu0 0.0
        %1741 = vmatpush1.msra.mxu0 0.0
        %1742 = vmatprep.subr.mxu0 0.0
        %1743 = vmatpush1.msra.mxu0 0.0
        %1744 = vmatprep.subr.mxu0 0.0
        %1745 = vmatpush1.msra.mxu0 0.0
        %1746 = vmatprep.subr.mxu0 0.0
        %1747 = vmatpush1.msra.mxu0 0.0
        %1748 = vmatprep.subr.mxu0 0.0
        %1749 = vmatpush1.msra.mxu0 0.0
        %1750 = vmatprep.subr.mxu0 0.0
        %1751 = vmatpush1.msra.mxu0 0.0
        %1752 = vmatprep.subr.mxu0 0.0
        %1753 = vmatpush1.msra.mxu0 0.0
        %1754 = vmatprep.subr.mxu0 0.0
        %1755 = vmatpush1.msra.mxu0 0.0
        %1756 = vmatprep.mubr.f32.mxu0 0.0
        %v1757 = vand.u32 %v431, 4294901760
        %v1758 = vsub.f32 %v431, %v1757
        %v1759 = vand.u32 %v1758, 4294901760
        %1760 = vmatmul.mubr.f32.gmra.mrb[0].mxu0 %v1759
        %v1761 = vpop.f32.mrb[0].mxu0
        %v1762 = vadd.f32 %v1656, %v1761
        %v1763 = vpop.f32.mrb[0].mxu0
        %v1764 = vadd.f32 %v1658, %v1763
        %1765 = vdwg.mxu0
        %v1766 = vand.u32 %v1140, 4294901760
        %v1767 = vsub.f32 %v1140, %v1766
        %v1768 = vand.u32 %v1767, 4294901760
        %1769 = vmatprep.subr.mxu0 %v1768
        %v1770 = vand.u32 %v1139, 4294901760
        %v1771 = vsub.f32 %v1139, %v1770
        %v1772 = vand.u32 %v1771, 4294901760
        %1773 = vmatpush1.msra.mxu0 %v1772
        %v1774 = vand.u32 %v1142, 4294901760
        %v1775 = vsub.f32 %v1142, %v1774
        %v1776 = vand.u32 %v1775, 4294901760
        %1777 = vmatprep.subr.mxu0 %v1776
        %v1778 = vand.u32 %v1141, 4294901760
        %v1779 = vsub.f32 %v1141, %v1778
        %v1780 = vand.u32 %v1779, 4294901760
        %1781 = vmatpush1.msra.mxu0 %v1780
        %v1782 = vand.u32 %v1144, 4294901760
        %v1783 = vsub.f32 %v1144, %v1782
        %v1784 = vand.u32 %v1783, 4294901760
        %1785 = vmatprep.subr.mxu0 %v1784
        %v1786 = vand.u32 %v1143, 4294901760
        %v1787 = vsub.f32 %v1143, %v1786
        %v1788 = vand.u32 %v1787, 4294901760
        %1789 = vmatpush1.msra.mxu0 %v1788
        %v1790 = vand.u32 %v1146, 4294901760
        %v1791 = vsub.f32 %v1146, %v1790
        %v1792 = vand.u32 %v1791, 4294901760
        %1793 = vmatprep.subr.mxu0 %v1792
        %v1794 = vand.u32 %v1145, 4294901760
        %v1795 = vsub.f32 %v1145, %v1794
        %v1796 = vand.u32 %v1795, 4294901760
        %1797 = vmatpush1.msra.mxu0 %v1796
        %v1798 = vand.u32 %v1148, 4294901760
        %v1799 = vsub.f32 %v1148, %v1798
        %v1800 = vand.u32 %v1799, 4294901760
        %1801 = vmatprep.subr.mxu0 %v1800
        %v1802 = vand.u32 %v1147, 4294901760
        %v1803 = vsub.f32 %v1147, %v1802
        %v1804 = vand.u32 %v1803, 4294901760
        %1805 = vmatpush1.msra.mxu0 %v1804
        %v1806 = vand.u32 %v1150, 4294901760
        %v1807 = vsub.f32 %v1150, %v1806
        %v1808 = vand.u32 %v1807, 4294901760
        %1809 = vmatprep.subr.mxu0 %v1808
        %v1810 = vand.u32 %v1149, 4294901760
        %v1811 = vsub.f32 %v1149, %v1810
        %v1812 = vand.u32 %v1811, 4294901760
        %1813 = vmatpush1.msra.mxu0 %v1812
        %v1814 = vand.u32 %v1152, 4294901760
        %v1815 = vsub.f32 %v1152, %v1814
        %v1816 = vand.u32 %v1815, 4294901760
        %1817 = vmatprep.subr.mxu0 %v1816
        %v1818 = vand.u32 %v1151, 4294901760
        %v1819 = vsub.f32 %v1151, %v1818
        %v1820 = vand.u32 %v1819, 4294901760
        %1821 = vmatpush1.msra.mxu0 %v1820
        %v1822 = vand.u32 %v1154, 4294901760
        %v1823 = vsub.f32 %v1154, %v1822
        %v1824 = vand.u32 %v1823, 4294901760
        %1825 = vmatprep.subr.mxu0 %v1824
        %v1826 = vand.u32 %v1153, 4294901760
        %v1827 = vsub.f32 %v1153, %v1826
        %v1828 = vand.u32 %v1827, 4294901760
        %1829 = vmatpush1.msra.mxu0 %v1828
        %v1830 = vand.u32 %v1156, 4294901760
        %v1831 = vsub.f32 %v1156, %v1830
        %v1832 = vand.u32 %v1831, 4294901760
        %1833 = vmatprep.subr.mxu0 %v1832
        %v1834 = vand.u32 %v1155, 4294901760
        %v1835 = vsub.f32 %v1155, %v1834
        %v1836 = vand.u32 %v1835, 4294901760
        %1837 = vmatpush1.msra.mxu0 %v1836
        %v1838 = vand.u32 %v1158, 4294901760
        %v1839 = vsub.f32 %v1158, %v1838
        %v1840 = vand.u32 %v1839, 4294901760
        %1841 = vmatprep.subr.mxu0 %v1840
        %v1842 = vand.u32 %v1157, 4294901760
        %v1843 = vsub.f32 %v1157, %v1842
        %v1844 = vand.u32 %v1843, 4294901760
        %1845 = vmatpush1.msra.mxu0 %v1844
        %v1846 = vand.u32 %v1160, 4294901760
        %v1847 = vsub.f32 %v1160, %v1846
        %v1848 = vand.u32 %v1847, 4294901760
        %1849 = vmatprep.subr.mxu0 %v1848
        %v1850 = vand.u32 %v1159, 4294901760
        %v1851 = vsub.f32 %v1159, %v1850
        %v1852 = vand.u32 %v1851, 4294901760
        %1853 = vmatpush1.msra.mxu0 %v1852
        %v1854 = vand.u32 %v1162, 4294901760
        %v1855 = vsub.f32 %v1162, %v1854
        %v1856 = vand.u32 %v1855, 4294901760
        %1857 = vmatprep.subr.mxu0 %v1856
        %v1858 = vand.u32 %v1161, 4294901760
        %v1859 = vsub.f32 %v1161, %v1858
        %v1860 = vand.u32 %v1859, 4294901760
        %1861 = vmatpush1.msra.mxu0 %v1860
        %v1862 = vand.u32 %v1164, 4294901760
        %v1863 = vsub.f32 %v1164, %v1862
        %v1864 = vand.u32 %v1863, 4294901760
        %1865 = vmatprep.subr.mxu0 %v1864
        %v1866 = vand.u32 %v1163, 4294901760
        %v1867 = vsub.f32 %v1163, %v1866
        %v1868 = vand.u32 %v1867, 4294901760
        %1869 = vmatpush1.msra.mxu0 %v1868
        %v1870 = vand.u32 %v1166, 4294901760
        %v1871 = vsub.f32 %v1166, %v1870
        %v1872 = vand.u32 %v1871, 4294901760
        %1873 = vmatprep.subr.mxu0 %v1872
        %v1874 = vand.u32 %v1165, 4294901760
        %v1875 = vsub.f32 %v1165, %v1874
        %v1876 = vand.u32 %v1875, 4294901760
        %1877 = vmatpush1.msra.mxu0 %v1876
        %v1878 = vand.u32 %v1168, 4294901760
        %v1879 = vsub.f32 %v1168, %v1878
        %v1880 = vand.u32 %v1879, 4294901760
        %1881 = vmatprep.subr.mxu0 %v1880
        %v1882 = vand.u32 %v1167, 4294901760
        %v1883 = vsub.f32 %v1167, %v1882
        %v1884 = vand.u32 %v1883, 4294901760
        %1885 = vmatpush1.msra.mxu0 %v1884
        %v1886 = vand.u32 %v1170, 4294901760
        %v1887 = vsub.f32 %v1170, %v1886
        %v1888 = vand.u32 %v1887, 4294901760
        %1889 = vmatprep.subr.mxu0 %v1888
        %v1890 = vand.u32 %v1169, 4294901760
        %v1891 = vsub.f32 %v1169, %v1890
        %v1892 = vand.u32 %v1891, 4294901760
        %1893 = vmatpush1.msra.mxu0 %v1892
        %1894 = vmatprep.subr.mxu0 0.0
        %1895 = vmatpush1.msra.mxu0 0.0
        %1896 = vmatprep.subr.mxu0 0.0
        %1897 = vmatpush1.msra.mxu0 0.0
        %1898 = vmatprep.subr.mxu0 0.0
        %1899 = vmatpush1.msra.mxu0 0.0
        %1900 = vmatprep.subr.mxu0 0.0
        %1901 = vmatpush1.msra.mxu0 0.0
        %1902 = vmatprep.subr.mxu0 0.0
        %1903 = vmatpush1.msra.mxu0 0.0
        %1904 = vmatprep.subr.mxu0 0.0
        %1905 = vmatpush1.msra.mxu0 0.0
        %1906 = vmatprep.subr.mxu0 0.0
        %1907 = vmatpush1.msra.mxu0 0.0
        %1908 = vmatprep.subr.mxu0 0.0
        %1909 = vmatpush1.msra.mxu0 0.0
        %1910 = vmatprep.subr.mxu0 0.0
        %1911 = vmatpush1.msra.mxu0 0.0
        %1912 = vmatprep.subr.mxu0 0.0
        %1913 = vmatpush1.msra.mxu0 0.0
        %1914 = vmatprep.subr.mxu0 0.0
        %1915 = vmatpush1.msra.mxu0 0.0
        %1916 = vmatprep.subr.mxu0 0.0
        %1917 = vmatpush1.msra.mxu0 0.0
        %1918 = vmatprep.subr.mxu0 0.0
        %1919 = vmatpush1.msra.mxu0 0.0
        %1920 = vmatprep.subr.mxu0 0.0
        %1921 = vmatpush1.msra.mxu0 0.0
        %1922 = vmatprep.subr.mxu0 0.0
        %1923 = vmatpush1.msra.mxu0 0.0
        %1924 = vmatprep.subr.mxu0 0.0
        %1925 = vmatpush1.msra.mxu0 0.0
        %1926 = vmatprep.mubr.f32.mxu0 0.0
        %v1927 = vand.u32 %v431, 4294901760
        %1928 = vmatmul.mubr.f32.gmra.mrb[0].mxu0 %v1927
        %v1929 = vpop.f32.mrb[0].mxu0
        %v1930 = vadd.f32 %v1762, %v1929
        %v1931 = vpop.f32.mrb[0].mxu0
        %v1932 = vadd.f32 %v1764, %v1931
        %1933 = vdwg.mxu0
        %v1934 = vand.u32 %v1140, 4294901760
        %1935 = vmatprep.subr.mxu0 %v1934
        %v1936 = vand.u32 %v1139, 4294901760
        %1937 = vmatpush1.msra.mxu0 %v1936
        %v1938 = vand.u32 %v1142, 4294901760
        %1939 = vmatprep.subr.mxu0 %v1938
        %v1940 = vand.u32 %v1141, 4294901760
        %1941 = vmatpush1.msra.mxu0 %v1940
        %v1942 = vand.u32 %v1144, 4294901760
        %1943 = vmatprep.subr.mxu0 %v1942
        %v1944 = vand.u32 %v1143, 4294901760
        %1945 = vmatpush1.msra.mxu0 %v1944
        %v1946 = vand.u32 %v1146, 4294901760
        %1947 = vmatprep.subr.mxu0 %v1946
        %v1948 = vand.u32 %v1145, 4294901760
        %1949 = vmatpush1.msra.mxu0 %v1948
        %v1950 = vand.u32 %v1148, 4294901760
        %1951 = vmatprep.subr.mxu0 %v1950
        %v1952 = vand.u32 %v1147, 4294901760
        %1953 = vmatpush1.msra.mxu0 %v1952
        %v1954 = vand.u32 %v1150, 4294901760
        %1955 = vmatprep.subr.mxu0 %v1954
        %v1956 = vand.u32 %v1149, 4294901760
        %1957 = vmatpush1.msra.mxu0 %v1956
        %v1958 = vand.u32 %v1152, 4294901760
        %1959 = vmatprep.subr.mxu0 %v1958
        %v1960 = vand.u32 %v1151, 4294901760
        %1961 = vmatpush1.msra.mxu0 %v1960
        %v1962 = vand.u32 %v1154, 4294901760
        %1963 = vmatprep.subr.mxu0 %v1962
        %v1964 = vand.u32 %v1153, 4294901760
        %1965 = vmatpush1.msra.mxu0 %v1964
        %v1966 = vand.u32 %v1156, 4294901760
        %1967 = vmatprep.subr.mxu0 %v1966
        %v1968 = vand.u32 %v1155, 4294901760
        %1969 = vmatpush1.msra.mxu0 %v1968
        %v1970 = vand.u32 %v1158, 4294901760
        %1971 = vmatprep.subr.mxu0 %v1970
        %v1972 = vand.u32 %v1157, 4294901760
        %1973 = vmatpush1.msra.mxu0 %v1972
        %v1974 = vand.u32 %v1160, 4294901760
        %1975 = vmatprep.subr.mxu0 %v1974
        %v1976 = vand.u32 %v1159, 4294901760
        %1977 = vmatpush1.msra.mxu0 %v1976
        %v1978 = vand.u32 %v1162, 4294901760
        %1979 = vmatprep.subr.mxu0 %v1978
        %v1980 = vand.u32 %v1161, 4294901760
        %1981 = vmatpush1.msra.mxu0 %v1980
        %v1982 = vand.u32 %v1164, 4294901760
        %1983 = vmatprep.subr.mxu0 %v1982
        %v1984 = vand.u32 %v1163, 4294901760
        %1985 = vmatpush1.msra.mxu0 %v1984
        %v1986 = vand.u32 %v1166, 4294901760
        %1987 = vmatprep.subr.mxu0 %v1986
        %v1988 = vand.u32 %v1165, 4294901760
        %1989 = vmatpush1.msra.mxu0 %v1988
        %v1990 = vand.u32 %v1168, 4294901760
        %1991 = vmatprep.subr.mxu0 %v1990
        %v1992 = vand.u32 %v1167, 4294901760
        %1993 = vmatpush1.msra.mxu0 %v1992
        %v1994 = vand.u32 %v1170, 4294901760
        %1995 = vmatprep.subr.mxu0 %v1994
        %v1996 = vand.u32 %v1169, 4294901760
        %1997 = vmatpush1.msra.mxu0 %v1996
        %1998 = vmatprep.subr.mxu0 0.0
        %1999 = vmatpush1.msra.mxu0 0.0
        %2000 = vmatprep.subr.mxu0 0.0
        %2001 = vmatpush1.msra.mxu0 0.0
        %2002 = vmatprep.subr.mxu0 0.0
        %2003 = vmatpush1.msra.mxu0 0.0
        %2004 = vmatprep.subr.mxu0 0.0
        %2005 = vmatpush1.msra.mxu0 0.0
        %2006 = vmatprep.subr.mxu0 0.0
        %2007 = vmatpush1.msra.mxu0 0.0
        %2008 = vmatprep.subr.mxu0 0.0
        %2009 = vmatpush1.msra.mxu0 0.0
        %2010 = vmatprep.subr.mxu0 0.0
        %2011 = vmatpush1.msra.mxu0 0.0
        %2012 = vmatprep.subr.mxu0 0.0
        %2013 = vmatpush1.msra.mxu0 0.0
        %2014 = vmatprep.subr.mxu0 0.0
        %2015 = vmatpush1.msra.mxu0 0.0
        %2016 = vmatprep.subr.mxu0 0.0
        %2017 = vmatpush1.msra.mxu0 0.0
        %2018 = vmatprep.subr.mxu0 0.0
        %2019 = vmatpush1.msra.mxu0 0.0
        %2020 = vmatprep.subr.mxu0 0.0
        %2021 = vmatpush1.msra.mxu0 0.0
        %2022 = vmatprep.subr.mxu0 0.0
        %2023 = vmatpush1.msra.mxu0 0.0
        %2024 = vmatprep.subr.mxu0 0.0
        %2025 = vmatpush1.msra.mxu0 0.0
        %2026 = vmatprep.subr.mxu0 0.0
        %2027 = vmatpush1.msra.mxu0 0.0
        %2028 = vmatprep.subr.mxu0 0.0
        %2029 = vmatpush1.msra.mxu0 0.0
        %2030 = vmatprep.mubr.f32.mxu0 0.0
        %v2031 = vand.u32 %v431, 4294901760
        %2032 = vmatmul.mubr.f32.gmra.mrb[0].mxu0 %v2031
        %v2033 = vpop.f32.mrb[0].mxu0
        %v2034 = vadd.f32 %v1930, %v2033
        %v2035 = vpop.f32.mrb[0].mxu0
        %v2036 = vadd.f32 %v1932, %v2035
        %2037 = vdwg.mxu0
        %vm2038 = vcmask 261120
        %v2040 = vsel %vm2038, %v1130, 0
        %v2043 = vsel %vm2038, %v1136, 0
        %v2046 = vsel %vm2038, %v2034, 0
        %2048 = vmatprep.subr.mxu0 0.0
        %v2049 = vand.u32 %v2046, 4294901760
        %2050 = vmatpush1.xpose.msra.mxu0 %v2049
        %2051 = vmatprep.subr.mxu0 0.0
        %2052 = vmatpush1.xpose.msra.mxu0 0.0
        %2053 = vmatprep.subr.mxu0 0.0
        %2054 = vmatpush1.xpose.msra.mxu0 0.0
        %2055 = vmatprep.subr.mxu0 0.0
        %2056 = vmatpush1.xpose.msra.mxu0 0.0
        %2057 = vmatprep.subr.mxu0 0.0
        %2058 = vmatpush1.xpose.msra.mxu0 0.0
        %2059 = vmatprep.subr.mxu0 0.0
        %2060 = vmatpush1.xpose.msra.mxu0 0.0
        %2061 = vmatprep.subr.mxu0 0.0
        %2062 = vmatpush1.xpose.msra.mxu0 0.0
        %2063 = vmatprep.subr.mxu0 0.0
        %2064 = vmatpush1.xpose.msra.mxu0 0.0
        %2065 = vmatprep.subr.mxu0 0.0
        %2066 = vmatpush1.xpose.msra.mxu0 0.0
        %2067 = vmatprep.subr.mxu0 0.0
        %2068 = vmatpush1.xpose.msra.mxu0 0.0
        %2069 = vmatprep.subr.mxu0 0.0
        %2070 = vmatpush1.xpose.msra.mxu0 0.0
        %2071 = vmatprep.subr.mxu0 0.0
        %2072 = vmatpush1.xpose.msra.mxu0 0.0
        %2073 = vmatprep.subr.mxu0 0.0
        %2074 = vmatpush1.xpose.msra.mxu0 0.0
        %2075 = vmatprep.subr.mxu0 0.0
        %2076 = vmatpush1.xpose.msra.mxu0 0.0
        %2077 = vmatprep.subr.mxu0 0.0
        %2078 = vmatpush1.xpose.msra.mxu0 0.0
        %2079 = vmatprep.subr.mxu0 0.0
        %2080 = vmatpush1.xpose.msra.mxu0 0.0
        %2081 = vmatprep.subr.mxu0 0.0
        %2082 = vmatpush1.xpose.msra.mxu0 0.0
        %2083 = vmatprep.subr.mxu0 0.0
        %2084 = vmatpush1.xpose.msra.mxu0 0.0
        %2085 = vmatprep.subr.mxu0 0.0
        %2086 = vmatpush1.xpose.msra.mxu0 0.0
        %2087 = vmatprep.subr.mxu0 0.0
        %2088 = vmatpush1.xpose.msra.mxu0 0.0
        %2089 = vmatprep.subr.mxu0 0.0
        %2090 = vmatpush1.xpose.msra.mxu0 0.0
        %2091 = vmatprep.subr.mxu0 0.0
        %2092 = vmatpush1.xpose.msra.mxu0 0.0
        %2093 = vmatprep.subr.mxu0 0.0
        %2094 = vmatpush1.xpose.msra.mxu0 0.0
        %2095 = vmatprep.subr.mxu0 0.0
        %2096 = vmatpush1.xpose.msra.mxu0 0.0
        %2097 = vmatprep.subr.mxu0 0.0
        %2098 = vmatpush1.xpose.msra.mxu0 0.0
        %2099 = vmatprep.subr.mxu0 0.0
        %2100 = vmatpush1.xpose.msra.mxu0 0.0
        %2101 = vmatprep.subr.mxu0 0.0
        %2102 = vmatpush1.xpose.msra.mxu0 0.0
        %2103 = vmatprep.subr.mxu0 0.0
        %2104 = vmatpush1.xpose.msra.mxu0 0.0
        %2105 = vmatprep.subr.mxu0 0.0
        %2106 = vmatpush1.xpose.msra.mxu0 0.0
        %2107 = vmatprep.subr.mxu0 0.0
        %2108 = vmatpush1.xpose.msra.mxu0 0.0
        %2109 = vmatprep.subr.mxu0 0.0
        %2110 = vmatpush1.xpose.msra.mxu0 0.0
        %2111 = vmatprep.subr.mxu0 0.0
        %2112 = vmatpush1.xpose.msra.mxu0 0.0
        %2113 = vmatprep.mubr.f32.mxu0 0.0
        %v2114 = vand.u32 %v2040, 4294901760
        %v2115 = vsub.f32 %v2040, %v2114
        %v2116 = vand.u32 %v2115, 4294901760
        %v2117 = vsub.f32 %v2115, %v2116
        %v2118 = vand.u32 %v2117, 4294901760
        %2119 = vmatmul.mubr.f32.gmra.mrb[0].mxu0 %v2118
        %v2120 = vpop.f32.mrb[0].mxu0
        %v2121 = vadd.f32 0.0, %v2120
        %v2122 = vpop.f32.mrb[0].mxu0
        %2123 = vmatprep.mubr.f32.mxu0 0.0
        %v2124 = vand.u32 %v2043, 4294901760
        %v2125 = vsub.f32 %v2043, %v2124
        %v2126 = vand.u32 %v2125, 4294901760
        %v2127 = vsub.f32 %v2125, %v2126
        %v2128 = vand.u32 %v2127, 4294901760
        %2129 = vmatmul.mubr.f32.gmra.mrb[0].mxu0 %v2128
        %v2130 = vpop.f32.mrb[0].mxu0
        %v2131 = vadd.f32 0.0, %v2130
        %v2132 = vpop.f32.mrb[0].mxu0
        %2133 = vdwg.mxu0
        %2134 = vmatprep.subr.mxu0 0.0
        %v2135 = vand.u32 %v2046, 4294901760
        %v2136 = vsub.f32 %v2046, %v2135
        %v2137 = vand.u32 %v2136, 4294901760
        %v2138 = vsub.f32 %v2136, %v2137
        %v2139 = vand.u32 %v2138, 4294901760
        %2140 = vmatpush1.xpose.msra.mxu0 %v2139
        %2141 = vmatprep.subr.mxu0 0.0
        %2142 = vmatpush1.xpose.msra.mxu0 0.0
        %2143 = vmatprep.subr.mxu0 0.0
        %2144 = vmatpush1.xpose.msra.mxu0 0.0
        %2145 = vmatprep.subr.mxu0 0.0
        %2146 = vmatpush1.xpose.msra.mxu0 0.0
        %2147 = vmatprep.subr.mxu0 0.0
        %2148 = vmatpush1.xpose.msra.mxu0 0.0
        %2149 = vmatprep.subr.mxu0 0.0
        %2150 = vmatpush1.xpose.msra.mxu0 0.0
        %2151 = vmatprep.subr.mxu0 0.0
        %2152 = vmatpush1.xpose.msra.mxu0 0.0
        %2153 = vmatprep.subr.mxu0 0.0
        %2154 = vmatpush1.xpose.msra.mxu0 0.0
        %2155 = vmatprep.subr.mxu0 0.0
        %2156 = vmatpush1.xpose.msra.mxu0 0.0
        %2157 = vmatprep.subr.mxu0 0.0
        %2158 = vmatpush1.xpose.msra.mxu0 0.0
        %2159 = vmatprep.subr.mxu0 0.0
        %2160 = vmatpush1.xpose.msra.mxu0 0.0
        %2161 = vmatprep.subr.mxu0 0.0
        %2162 = vmatpush1.xpose.msra.mxu0 0.0
        %2163 = vmatprep.subr.mxu0 0.0
        %2164 = vmatpush1.xpose.msra.mxu0 0.0
        %2165 = vmatprep.subr.mxu0 0.0
        %2166 = vmatpush1.xpose.msra.mxu0 0.0
        %2167 = vmatprep.subr.mxu0 0.0
        %2168 = vmatpush1.xpose.msra.mxu0 0.0
        %2169 = vmatprep.subr.mxu0 0.0
        %2170 = vmatpush1.xpose.msra.mxu0 0.0
        %2171 = vmatprep.subr.mxu0 0.0
        %2172 = vmatpush1.xpose.msra.mxu0 0.0
        %2173 = vmatprep.subr.mxu0 0.0
        %2174 = vmatpush1.xpose.msra.mxu0 0.0
        %2175 = vmatprep.subr.mxu0 0.0
        %2176 = vmatpush1.xpose.msra.mxu0 0.0
        %2177 = vmatprep.subr.mxu0 0.0
        %2178 = vmatpush1.xpose.msra.mxu0 0.0
        %2179 = vmatprep.subr.mxu0 0.0
        %2180 = vmatpush1.xpose.msra.mxu0 0.0
        %2181 = vmatprep.subr.mxu0 0.0
        %2182 = vmatpush1.xpose.msra.mxu0 0.0
        %2183 = vmatprep.subr.mxu0 0.0
        %2184 = vmatpush1.xpose.msra.mxu0 0.0
        %2185 = vmatprep.subr.mxu0 0.0
        %2186 = vmatpush1.xpose.msra.mxu0 0.0
        %2187 = vmatprep.subr.mxu0 0.0
        %2188 = vmatpush1.xpose.msra.mxu0 0.0
        %2189 = vmatprep.subr.mxu0 0.0
        %2190 = vmatpush1.xpose.msra.mxu0 0.0
        %2191 = vmatprep.subr.mxu0 0.0
        %2192 = vmatpush1.xpose.msra.mxu0 0.0
        %2193 = vmatprep.subr.mxu0 0.0
        %2194 = vmatpush1.xpose.msra.mxu0 0.0
        %2195 = vmatprep.subr.mxu0 0.0
        %2196 = vmatpush1.xpose.msra.mxu0 0.0
        %2197 = vmatprep.subr.mxu0 0.0
        %2198 = vmatpush1.xpose.msra.mxu0 0.0
        %2199 = vmatprep.subr.mxu0 0.0
        %2200 = vmatpush1.xpose.msra.mxu0 0.0
        %2201 = vmatprep.subr.mxu0 0.0
        %2202 = vmatpush1.xpose.msra.mxu0 0.0
        %2203 = vmatprep.mubr.f32.mxu0 0.0
        %v2204 = vand.u32 %v2040, 4294901760
        %2205 = vmatmul.mubr.f32.gmra.mrb[0].mxu0 %v2204
        %v2206 = vpop.f32.mrb[0].mxu0
        %v2207 = vadd.f32 %v2121, %v2206
        %v2208 = vpop.f32.mrb[0].mxu0
        %2209 = vmatprep.mubr.f32.mxu0 0.0
        %v2210 = vand.u32 %v2043, 4294901760
        %2211 = vmatmul.mubr.f32.gmra.mrb[0].mxu0 %v2210
        %v2212 = vpop.f32.mrb[0].mxu0
        %v2213 = vadd.f32 %v2131, %v2212
        %v2214 = vpop.f32.mrb[0].mxu0
        %2215 = vdwg.mxu0
        %2216 = vmatprep.subr.mxu0 0.0
        %v2217 = vand.u32 %v2046, 4294901760
        %v2218 = vsub.f32 %v2046, %v2217
        %2219 = vmatpush1.xpose.msra.mxu0 %v2218
        %2220 = vmatprep.subr.mxu0 0.0
        %2221 = vmatpush1.xpose.msra.mxu0 0.0
        %2222 = vmatprep.subr.mxu0 0.0
        %2223 = vmatpush1.xpose.msra.mxu0 0.0
        %2224 = vmatprep.subr.mxu0 0.0
        %2225 = vmatpush1.xpose.msra.mxu0 0.0
        %2226 = vmatprep.subr.mxu0 0.0
        %2227 = vmatpush1.xpose.msra.mxu0 0.0
        %2228 = vmatprep.subr.mxu0 0.0
        %2229 = vmatpush1.xpose.msra.mxu0 0.0
        %2230 = vmatprep.subr.mxu0 0.0
        %2231 = vmatpush1.xpose.msra.mxu0 0.0
        %2232 = vmatprep.subr.mxu0 0.0
        %2233 = vmatpush1.xpose.msra.mxu0 0.0
        %2234 = vmatprep.subr.mxu0 0.0
        %2235 = vmatpush1.xpose.msra.mxu0 0.0
        %2236 = vmatprep.subr.mxu0 0.0
        %2237 = vmatpush1.xpose.msra.mxu0 0.0
        %2238 = vmatprep.subr.mxu0 0.0
        %2239 = vmatpush1.xpose.msra.mxu0 0.0
        %2240 = vmatprep.subr.mxu0 0.0
        %2241 = vmatpush1.xpose.msra.mxu0 0.0
        %2242 = vmatprep.subr.mxu0 0.0
        %2243 = vmatpush1.xpose.msra.mxu0 0.0
        %2244 = vmatprep.subr.mxu0 0.0
        %2245 = vmatpush1.xpose.msra.mxu0 0.0
        %2246 = vmatprep.subr.mxu0 0.0
        %2247 = vmatpush1.xpose.msra.mxu0 0.0
        %2248 = vmatprep.subr.mxu0 0.0
        %2249 = vmatpush1.xpose.msra.mxu0 0.0
        %2250 = vmatprep.subr.mxu0 0.0
        %2251 = vmatpush1.xpose.msra.mxu0 0.0
        %2252 = vmatprep.subr.mxu0 0.0
        %2253 = vmatpush1.xpose.msra.mxu0 0.0
        %2254 = vmatprep.subr.mxu0 0.0
        %2255 = vmatpush1.xpose.msra.mxu0 0.0
        %2256 = vmatprep.subr.mxu0 0.0
        %2257 = vmatpush1.xpose.msra.mxu0 0.0
        %2258 = vmatprep.subr.mxu0 0.0
        %2259 = vmatpush1.xpose.msra.mxu0 0.0
        %2260 = vmatprep.subr.mxu0 0.0
        %2261 = vmatpush1.xpose.msra.mxu0 0.0
        %2262 = vmatprep.subr.mxu0 0.0
        %2263 = vmatpush1.xpose.msra.mxu0 0.0
        %2264 = vmatprep.subr.mxu0 0.0
        %2265 = vmatpush1.xpose.msra.mxu0 0.0
        %2266 = vmatprep.subr.mxu0 0.0
        %2267 = vmatpush1.xpose.msra.mxu0 0.0
        %2268 = vmatprep.subr.mxu0 0.0
        %2269 = vmatpush1.xpose.msra.mxu0 0.0
        %2270 = vmatprep.subr.mxu0 0.0
        %2271 = vmatpush1.xpose.msra.mxu0 0.0
        %2272 = vmatprep.subr.mxu0 0.0
        %2273 = vmatpush1.xpose.msra.mxu0 0.0
        %2274 = vmatprep.subr.mxu0 0.0
        %2275 = vmatpush1.xpose.msra.mxu0 0.0
        %2276 = vmatprep.subr.mxu0 0.0
        %2277 = vmatpush1.xpose.msra.mxu0 0.0
        %2278 = vmatprep.subr.mxu0 0.0
        %2279 = vmatpush1.xpose.msra.mxu0 0.0
        %2280 = vmatprep.subr.mxu0 0.0
        %2281 = vmatpush1.xpose.msra.mxu0 0.0
        %2282 = vmatprep.mubr.f32.mxu0 0.0
        %v2283 = vand.u32 %v2040, 4294901760
        %v2284 = vsub.f32 %v2040, %v2283
        %2285 = vmatmul.mubr.f32.gmra.mrb[0].mxu0 %v2284
        %v2286 = vpop.f32.mrb[0].mxu0
        %v2287 = vadd.f32 %v2207, %v2286
        %v2288 = vpop.f32.mrb[0].mxu0
        %2289 = vmatprep.mubr.f32.mxu0 0.0
        %v2290 = vand.u32 %v2043, 4294901760
        %v2291 = vsub.f32 %v2043, %v2290
        %2292 = vmatmul.mubr.f32.gmra.mrb[0].mxu0 %v2291
        %v2293 = vpop.f32.mrb[0].mxu0
        %v2294 = vadd.f32 %v2213, %v2293
        %v2295 = vpop.f32.mrb[0].mxu0
        %2296 = vdwg.mxu0
        %2297 = vmatprep.subr.mxu0 0.0
        %v2298 = vand.u32 %v2046, 4294901760
        %2299 = vmatpush1.xpose.msra.mxu0 %v2298
        %2300 = vmatprep.subr.mxu0 0.0
        %2301 = vmatpush1.xpose.msra.mxu0 0.0
        %2302 = vmatprep.subr.mxu0 0.0
        %2303 = vmatpush1.xpose.msra.mxu0 0.0
        %2304 = vmatprep.subr.mxu0 0.0
        %2305 = vmatpush1.xpose.msra.mxu0 0.0
        %2306 = vmatprep.subr.mxu0 0.0
        %2307 = vmatpush1.xpose.msra.mxu0 0.0
        %2308 = vmatprep.subr.mxu0 0.0
        %2309 = vmatpush1.xpose.msra.mxu0 0.0
        %2310 = vmatprep.subr.mxu0 0.0
        %2311 = vmatpush1.xpose.msra.mxu0 0.0
        %2312 = vmatprep.subr.mxu0 0.0
        %2313 = vmatpush1.xpose.msra.mxu0 0.0
        %2314 = vmatprep.subr.mxu0 0.0
        %2315 = vmatpush1.xpose.msra.mxu0 0.0
        %2316 = vmatprep.subr.mxu0 0.0
        %2317 = vmatpush1.xpose.msra.mxu0 0.0
        %2318 = vmatprep.subr.mxu0 0.0
        %2319 = vmatpush1.xpose.msra.mxu0 0.0
        %2320 = vmatprep.subr.mxu0 0.0
        %2321 = vmatpush1.xpose.msra.mxu0 0.0
        %2322 = vmatprep.subr.mxu0 0.0
        %2323 = vmatpush1.xpose.msra.mxu0 0.0
        %2324 = vmatprep.subr.mxu0 0.0
        %2325 = vmatpush1.xpose.msra.mxu0 0.0
        %2326 = vmatprep.subr.mxu0 0.0
        %2327 = vmatpush1.xpose.msra.mxu0 0.0
        %2328 = vmatprep.subr.mxu0 0.0
        %2329 = vmatpush1.xpose.msra.mxu0 0.0
        %2330 = vmatprep.subr.mxu0 0.0
        %2331 = vmatpush1.xpose.msra.mxu0 0.0
        %2332 = vmatprep.subr.mxu0 0.0
        %2333 = vmatpush1.xpose.msra.mxu0 0.0
        %2334 = vmatprep.subr.mxu0 0.0
        %2335 = vmatpush1.xpose.msra.mxu0 0.0
        %2336 = vmatprep.subr.mxu0 0.0
        %2337 = vmatpush1.xpose.msra.mxu0 0.0
        %2338 = vmatprep.subr.mxu0 0.0
        %2339 = vmatpush1.xpose.msra.mxu0 0.0
        %2340 = vmatprep.subr.mxu0 0.0
        %2341 = vmatpush1.xpose.msra.mxu0 0.0
        %2342 = vmatprep.subr.mxu0 0.0
        %2343 = vmatpush1.xpose.msra.mxu0 0.0
        %2344 = vmatprep.subr.mxu0 0.0
        %2345 = vmatpush1.xpose.msra.mxu0 0.0
        %2346 = vmatprep.subr.mxu0 0.0
        %2347 = vmatpush1.xpose.msra.mxu0 0.0
        %2348 = vmatprep.subr.mxu0 0.0
        %2349 = vmatpush1.xpose.msra.mxu0 0.0
        %2350 = vmatprep.subr.mxu0 0.0
        %2351 = vmatpush1.xpose.msra.mxu0 0.0
        %2352 = vmatprep.subr.mxu0 0.0
        %2353 = vmatpush1.xpose.msra.mxu0 0.0
        %2354 = vmatprep.subr.mxu0 0.0
        %2355 = vmatpush1.xpose.msra.mxu0 0.0
        %2356 = vmatprep.subr.mxu0 0.0
        %2357 = vmatpush1.xpose.msra.mxu0 0.0
        %2358 = vmatprep.subr.mxu0 0.0
        %2359 = vmatpush1.xpose.msra.mxu0 0.0
        %2360 = vmatprep.subr.mxu0 0.0
        %2361 = vmatpush1.xpose.msra.mxu0 0.0
        %2362 = vmatprep.mubr.f32.mxu0 0.0
        %v2363 = vand.u32 %v2040, 4294901760
        %v2364 = vsub.f32 %v2040, %v2363
        %v2365 = vand.u32 %v2364, 4294901760
        %2366 = vmatmul.mubr.f32.gmra.mrb[0].mxu0 %v2365
        %v2367 = vpop.f32.mrb[0].mxu0
        %v2368 = vadd.f32 %v2287, %v2367
        %v2369 = vpop.f32.mrb[0].mxu0
        %2370 = vmatprep.mubr.f32.mxu0 0.0
        %v2371 = vand.u32 %v2043, 4294901760
        %v2372 = vsub.f32 %v2043, %v2371
        %v2373 = vand.u32 %v2372, 4294901760
        %2374 = vmatmul.mubr.f32.gmra.mrb[0].mxu0 %v2373
        %v2375 = vpop.f32.mrb[0].mxu0
        %v2376 = vadd.f32 %v2294, %v2375
        %v2377 = vpop.f32.mrb[0].mxu0
        %2378 = vdwg.mxu0
        %2379 = vmatprep.subr.mxu0 0.0
        %v2380 = vand.u32 %v2046, 4294901760
        %v2381 = vsub.f32 %v2046, %v2380
        %v2382 = vand.u32 %v2381, 4294901760
        %2383 = vmatpush1.xpose.msra.mxu0 %v2382
        %2384 = vmatprep.subr.mxu0 0.0
        %2385 = vmatpush1.xpose.msra.mxu0 0.0
        %2386 = vmatprep.subr.mxu0 0.0
        %2387 = vmatpush1.xpose.msra.mxu0 0.0
        %2388 = vmatprep.subr.mxu0 0.0
        %2389 = vmatpush1.xpose.msra.mxu0 0.0
        %2390 = vmatprep.subr.mxu0 0.0
        %2391 = vmatpush1.xpose.msra.mxu0 0.0
        %2392 = vmatprep.subr.mxu0 0.0
        %2393 = vmatpush1.xpose.msra.mxu0 0.0
        %2394 = vmatprep.subr.mxu0 0.0
        %2395 = vmatpush1.xpose.msra.mxu0 0.0
        %2396 = vmatprep.subr.mxu0 0.0
        %2397 = vmatpush1.xpose.msra.mxu0 0.0
        %2398 = vmatprep.subr.mxu0 0.0
        %2399 = vmatpush1.xpose.msra.mxu0 0.0
        %2400 = vmatprep.subr.mxu0 0.0
        %2401 = vmatpush1.xpose.msra.mxu0 0.0
        %2402 = vmatprep.subr.mxu0 0.0
        %2403 = vmatpush1.xpose.msra.mxu0 0.0
        %2404 = vmatprep.subr.mxu0 0.0
        %2405 = vmatpush1.xpose.msra.mxu0 0.0
        %2406 = vmatprep.subr.mxu0 0.0
        %2407 = vmatpush1.xpose.msra.mxu0 0.0
        %2408 = vmatprep.subr.mxu0 0.0
        %2409 = vmatpush1.xpose.msra.mxu0 0.0
        %2410 = vmatprep.subr.mxu0 0.0
        %2411 = vmatpush1.xpose.msra.mxu0 0.0
        %2412 = vmatprep.subr.mxu0 0.0
        %2413 = vmatpush1.xpose.msra.mxu0 0.0
        %2414 = vmatprep.subr.mxu0 0.0
        %2415 = vmatpush1.xpose.msra.mxu0 0.0
        %2416 = vmatprep.subr.mxu0 0.0
        %2417 = vmatpush1.xpose.msra.mxu0 0.0
        %2418 = vmatprep.subr.mxu0 0.0
        %2419 = vmatpush1.xpose.msra.mxu0 0.0
        %2420 = vmatprep.subr.mxu0 0.0
        %2421 = vmatpush1.xpose.msra.mxu0 0.0
        %2422 = vmatprep.subr.mxu0 0.0
        %2423 = vmatpush1.xpose.msra.mxu0 0.0
        %2424 = vmatprep.subr.mxu0 0.0
        %2425 = vmatpush1.xpose.msra.mxu0 0.0
        %2426 = vmatprep.subr.mxu0 0.0
        %2427 = vmatpush1.xpose.msra.mxu0 0.0
        %2428 = vmatprep.subr.mxu0 0.0
        %2429 = vmatpush1.xpose.msra.mxu0 0.0
        %2430 = vmatprep.subr.mxu0 0.0
        %2431 = vmatpush1.xpose.msra.mxu0 0.0
        %2432 = vmatprep.subr.mxu0 0.0
        %2433 = vmatpush1.xpose.msra.mxu0 0.0
        %2434 = vmatprep.subr.mxu0 0.0
        %2435 = vmatpush1.xpose.msra.mxu0 0.0
        %2436 = vmatprep.subr.mxu0 0.0
        %2437 = vmatpush1.xpose.msra.mxu0 0.0
        %2438 = vmatprep.subr.mxu0 0.0
        %2439 = vmatpush1.xpose.msra.mxu0 0.0
        %2440 = vmatprep.subr.mxu0 0.0
        %2441 = vmatpush1.xpose.msra.mxu0 0.0
        %2442 = vmatprep.subr.mxu0 0.0
        %2443 = vmatpush1.xpose.msra.mxu0 0.0
        %2444 = vmatprep.subr.mxu0 0.0
        %2445 = vmatpush1.xpose.msra.mxu0 0.0
        %2446 = vmatprep.mubr.f32.mxu0 0.0
        %v2447 = vand.u32 %v2040, 4294901760
        %2448 = vmatmul.mubr.f32.gmra.mrb[0].mxu0 %v2447
        %v2449 = vpop.f32.mrb[0].mxu0
        %v2450 = vadd.f32 %v2368, %v2449
        %v2451 = vpop.f32.mrb[0].mxu0
        %2452 = vmatprep.mubr.f32.mxu0 0.0
        %v2453 = vand.u32 %v2043, 4294901760
        %2454 = vmatmul.mubr.f32.gmra.mrb[0].mxu0 %v2453
        %v2455 = vpop.f32.mrb[0].mxu0
        %v2456 = vadd.f32 %v2376, %v2455
        %v2457 = vpop.f32.mrb[0].mxu0
        %2458 = vdwg.mxu0
        %2459 = vmatprep.subr.mxu0 0.0
        %v2460 = vand.u32 %v2046, 4294901760
        %2461 = vmatpush1.xpose.msra.mxu0 %v2460
        %2462 = vmatprep.subr.mxu0 0.0
        %2463 = vmatpush1.xpose.msra.mxu0 0.0
        %2464 = vmatprep.subr.mxu0 0.0
        %2465 = vmatpush1.xpose.msra.mxu0 0.0
        %2466 = vmatprep.subr.mxu0 0.0
        %2467 = vmatpush1.xpose.msra.mxu0 0.0
        %2468 = vmatprep.subr.mxu0 0.0
        %2469 = vmatpush1.xpose.msra.mxu0 0.0
        %2470 = vmatprep.subr.mxu0 0.0
        %2471 = vmatpush1.xpose.msra.mxu0 0.0
        %2472 = vmatprep.subr.mxu0 0.0
        %2473 = vmatpush1.xpose.msra.mxu0 0.0
        %2474 = vmatprep.subr.mxu0 0.0
        %2475 = vmatpush1.xpose.msra.mxu0 0.0
        %2476 = vmatprep.subr.mxu0 0.0
        %2477 = vmatpush1.xpose.msra.mxu0 0.0
        %2478 = vmatprep.subr.mxu0 0.0
        %2479 = vmatpush1.xpose.msra.mxu0 0.0
        %2480 = vmatprep.subr.mxu0 0.0
        %2481 = vmatpush1.xpose.msra.mxu0 0.0
        %2482 = vmatprep.subr.mxu0 0.0
        %2483 = vmatpush1.xpose.msra.mxu0 0.0
        %2484 = vmatprep.subr.mxu0 0.0
        %2485 = vmatpush1.xpose.msra.mxu0 0.0
        %2486 = vmatprep.subr.mxu0 0.0
        %2487 = vmatpush1.xpose.msra.mxu0 0.0
        %2488 = vmatprep.subr.mxu0 0.0
        %2489 = vmatpush1.xpose.msra.mxu0 0.0
        %2490 = vmatprep.subr.mxu0 0.0
        %2491 = vmatpush1.xpose.msra.mxu0 0.0
        %2492 = vmatprep.subr.mxu0 0.0
        %2493 = vmatpush1.xpose.msra.mxu0 0.0
        %2494 = vmatprep.subr.mxu0 0.0
        %2495 = vmatpush1.xpose.msra.mxu0 0.0
        %2496 = vmatprep.subr.mxu0 0.0
        %2497 = vmatpush1.xpose.msra.mxu0 0.0
        %2498 = vmatprep.subr.mxu0 0.0
        %2499 = vmatpush1.xpose.msra.mxu0 0.0
        %2500 = vmatprep.subr.mxu0 0.0
        %2501 = vmatpush1.xpose.msra.mxu0 0.0
        %2502 = vmatprep.subr.mxu0 0.0
        %2503 = vmatpush1.xpose.msra.mxu0 0.0
        %2504 = vmatprep.subr.mxu0 0.0
        %2505 = vmatpush1.xpose.msra.mxu0 0.0
        %2506 = vmatprep.subr.mxu0 0.0
        %2507 = vmatpush1.xpose.msra.mxu0 0.0
        %2508 = vmatprep.subr.mxu0 0.0
        %2509 = vmatpush1.xpose.msra.mxu0 0.0
        %2510 = vmatprep.subr.mxu0 0.0
        %2511 = vmatpush1.xpose.msra.mxu0 0.0
        %2512 = vmatprep.subr.mxu0 0.0
        %2513 = vmatpush1.xpose.msra.mxu0 0.0
        %2514 = vmatprep.subr.mxu0 0.0
        %2515 = vmatpush1.xpose.msra.mxu0 0.0
        %2516 = vmatprep.subr.mxu0 0.0
        %2517 = vmatpush1.xpose.msra.mxu0 0.0
        %2518 = vmatprep.subr.mxu0 0.0
        %2519 = vmatpush1.xpose.msra.mxu0 0.0
        %2520 = vmatprep.subr.mxu0 0.0
        %2521 = vmatpush1.xpose.msra.mxu0 0.0
        %2522 = vmatprep.subr.mxu0 0.0
        %2523 = vmatpush1.xpose.msra.mxu0 0.0
        %2524 = vmatprep.mubr.f32.mxu0 0.0
        %v2525 = vand.u32 %v2040, 4294901760
        %2526 = vmatmul.mubr.f32.gmra.mrb[0].mxu0 %v2525
        %v2527 = vpop.f32.mrb[0].mxu0
        %v2528 = vadd.f32 %v2450, %v2527
        %v2529 = vpop.f32.mrb[0].mxu0
        %2530 = vmatprep.mubr.f32.mxu0 0.0
        %v2531 = vand.u32 %v2043, 4294901760
        %2532 = vmatmul.mubr.f32.gmra.mrb[0].mxu0 %v2531
        %v2533 = vpop.f32.mrb[0].mxu0
        %v2534 = vadd.f32 %v2456, %v2533
        %v2535 = vpop.f32.mrb[0].mxu0
        %2536 = vdwg.mxu0
        %v2537 = vmul.f32 %v2528, 0.088388346
        %v2538 = vmul.f32 %v2534, 0.088388346
        %vm2539 = vcmask 64512
        %v2540 = vsel %vm2539, %v2537, -inf
        %2541 = vmax.xlane.f32.xlu0 %v2540
        %v2542 = vpop.xlane.xlu0 %2541
        %v2543 = vsel %vm2539, %v2538, -inf
        %2544 = vmax.xlane.f32.xlu0 %v2543
        %v2545 = vpop.xlane.xlu0 %2544
        %v2546 = vsub.f32 %v2537, %v2542
        %v2547 = vsub.f32 %v2538, %v2545
        %v2548 = vmul.f32 %v2546, 1.442695
        %v2549 = vpow.pop %v2548
        %v2550 = vmul.f32 %v2547, 1.442695
        %v2551 = vpow.pop %v2550
        %v2552 = vsel %vm2539, %v2549, 0.0
        %2553 = vadd.xlane.f32.xlu0 %v2552
        %v2554 = vpop.xlane.xlu0 %2553
        %v2555 = vsel %vm2539, %v2551, 0.0
        %2556 = vadd.xlane.f32.xlu0 %v2555
        %v2557 = vpop.xlane.xlu0 %2556
        %v2558 = vrcp.pop %v2554
        %v2559 = vmul.f32 %v2549, %v2558
        %v2560 = vrcp.pop %v2557
        %v2561 = vmul.f32 %v2551, %v2560
        %v2563 = vsel %vm2539, %v2559, 0
        %v2566 = vsel %vm2539, %v2561, 0
        %2568 = vmatprep.subr.mxu0 0.0
        %v2569 = vand.u32 %v2036, 4294901760
        %2570 = vmatpush1.msra.mxu0 %v2569
        %2571 = vmatprep.subr.mxu0 0.0
        %2572 = vmatpush1.msra.mxu0 0.0
        %2573 = vmatprep.subr.mxu0 0.0
        %2574 = vmatpush1.msra.mxu0 0.0
        %2575 = vmatprep.subr.mxu0 0.0
        %2576 = vmatpush1.msra.mxu0 0.0
        %2577 = vmatprep.subr.mxu0 0.0
        %2578 = vmatpush1.msra.mxu0 0.0
        %2579 = vmatprep.subr.mxu0 0.0
        %2580 = vmatpush1.msra.mxu0 0.0
        %2581 = vmatprep.subr.mxu0 0.0
        %2582 = vmatpush1.msra.mxu0 0.0
        %2583 = vmatprep.subr.mxu0 0.0
        %2584 = vmatpush1.msra.mxu0 0.0
        %2585 = vmatprep.subr.mxu0 0.0
        %2586 = vmatpush1.msra.mxu0 0.0
        %2587 = vmatprep.subr.mxu0 0.0
        %2588 = vmatpush1.msra.mxu0 0.0
        %2589 = vmatprep.subr.mxu0 0.0
        %2590 = vmatpush1.msra.mxu0 0.0
        %2591 = vmatprep.subr.mxu0 0.0
        %2592 = vmatpush1.msra.mxu0 0.0
        %2593 = vmatprep.subr.mxu0 0.0
        %2594 = vmatpush1.msra.mxu0 0.0
        %2595 = vmatprep.subr.mxu0 0.0
        %2596 = vmatpush1.msra.mxu0 0.0
        %2597 = vmatprep.subr.mxu0 0.0
        %2598 = vmatpush1.msra.mxu0 0.0
        %2599 = vmatprep.subr.mxu0 0.0
        %2600 = vmatpush1.msra.mxu0 0.0
        %2601 = vmatprep.subr.mxu0 0.0
        %2602 = vmatpush1.msra.mxu0 0.0
        %2603 = vmatprep.subr.mxu0 0.0
        %2604 = vmatpush1.msra.mxu0 0.0
        %2605 = vmatprep.subr.mxu0 0.0
        %2606 = vmatpush1.msra.mxu0 0.0
        %2607 = vmatprep.subr.mxu0 0.0
        %2608 = vmatpush1.msra.mxu0 0.0
        %2609 = vmatprep.subr.mxu0 0.0
        %2610 = vmatpush1.msra.mxu0 0.0
        %2611 = vmatprep.subr.mxu0 0.0
        %2612 = vmatpush1.msra.mxu0 0.0
        %2613 = vmatprep.subr.mxu0 0.0
        %2614 = vmatpush1.msra.mxu0 0.0
        %2615 = vmatprep.subr.mxu0 0.0
        %2616 = vmatpush1.msra.mxu0 0.0
        %2617 = vmatprep.subr.mxu0 0.0
        %2618 = vmatpush1.msra.mxu0 0.0
        %2619 = vmatprep.subr.mxu0 0.0
        %2620 = vmatpush1.msra.mxu0 0.0
        %2621 = vmatprep.subr.mxu0 0.0
        %2622 = vmatpush1.msra.mxu0 0.0
        %2623 = vmatprep.subr.mxu0 0.0
        %2624 = vmatpush1.msra.mxu0 0.0
        %2625 = vmatprep.subr.mxu0 0.0
        %2626 = vmatpush1.msra.mxu0 0.0
        %2627 = vmatprep.subr.mxu0 0.0
        %2628 = vmatpush1.msra.mxu0 0.0
        %2629 = vmatprep.subr.mxu0 0.0
        %2630 = vmatpush1.msra.mxu0 0.0
        %2631 = vmatprep.subr.mxu0 0.0
        %2632 = vmatpush1.msra.mxu0 0.0
        %2633 = vmatprep.mubr.f32.mxu0 0.0
        %v2634 = vand.u32 %v2563, 4294901760
        %v2635 = vsub.f32 %v2563, %v2634
        %v2636 = vand.u32 %v2635, 4294901760
        %v2637 = vsub.f32 %v2635, %v2636
        %v2638 = vand.u32 %v2637, 4294901760
        %2639 = vmatmul.mubr.f32.gmra.mrb[0].mxu0 %v2638
        %v2640 = vpop.f32.mrb[0].mxu0
        %v2641 = vadd.f32 0.0, %v2640
        %v2642 = vpop.f32.mrb[0].mxu0
        %2643 = vmatprep.mubr.f32.mxu0 0.0
        %v2644 = vand.u32 %v2566, 4294901760
        %v2645 = vsub.f32 %v2566, %v2644
        %v2646 = vand.u32 %v2645, 4294901760
        %v2647 = vsub.f32 %v2645, %v2646
        %v2648 = vand.u32 %v2647, 4294901760
        %2649 = vmatmul.mubr.f32.gmra.mrb[0].mxu0 %v2648
        %v2650 = vpop.f32.mrb[0].mxu0
        %v2651 = vadd.f32 0.0, %v2650
        %v2652 = vpop.f32.mrb[0].mxu0
        %2653 = vdwg.mxu0
        %2654 = vmatprep.subr.mxu0 0.0
        %v2655 = vand.u32 %v2036, 4294901760
        %v2656 = vsub.f32 %v2036, %v2655
        %v2657 = vand.u32 %v2656, 4294901760
        %v2658 = vsub.f32 %v2656, %v2657
        %v2659 = vand.u32 %v2658, 4294901760
        %2660 = vmatpush1.msra.mxu0 %v2659
        %2661 = vmatprep.subr.mxu0 0.0
        %2662 = vmatpush1.msra.mxu0 0.0
        %2663 = vmatprep.subr.mxu0 0.0
        %2664 = vmatpush1.msra.mxu0 0.0
        %2665 = vmatprep.subr.mxu0 0.0
        %2666 = vmatpush1.msra.mxu0 0.0
        %2667 = vmatprep.subr.mxu0 0.0
        %2668 = vmatpush1.msra.mxu0 0.0
        %2669 = vmatprep.subr.mxu0 0.0
        %2670 = vmatpush1.msra.mxu0 0.0
        %2671 = vmatprep.subr.mxu0 0.0
        %2672 = vmatpush1.msra.mxu0 0.0
        %2673 = vmatprep.subr.mxu0 0.0
        %2674 = vmatpush1.msra.mxu0 0.0
        %2675 = vmatprep.subr.mxu0 0.0
        %2676 = vmatpush1.msra.mxu0 0.0
        %2677 = vmatprep.subr.mxu0 0.0
        %2678 = vmatpush1.msra.mxu0 0.0
        %2679 = vmatprep.subr.mxu0 0.0
        %2680 = vmatpush1.msra.mxu0 0.0
        %2681 = vmatprep.subr.mxu0 0.0
        %2682 = vmatpush1.msra.mxu0 0.0
        %2683 = vmatprep.subr.mxu0 0.0
        %2684 = vmatpush1.msra.mxu0 0.0
        %2685 = vmatprep.subr.mxu0 0.0
        %2686 = vmatpush1.msra.mxu0 0.0
        %2687 = vmatprep.subr.mxu0 0.0
        %2688 = vmatpush1.msra.mxu0 0.0
        %2689 = vmatprep.subr.mxu0 0.0
        %2690 = vmatpush1.msra.mxu0 0.0
        %2691 = vmatprep.subr.mxu0 0.0
        %2692 = vmatpush1.msra.mxu0 0.0
        %2693 = vmatprep.subr.mxu0 0.0
        %2694 = vmatpush1.msra.mxu0 0.0
        %2695 = vmatprep.subr.mxu0 0.0
        %2696 = vmatpush1.msra.mxu0 0.0
        %2697 = vmatprep.subr.mxu0 0.0
        %2698 = vmatpush1.msra.mxu0 0.0
        %2699 = vmatprep.subr.mxu0 0.0
        %2700 = vmatpush1.msra.mxu0 0.0
        %2701 = vmatprep.subr.mxu0 0.0
        %2702 = vmatpush1.msra.mxu0 0.0
        %2703 = vmatprep.subr.mxu0 0.0
        %2704 = vmatpush1.msra.mxu0 0.0
        %2705 = vmatprep.subr.mxu0 0.0
        %2706 = vmatpush1.msra.mxu0 0.0
        %2707 = vmatprep.subr.mxu0 0.0
        %2708 = vmatpush1.msra.mxu0 0.0
        %2709 = vmatprep.subr.mxu0 0.0
        %2710 = vmatpush1.msra.mxu0 0.0
        %2711 = vmatprep.subr.mxu0 0.0
        %2712 = vmatpush1.msra.mxu0 0.0
        %2713 = vmatprep.subr.mxu0 0.0
        %2714 = vmatpush1.msra.mxu0 0.0
        %2715 = vmatprep.subr.mxu0 0.0
        %2716 = vmatpush1.msra.mxu0 0.0
        %2717 = vmatprep.subr.mxu0 0.0
        %2718 = vmatpush1.msra.mxu0 0.0
        %2719 = vmatprep.subr.mxu0 0.0
        %2720 = vmatpush1.msra.mxu0 0.0
        %2721 = vmatprep.subr.mxu0 0.0
        %2722 = vmatpush1.msra.mxu0 0.0
        %2723 = vmatprep.mubr.f32.mxu0 0.0
        %v2724 = vand.u32 %v2563, 4294901760
        %2725 = vmatmul.mubr.f32.gmra.mrb[0].mxu0 %v2724
        %v2726 = vpop.f32.mrb[0].mxu0
        %v2727 = vadd.f32 %v2641, %v2726
        %v2728 = vpop.f32.mrb[0].mxu0
        %2729 = vmatprep.mubr.f32.mxu0 0.0
        %v2730 = vand.u32 %v2566, 4294901760
        %2731 = vmatmul.mubr.f32.gmra.mrb[0].mxu0 %v2730
        %v2732 = vpop.f32.mrb[0].mxu0
        %v2733 = vadd.f32 %v2651, %v2732
        %v2734 = vpop.f32.mrb[0].mxu0
        %2735 = vdwg.mxu0
        %2736 = vmatprep.subr.mxu0 0.0
        %v2737 = vand.u32 %v2036, 4294901760
        %v2738 = vsub.f32 %v2036, %v2737
        %2739 = vmatpush1.msra.mxu0 %v2738
        %2740 = vmatprep.subr.mxu0 0.0
        %2741 = vmatpush1.msra.mxu0 0.0
        %2742 = vmatprep.subr.mxu0 0.0
        %2743 = vmatpush1.msra.mxu0 0.0
        %2744 = vmatprep.subr.mxu0 0.0
        %2745 = vmatpush1.msra.mxu0 0.0
        %2746 = vmatprep.subr.mxu0 0.0
        %2747 = vmatpush1.msra.mxu0 0.0
        %2748 = vmatprep.subr.mxu0 0.0
        %2749 = vmatpush1.msra.mxu0 0.0
        %2750 = vmatprep.subr.mxu0 0.0
        %2751 = vmatpush1.msra.mxu0 0.0
        %2752 = vmatprep.subr.mxu0 0.0
        %2753 = vmatpush1.msra.mxu0 0.0
        %2754 = vmatprep.subr.mxu0 0.0
        %2755 = vmatpush1.msra.mxu0 0.0
        %2756 = vmatprep.subr.mxu0 0.0
        %2757 = vmatpush1.msra.mxu0 0.0
        %2758 = vmatprep.subr.mxu0 0.0
        %2759 = vmatpush1.msra.mxu0 0.0
        %2760 = vmatprep.subr.mxu0 0.0
        %2761 = vmatpush1.msra.mxu0 0.0
        %2762 = vmatprep.subr.mxu0 0.0
        %2763 = vmatpush1.msra.mxu0 0.0
        %2764 = vmatprep.subr.mxu0 0.0
        %2765 = vmatpush1.msra.mxu0 0.0
        %2766 = vmatprep.subr.mxu0 0.0
        %2767 = vmatpush1.msra.mxu0 0.0
        %2768 = vmatprep.subr.mxu0 0.0
        %2769 = vmatpush1.msra.mxu0 0.0
        %2770 = vmatprep.subr.mxu0 0.0
        %2771 = vmatpush1.msra.mxu0 0.0
        %2772 = vmatprep.subr.mxu0 0.0
        %2773 = vmatpush1.msra.mxu0 0.0
        %2774 = vmatprep.subr.mxu0 0.0
        %2775 = vmatpush1.msra.mxu0 0.0
        %2776 = vmatprep.subr.mxu0 0.0
        %2777 = vmatpush1.msra.mxu0 0.0
        %2778 = vmatprep.subr.mxu0 0.0
        %2779 = vmatpush1.msra.mxu0 0.0
        %2780 = vmatprep.subr.mxu0 0.0
        %2781 = vmatpush1.msra.mxu0 0.0
        %2782 = vmatprep.subr.mxu0 0.0
        %2783 = vmatpush1.msra.mxu0 0.0
        %2784 = vmatprep.subr.mxu0 0.0
        %2785 = vmatpush1.msra.mxu0 0.0
        %2786 = vmatprep.subr.mxu0 0.0
        %2787 = vmatpush1.msra.mxu0 0.0
        %2788 = vmatprep.subr.mxu0 0.0
        %2789 = vmatpush1.msra.mxu0 0.0
        %2790 = vmatprep.subr.mxu0 0.0
        %2791 = vmatpush1.msra.mxu0 0.0
        %2792 = vmatprep.subr.mxu0 0.0
        %2793 = vmatpush1.msra.mxu0 0.0
        %2794 = vmatprep.subr.mxu0 0.0
        %2795 = vmatpush1.msra.mxu0 0.0
        %2796 = vmatprep.subr.mxu0 0.0
        %2797 = vmatpush1.msra.mxu0 0.0
        %2798 = vmatprep.subr.mxu0 0.0
        %2799 = vmatpush1.msra.mxu0 0.0
        %2800 = vmatprep.subr.mxu0 0.0
        %2801 = vmatpush1.msra.mxu0 0.0
        %2802 = vmatprep.mubr.f32.mxu0 0.0
        %v2803 = vand.u32 %v2563, 4294901760
        %v2804 = vsub.f32 %v2563, %v2803
        %2805 = vmatmul.mubr.f32.gmra.mrb[0].mxu0 %v2804
        %v2806 = vpop.f32.mrb[0].mxu0
        %v2807 = vadd.f32 %v2727, %v2806
        %v2808 = vpop.f32.mrb[0].mxu0
        %2809 = vmatprep.mubr.f32.mxu0 0.0
        %v2810 = vand.u32 %v2566, 4294901760
        %v2811 = vsub.f32 %v2566, %v2810
        %2812 = vmatmul.mubr.f32.gmra.mrb[0].mxu0 %v2811
        %v2813 = vpop.f32.mrb[0].mxu0
        %v2814 = vadd.f32 %v2733, %v2813
        %v2815 = vpop.f32.mrb[0].mxu0
        %2816 = vdwg.mxu0
        %2817 = vmatprep.subr.mxu0 0.0
        %v2818 = vand.u32 %v2036, 4294901760
        %2819 = vmatpush1.msra.mxu0 %v2818
        %2820 = vmatprep.subr.mxu0 0.0
        %2821 = vmatpush1.msra.mxu0 0.0
        %2822 = vmatprep.subr.mxu0 0.0
        %2823 = vmatpush1.msra.mxu0 0.0
        %2824 = vmatprep.subr.mxu0 0.0
        %2825 = vmatpush1.msra.mxu0 0.0
        %2826 = vmatprep.subr.mxu0 0.0
        %2827 = vmatpush1.msra.mxu0 0.0
        %2828 = vmatprep.subr.mxu0 0.0
        %2829 = vmatpush1.msra.mxu0 0.0
        %2830 = vmatprep.subr.mxu0 0.0
        %2831 = vmatpush1.msra.mxu0 0.0
        %2832 = vmatprep.subr.mxu0 0.0
        %2833 = vmatpush1.msra.mxu0 0.0
        %2834 = vmatprep.subr.mxu0 0.0
        %2835 = vmatpush1.msra.mxu0 0.0
        %2836 = vmatprep.subr.mxu0 0.0
        %2837 = vmatpush1.msra.mxu0 0.0
        %2838 = vmatprep.subr.mxu0 0.0
        %2839 = vmatpush1.msra.mxu0 0.0
        %2840 = vmatprep.subr.mxu0 0.0
        %2841 = vmatpush1.msra.mxu0 0.0
        %2842 = vmatprep.subr.mxu0 0.0
        %2843 = vmatpush1.msra.mxu0 0.0
        %2844 = vmatprep.subr.mxu0 0.0
        %2845 = vmatpush1.msra.mxu0 0.0
        %2846 = vmatprep.subr.mxu0 0.0
        %2847 = vmatpush1.msra.mxu0 0.0
        %2848 = vmatprep.subr.mxu0 0.0
        %2849 = vmatpush1.msra.mxu0 0.0
        %2850 = vmatprep.subr.mxu0 0.0
        %2851 = vmatpush1.msra.mxu0 0.0
        %2852 = vmatprep.subr.mxu0 0.0
        %2853 = vmatpush1.msra.mxu0 0.0
        %2854 = vmatprep.subr.mxu0 0.0
        %2855 = vmatpush1.msra.mxu0 0.0
        %2856 = vmatprep.subr.mxu0 0.0
        %2857 = vmatpush1.msra.mxu0 0.0
        %2858 = vmatprep.subr.mxu0 0.0
        %2859 = vmatpush1.msra.mxu0 0.0
        %2860 = vmatprep.subr.mxu0 0.0
        %2861 = vmatpush1.msra.mxu0 0.0
        %2862 = vmatprep.subr.mxu0 0.0
        %2863 = vmatpush1.msra.mxu0 0.0
        %2864 = vmatprep.subr.mxu0 0.0
        %2865 = vmatpush1.msra.mxu0 0.0
        %2866 = vmatprep.subr.mxu0 0.0
        %2867 = vmatpush1.msra.mxu0 0.0
        %2868 = vmatprep.subr.mxu0 0.0
        %2869 = vmatpush1.msra.mxu0 0.0
        %2870 = vmatprep.subr.mxu0 0.0
        %2871 = vmatpush1.msra.mxu0 0.0
        %2872 = vmatprep.subr.mxu0 0.0
        %2873 = vmatpush1.msra.mxu0 0.0
        %2874 = vmatprep.subr.mxu0 0.0
        %2875 = vmatpush1.msra.mxu0 0.0
        %2876 = vmatprep.subr.mxu0 0.0
        %2877 = vmatpush1.msra.mxu0 0.0
        %2878 = vmatprep.subr.mxu0 0.0
        %2879 = vmatpush1.msra.mxu0 0.0
        %2880 = vmatprep.subr.mxu0 0.0
        %2881 = vmatpush1.msra.mxu0 0.0
        %2882 = vmatprep.mubr.f32.mxu0 0.0
        %v2883 = vand.u32 %v2563, 4294901760
        %v2884 = vsub.f32 %v2563, %v2883
        %v2885 = vand.u32 %v2884, 4294901760
        %2886 = vmatmul.mubr.f32.gmra.mrb[0].mxu0 %v2885
        %v2887 = vpop.f32.mrb[0].mxu0
        %v2888 = vadd.f32 %v2807, %v2887
        %v2889 = vpop.f32.mrb[0].mxu0
        %2890 = vmatprep.mubr.f32.mxu0 0.0
        %v2891 = vand.u32 %v2566, 4294901760
        %v2892 = vsub.f32 %v2566, %v2891
        %v2893 = vand.u32 %v2892, 4294901760
        %2894 = vmatmul.mubr.f32.gmra.mrb[0].mxu0 %v2893
        %v2895 = vpop.f32.mrb[0].mxu0
        %v2896 = vadd.f32 %v2814, %v2895
        %v2897 = vpop.f32.mrb[0].mxu0
        %2898 = vdwg.mxu0
        %2899 = vmatprep.subr.mxu0 0.0
        %v2900 = vand.u32 %v2036, 4294901760
        %v2901 = vsub.f32 %v2036, %v2900
        %v2902 = vand.u32 %v2901, 4294901760
        %2903 = vmatpush1.msra.mxu0 %v2902
        %2904 = vmatprep.subr.mxu0 0.0
        %2905 = vmatpush1.msra.mxu0 0.0
        %2906 = vmatprep.subr.mxu0 0.0
        %2907 = vmatpush1.msra.mxu0 0.0
        %2908 = vmatprep.subr.mxu0 0.0
        %2909 = vmatpush1.msra.mxu0 0.0
        %2910 = vmatprep.subr.mxu0 0.0
        %2911 = vmatpush1.msra.mxu0 0.0
        %2912 = vmatprep.subr.mxu0 0.0
        %2913 = vmatpush1.msra.mxu0 0.0
        %2914 = vmatprep.subr.mxu0 0.0
        %2915 = vmatpush1.msra.mxu0 0.0
        %2916 = vmatprep.subr.mxu0 0.0
        %2917 = vmatpush1.msra.mxu0 0.0
        %2918 = vmatprep.subr.mxu0 0.0
        %2919 = vmatpush1.msra.mxu0 0.0
        %2920 = vmatprep.subr.mxu0 0.0
        %2921 = vmatpush1.msra.mxu0 0.0
        %2922 = vmatprep.subr.mxu0 0.0
        %2923 = vmatpush1.msra.mxu0 0.0
        %2924 = vmatprep.subr.mxu0 0.0
        %2925 = vmatpush1.msra.mxu0 0.0
        %2926 = vmatprep.subr.mxu0 0.0
        %2927 = vmatpush1.msra.mxu0 0.0
        %2928 = vmatprep.subr.mxu0 0.0
        %2929 = vmatpush1.msra.mxu0 0.0
        %2930 = vmatprep.subr.mxu0 0.0
        %2931 = vmatpush1.msra.mxu0 0.0
        %2932 = vmatprep.subr.mxu0 0.0
        %2933 = vmatpush1.msra.mxu0 0.0
        %2934 = vmatprep.subr.mxu0 0.0
        %2935 = vmatpush1.msra.mxu0 0.0
        %2936 = vmatprep.subr.mxu0 0.0
        %2937 = vmatpush1.msra.mxu0 0.0
        %2938 = vmatprep.subr.mxu0 0.0
        %2939 = vmatpush1.msra.mxu0 0.0
        %2940 = vmatprep.subr.mxu0 0.0
        %2941 = vmatpush1.msra.mxu0 0.0
        %2942 = vmatprep.subr.mxu0 0.0
        %2943 = vmatpush1.msra.mxu0 0.0
        %2944 = vmatprep.subr.mxu0 0.0
        %2945 = vmatpush1.msra.mxu0 0.0
        %2946 = vmatprep.subr.mxu0 0.0
        %2947 = vmatpush1.msra.mxu0 0.0
        %2948 = vmatprep.subr.mxu0 0.0
        %2949 = vmatpush1.msra.mxu0 0.0
        %2950 = vmatprep.subr.mxu0 0.0
        %2951 = vmatpush1.msra.mxu0 0.0
        %2952 = vmatprep.subr.mxu0 0.0
        %2953 = vmatpush1.msra.mxu0 0.0
        %2954 = vmatprep.subr.mxu0 0.0
        %2955 = vmatpush1.msra.mxu0 0.0
        %2956 = vmatprep.subr.mxu0 0.0
        %2957 = vmatpush1.msra.mxu0 0.0
        %2958 = vmatprep.subr.mxu0 0.0
        %2959 = vmatpush1.msra.mxu0 0.0
        %2960 = vmatprep.subr.mxu0 0.0
        %2961 = vmatpush1.msra.mxu0 0.0
        %2962 = vmatprep.subr.mxu0 0.0
        %2963 = vmatpush1.msra.mxu0 0.0
        %2964 = vmatprep.subr.mxu0 0.0
        %2965 = vmatpush1.msra.mxu0 0.0
        %2966 = vmatprep.mubr.f32.mxu0 0.0
        %v2967 = vand.u32 %v2563, 4294901760
        %2968 = vmatmul.mubr.f32.gmra.mrb[0].mxu0 %v2967
        %v2969 = vpop.f32.mrb[0].mxu0
        %v2970 = vadd.f32 %v2888, %v2969
        %v2971 = vpop.f32.mrb[0].mxu0
        %2972 = vmatprep.mubr.f32.mxu0 0.0
        %v2973 = vand.u32 %v2566, 4294901760
        %2974 = vmatmul.mubr.f32.gmra.mrb[0].mxu0 %v2973
        %v2975 = vpop.f32.mrb[0].mxu0
        %v2976 = vadd.f32 %v2896, %v2975
        %v2977 = vpop.f32.mrb[0].mxu0
        %2978 = vdwg.mxu0
        %2979 = vmatprep.subr.mxu0 0.0
        %v2980 = vand.u32 %v2036, 4294901760
        %2981 = vmatpush1.msra.mxu0 %v2980
        %2982 = vmatprep.subr.mxu0 0.0
        %2983 = vmatpush1.msra.mxu0 0.0
        %2984 = vmatprep.subr.mxu0 0.0
        %2985 = vmatpush1.msra.mxu0 0.0
        %2986 = vmatprep.subr.mxu0 0.0
        %2987 = vmatpush1.msra.mxu0 0.0
        %2988 = vmatprep.subr.mxu0 0.0
        %2989 = vmatpush1.msra.mxu0 0.0
        %2990 = vmatprep.subr.mxu0 0.0
        %2991 = vmatpush1.msra.mxu0 0.0
        %2992 = vmatprep.subr.mxu0 0.0
        %2993 = vmatpush1.msra.mxu0 0.0
        %2994 = vmatprep.subr.mxu0 0.0
        %2995 = vmatpush1.msra.mxu0 0.0
        %2996 = vmatprep.subr.mxu0 0.0
        %2997 = vmatpush1.msra.mxu0 0.0
        %2998 = vmatprep.subr.mxu0 0.0
        %2999 = vmatpush1.msra.mxu0 0.0
        %3000 = vmatprep.subr.mxu0 0.0
        %3001 = vmatpush1.msra.mxu0 0.0
        %3002 = vmatprep.subr.mxu0 0.0
        %3003 = vmatpush1.msra.mxu0 0.0
        %3004 = vmatprep.subr.mxu0 0.0
        %3005 = vmatpush1.msra.mxu0 0.0
        %3006 = vmatprep.subr.mxu0 0.0
        %3007 = vmatpush1.msra.mxu0 0.0
        %3008 = vmatprep.subr.mxu0 0.0
        %3009 = vmatpush1.msra.mxu0 0.0
        %3010 = vmatprep.subr.mxu0 0.0
        %3011 = vmatpush1.msra.mxu0 0.0
        %3012 = vmatprep.subr.mxu0 0.0
        %3013 = vmatpush1.msra.mxu0 0.0
        %3014 = vmatprep.subr.mxu0 0.0
        %3015 = vmatpush1.msra.mxu0 0.0
        %3016 = vmatprep.subr.mxu0 0.0
        %3017 = vmatpush1.msra.mxu0 0.0
        %3018 = vmatprep.subr.mxu0 0.0
        %3019 = vmatpush1.msra.mxu0 0.0
        %3020 = vmatprep.subr.mxu0 0.0
        %3021 = vmatpush1.msra.mxu0 0.0
        %3022 = vmatprep.subr.mxu0 0.0
        %3023 = vmatpush1.msra.mxu0 0.0
        %3024 = vmatprep.subr.mxu0 0.0
        %3025 = vmatpush1.msra.mxu0 0.0
        %3026 = vmatprep.subr.mxu0 0.0
        %3027 = vmatpush1.msra.mxu0 0.0
        %3028 = vmatprep.subr.mxu0 0.0
        %3029 = vmatpush1.msra.mxu0 0.0
        %3030 = vmatprep.subr.mxu0 0.0
        %3031 = vmatpush1.msra.mxu0 0.0
        %3032 = vmatprep.subr.mxu0 0.0
        %3033 = vmatpush1.msra.mxu0 0.0
        %3034 = vmatprep.subr.mxu0 0.0
        %3035 = vmatpush1.msra.mxu0 0.0
        %3036 = vmatprep.subr.mxu0 0.0
        %3037 = vmatpush1.msra.mxu0 0.0
        %3038 = vmatprep.subr.mxu0 0.0
        %3039 = vmatpush1.msra.mxu0 0.0
        %3040 = vmatprep.subr.mxu0 0.0
        %3041 = vmatpush1.msra.mxu0 0.0
        %3042 = vmatprep.subr.mxu0 0.0
        %3043 = vmatpush1.msra.mxu0 0.0
        %3044 = vmatprep.mubr.f32.mxu0 0.0
        %v3045 = vand.u32 %v2563, 4294901760
        %3046 = vmatmul.mubr.f32.gmra.mrb[0].mxu0 %v3045
        %v3047 = vpop.f32.mrb[0].mxu0
        %v3048 = vadd.f32 %v2970, %v3047
        %v3049 = vpop.f32.mrb[0].mxu0
        %3050 = vmatprep.mubr.f32.mxu0 0.0
        %v3051 = vand.u32 %v2566, 4294901760
        %3052 = vmatmul.mubr.f32.gmra.mrb[0].mxu0 %v3051
        %v3053 = vpop.f32.mrb[0].mxu0
        %v3054 = vadd.f32 %v2976, %v3053
        %v3055 = vpop.f32.mrb[0].mxu0
        %3056 = vdwg.mxu0
        %3057 = vrot.lane.b32.xlu0 %v1130, 96
        %v3058 = vpop.permute.xlu0 %3057
        %3059 = vrot.lane.b32.xlu0 %v1136, 96
        %v3060 = vpop.permute.xlu0 %3059
        %3061 = vrot.lane.b32.xlu0 %v2034, 96
        %v3062 = vpop.permute.xlu0 %3061
        %v3063 = vsel %vm2038, %v3058, 0
        %v3065 = vsel %vm2038, %v3060, 0
        %v3067 = vsel %vm2038, %v3062, 0
        %3069 = vmatprep.subr.mxu0 0.0
        %v3070 = vand.u32 %v3067, 4294901760
        %3071 = vmatpush1.xpose.msra.mxu0 %v3070
        %3072 = vmatprep.subr.mxu0 0.0
        %3073 = vmatpush1.xpose.msra.mxu0 0.0
        %3074 = vmatprep.subr.mxu0 0.0
        %3075 = vmatpush1.xpose.msra.mxu0 0.0
        %3076 = vmatprep.subr.mxu0 0.0
        %3077 = vmatpush1.xpose.msra.mxu0 0.0
        %3078 = vmatprep.subr.mxu0 0.0
        %3079 = vmatpush1.xpose.msra.mxu0 0.0
        %3080 = vmatprep.subr.mxu0 0.0
        %3081 = vmatpush1.xpose.msra.mxu0 0.0
        %3082 = vmatprep.subr.mxu0 0.0
        %3083 = vmatpush1.xpose.msra.mxu0 0.0
        %3084 = vmatprep.subr.mxu0 0.0
        %3085 = vmatpush1.xpose.msra.mxu0 0.0
        %3086 = vmatprep.subr.mxu0 0.0
        %3087 = vmatpush1.xpose.msra.mxu0 0.0
        %3088 = vmatprep.subr.mxu0 0.0
        %3089 = vmatpush1.xpose.msra.mxu0 0.0
        %3090 = vmatprep.subr.mxu0 0.0
        %3091 = vmatpush1.xpose.msra.mxu0 0.0
        %3092 = vmatprep.subr.mxu0 0.0
        %3093 = vmatpush1.xpose.msra.mxu0 0.0
        %3094 = vmatprep.subr.mxu0 0.0
        %3095 = vmatpush1.xpose.msra.mxu0 0.0
        %3096 = vmatprep.subr.mxu0 0.0
        %3097 = vmatpush1.xpose.msra.mxu0 0.0
        %3098 = vmatprep.subr.mxu0 0.0
        %3099 = vmatpush1.xpose.msra.mxu0 0.0
        %3100 = vmatprep.subr.mxu0 0.0
        %3101 = vmatpush1.xpose.msra.mxu0 0.0
        %3102 = vmatprep.subr.mxu0 0.0
        %3103 = vmatpush1.xpose.msra.mxu0 0.0
        %3104 = vmatprep.subr.mxu0 0.0
        %3105 = vmatpush1.xpose.msra.mxu0 0.0
        %3106 = vmatprep.subr.mxu0 0.0
        %3107 = vmatpush1.xpose.msra.mxu0 0.0
        %3108 = vmatprep.subr.mxu0 0.0
        %3109 = vmatpush1.xpose.msra.mxu0 0.0
        %3110 = vmatprep.subr.mxu0 0.0
        %3111 = vmatpush1.xpose.msra.mxu0 0.0
        %3112 = vmatprep.subr.mxu0 0.0
        %3113 = vmatpush1.xpose.msra.mxu0 0.0
        %3114 = vmatprep.subr.mxu0 0.0
        %3115 = vmatpush1.xpose.msra.mxu0 0.0
        %3116 = vmatprep.subr.mxu0 0.0
        %3117 = vmatpush1.xpose.msra.mxu0 0.0
        %3118 = vmatprep.subr.mxu0 0.0
        %3119 = vmatpush1.xpose.msra.mxu0 0.0
        %3120 = vmatprep.subr.mxu0 0.0
        %3121 = vmatpush1.xpose.msra.mxu0 0.0
        %3122 = vmatprep.subr.mxu0 0.0
        %3123 = vmatpush1.xpose.msra.mxu0 0.0
        %3124 = vmatprep.subr.mxu0 0.0
        %3125 = vmatpush1.xpose.msra.mxu0 0.0
        %3126 = vmatprep.subr.mxu0 0.0
        %3127 = vmatpush1.xpose.msra.mxu0 0.0
        %3128 = vmatprep.subr.mxu0 0.0
        %3129 = vmatpush1.xpose.msra.mxu0 0.0
        %3130 = vmatprep.subr.mxu0 0.0
        %3131 = vmatpush1.xpose.msra.mxu0 0.0
        %3132 = vmatprep.subr.mxu0 0.0
        %3133 = vmatpush1.xpose.msra.mxu0 0.0
        %3134 = vmatprep.mubr.f32.mxu0 0.0
        %v3135 = vand.u32 %v3063, 4294901760
        %v3136 = vsub.f32 %v3063, %v3135
        %v3137 = vand.u32 %v3136, 4294901760
        %v3138 = vsub.f32 %v3136, %v3137
        %v3139 = vand.u32 %v3138, 4294901760
        %3140 = vmatmul.mubr.f32.gmra.mrb[0].mxu0 %v3139
        %v3141 = vpop.f32.mrb[0].mxu0
        %v3142 = vadd.f32 0.0, %v3141
        %v3143 = vpop.f32.mrb[0].mxu0
        %3144 = vmatprep.mubr.f32.mxu0 0.0
        %v3145 = vand.u32 %v3065, 4294901760
        %v3146 = vsub.f32 %v3065, %v3145
        %v3147 = vand.u32 %v3146, 4294901760
        %v3148 = vsub.f32 %v3146, %v3147
        %v3149 = vand.u32 %v3148, 4294901760
        %3150 = vmatmul.mubr.f32.gmra.mrb[0].mxu0 %v3149
        %v3151 = vpop.f32.mrb[0].mxu0
        %v3152 = vadd.f32 0.0, %v3151
        %v3153 = vpop.f32.mrb[0].mxu0
        %3154 = vdwg.mxu0
        %3155 = vmatprep.subr.mxu0 0.0
        %v3156 = vand.u32 %v3067, 4294901760
        %v3157 = vsub.f32 %v3067, %v3156
        %v3158 = vand.u32 %v3157, 4294901760
        %v3159 = vsub.f32 %v3157, %v3158
        %v3160 = vand.u32 %v3159, 4294901760
        %3161 = vmatpush1.xpose.msra.mxu0 %v3160
        %3162 = vmatprep.subr.mxu0 0.0
        %3163 = vmatpush1.xpose.msra.mxu0 0.0
        %3164 = vmatprep.subr.mxu0 0.0
        %3165 = vmatpush1.xpose.msra.mxu0 0.0
        %3166 = vmatprep.subr.mxu0 0.0
        %3167 = vmatpush1.xpose.msra.mxu0 0.0
        %3168 = vmatprep.subr.mxu0 0.0
        %3169 = vmatpush1.xpose.msra.mxu0 0.0
        %3170 = vmatprep.subr.mxu0 0.0
        %3171 = vmatpush1.xpose.msra.mxu0 0.0
        %3172 = vmatprep.subr.mxu0 0.0
        %3173 = vmatpush1.xpose.msra.mxu0 0.0
        %3174 = vmatprep.subr.mxu0 0.0
        %3175 = vmatpush1.xpose.msra.mxu0 0.0
        %3176 = vmatprep.subr.mxu0 0.0
        %3177 = vmatpush1.xpose.msra.mxu0 0.0
        %3178 = vmatprep.subr.mxu0 0.0
        %3179 = vmatpush1.xpose.msra.mxu0 0.0
        %3180 = vmatprep.subr.mxu0 0.0
        %3181 = vmatpush1.xpose.msra.mxu0 0.0
        %3182 = vmatprep.subr.mxu0 0.0
        %3183 = vmatpush1.xpose.msra.mxu0 0.0
        %3184 = vmatprep.subr.mxu0 0.0
        %3185 = vmatpush1.xpose.msra.mxu0 0.0
        %3186 = vmatprep.subr.mxu0 0.0
        %3187 = vmatpush1.xpose.msra.mxu0 0.0
        %3188 = vmatprep.subr.mxu0 0.0
        %3189 = vmatpush1.xpose.msra.mxu0 0.0
        %3190 = vmatprep.subr.mxu0 0.0
        %3191 = vmatpush1.xpose.msra.mxu0 0.0
        %3192 = vmatprep.subr.mxu0 0.0
        %3193 = vmatpush1.xpose.msra.mxu0 0.0
        %3194 = vmatprep.subr.mxu0 0.0
        %3195 = vmatpush1.xpose.msra.mxu0 0.0
        %3196 = vmatprep.subr.mxu0 0.0
        %3197 = vmatpush1.xpose.msra.mxu0 0.0
        %3198 = vmatprep.subr.mxu0 0.0
        %3199 = vmatpush1.xpose.msra.mxu0 0.0
        %3200 = vmatprep.subr.mxu0 0.0
        %3201 = vmatpush1.xpose.msra.mxu0 0.0
        %3202 = vmatprep.subr.mxu0 0.0
        %3203 = vmatpush1.xpose.msra.mxu0 0.0
        %3204 = vmatprep.subr.mxu0 0.0
        %3205 = vmatpush1.xpose.msra.mxu0 0.0
        %3206 = vmatprep.subr.mxu0 0.0
        %3207 = vmatpush1.xpose.msra.mxu0 0.0
        %3208 = vmatprep.subr.mxu0 0.0
        %3209 = vmatpush1.xpose.msra.mxu0 0.0
        %3210 = vmatprep.subr.mxu0 0.0
        %3211 = vmatpush1.xpose.msra.mxu0 0.0
        %3212 = vmatprep.subr.mxu0 0.0
        %3213 = vmatpush1.xpose.msra.mxu0 0.0
        %3214 = vmatprep.subr.mxu0 0.0
        %3215 = vmatpush1.xpose.msra.mxu0 0.0
        %3216 = vmatprep.subr.mxu0 0.0
        %3217 = vmatpush1.xpose.msra.mxu0 0.0
        %3218 = vmatprep.subr.mxu0 0.0
        %3219 = vmatpush1.xpose.msra.mxu0 0.0
        %3220 = vmatprep.subr.mxu0 0.0
        %3221 = vmatpush1.xpose.msra.mxu0 0.0
        %3222 = vmatprep.subr.mxu0 0.0
        %3223 = vmatpush1.xpose.msra.mxu0 0.0
        %3224 = vmatprep.mubr.f32.mxu0 0.0
        %v3225 = vand.u32 %v3063, 4294901760
        %3226 = vmatmul.mubr.f32.gmra.mrb[0].mxu0 %v3225
        %v3227 = vpop.f32.mrb[0].mxu0
        %v3228 = vadd.f32 %v3142, %v3227
        %v3229 = vpop.f32.mrb[0].mxu0
        %3230 = vmatprep.mubr.f32.mxu0 0.0
        %v3231 = vand.u32 %v3065, 4294901760
        %3232 = vmatmul.mubr.f32.gmra.mrb[0].mxu0 %v3231
        %v3233 = vpop.f32.mrb[0].mxu0
        %v3234 = vadd.f32 %v3152, %v3233
        %v3235 = vpop.f32.mrb[0].mxu0
        %3236 = vdwg.mxu0
        %3237 = vmatprep.subr.mxu0 0.0
        %v3238 = vand.u32 %v3067, 4294901760
        %v3239 = vsub.f32 %v3067, %v3238
        %3240 = vmatpush1.xpose.msra.mxu0 %v3239
        %3241 = vmatprep.subr.mxu0 0.0
        %3242 = vmatpush1.xpose.msra.mxu0 0.0
        %3243 = vmatprep.subr.mxu0 0.0
        %3244 = vmatpush1.xpose.msra.mxu0 0.0
        %3245 = vmatprep.subr.mxu0 0.0
        %3246 = vmatpush1.xpose.msra.mxu0 0.0
        %3247 = vmatprep.subr.mxu0 0.0
        %3248 = vmatpush1.xpose.msra.mxu0 0.0
        %3249 = vmatprep.subr.mxu0 0.0
        %3250 = vmatpush1.xpose.msra.mxu0 0.0
        %3251 = vmatprep.subr.mxu0 0.0
        %3252 = vmatpush1.xpose.msra.mxu0 0.0
        %3253 = vmatprep.subr.mxu0 0.0
        %3254 = vmatpush1.xpose.msra.mxu0 0.0
        %3255 = vmatprep.subr.mxu0 0.0
        %3256 = vmatpush1.xpose.msra.mxu0 0.0
        %3257 = vmatprep.subr.mxu0 0.0
        %3258 = vmatpush1.xpose.msra.mxu0 0.0
        %3259 = vmatprep.subr.mxu0 0.0
        %3260 = vmatpush1.xpose.msra.mxu0 0.0
        %3261 = vmatprep.subr.mxu0 0.0
        %3262 = vmatpush1.xpose.msra.mxu0 0.0
        %3263 = vmatprep.subr.mxu0 0.0
        %3264 = vmatpush1.xpose.msra.mxu0 0.0
        %3265 = vmatprep.subr.mxu0 0.0
        %3266 = vmatpush1.xpose.msra.mxu0 0.0
        %3267 = vmatprep.subr.mxu0 0.0
        %3268 = vmatpush1.xpose.msra.mxu0 0.0
        %3269 = vmatprep.subr.mxu0 0.0
        %3270 = vmatpush1.xpose.msra.mxu0 0.0
        %3271 = vmatprep.subr.mxu0 0.0
        %3272 = vmatpush1.xpose.msra.mxu0 0.0
        %3273 = vmatprep.subr.mxu0 0.0
        %3274 = vmatpush1.xpose.msra.mxu0 0.0
        %3275 = vmatprep.subr.mxu0 0.0
        %3276 = vmatpush1.xpose.msra.mxu0 0.0
        %3277 = vmatprep.subr.mxu0 0.0
        %3278 = vmatpush1.xpose.msra.mxu0 0.0
        %3279 = vmatprep.subr.mxu0 0.0
        %3280 = vmatpush1.xpose.msra.mxu0 0.0
        %3281 = vmatprep.subr.mxu0 0.0
        %3282 = vmatpush1.xpose.msra.mxu0 0.0
        %3283 = vmatprep.subr.mxu0 0.0
        %3284 = vmatpush1.xpose.msra.mxu0 0.0
        %3285 = vmatprep.subr.mxu0 0.0
        %3286 = vmatpush1.xpose.msra.mxu0 0.0
        %3287 = vmatprep.subr.mxu0 0.0
        %3288 = vmatpush1.xpose.msra.mxu0 0.0
        %3289 = vmatprep.subr.mxu0 0.0
        %3290 = vmatpush1.xpose.msra.mxu0 0.0
        %3291 = vmatprep.subr.mxu0 0.0
        %3292 = vmatpush1.xpose.msra.mxu0 0.0
        %3293 = vmatprep.subr.mxu0 0.0
        %3294 = vmatpush1.xpose.msra.mxu0 0.0
        %3295 = vmatprep.subr.mxu0 0.0
        %3296 = vmatpush1.xpose.msra.mxu0 0.0
        %3297 = vmatprep.subr.mxu0 0.0
        %3298 = vmatpush1.xpose.msra.mxu0 0.0
        %3299 = vmatprep.subr.mxu0 0.0
        %3300 = vmatpush1.xpose.msra.mxu0 0.0
        %3301 = vmatprep.subr.mxu0 0.0
        %3302 = vmatpush1.xpose.msra.mxu0 0.0
        %3303 = vmatprep.mubr.f32.mxu0 0.0
        %v3304 = vand.u32 %v3063, 4294901760
        %v3305 = vsub.f32 %v3063, %v3304
        %3306 = vmatmul.mubr.f32.gmra.mrb[0].mxu0 %v3305
        %v3307 = vpop.f32.mrb[0].mxu0
        %v3308 = vadd.f32 %v3228, %v3307
        %v3309 = vpop.f32.mrb[0].mxu0
        %3310 = vmatprep.mubr.f32.mxu0 0.0
        %v3311 = vand.u32 %v3065, 4294901760
        %v3312 = vsub.f32 %v3065, %v3311
        %3313 = vmatmul.mubr.f32.gmra.mrb[0].mxu0 %v3312
        %v3314 = vpop.f32.mrb[0].mxu0
        %v3315 = vadd.f32 %v3234, %v3314
        %v3316 = vpop.f32.mrb[0].mxu0
        %3317 = vdwg.mxu0
        %3318 = vmatprep.subr.mxu0 0.0
        %v3319 = vand.u32 %v3067, 4294901760
        %3320 = vmatpush1.xpose.msra.mxu0 %v3319
        %3321 = vmatprep.subr.mxu0 0.0
        %3322 = vmatpush1.xpose.msra.mxu0 0.0
        %3323 = vmatprep.subr.mxu0 0.0
        %3324 = vmatpush1.xpose.msra.mxu0 0.0
        %3325 = vmatprep.subr.mxu0 0.0
        %3326 = vmatpush1.xpose.msra.mxu0 0.0
        %3327 = vmatprep.subr.mxu0 0.0
        %3328 = vmatpush1.xpose.msra.mxu0 0.0
        %3329 = vmatprep.subr.mxu0 0.0
        %3330 = vmatpush1.xpose.msra.mxu0 0.0
        %3331 = vmatprep.subr.mxu0 0.0
        %3332 = vmatpush1.xpose.msra.mxu0 0.0
        %3333 = vmatprep.subr.mxu0 0.0
        %3334 = vmatpush1.xpose.msra.mxu0 0.0
        %3335 = vmatprep.subr.mxu0 0.0
        %3336 = vmatpush1.xpose.msra.mxu0 0.0
        %3337 = vmatprep.subr.mxu0 0.0
        %3338 = vmatpush1.xpose.msra.mxu0 0.0
        %3339 = vmatprep.subr.mxu0 0.0
        %3340 = vmatpush1.xpose.msra.mxu0 0.0
        %3341 = vmatprep.subr.mxu0 0.0
        %3342 = vmatpush1.xpose.msra.mxu0 0.0
        %3343 = vmatprep.subr.mxu0 0.0
        %3344 = vmatpush1.xpose.msra.mxu0 0.0
        %3345 = vmatprep.subr.mxu0 0.0
        %3346 = vmatpush1.xpose.msra.mxu0 0.0
        %3347 = vmatprep.subr.mxu0 0.0
        %3348 = vmatpush1.xpose.msra.mxu0 0.0
        %3349 = vmatprep.subr.mxu0 0.0
        %3350 = vmatpush1.xpose.msra.mxu0 0.0
        %3351 = vmatprep.subr.mxu0 0.0
        %3352 = vmatpush1.xpose.msra.mxu0 0.0
        %3353 = vmatprep.subr.mxu0 0.0
        %3354 = vmatpush1.xpose.msra.mxu0 0.0
        %3355 = vmatprep.subr.mxu0 0.0
        %3356 = vmatpush1.xpose.msra.mxu0 0.0
        %3357 = vmatprep.subr.mxu0 0.0
        %3358 = vmatpush1.xpose.msra.mxu0 0.0
        %3359 = vmatprep.subr.mxu0 0.0
        %3360 = vmatpush1.xpose.msra.mxu0 0.0
        %3361 = vmatprep.subr.mxu0 0.0
        %3362 = vmatpush1.xpose.msra.mxu0 0.0
        %3363 = vmatprep.subr.mxu0 0.0
        %3364 = vmatpush1.xpose.msra.mxu0 0.0
        %3365 = vmatprep.subr.mxu0 0.0
        %3366 = vmatpush1.xpose.msra.mxu0 0.0
        %3367 = vmatprep.subr.mxu0 0.0
        %3368 = vmatpush1.xpose.msra.mxu0 0.0
        %3369 = vmatprep.subr.mxu0 0.0
        %3370 = vmatpush1.xpose.msra.mxu0 0.0
        %3371 = vmatprep.subr.mxu0 0.0
        %3372 = vmatpush1.xpose.msra.mxu0 0.0
        %3373 = vmatprep.subr.mxu0 0.0
        %3374 = vmatpush1.xpose.msra.mxu0 0.0
        %3375 = vmatprep.subr.mxu0 0.0
        %3376 = vmatpush1.xpose.msra.mxu0 0.0
        %3377 = vmatprep.subr.mxu0 0.0
        %3378 = vmatpush1.xpose.msra.mxu0 0.0
        %3379 = vmatprep.subr.mxu0 0.0
        %3380 = vmatpush1.xpose.msra.mxu0 0.0
        %3381 = vmatprep.subr.mxu0 0.0
        %3382 = vmatpush1.xpose.msra.mxu0 0.0
        %3383 = vmatprep.mubr.f32.mxu0 0.0
        %v3384 = vand.u32 %v3063, 4294901760
        %v3385 = vsub.f32 %v3063, %v3384
        %v3386 = vand.u32 %v3385, 4294901760
        %3387 = vmatmul.mubr.f32.gmra.mrb[0].mxu0 %v3386
        %v3388 = vpop.f32.mrb[0].mxu0
        %v3389 = vadd.f32 %v3308, %v3388
        %v3390 = vpop.f32.mrb[0].mxu0
        %3391 = vmatprep.mubr.f32.mxu0 0.0
        %v3392 = vand.u32 %v3065, 4294901760
        %v3393 = vsub.f32 %v3065, %v3392
        %v3394 = vand.u32 %v3393, 4294901760
        %3395 = vmatmul.mubr.f32.gmra.mrb[0].mxu0 %v3394
        %v3396 = vpop.f32.mrb[0].mxu0
        %v3397 = vadd.f32 %v3315, %v3396
        %v3398 = vpop.f32.mrb[0].mxu0
        %3399 = vdwg.mxu0
        %3400 = vmatprep.subr.mxu0 0.0
        %v3401 = vand.u32 %v3067, 4294901760
        %v3402 = vsub.f32 %v3067, %v3401
        %v3403 = vand.u32 %v3402, 4294901760
        %3404 = vmatpush1.xpose.msra.mxu0 %v3403
        %3405 = vmatprep.subr.mxu0 0.0
        %3406 = vmatpush1.xpose.msra.mxu0 0.0
        %3407 = vmatprep.subr.mxu0 0.0
        %3408 = vmatpush1.xpose.msra.mxu0 0.0
        %3409 = vmatprep.subr.mxu0 0.0
        %3410 = vmatpush1.xpose.msra.mxu0 0.0
        %3411 = vmatprep.subr.mxu0 0.0
        %3412 = vmatpush1.xpose.msra.mxu0 0.0
        %3413 = vmatprep.subr.mxu0 0.0
        %3414 = vmatpush1.xpose.msra.mxu0 0.0
        %3415 = vmatprep.subr.mxu0 0.0
        %3416 = vmatpush1.xpose.msra.mxu0 0.0
        %3417 = vmatprep.subr.mxu0 0.0
        %3418 = vmatpush1.xpose.msra.mxu0 0.0
        %3419 = vmatprep.subr.mxu0 0.0
        %3420 = vmatpush1.xpose.msra.mxu0 0.0
        %3421 = vmatprep.subr.mxu0 0.0
        %3422 = vmatpush1.xpose.msra.mxu0 0.0
        %3423 = vmatprep.subr.mxu0 0.0
        %3424 = vmatpush1.xpose.msra.mxu0 0.0
        %3425 = vmatprep.subr.mxu0 0.0
        %3426 = vmatpush1.xpose.msra.mxu0 0.0
        %3427 = vmatprep.subr.mxu0 0.0
        %3428 = vmatpush1.xpose.msra.mxu0 0.0
        %3429 = vmatprep.subr.mxu0 0.0
        %3430 = vmatpush1.xpose.msra.mxu0 0.0
        %3431 = vmatprep.subr.mxu0 0.0
        %3432 = vmatpush1.xpose.msra.mxu0 0.0
        %3433 = vmatprep.subr.mxu0 0.0
        %3434 = vmatpush1.xpose.msra.mxu0 0.0
        %3435 = vmatprep.subr.mxu0 0.0
        %3436 = vmatpush1.xpose.msra.mxu0 0.0
        %3437 = vmatprep.subr.mxu0 0.0
        %3438 = vmatpush1.xpose.msra.mxu0 0.0
        %3439 = vmatprep.subr.mxu0 0.0
        %3440 = vmatpush1.xpose.msra.mxu0 0.0
        %3441 = vmatprep.subr.mxu0 0.0
        %3442 = vmatpush1.xpose.msra.mxu0 0.0
        %3443 = vmatprep.subr.mxu0 0.0
        %3444 = vmatpush1.xpose.msra.mxu0 0.0
        %3445 = vmatprep.subr.mxu0 0.0
        %3446 = vmatpush1.xpose.msra.mxu0 0.0
        %3447 = vmatprep.subr.mxu0 0.0
        %3448 = vmatpush1.xpose.msra.mxu0 0.0
        %3449 = vmatprep.subr.mxu0 0.0
        %3450 = vmatpush1.xpose.msra.mxu0 0.0
        %3451 = vmatprep.subr.mxu0 0.0
        %3452 = vmatpush1.xpose.msra.mxu0 0.0
        %3453 = vmatprep.subr.mxu0 0.0
        %3454 = vmatpush1.xpose.msra.mxu0 0.0
        %3455 = vmatprep.subr.mxu0 0.0
        %3456 = vmatpush1.xpose.msra.mxu0 0.0
        %3457 = vmatprep.subr.mxu0 0.0
        %3458 = vmatpush1.xpose.msra.mxu0 0.0
        %3459 = vmatprep.subr.mxu0 0.0
        %3460 = vmatpush1.xpose.msra.mxu0 0.0
        %3461 = vmatprep.subr.mxu0 0.0
        %3462 = vmatpush1.xpose.msra.mxu0 0.0
        %3463 = vmatprep.subr.mxu0 0.0
        %3464 = vmatpush1.xpose.msra.mxu0 0.0
        %3465 = vmatprep.subr.mxu0 0.0
        %3466 = vmatpush1.xpose.msra.mxu0 0.0
        %3467 = vmatprep.mubr.f32.mxu0 0.0
        %v3468 = vand.u32 %v3063, 4294901760
        %3469 = vmatmul.mubr.f32.gmra.mrb[0].mxu0 %v3468
        %v3470 = vpop.f32.mrb[0].mxu0
        %v3471 = vadd.f32 %v3389, %v3470
        %v3472 = vpop.f32.mrb[0].mxu0
        %3473 = vmatprep.mubr.f32.mxu0 0.0
        %v3474 = vand.u32 %v3065, 4294901760
        %3475 = vmatmul.mubr.f32.gmra.mrb[0].mxu0 %v3474
        %v3476 = vpop.f32.mrb[0].mxu0
        %v3477 = vadd.f32 %v3397, %v3476
        %v3478 = vpop.f32.mrb[0].mxu0
        %3479 = vdwg.mxu0
        %3480 = vmatprep.subr.mxu0 0.0
        %v3481 = vand.u32 %v3067, 4294901760
        %3482 = vmatpush1.xpose.msra.mxu0 %v3481
        %3483 = vmatprep.subr.mxu0 0.0
        %3484 = vmatpush1.xpose.msra.mxu0 0.0
        %3485 = vmatprep.subr.mxu0 0.0
        %3486 = vmatpush1.xpose.msra.mxu0 0.0
        %3487 = vmatprep.subr.mxu0 0.0
        %3488 = vmatpush1.xpose.msra.mxu0 0.0
        %3489 = vmatprep.subr.mxu0 0.0
        %3490 = vmatpush1.xpose.msra.mxu0 0.0
        %3491 = vmatprep.subr.mxu0 0.0
        %3492 = vmatpush1.xpose.msra.mxu0 0.0
        %3493 = vmatprep.subr.mxu0 0.0
        %3494 = vmatpush1.xpose.msra.mxu0 0.0
        %3495 = vmatprep.subr.mxu0 0.0
        %3496 = vmatpush1.xpose.msra.mxu0 0.0
        %3497 = vmatprep.subr.mxu0 0.0
        %3498 = vmatpush1.xpose.msra.mxu0 0.0
        %3499 = vmatprep.subr.mxu0 0.0
        %3500 = vmatpush1.xpose.msra.mxu0 0.0
        %3501 = vmatprep.subr.mxu0 0.0
        %3502 = vmatpush1.xpose.msra.mxu0 0.0
        %3503 = vmatprep.subr.mxu0 0.0
        %3504 = vmatpush1.xpose.msra.mxu0 0.0
        %3505 = vmatprep.subr.mxu0 0.0
        %3506 = vmatpush1.xpose.msra.mxu0 0.0
        %3507 = vmatprep.subr.mxu0 0.0
        %3508 = vmatpush1.xpose.msra.mxu0 0.0
        %3509 = vmatprep.subr.mxu0 0.0
        %3510 = vmatpush1.xpose.msra.mxu0 0.0
        %3511 = vmatprep.subr.mxu0 0.0
        %3512 = vmatpush1.xpose.msra.mxu0 0.0
        %3513 = vmatprep.subr.mxu0 0.0
        %3514 = vmatpush1.xpose.msra.mxu0 0.0
        %3515 = vmatprep.subr.mxu0 0.0
        %3516 = vmatpush1.xpose.msra.mxu0 0.0
        %3517 = vmatprep.subr.mxu0 0.0
        %3518 = vmatpush1.xpose.msra.mxu0 0.0
        %3519 = vmatprep.subr.mxu0 0.0
        %3520 = vmatpush1.xpose.msra.mxu0 0.0
        %3521 = vmatprep.subr.mxu0 0.0
        %3522 = vmatpush1.xpose.msra.mxu0 0.0
        %3523 = vmatprep.subr.mxu0 0.0
        %3524 = vmatpush1.xpose.msra.mxu0 0.0
        %3525 = vmatprep.subr.mxu0 0.0
        %3526 = vmatpush1.xpose.msra.mxu0 0.0
        %3527 = vmatprep.subr.mxu0 0.0
        %3528 = vmatpush1.xpose.msra.mxu0 0.0
        %3529 = vmatprep.subr.mxu0 0.0
        %3530 = vmatpush1.xpose.msra.mxu0 0.0
        %3531 = vmatprep.subr.mxu0 0.0
        %3532 = vmatpush1.xpose.msra.mxu0 0.0
        %3533 = vmatprep.subr.mxu0 0.0
        %3534 = vmatpush1.xpose.msra.mxu0 0.0
        %3535 = vmatprep.subr.mxu0 0.0
        %3536 = vmatpush1.xpose.msra.mxu0 0.0
        %3537 = vmatprep.subr.mxu0 0.0
        %3538 = vmatpush1.xpose.msra.mxu0 0.0
        %3539 = vmatprep.subr.mxu0 0.0
        %3540 = vmatpush1.xpose.msra.mxu0 0.0
        %3541 = vmatprep.subr.mxu0 0.0
        %3542 = vmatpush1.xpose.msra.mxu0 0.0
        %3543 = vmatprep.subr.mxu0 0.0
        %3544 = vmatpush1.xpose.msra.mxu0 0.0
        %3545 = vmatprep.mubr.f32.mxu0 0.0
        %v3546 = vand.u32 %v3063, 4294901760
        %3547 = vmatmul.mubr.f32.gmra.mrb[0].mxu0 %v3546
        %v3548 = vpop.f32.mrb[0].mxu0
        %v3549 = vadd.f32 %v3471, %v3548
        %v3550 = vpop.f32.mrb[0].mxu0
        %3551 = vmatprep.mubr.f32.mxu0 0.0
        %v3552 = vand.u32 %v3065, 4294901760
        %3553 = vmatmul.mubr.f32.gmra.mrb[0].mxu0 %v3552
        %v3554 = vpop.f32.mrb[0].mxu0
        %v3555 = vadd.f32 %v3477, %v3554
        %v3556 = vpop.f32.mrb[0].mxu0
        %3557 = vdwg.mxu0
        %v3558 = vmul.f32 %v3549, 0.088388346
        %v3559 = vmul.f32 %v3555, 0.088388346
        %v3560 = vsel %vm2539, %v3558, -inf
        %3561 = vmax.xlane.f32.xlu0 %v3560
        %v3562 = vpop.xlane.xlu0 %3561
        %v3563 = vsel %vm2539, %v3559, -inf
        %3564 = vmax.xlane.f32.xlu0 %v3563
        %v3565 = vpop.xlane.xlu0 %3564
        %v3566 = vsub.f32 %v3558, %v3562
        %v3567 = vsub.f32 %v3559, %v3565
        %v3568 = vmul.f32 %v3566, 1.442695
        %v3569 = vpow.pop %v3568
        %v3570 = vmul.f32 %v3567, 1.442695
        %v3571 = vpow.pop %v3570
        %v3572 = vsel %vm2539, %v3569, 0.0
        %3573 = vadd.xlane.f32.xlu0 %v3572
        %v3574 = vpop.xlane.xlu0 %3573
        %v3575 = vsel %vm2539, %v3571, 0.0
        %3576 = vadd.xlane.f32.xlu0 %v3575
        %v3577 = vpop.xlane.xlu0 %3576
        %v3578 = vrcp.pop %v3574
        %v3579 = vmul.f32 %v3569, %v3578
        %v3580 = vrcp.pop %v3577
        %v3581 = vmul.f32 %v3571, %v3580
        %3583 = vrot.lane.b32.xlu0 %v2036, 96
        %v3584 = vpop.permute.xlu0 %3583
        %v3587 = vsel %vm2539, %v3579, 0
        %v3590 = vsel %vm2539, %v3581, 0
        %3592 = vmatprep.subr.mxu0 0.0
        %v3593 = vand.u32 %v3584, 4294901760
        %3594 = vmatpush1.msra.mxu0 %v3593
        %3595 = vmatprep.subr.mxu0 0.0
        %3596 = vmatpush1.msra.mxu0 0.0
        %3597 = vmatprep.subr.mxu0 0.0
        %3598 = vmatpush1.msra.mxu0 0.0
        %3599 = vmatprep.subr.mxu0 0.0
        %3600 = vmatpush1.msra.mxu0 0.0
        %3601 = vmatprep.subr.mxu0 0.0
        %3602 = vmatpush1.msra.mxu0 0.0
        %3603 = vmatprep.subr.mxu0 0.0
        %3604 = vmatpush1.msra.mxu0 0.0
        %3605 = vmatprep.subr.mxu0 0.0
        %3606 = vmatpush1.msra.mxu0 0.0
        %3607 = vmatprep.subr.mxu0 0.0
        %3608 = vmatpush1.msra.mxu0 0.0
        %3609 = vmatprep.subr.mxu0 0.0
        %3610 = vmatpush1.msra.mxu0 0.0
        %3611 = vmatprep.subr.mxu0 0.0
        %3612 = vmatpush1.msra.mxu0 0.0
        %3613 = vmatprep.subr.mxu0 0.0
        %3614 = vmatpush1.msra.mxu0 0.0
        %3615 = vmatprep.subr.mxu0 0.0
        %3616 = vmatpush1.msra.mxu0 0.0
        %3617 = vmatprep.subr.mxu0 0.0
        %3618 = vmatpush1.msra.mxu0 0.0
        %3619 = vmatprep.subr.mxu0 0.0
        %3620 = vmatpush1.msra.mxu0 0.0
        %3621 = vmatprep.subr.mxu0 0.0
        %3622 = vmatpush1.msra.mxu0 0.0
        %3623 = vmatprep.subr.mxu0 0.0
        %3624 = vmatpush1.msra.mxu0 0.0
        %3625 = vmatprep.subr.mxu0 0.0
        %3626 = vmatpush1.msra.mxu0 0.0
        %3627 = vmatprep.subr.mxu0 0.0
        %3628 = vmatpush1.msra.mxu0 0.0
        %3629 = vmatprep.subr.mxu0 0.0
        %3630 = vmatpush1.msra.mxu0 0.0
        %3631 = vmatprep.subr.mxu0 0.0
        %3632 = vmatpush1.msra.mxu0 0.0
        %3633 = vmatprep.subr.mxu0 0.0
        %3634 = vmatpush1.msra.mxu0 0.0
        %3635 = vmatprep.subr.mxu0 0.0
        %3636 = vmatpush1.msra.mxu0 0.0
        %3637 = vmatprep.subr.mxu0 0.0
        %3638 = vmatpush1.msra.mxu0 0.0
        %3639 = vmatprep.subr.mxu0 0.0
        %3640 = vmatpush1.msra.mxu0 0.0
        %3641 = vmatprep.subr.mxu0 0.0
        %3642 = vmatpush1.msra.mxu0 0.0
        %3643 = vmatprep.subr.mxu0 0.0
        %3644 = vmatpush1.msra.mxu0 0.0
        %3645 = vmatprep.subr.mxu0 0.0
        %3646 = vmatpush1.msra.mxu0 0.0
        %3647 = vmatprep.subr.mxu0 0.0
        %3648 = vmatpush1.msra.mxu0 0.0
        %3649 = vmatprep.subr.mxu0 0.0
        %3650 = vmatpush1.msra.mxu0 0.0
        %3651 = vmatprep.subr.mxu0 0.0
        %3652 = vmatpush1.msra.mxu0 0.0
        %3653 = vmatprep.subr.mxu0 0.0
        %3654 = vmatpush1.msra.mxu0 0.0
        %3655 = vmatprep.subr.mxu0 0.0
        %3656 = vmatpush1.msra.mxu0 0.0
        %3657 = vmatprep.mubr.f32.mxu0 0.0
        %v3658 = vand.u32 %v3587, 4294901760
        %v3659 = vsub.f32 %v3587, %v3658
        %v3660 = vand.u32 %v3659, 4294901760
        %v3661 = vsub.f32 %v3659, %v3660
        %v3662 = vand.u32 %v3661, 4294901760
        %3663 = vmatmul.mubr.f32.gmra.mrb[0].mxu0 %v3662
        %v3664 = vpop.f32.mrb[0].mxu0
        %v3665 = vadd.f32 0.0, %v3664
        %v3666 = vpop.f32.mrb[0].mxu0
        %3667 = vmatprep.mubr.f32.mxu0 0.0
        %v3668 = vand.u32 %v3590, 4294901760
        %v3669 = vsub.f32 %v3590, %v3668
        %v3670 = vand.u32 %v3669, 4294901760
        %v3671 = vsub.f32 %v3669, %v3670
        %v3672 = vand.u32 %v3671, 4294901760
        %3673 = vmatmul.mubr.f32.gmra.mrb[0].mxu0 %v3672
        %v3674 = vpop.f32.mrb[0].mxu0
        %v3675 = vadd.f32 0.0, %v3674
        %v3676 = vpop.f32.mrb[0].mxu0
        %3677 = vdwg.mxu0
        %3678 = vmatprep.subr.mxu0 0.0
        %v3679 = vand.u32 %v3584, 4294901760
        %v3680 = vsub.f32 %v3584, %v3679
        %v3681 = vand.u32 %v3680, 4294901760
        %v3682 = vsub.f32 %v3680, %v3681
        %v3683 = vand.u32 %v3682, 4294901760
        %3684 = vmatpush1.msra.mxu0 %v3683
        %3685 = vmatprep.subr.mxu0 0.0
        %3686 = vmatpush1.msra.mxu0 0.0
        %3687 = vmatprep.subr.mxu0 0.0
        %3688 = vmatpush1.msra.mxu0 0.0
        %3689 = vmatprep.subr.mxu0 0.0
        %3690 = vmatpush1.msra.mxu0 0.0
        %3691 = vmatprep.subr.mxu0 0.0
        %3692 = vmatpush1.msra.mxu0 0.0
        %3693 = vmatprep.subr.mxu0 0.0
        %3694 = vmatpush1.msra.mxu0 0.0
        %3695 = vmatprep.subr.mxu0 0.0
        %3696 = vmatpush1.msra.mxu0 0.0
        %3697 = vmatprep.subr.mxu0 0.0
        %3698 = vmatpush1.msra.mxu0 0.0
        %3699 = vmatprep.subr.mxu0 0.0
        %3700 = vmatpush1.msra.mxu0 0.0
        %3701 = vmatprep.subr.mxu0 0.0
        %3702 = vmatpush1.msra.mxu0 0.0
        %3703 = vmatprep.subr.mxu0 0.0
        %3704 = vmatpush1.msra.mxu0 0.0
        %3705 = vmatprep.subr.mxu0 0.0
        %3706 = vmatpush1.msra.mxu0 0.0
        %3707 = vmatprep.subr.mxu0 0.0
        %3708 = vmatpush1.msra.mxu0 0.0
        %3709 = vmatprep.subr.mxu0 0.0
        %3710 = vmatpush1.msra.mxu0 0.0
        %3711 = vmatprep.subr.mxu0 0.0
        %3712 = vmatpush1.msra.mxu0 0.0
        %3713 = vmatprep.subr.mxu0 0.0
        %3714 = vmatpush1.msra.mxu0 0.0
        %3715 = vmatprep.subr.mxu0 0.0
        %3716 = vmatpush1.msra.mxu0 0.0
        %3717 = vmatprep.subr.mxu0 0.0
        %3718 = vmatpush1.msra.mxu0 0.0
        %3719 = vmatprep.subr.mxu0 0.0
        %3720 = vmatpush1.msra.mxu0 0.0
        %3721 = vmatprep.subr.mxu0 0.0
        %3722 = vmatpush1.msra.mxu0 0.0
        %3723 = vmatprep.subr.mxu0 0.0
        %3724 = vmatpush1.msra.mxu0 0.0
        %3725 = vmatprep.subr.mxu0 0.0
        %3726 = vmatpush1.msra.mxu0 0.0
        %3727 = vmatprep.subr.mxu0 0.0
        %3728 = vmatpush1.msra.mxu0 0.0
        %3729 = vmatprep.subr.mxu0 0.0
        %3730 = vmatpush1.msra.mxu0 0.0
        %3731 = vmatprep.subr.mxu0 0.0
        %3732 = vmatpush1.msra.mxu0 0.0
        %3733 = vmatprep.subr.mxu0 0.0
        %3734 = vmatpush1.msra.mxu0 0.0
        %3735 = vmatprep.subr.mxu0 0.0
        %3736 = vmatpush1.msra.mxu0 0.0
        %3737 = vmatprep.subr.mxu0 0.0
        %3738 = vmatpush1.msra.mxu0 0.0
        %3739 = vmatprep.subr.mxu0 0.0
        %3740 = vmatpush1.msra.mxu0 0.0
        %3741 = vmatprep.subr.mxu0 0.0
        %3742 = vmatpush1.msra.mxu0 0.0
        %3743 = vmatprep.subr.mxu0 0.0
        %3744 = vmatpush1.msra.mxu0 0.0
        %3745 = vmatprep.subr.mxu0 0.0
        %3746 = vmatpush1.msra.mxu0 0.0
        %3747 = vmatprep.mubr.f32.mxu0 0.0
        %v3748 = vand.u32 %v3587, 4294901760
        %3749 = vmatmul.mubr.f32.gmra.mrb[0].mxu0 %v3748
        %v3750 = vpop.f32.mrb[0].mxu0
        %v3751 = vadd.f32 %v3665, %v3750
        %v3752 = vpop.f32.mrb[0].mxu0
        %3753 = vmatprep.mubr.f32.mxu0 0.0
        %v3754 = vand.u32 %v3590, 4294901760
        %3755 = vmatmul.mubr.f32.gmra.mrb[0].mxu0 %v3754
        %v3756 = vpop.f32.mrb[0].mxu0
        %v3757 = vadd.f32 %v3675, %v3756
        %v3758 = vpop.f32.mrb[0].mxu0
        %3759 = vdwg.mxu0
        %3760 = vmatprep.subr.mxu0 0.0
        %v3761 = vand.u32 %v3584, 4294901760
        %v3762 = vsub.f32 %v3584, %v3761
        %3763 = vmatpush1.msra.mxu0 %v3762
        %3764 = vmatprep.subr.mxu0 0.0
        %3765 = vmatpush1.msra.mxu0 0.0
        %3766 = vmatprep.subr.mxu0 0.0
        %3767 = vmatpush1.msra.mxu0 0.0
        %3768 = vmatprep.subr.mxu0 0.0
        %3769 = vmatpush1.msra.mxu0 0.0
        %3770 = vmatprep.subr.mxu0 0.0
        %3771 = vmatpush1.msra.mxu0 0.0
        %3772 = vmatprep.subr.mxu0 0.0
        %3773 = vmatpush1.msra.mxu0 0.0
        %3774 = vmatprep.subr.mxu0 0.0
        %3775 = vmatpush1.msra.mxu0 0.0
        %3776 = vmatprep.subr.mxu0 0.0
        %3777 = vmatpush1.msra.mxu0 0.0
        %3778 = vmatprep.subr.mxu0 0.0
        %3779 = vmatpush1.msra.mxu0 0.0
        %3780 = vmatprep.subr.mxu0 0.0
        %3781 = vmatpush1.msra.mxu0 0.0
        %3782 = vmatprep.subr.mxu0 0.0
        %3783 = vmatpush1.msra.mxu0 0.0
        %3784 = vmatprep.subr.mxu0 0.0
        %3785 = vmatpush1.msra.mxu0 0.0
        %3786 = vmatprep.subr.mxu0 0.0
        %3787 = vmatpush1.msra.mxu0 0.0
        %3788 = vmatprep.subr.mxu0 0.0
        %3789 = vmatpush1.msra.mxu0 0.0
        %3790 = vmatprep.subr.mxu0 0.0
        %3791 = vmatpush1.msra.mxu0 0.0
        %3792 = vmatprep.subr.mxu0 0.0
        %3793 = vmatpush1.msra.mxu0 0.0
        %3794 = vmatprep.subr.mxu0 0.0
        %3795 = vmatpush1.msra.mxu0 0.0
        %3796 = vmatprep.subr.mxu0 0.0
        %3797 = vmatpush1.msra.mxu0 0.0
        %3798 = vmatprep.subr.mxu0 0.0
        %3799 = vmatpush1.msra.mxu0 0.0
        %3800 = vmatprep.subr.mxu0 0.0
        %3801 = vmatpush1.msra.mxu0 0.0
        %3802 = vmatprep.subr.mxu0 0.0
        %3803 = vmatpush1.msra.mxu0 0.0
        %3804 = vmatprep.subr.mxu0 0.0
        %3805 = vmatpush1.msra.mxu0 0.0
        %3806 = vmatprep.subr.mxu0 0.0
        %3807 = vmatpush1.msra.mxu0 0.0
        %3808 = vmatprep.subr.mxu0 0.0
        %3809 = vmatpush1.msra.mxu0 0.0
        %3810 = vmatprep.subr.mxu0 0.0
        %3811 = vmatpush1.msra.mxu0 0.0
        %3812 = vmatprep.subr.mxu0 0.0
        %3813 = vmatpush1.msra.mxu0 0.0
        %3814 = vmatprep.subr.mxu0 0.0
        %3815 = vmatpush1.msra.mxu0 0.0
        %3816 = vmatprep.subr.mxu0 0.0
        %3817 = vmatpush1.msra.mxu0 0.0
        %3818 = vmatprep.subr.mxu0 0.0
        %3819 = vmatpush1.msra.mxu0 0.0
        %3820 = vmatprep.subr.mxu0 0.0
        %3821 = vmatpush1.msra.mxu0 0.0
        %3822 = vmatprep.subr.mxu0 0.0
        %3823 = vmatpush1.msra.mxu0 0.0
        %3824 = vmatprep.subr.mxu0 0.0
        %3825 = vmatpush1.msra.mxu0 0.0
        %3826 = vmatprep.mubr.f32.mxu0 0.0
        %v3827 = vand.u32 %v3587, 4294901760
        %v3828 = vsub.f32 %v3587, %v3827
        %3829 = vmatmul.mubr.f32.gmra.mrb[0].mxu0 %v3828
        %v3830 = vpop.f32.mrb[0].mxu0
        %v3831 = vadd.f32 %v3751, %v3830
        %v3832 = vpop.f32.mrb[0].mxu0
        %3833 = vmatprep.mubr.f32.mxu0 0.0
        %v3834 = vand.u32 %v3590, 4294901760
        %v3835 = vsub.f32 %v3590, %v3834
        %3836 = vmatmul.mubr.f32.gmra.mrb[0].mxu0 %v3835
        %v3837 = vpop.f32.mrb[0].mxu0
        %v3838 = vadd.f32 %v3757, %v3837
        %v3839 = vpop.f32.mrb[0].mxu0
        %3840 = vdwg.mxu0
        %3841 = vmatprep.subr.mxu0 0.0
        %v3842 = vand.u32 %v3584, 4294901760
        %3843 = vmatpush1.msra.mxu0 %v3842
        %3844 = vmatprep.subr.mxu0 0.0
        %3845 = vmatpush1.msra.mxu0 0.0
        %3846 = vmatprep.subr.mxu0 0.0
        %3847 = vmatpush1.msra.mxu0 0.0
        %3848 = vmatprep.subr.mxu0 0.0
        %3849 = vmatpush1.msra.mxu0 0.0
        %3850 = vmatprep.subr.mxu0 0.0
        %3851 = vmatpush1.msra.mxu0 0.0
        %3852 = vmatprep.subr.mxu0 0.0
        %3853 = vmatpush1.msra.mxu0 0.0
        %3854 = vmatprep.subr.mxu0 0.0
        %3855 = vmatpush1.msra.mxu0 0.0
        %3856 = vmatprep.subr.mxu0 0.0
        %3857 = vmatpush1.msra.mxu0 0.0
        %3858 = vmatprep.subr.mxu0 0.0
        %3859 = vmatpush1.msra.mxu0 0.0
        %3860 = vmatprep.subr.mxu0 0.0
        %3861 = vmatpush1.msra.mxu0 0.0
        %3862 = vmatprep.subr.mxu0 0.0
        %3863 = vmatpush1.msra.mxu0 0.0
        %3864 = vmatprep.subr.mxu0 0.0
        %3865 = vmatpush1.msra.mxu0 0.0
        %3866 = vmatprep.subr.mxu0 0.0
        %3867 = vmatpush1.msra.mxu0 0.0
        %3868 = vmatprep.subr.mxu0 0.0
        %3869 = vmatpush1.msra.mxu0 0.0
        %3870 = vmatprep.subr.mxu0 0.0
        %3871 = vmatpush1.msra.mxu0 0.0
        %3872 = vmatprep.subr.mxu0 0.0
        %3873 = vmatpush1.msra.mxu0 0.0
        %3874 = vmatprep.subr.mxu0 0.0
        %3875 = vmatpush1.msra.mxu0 0.0
        %3876 = vmatprep.subr.mxu0 0.0
        %3877 = vmatpush1.msra.mxu0 0.0
        %3878 = vmatprep.subr.mxu0 0.0
        %3879 = vmatpush1.msra.mxu0 0.0
        %3880 = vmatprep.subr.mxu0 0.0
        %3881 = vmatpush1.msra.mxu0 0.0
        %3882 = vmatprep.subr.mxu0 0.0
        %3883 = vmatpush1.msra.mxu0 0.0
        %3884 = vmatprep.subr.mxu0 0.0
        %3885 = vmatpush1.msra.mxu0 0.0
        %3886 = vmatprep.subr.mxu0 0.0
        %3887 = vmatpush1.msra.mxu0 0.0
        %3888 = vmatprep.subr.mxu0 0.0
        %3889 = vmatpush1.msra.mxu0 0.0
        %3890 = vmatprep.subr.mxu0 0.0
        %3891 = vmatpush1.msra.mxu0 0.0
        %3892 = vmatprep.subr.mxu0 0.0
        %3893 = vmatpush1.msra.mxu0 0.0
        %3894 = vmatprep.subr.mxu0 0.0
        %3895 = vmatpush1.msra.mxu0 0.0
        %3896 = vmatprep.subr.mxu0 0.0
        %3897 = vmatpush1.msra.mxu0 0.0
        %3898 = vmatprep.subr.mxu0 0.0
        %3899 = vmatpush1.msra.mxu0 0.0
        %3900 = vmatprep.subr.mxu0 0.0
        %3901 = vmatpush1.msra.mxu0 0.0
        %3902 = vmatprep.subr.mxu0 0.0
        %3903 = vmatpush1.msra.mxu0 0.0
        %3904 = vmatprep.subr.mxu0 0.0
        %3905 = vmatpush1.msra.mxu0 0.0
        %3906 = vmatprep.mubr.f32.mxu0 0.0
        %v3907 = vand.u32 %v3587, 4294901760
        %v3908 = vsub.f32 %v3587, %v3907
        %v3909 = vand.u32 %v3908, 4294901760
        %3910 = vmatmul.mubr.f32.gmra.mrb[0].mxu0 %v3909
        %v3911 = vpop.f32.mrb[0].mxu0
        %v3912 = vadd.f32 %v3831, %v3911
        %v3913 = vpop.f32.mrb[0].mxu0
        %3914 = vmatprep.mubr.f32.mxu0 0.0
        %v3915 = vand.u32 %v3590, 4294901760
        %v3916 = vsub.f32 %v3590, %v3915
        %v3917 = vand.u32 %v3916, 4294901760
        %3918 = vmatmul.mubr.f32.gmra.mrb[0].mxu0 %v3917
        %v3919 = vpop.f32.mrb[0].mxu0
        %v3920 = vadd.f32 %v3838, %v3919
        %v3921 = vpop.f32.mrb[0].mxu0
        %3922 = vdwg.mxu0
        %3923 = vmatprep.subr.mxu0 0.0
        %v3924 = vand.u32 %v3584, 4294901760
        %v3925 = vsub.f32 %v3584, %v3924
        %v3926 = vand.u32 %v3925, 4294901760
        %3927 = vmatpush1.msra.mxu0 %v3926
        %3928 = vmatprep.subr.mxu0 0.0
        %3929 = vmatpush1.msra.mxu0 0.0
        %3930 = vmatprep.subr.mxu0 0.0
        %3931 = vmatpush1.msra.mxu0 0.0
        %3932 = vmatprep.subr.mxu0 0.0
        %3933 = vmatpush1.msra.mxu0 0.0
        %3934 = vmatprep.subr.mxu0 0.0
        %3935 = vmatpush1.msra.mxu0 0.0
        %3936 = vmatprep.subr.mxu0 0.0
        %3937 = vmatpush1.msra.mxu0 0.0
        %3938 = vmatprep.subr.mxu0 0.0
        %3939 = vmatpush1.msra.mxu0 0.0
        %3940 = vmatprep.subr.mxu0 0.0
        %3941 = vmatpush1.msra.mxu0 0.0
        %3942 = vmatprep.subr.mxu0 0.0
        %3943 = vmatpush1.msra.mxu0 0.0
        %3944 = vmatprep.subr.mxu0 0.0
        %3945 = vmatpush1.msra.mxu0 0.0
        %3946 = vmatprep.subr.mxu0 0.0
        %3947 = vmatpush1.msra.mxu0 0.0
        %3948 = vmatprep.subr.mxu0 0.0
        %3949 = vmatpush1.msra.mxu0 0.0
        %3950 = vmatprep.subr.mxu0 0.0
        %3951 = vmatpush1.msra.mxu0 0.0
        %3952 = vmatprep.subr.mxu0 0.0
        %3953 = vmatpush1.msra.mxu0 0.0
        %3954 = vmatprep.subr.mxu0 0.0
        %3955 = vmatpush1.msra.mxu0 0.0
        %3956 = vmatprep.subr.mxu0 0.0
        %3957 = vmatpush1.msra.mxu0 0.0
        %3958 = vmatprep.subr.mxu0 0.0
        %3959 = vmatpush1.msra.mxu0 0.0
        %3960 = vmatprep.subr.mxu0 0.0
        %3961 = vmatpush1.msra.mxu0 0.0
        %3962 = vmatprep.subr.mxu0 0.0
        %3963 = vmatpush1.msra.mxu0 0.0
        %3964 = vmatprep.subr.mxu0 0.0
        %3965 = vmatpush1.msra.mxu0 0.0
        %3966 = vmatprep.subr.mxu0 0.0
        %3967 = vmatpush1.msra.mxu0 0.0
        %3968 = vmatprep.subr.mxu0 0.0
        %3969 = vmatpush1.msra.mxu0 0.0
        %3970 = vmatprep.subr.mxu0 0.0
        %3971 = vmatpush1.msra.mxu0 0.0
        %3972 = vmatprep.subr.mxu0 0.0
        %3973 = vmatpush1.msra.mxu0 0.0
        %3974 = vmatprep.subr.mxu0 0.0
        %3975 = vmatpush1.msra.mxu0 0.0
        %3976 = vmatprep.subr.mxu0 0.0
        %3977 = vmatpush1.msra.mxu0 0.0
        %3978 = vmatprep.subr.mxu0 0.0
        %3979 = vmatpush1.msra.mxu0 0.0
        %3980 = vmatprep.subr.mxu0 0.0
        %3981 = vmatpush1.msra.mxu0 0.0
        %3982 = vmatprep.subr.mxu0 0.0
        %3983 = vmatpush1.msra.mxu0 0.0
        %3984 = vmatprep.subr.mxu0 0.0
        %3985 = vmatpush1.msra.mxu0 0.0
        %3986 = vmatprep.subr.mxu0 0.0
        %3987 = vmatpush1.msra.mxu0 0.0
        %3988 = vmatprep.subr.mxu0 0.0
        %3989 = vmatpush1.msra.mxu0 0.0
        %3990 = vmatprep.mubr.f32.mxu0 0.0
        %v3991 = vand.u32 %v3587, 4294901760
        %3992 = vmatmul.mubr.f32.gmra.mrb[0].mxu0 %v3991
        %v3993 = vpop.f32.mrb[0].mxu0
        %v3994 = vadd.f32 %v3912, %v3993
        %v3995 = vpop.f32.mrb[0].mxu0
        %3996 = vmatprep.mubr.f32.mxu0 0.0
        %v3997 = vand.u32 %v3590, 4294901760
        %3998 = vmatmul.mubr.f32.gmra.mrb[0].mxu0 %v3997
        %v3999 = vpop.f32.mrb[0].mxu0
        %v4000 = vadd.f32 %v3920, %v3999
        %v4001 = vpop.f32.mrb[0].mxu0
        %4002 = vdwg.mxu0
        %4003 = vmatprep.subr.mxu0 0.0
        %v4004 = vand.u32 %v3584, 4294901760
        %4005 = vmatpush1.msra.mxu0 %v4004
        %4006 = vmatprep.subr.mxu0 0.0
        %4007 = vmatpush1.msra.mxu0 0.0
        %4008 = vmatprep.subr.mxu0 0.0
        %4009 = vmatpush1.msra.mxu0 0.0
        %4010 = vmatprep.subr.mxu0 0.0
        %4011 = vmatpush1.msra.mxu0 0.0
        %4012 = vmatprep.subr.mxu0 0.0
        %4013 = vmatpush1.msra.mxu0 0.0
        %4014 = vmatprep.subr.mxu0 0.0
        %4015 = vmatpush1.msra.mxu0 0.0
        %4016 = vmatprep.subr.mxu0 0.0
        %4017 = vmatpush1.msra.mxu0 0.0
        %4018 = vmatprep.subr.mxu0 0.0
        %4019 = vmatpush1.msra.mxu0 0.0
        %4020 = vmatprep.subr.mxu0 0.0
        %4021 = vmatpush1.msra.mxu0 0.0
        %4022 = vmatprep.subr.mxu0 0.0
        %4023 = vmatpush1.msra.mxu0 0.0
        %4024 = vmatprep.subr.mxu0 0.0
        %4025 = vmatpush1.msra.mxu0 0.0
        %4026 = vmatprep.subr.mxu0 0.0
        %4027 = vmatpush1.msra.mxu0 0.0
        %4028 = vmatprep.subr.mxu0 0.0
        %4029 = vmatpush1.msra.mxu0 0.0
        %4030 = vmatprep.subr.mxu0 0.0
        %4031 = vmatpush1.msra.mxu0 0.0
        %4032 = vmatprep.subr.mxu0 0.0
        %4033 = vmatpush1.msra.mxu0 0.0
        %4034 = vmatprep.subr.mxu0 0.0
        %4035 = vmatpush1.msra.mxu0 0.0
        %4036 = vmatprep.subr.mxu0 0.0
        %4037 = vmatpush1.msra.mxu0 0.0
        %4038 = vmatprep.subr.mxu0 0.0
        %4039 = vmatpush1.msra.mxu0 0.0
        %4040 = vmatprep.subr.mxu0 0.0
        %4041 = vmatpush1.msra.mxu0 0.0
        %4042 = vmatprep.subr.mxu0 0.0
        %4043 = vmatpush1.msra.mxu0 0.0
        %4044 = vmatprep.subr.mxu0 0.0
        %4045 = vmatpush1.msra.mxu0 0.0
        %4046 = vmatprep.subr.mxu0 0.0
        %4047 = vmatpush1.msra.mxu0 0.0
        %4048 = vmatprep.subr.mxu0 0.0
        %4049 = vmatpush1.msra.mxu0 0.0
        %4050 = vmatprep.subr.mxu0 0.0
        %4051 = vmatpush1.msra.mxu0 0.0
        %4052 = vmatprep.subr.mxu0 0.0
        %4053 = vmatpush1.msra.mxu0 0.0
        %4054 = vmatprep.subr.mxu0 0.0
        %4055 = vmatpush1.msra.mxu0 0.0
        %4056 = vmatprep.subr.mxu0 0.0
        %4057 = vmatpush1.msra.mxu0 0.0
        %4058 = vmatprep.subr.mxu0 0.0
        %4059 = vmatpush1.msra.mxu0 0.0
        %4060 = vmatprep.subr.mxu0 0.0
        %4061 = vmatpush1.msra.mxu0 0.0
        %4062 = vmatprep.subr.mxu0 0.0
        %4063 = vmatpush1.msra.mxu0 0.0
        %4064 = vmatprep.subr.mxu0 0.0
        %4065 = vmatpush1.msra.mxu0 0.0
        %4066 = vmatprep.subr.mxu0 0.0
        %4067 = vmatpush1.msra.mxu0 0.0
        %4068 = vmatprep.mubr.f32.mxu0 0.0
        %v4069 = vand.u32 %v3587, 4294901760
        %4070 = vmatmul.mubr.f32.gmra.mrb[0].mxu0 %v4069
        %v4071 = vpop.f32.mrb[0].mxu0
        %v4072 = vadd.f32 %v3994, %v4071
        %v4073 = vpop.f32.mrb[0].mxu0
        %4074 = vmatprep.mubr.f32.mxu0 0.0
        %v4075 = vand.u32 %v3590, 4294901760
        %4076 = vmatmul.mubr.f32.gmra.mrb[0].mxu0 %v4075
        %v4077 = vpop.f32.mrb[0].mxu0
        %v4078 = vadd.f32 %v4000, %v4077
        %v4079 = vpop.f32.mrb[0].mxu0
        %4080 = vdwg.mxu0
        %4081 = vrot.lane.b32.xlu0 %v1130, 64
        %v4082 = vpop.permute.xlu0 %4081
        %4083 = vrot.lane.b32.xlu0 %v1136, 64
        %v4084 = vpop.permute.xlu0 %4083
        %4085 = vrot.lane.b32.xlu0 %v2034, 64
        %v4086 = vpop.permute.xlu0 %4085
        %v4087 = vsel %vm2038, %v4082, 0
        %v4089 = vsel %vm2038, %v4084, 0
        %v4091 = vsel %vm2038, %v4086, 0
        %4093 = vmatprep.subr.mxu0 0.0
        %v4094 = vand.u32 %v4091, 4294901760
        %4095 = vmatpush1.xpose.msra.mxu0 %v4094
        %4096 = vmatprep.subr.mxu0 0.0
        %4097 = vmatpush1.xpose.msra.mxu0 0.0
        %4098 = vmatprep.subr.mxu0 0.0
        %4099 = vmatpush1.xpose.msra.mxu0 0.0
        %4100 = vmatprep.subr.mxu0 0.0
        %4101 = vmatpush1.xpose.msra.mxu0 0.0
        %4102 = vmatprep.subr.mxu0 0.0
        %4103 = vmatpush1.xpose.msra.mxu0 0.0
        %4104 = vmatprep.subr.mxu0 0.0
        %4105 = vmatpush1.xpose.msra.mxu0 0.0
        %4106 = vmatprep.subr.mxu0 0.0
        %4107 = vmatpush1.xpose.msra.mxu0 0.0
        %4108 = vmatprep.subr.mxu0 0.0
        %4109 = vmatpush1.xpose.msra.mxu0 0.0
        %4110 = vmatprep.subr.mxu0 0.0
        %4111 = vmatpush1.xpose.msra.mxu0 0.0
        %4112 = vmatprep.subr.mxu0 0.0
        %4113 = vmatpush1.xpose.msra.mxu0 0.0
        %4114 = vmatprep.subr.mxu0 0.0
        %4115 = vmatpush1.xpose.msra.mxu0 0.0
        %4116 = vmatprep.subr.mxu0 0.0
        %4117 = vmatpush1.xpose.msra.mxu0 0.0
        %4118 = vmatprep.subr.mxu0 0.0
        %4119 = vmatpush1.xpose.msra.mxu0 0.0
        %4120 = vmatprep.subr.mxu0 0.0
        %4121 = vmatpush1.xpose.msra.mxu0 0.0
        %4122 = vmatprep.subr.mxu0 0.0
        %4123 = vmatpush1.xpose.msra.mxu0 0.0
        %4124 = vmatprep.subr.mxu0 0.0
        %4125 = vmatpush1.xpose.msra.mxu0 0.0
        %4126 = vmatprep.subr.mxu0 0.0
        %4127 = vmatpush1.xpose.msra.mxu0 0.0
        %4128 = vmatprep.subr.mxu0 0.0
        %4129 = vmatpush1.xpose.msra.mxu0 0.0
        %4130 = vmatprep.subr.mxu0 0.0
        %4131 = vmatpush1.xpose.msra.mxu0 0.0
        %4132 = vmatprep.subr.mxu0 0.0
        %4133 = vmatpush1.xpose.msra.mxu0 0.0
        %4134 = vmatprep.subr.mxu0 0.0
        %4135 = vmatpush1.xpose.msra.mxu0 0.0
        %4136 = vmatprep.subr.mxu0 0.0
        %4137 = vmatpush1.xpose.msra.mxu0 0.0
        %4138 = vmatprep.subr.mxu0 0.0
        %4139 = vmatpush1.xpose.msra.mxu0 0.0
        %4140 = vmatprep.subr.mxu0 0.0
        %4141 = vmatpush1.xpose.msra.mxu0 0.0
        %4142 = vmatprep.subr.mxu0 0.0
        %4143 = vmatpush1.xpose.msra.mxu0 0.0
        %4144 = vmatprep.subr.mxu0 0.0
        %4145 = vmatpush1.xpose.msra.mxu0 0.0
        %4146 = vmatprep.subr.mxu0 0.0
        %4147 = vmatpush1.xpose.msra.mxu0 0.0
        %4148 = vmatprep.subr.mxu0 0.0
        %4149 = vmatpush1.xpose.msra.mxu0 0.0
        %4150 = vmatprep.subr.mxu0 0.0
        %4151 = vmatpush1.xpose.msra.mxu0 0.0
        %4152 = vmatprep.subr.mxu0 0.0
        %4153 = vmatpush1.xpose.msra.mxu0 0.0
        %4154 = vmatprep.subr.mxu0 0.0
        %4155 = vmatpush1.xpose.msra.mxu0 0.0
        %4156 = vmatprep.subr.mxu0 0.0
        %4157 = vmatpush1.xpose.msra.mxu0 0.0
        %4158 = vmatprep.mubr.f32.mxu0 0.0
        %v4159 = vand.u32 %v4087, 4294901760
        %v4160 = vsub.f32 %v4087, %v4159
        %v4161 = vand.u32 %v4160, 4294901760
        %v4162 = vsub.f32 %v4160, %v4161
        %v4163 = vand.u32 %v4162, 4294901760
        %4164 = vmatmul.mubr.f32.gmra.mrb[0].mxu0 %v4163
        %v4165 = vpop.f32.mrb[0].mxu0
        %v4166 = vadd.f32 0.0, %v4165
        %v4167 = vpop.f32.mrb[0].mxu0
        %4168 = vmatprep.mubr.f32.mxu0 0.0
        %v4169 = vand.u32 %v4089, 4294901760
        %v4170 = vsub.f32 %v4089, %v4169
        %v4171 = vand.u32 %v4170, 4294901760
        %v4172 = vsub.f32 %v4170, %v4171
        %v4173 = vand.u32 %v4172, 4294901760
        %4174 = vmatmul.mubr.f32.gmra.mrb[0].mxu0 %v4173
        %v4175 = vpop.f32.mrb[0].mxu0
        %v4176 = vadd.f32 0.0, %v4175
        %v4177 = vpop.f32.mrb[0].mxu0
        %4178 = vdwg.mxu0
        %4179 = vmatprep.subr.mxu0 0.0
        %v4180 = vand.u32 %v4091, 4294901760
        %v4181 = vsub.f32 %v4091, %v4180
        %v4182 = vand.u32 %v4181, 4294901760
        %v4183 = vsub.f32 %v4181, %v4182
        %v4184 = vand.u32 %v4183, 4294901760
        %4185 = vmatpush1.xpose.msra.mxu0 %v4184
        %4186 = vmatprep.subr.mxu0 0.0
        %4187 = vmatpush1.xpose.msra.mxu0 0.0
        %4188 = vmatprep.subr.mxu0 0.0
        %4189 = vmatpush1.xpose.msra.mxu0 0.0
        %4190 = vmatprep.subr.mxu0 0.0
        %4191 = vmatpush1.xpose.msra.mxu0 0.0
        %4192 = vmatprep.subr.mxu0 0.0
        %4193 = vmatpush1.xpose.msra.mxu0 0.0
        %4194 = vmatprep.subr.mxu0 0.0
        %4195 = vmatpush1.xpose.msra.mxu0 0.0
        %4196 = vmatprep.subr.mxu0 0.0
        %4197 = vmatpush1.xpose.msra.mxu0 0.0
        %4198 = vmatprep.subr.mxu0 0.0
        %4199 = vmatpush1.xpose.msra.mxu0 0.0
        %4200 = vmatprep.subr.mxu0 0.0
        %4201 = vmatpush1.xpose.msra.mxu0 0.0
        %4202 = vmatprep.subr.mxu0 0.0
        %4203 = vmatpush1.xpose.msra.mxu0 0.0
        %4204 = vmatprep.subr.mxu0 0.0
        %4205 = vmatpush1.xpose.msra.mxu0 0.0
        %4206 = vmatprep.subr.mxu0 0.0
        %4207 = vmatpush1.xpose.msra.mxu0 0.0
        %4208 = vmatprep.subr.mxu0 0.0
        %4209 = vmatpush1.xpose.msra.mxu0 0.0
        %4210 = vmatprep.subr.mxu0 0.0
        %4211 = vmatpush1.xpose.msra.mxu0 0.0
        %4212 = vmatprep.subr.mxu0 0.0
        %4213 = vmatpush1.xpose.msra.mxu0 0.0
        %4214 = vmatprep.subr.mxu0 0.0
        %4215 = vmatpush1.xpose.msra.mxu0 0.0
        %4216 = vmatprep.subr.mxu0 0.0
        %4217 = vmatpush1.xpose.msra.mxu0 0.0
        %4218 = vmatprep.subr.mxu0 0.0
        %4219 = vmatpush1.xpose.msra.mxu0 0.0
        %4220 = vmatprep.subr.mxu0 0.0
        %4221 = vmatpush1.xpose.msra.mxu0 0.0
        %4222 = vmatprep.subr.mxu0 0.0
        %4223 = vmatpush1.xpose.msra.mxu0 0.0
        %4224 = vmatprep.subr.mxu0 0.0
        %4225 = vmatpush1.xpose.msra.mxu0 0.0
        %4226 = vmatprep.subr.mxu0 0.0
        %4227 = vmatpush1.xpose.msra.mxu0 0.0
        %4228 = vmatprep.subr.mxu0 0.0
        %4229 = vmatpush1.xpose.msra.mxu0 0.0
        %4230 = vmatprep.subr.mxu0 0.0
        %4231 = vmatpush1.xpose.msra.mxu0 0.0
        %4232 = vmatprep.subr.mxu0 0.0
        %4233 = vmatpush1.xpose.msra.mxu0 0.0
        %4234 = vmatprep.subr.mxu0 0.0
        %4235 = vmatpush1.xpose.msra.mxu0 0.0
        %4236 = vmatprep.subr.mxu0 0.0
        %4237 = vmatpush1.xpose.msra.mxu0 0.0
        %4238 = vmatprep.subr.mxu0 0.0
        %4239 = vmatpush1.xpose.msra.mxu0 0.0
        %4240 = vmatprep.subr.mxu0 0.0
        %4241 = vmatpush1.xpose.msra.mxu0 0.0
        %4242 = vmatprep.subr.mxu0 0.0
        %4243 = vmatpush1.xpose.msra.mxu0 0.0
        %4244 = vmatprep.subr.mxu0 0.0
        %4245 = vmatpush1.xpose.msra.mxu0 0.0
        %4246 = vmatprep.subr.mxu0 0.0
        %4247 = vmatpush1.xpose.msra.mxu0 0.0
        %4248 = vmatprep.mubr.f32.mxu0 0.0
        %v4249 = vand.u32 %v4087, 4294901760
        %4250 = vmatmul.mubr.f32.gmra.mrb[0].mxu0 %v4249
        %v4251 = vpop.f32.mrb[0].mxu0
        %v4252 = vadd.f32 %v4166, %v4251
        %v4253 = vpop.f32.mrb[0].mxu0
        %4254 = vmatprep.mubr.f32.mxu0 0.0
        %v4255 = vand.u32 %v4089, 4294901760
        %4256 = vmatmul.mubr.f32.gmra.mrb[0].mxu0 %v4255
        %v4257 = vpop.f32.mrb[0].mxu0
        %v4258 = vadd.f32 %v4176, %v4257
        %v4259 = vpop.f32.mrb[0].mxu0
        %4260 = vdwg.mxu0
        %4261 = vmatprep.subr.mxu0 0.0
        %v4262 = vand.u32 %v4091, 4294901760
        %v4263 = vsub.f32 %v4091, %v4262
        %4264 = vmatpush1.xpose.msra.mxu0 %v4263
        %4265 = vmatprep.subr.mxu0 0.0
        %4266 = vmatpush1.xpose.msra.mxu0 0.0
        %4267 = vmatprep.subr.mxu0 0.0
        %4268 = vmatpush1.xpose.msra.mxu0 0.0
        %4269 = vmatprep.subr.mxu0 0.0
        %4270 = vmatpush1.xpose.msra.mxu0 0.0
        %4271 = vmatprep.subr.mxu0 0.0
        %4272 = vmatpush1.xpose.msra.mxu0 0.0
        %4273 = vmatprep.subr.mxu0 0.0
        %4274 = vmatpush1.xpose.msra.mxu0 0.0
        %4275 = vmatprep.subr.mxu0 0.0
        %4276 = vmatpush1.xpose.msra.mxu0 0.0
        %4277 = vmatprep.subr.mxu0 0.0
        %4278 = vmatpush1.xpose.msra.mxu0 0.0
        %4279 = vmatprep.subr.mxu0 0.0
        %4280 = vmatpush1.xpose.msra.mxu0 0.0
        %4281 = vmatprep.subr.mxu0 0.0
        %4282 = vmatpush1.xpose.msra.mxu0 0.0
        %4283 = vmatprep.subr.mxu0 0.0
        %4284 = vmatpush1.xpose.msra.mxu0 0.0
        %4285 = vmatprep.subr.mxu0 0.0
        %4286 = vmatpush1.xpose.msra.mxu0 0.0
        %4287 = vmatprep.subr.mxu0 0.0
        %4288 = vmatpush1.xpose.msra.mxu0 0.0
        %4289 = vmatprep.subr.mxu0 0.0
        %4290 = vmatpush1.xpose.msra.mxu0 0.0
        %4291 = vmatprep.subr.mxu0 0.0
        %4292 = vmatpush1.xpose.msra.mxu0 0.0
        %4293 = vmatprep.subr.mxu0 0.0
        %4294 = vmatpush1.xpose.msra.mxu0 0.0
        %4295 = vmatprep.subr.mxu0 0.0
        %4296 = vmatpush1.xpose.msra.mxu0 0.0
        %4297 = vmatprep.subr.mxu0 0.0
        %4298 = vmatpush1.xpose.msra.mxu0 0.0
        %4299 = vmatprep.subr.mxu0 0.0
        %4300 = vmatpush1.xpose.msra.mxu0 0.0
        %4301 = vmatprep.subr.mxu0 0.0
        %4302 = vmatpush1.xpose.msra.mxu0 0.0
        %4303 = vmatprep.subr.mxu0 0.0
        %4304 = vmatpush1.xpose.msra.mxu0 0.0
        %4305 = vmatprep.subr.mxu0 0.0
        %4306 = vmatpush1.xpose.msra.mxu0 0.0
        %4307 = vmatprep.subr.mxu0 0.0
        %4308 = vmatpush1.xpose.msra.mxu0 0.0
        %4309 = vmatprep.subr.mxu0 0.0
        %4310 = vmatpush1.xpose.msra.mxu0 0.0
        %4311 = vmatprep.subr.mxu0 0.0
        %4312 = vmatpush1.xpose.msra.mxu0 0.0
        %4313 = vmatprep.subr.mxu0 0.0
        %4314 = vmatpush1.xpose.msra.mxu0 0.0
        %4315 = vmatprep.subr.mxu0 0.0
        %4316 = vmatpush1.xpose.msra.mxu0 0.0
        %4317 = vmatprep.subr.mxu0 0.0
        %4318 = vmatpush1.xpose.msra.mxu0 0.0
        %4319 = vmatprep.subr.mxu0 0.0
        %4320 = vmatpush1.xpose.msra.mxu0 0.0
        %4321 = vmatprep.subr.mxu0 0.0
        %4322 = vmatpush1.xpose.msra.mxu0 0.0
        %4323 = vmatprep.subr.mxu0 0.0
        %4324 = vmatpush1.xpose.msra.mxu0 0.0
        %4325 = vmatprep.subr.mxu0 0.0
        %4326 = vmatpush1.xpose.msra.mxu0 0.0
        %4327 = vmatprep.mubr.f32.mxu0 0.0
        %v4328 = vand.u32 %v4087, 4294901760
        %v4329 = vsub.f32 %v4087, %v4328
        %4330 = vmatmul.mubr.f32.gmra.mrb[0].mxu0 %v4329
        %v4331 = vpop.f32.mrb[0].mxu0
        %v4332 = vadd.f32 %v4252, %v4331
        %v4333 = vpop.f32.mrb[0].mxu0
        %4334 = vmatprep.mubr.f32.mxu0 0.0
        %v4335 = vand.u32 %v4089, 4294901760
        %v4336 = vsub.f32 %v4089, %v4335
        %4337 = vmatmul.mubr.f32.gmra.mrb[0].mxu0 %v4336
        %v4338 = vpop.f32.mrb[0].mxu0
        %v4339 = vadd.f32 %v4258, %v4338
        %v4340 = vpop.f32.mrb[0].mxu0
        %4341 = vdwg.mxu0
        %4342 = vmatprep.subr.mxu0 0.0
        %v4343 = vand.u32 %v4091, 4294901760
        %4344 = vmatpush1.xpose.msra.mxu0 %v4343
        %4345 = vmatprep.subr.mxu0 0.0
        %4346 = vmatpush1.xpose.msra.mxu0 0.0
        %4347 = vmatprep.subr.mxu0 0.0
        %4348 = vmatpush1.xpose.msra.mxu0 0.0
        %4349 = vmatprep.subr.mxu0 0.0
        %4350 = vmatpush1.xpose.msra.mxu0 0.0
        %4351 = vmatprep.subr.mxu0 0.0
        %4352 = vmatpush1.xpose.msra.mxu0 0.0
        %4353 = vmatprep.subr.mxu0 0.0
        %4354 = vmatpush1.xpose.msra.mxu0 0.0
        %4355 = vmatprep.subr.mxu0 0.0
        %4356 = vmatpush1.xpose.msra.mxu0 0.0
        %4357 = vmatprep.subr.mxu0 0.0
        %4358 = vmatpush1.xpose.msra.mxu0 0.0
        %4359 = vmatprep.subr.mxu0 0.0
        %4360 = vmatpush1.xpose.msra.mxu0 0.0
        %4361 = vmatprep.subr.mxu0 0.0
        %4362 = vmatpush1.xpose.msra.mxu0 0.0
        %4363 = vmatprep.subr.mxu0 0.0
        %4364 = vmatpush1.xpose.msra.mxu0 0.0
        %4365 = vmatprep.subr.mxu0 0.0
        %4366 = vmatpush1.xpose.msra.mxu0 0.0
        %4367 = vmatprep.subr.mxu0 0.0
        %4368 = vmatpush1.xpose.msra.mxu0 0.0
        %4369 = vmatprep.subr.mxu0 0.0
        %4370 = vmatpush1.xpose.msra.mxu0 0.0
        %4371 = vmatprep.subr.mxu0 0.0
        %4372 = vmatpush1.xpose.msra.mxu0 0.0
        %4373 = vmatprep.subr.mxu0 0.0
        %4374 = vmatpush1.xpose.msra.mxu0 0.0
        %4375 = vmatprep.subr.mxu0 0.0
        %4376 = vmatpush1.xpose.msra.mxu0 0.0
        %4377 = vmatprep.subr.mxu0 0.0
        %4378 = vmatpush1.xpose.msra.mxu0 0.0
        %4379 = vmatprep.subr.mxu0 0.0
        %4380 = vmatpush1.xpose.msra.mxu0 0.0
        %4381 = vmatprep.subr.mxu0 0.0
        %4382 = vmatpush1.xpose.msra.mxu0 0.0
        %4383 = vmatprep.subr.mxu0 0.0
        %4384 = vmatpush1.xpose.msra.mxu0 0.0
        %4385 = vmatprep.subr.mxu0 0.0
        %4386 = vmatpush1.xpose.msra.mxu0 0.0
        %4387 = vmatprep.subr.mxu0 0.0
        %4388 = vmatpush1.xpose.msra.mxu0 0.0
        %4389 = vmatprep.subr.mxu0 0.0
        %4390 = vmatpush1.xpose.msra.mxu0 0.0
        %4391 = vmatprep.subr.mxu0 0.0
        %4392 = vmatpush1.xpose.msra.mxu0 0.0
        %4393 = vmatprep.subr.mxu0 0.0
        %4394 = vmatpush1.xpose.msra.mxu0 0.0
        %4395 = vmatprep.subr.mxu0 0.0
        %4396 = vmatpush1.xpose.msra.mxu0 0.0
        %4397 = vmatprep.subr.mxu0 0.0
        %4398 = vmatpush1.xpose.msra.mxu0 0.0
        %4399 = vmatprep.subr.mxu0 0.0
        %4400 = vmatpush1.xpose.msra.mxu0 0.0
        %4401 = vmatprep.subr.mxu0 0.0
        %4402 = vmatpush1.xpose.msra.mxu0 0.0
        %4403 = vmatprep.subr.mxu0 0.0
        %4404 = vmatpush1.xpose.msra.mxu0 0.0
        %4405 = vmatprep.subr.mxu0 0.0
        %4406 = vmatpush1.xpose.msra.mxu0 0.0
        %4407 = vmatprep.mubr.f32.mxu0 0.0
        %v4408 = vand.u32 %v4087, 4294901760
        %v4409 = vsub.f32 %v4087, %v4408
        %v4410 = vand.u32 %v4409, 4294901760
        %4411 = vmatmul.mubr.f32.gmra.mrb[0].mxu0 %v4410
        %v4412 = vpop.f32.mrb[0].mxu0
        %v4413 = vadd.f32 %v4332, %v4412
        %v4414 = vpop.f32.mrb[0].mxu0
        %4415 = vmatprep.mubr.f32.mxu0 0.0
        %v4416 = vand.u32 %v4089, 4294901760
        %v4417 = vsub.f32 %v4089, %v4416
        %v4418 = vand.u32 %v4417, 4294901760
        %4419 = vmatmul.mubr.f32.gmra.mrb[0].mxu0 %v4418
        %v4420 = vpop.f32.mrb[0].mxu0
        %v4421 = vadd.f32 %v4339, %v4420
        %v4422 = vpop.f32.mrb[0].mxu0
        %4423 = vdwg.mxu0
        %4424 = vmatprep.subr.mxu0 0.0
        %v4425 = vand.u32 %v4091, 4294901760
        %v4426 = vsub.f32 %v4091, %v4425
        %v4427 = vand.u32 %v4426, 4294901760
        %4428 = vmatpush1.xpose.msra.mxu0 %v4427
        %4429 = vmatprep.subr.mxu0 0.0
        %4430 = vmatpush1.xpose.msra.mxu0 0.0
        %4431 = vmatprep.subr.mxu0 0.0
        %4432 = vmatpush1.xpose.msra.mxu0 0.0
        %4433 = vmatprep.subr.mxu0 0.0
        %4434 = vmatpush1.xpose.msra.mxu0 0.0
        %4435 = vmatprep.subr.mxu0 0.0
        %4436 = vmatpush1.xpose.msra.mxu0 0.0
        %4437 = vmatprep.subr.mxu0 0.0
        %4438 = vmatpush1.xpose.msra.mxu0 0.0
        %4439 = vmatprep.subr.mxu0 0.0
        %4440 = vmatpush1.xpose.msra.mxu0 0.0
        %4441 = vmatprep.subr.mxu0 0.0
        %4442 = vmatpush1.xpose.msra.mxu0 0.0
        %4443 = vmatprep.subr.mxu0 0.0
        %4444 = vmatpush1.xpose.msra.mxu0 0.0
        %4445 = vmatprep.subr.mxu0 0.0
        %4446 = vmatpush1.xpose.msra.mxu0 0.0
        %4447 = vmatprep.subr.mxu0 0.0
        %4448 = vmatpush1.xpose.msra.mxu0 0.0
        %4449 = vmatprep.subr.mxu0 0.0
        %4450 = vmatpush1.xpose.msra.mxu0 0.0
        %4451 = vmatprep.subr.mxu0 0.0
        %4452 = vmatpush1.xpose.msra.mxu0 0.0
        %4453 = vmatprep.subr.mxu0 0.0
        %4454 = vmatpush1.xpose.msra.mxu0 0.0
        %4455 = vmatprep.subr.mxu0 0.0
        %4456 = vmatpush1.xpose.msra.mxu0 0.0
        %4457 = vmatprep.subr.mxu0 0.0
        %4458 = vmatpush1.xpose.msra.mxu0 0.0
        %4459 = vmatprep.subr.mxu0 0.0
        %4460 = vmatpush1.xpose.msra.mxu0 0.0
        %4461 = vmatprep.subr.mxu0 0.0
        %4462 = vmatpush1.xpose.msra.mxu0 0.0
        %4463 = vmatprep.subr.mxu0 0.0
        %4464 = vmatpush1.xpose.msra.mxu0 0.0
        %4465 = vmatprep.subr.mxu0 0.0
        %4466 = vmatpush1.xpose.msra.mxu0 0.0
        %4467 = vmatprep.subr.mxu0 0.0
        %4468 = vmatpush1.xpose.msra.mxu0 0.0
        %4469 = vmatprep.subr.mxu0 0.0
        %4470 = vmatpush1.xpose.msra.mxu0 0.0
        %4471 = vmatprep.subr.mxu0 0.0
        %4472 = vmatpush1.xpose.msra.mxu0 0.0
        %4473 = vmatprep.subr.mxu0 0.0
        %4474 = vmatpush1.xpose.msra.mxu0 0.0
        %4475 = vmatprep.subr.mxu0 0.0
        %4476 = vmatpush1.xpose.msra.mxu0 0.0
        %4477 = vmatprep.subr.mxu0 0.0
        %4478 = vmatpush1.xpose.msra.mxu0 0.0
        %4479 = vmatprep.subr.mxu0 0.0
        %4480 = vmatpush1.xpose.msra.mxu0 0.0
        %4481 = vmatprep.subr.mxu0 0.0
        %4482 = vmatpush1.xpose.msra.mxu0 0.0
        %4483 = vmatprep.subr.mxu0 0.0
        %4484 = vmatpush1.xpose.msra.mxu0 0.0
        %4485 = vmatprep.subr.mxu0 0.0
        %4486 = vmatpush1.xpose.msra.mxu0 0.0
        %4487 = vmatprep.subr.mxu0 0.0
        %4488 = vmatpush1.xpose.msra.mxu0 0.0
        %4489 = vmatprep.subr.mxu0 0.0
        %4490 = vmatpush1.xpose.msra.mxu0 0.0
        %4491 = vmatprep.mubr.f32.mxu0 0.0
        %v4492 = vand.u32 %v4087, 4294901760
        %4493 = vmatmul.mubr.f32.gmra.mrb[0].mxu0 %v4492
        %v4494 = vpop.f32.mrb[0].mxu0
        %v4495 = vadd.f32 %v4413, %v4494
        %v4496 = vpop.f32.mrb[0].mxu0
        %4497 = vmatprep.mubr.f32.mxu0 0.0
        %v4498 = vand.u32 %v4089, 4294901760
        %4499 = vmatmul.mubr.f32.gmra.mrb[0].mxu0 %v4498
        %v4500 = vpop.f32.mrb[0].mxu0
        %v4501 = vadd.f32 %v4421, %v4500
        %v4502 = vpop.f32.mrb[0].mxu0
        %4503 = vdwg.mxu0
        %4504 = vmatprep.subr.mxu0 0.0
        %v4505 = vand.u32 %v4091, 4294901760
        %4506 = vmatpush1.xpose.msra.mxu0 %v4505
        %4507 = vmatprep.subr.mxu0 0.0
        %4508 = vmatpush1.xpose.msra.mxu0 0.0
        %4509 = vmatprep.subr.mxu0 0.0
        %4510 = vmatpush1.xpose.msra.mxu0 0.0
        %4511 = vmatprep.subr.mxu0 0.0
        %4512 = vmatpush1.xpose.msra.mxu0 0.0
        %4513 = vmatprep.subr.mxu0 0.0
        %4514 = vmatpush1.xpose.msra.mxu0 0.0
        %4515 = vmatprep.subr.mxu0 0.0
        %4516 = vmatpush1.xpose.msra.mxu0 0.0
        %4517 = vmatprep.subr.mxu0 0.0
        %4518 = vmatpush1.xpose.msra.mxu0 0.0
        %4519 = vmatprep.subr.mxu0 0.0
        %4520 = vmatpush1.xpose.msra.mxu0 0.0
        %4521 = vmatprep.subr.mxu0 0.0
        %4522 = vmatpush1.xpose.msra.mxu0 0.0
        %4523 = vmatprep.subr.mxu0 0.0
        %4524 = vmatpush1.xpose.msra.mxu0 0.0
        %4525 = vmatprep.subr.mxu0 0.0
        %4526 = vmatpush1.xpose.msra.mxu0 0.0
        %4527 = vmatprep.subr.mxu0 0.0
        %4528 = vmatpush1.xpose.msra.mxu0 0.0
        %4529 = vmatprep.subr.mxu0 0.0
        %4530 = vmatpush1.xpose.msra.mxu0 0.0
        %4531 = vmatprep.subr.mxu0 0.0
        %4532 = vmatpush1.xpose.msra.mxu0 0.0
        %4533 = vmatprep.subr.mxu0 0.0
        %4534 = vmatpush1.xpose.msra.mxu0 0.0
        %4535 = vmatprep.subr.mxu0 0.0
        %4536 = vmatpush1.xpose.msra.mxu0 0.0
        %4537 = vmatprep.subr.mxu0 0.0
        %4538 = vmatpush1.xpose.msra.mxu0 0.0
        %4539 = vmatprep.subr.mxu0 0.0
        %4540 = vmatpush1.xpose.msra.mxu0 0.0
        %4541 = vmatprep.subr.mxu0 0.0
        %4542 = vmatpush1.xpose.msra.mxu0 0.0
        %4543 = vmatprep.subr.mxu0 0.0
        %4544 = vmatpush1.xpose.msra.mxu0 0.0
        %4545 = vmatprep.subr.mxu0 0.0
        %4546 = vmatpush1.xpose.msra.mxu0 0.0
        %4547 = vmatprep.subr.mxu0 0.0
        %4548 = vmatpush1.xpose.msra.mxu0 0.0
        %4549 = vmatprep.subr.mxu0 0.0
        %4550 = vmatpush1.xpose.msra.mxu0 0.0
        %4551 = vmatprep.subr.mxu0 0.0
        %4552 = vmatpush1.xpose.msra.mxu0 0.0
        %4553 = vmatprep.subr.mxu0 0.0
        %4554 = vmatpush1.xpose.msra.mxu0 0.0
        %4555 = vmatprep.subr.mxu0 0.0
        %4556 = vmatpush1.xpose.msra.mxu0 0.0
        %4557 = vmatprep.subr.mxu0 0.0
        %4558 = vmatpush1.xpose.msra.mxu0 0.0
        %4559 = vmatprep.subr.mxu0 0.0
        %4560 = vmatpush1.xpose.msra.mxu0 0.0
        %4561 = vmatprep.subr.mxu0 0.0
        %4562 = vmatpush1.xpose.msra.mxu0 0.0
        %4563 = vmatprep.subr.mxu0 0.0
        %4564 = vmatpush1.xpose.msra.mxu0 0.0
        %4565 = vmatprep.subr.mxu0 0.0
        %4566 = vmatpush1.xpose.msra.mxu0 0.0
        %4567 = vmatprep.subr.mxu0 0.0
        %4568 = vmatpush1.xpose.msra.mxu0 0.0
        %4569 = vmatprep.mubr.f32.mxu0 0.0
        %v4570 = vand.u32 %v4087, 4294901760
        %4571 = vmatmul.mubr.f32.gmra.mrb[0].mxu0 %v4570
        %v4572 = vpop.f32.mrb[0].mxu0
        %v4573 = vadd.f32 %v4495, %v4572
        %v4574 = vpop.f32.mrb[0].mxu0
        %4575 = vmatprep.mubr.f32.mxu0 0.0
        %v4576 = vand.u32 %v4089, 4294901760
        %4577 = vmatmul.mubr.f32.gmra.mrb[0].mxu0 %v4576
        %v4578 = vpop.f32.mrb[0].mxu0
        %v4579 = vadd.f32 %v4501, %v4578
        %v4580 = vpop.f32.mrb[0].mxu0
        %4581 = vdwg.mxu0
        %v4582 = vmul.f32 %v4573, 0.088388346
        %v4583 = vmul.f32 %v4579, 0.088388346
        %v4584 = vsel %vm2539, %v4582, -inf
        %4585 = vmax.xlane.f32.xlu0 %v4584
        %v4586 = vpop.xlane.xlu0 %4585
        %v4587 = vsel %vm2539, %v4583, -inf
        %4588 = vmax.xlane.f32.xlu0 %v4587
        %v4589 = vpop.xlane.xlu0 %4588
        %v4590 = vsub.f32 %v4582, %v4586
        %v4591 = vsub.f32 %v4583, %v4589
        %v4592 = vmul.f32 %v4590, 1.442695
        %v4593 = vpow.pop %v4592
        %v4594 = vmul.f32 %v4591, 1.442695
        %v4595 = vpow.pop %v4594
        %v4596 = vsel %vm2539, %v4593, 0.0
        %4597 = vadd.xlane.f32.xlu0 %v4596
        %v4598 = vpop.xlane.xlu0 %4597
        %v4599 = vsel %vm2539, %v4595, 0.0
        %4600 = vadd.xlane.f32.xlu0 %v4599
        %v4601 = vpop.xlane.xlu0 %4600
        %v4602 = vrcp.pop %v4598
        %v4603 = vmul.f32 %v4593, %v4602
        %v4604 = vrcp.pop %v4601
        %v4605 = vmul.f32 %v4595, %v4604
        %4606 = vrot.lane.b32.xlu0 %v2036, 64
        %v4607 = vpop.permute.xlu0 %4606
        %v4610 = vsel %vm2539, %v4603, 0
        %v4613 = vsel %vm2539, %v4605, 0
        %4615 = vmatprep.subr.mxu0 0.0
        %v4616 = vand.u32 %v4607, 4294901760
        %4617 = vmatpush1.msra.mxu0 %v4616
        %4618 = vmatprep.subr.mxu0 0.0
        %4619 = vmatpush1.msra.mxu0 0.0
        %4620 = vmatprep.subr.mxu0 0.0
        %4621 = vmatpush1.msra.mxu0 0.0
        %4622 = vmatprep.subr.mxu0 0.0
        %4623 = vmatpush1.msra.mxu0 0.0
        %4624 = vmatprep.subr.mxu0 0.0
        %4625 = vmatpush1.msra.mxu0 0.0
        %4626 = vmatprep.subr.mxu0 0.0
        %4627 = vmatpush1.msra.mxu0 0.0
        %4628 = vmatprep.subr.mxu0 0.0
        %4629 = vmatpush1.msra.mxu0 0.0
        %4630 = vmatprep.subr.mxu0 0.0
        %4631 = vmatpush1.msra.mxu0 0.0
        %4632 = vmatprep.subr.mxu0 0.0
        %4633 = vmatpush1.msra.mxu0 0.0
        %4634 = vmatprep.subr.mxu0 0.0
        %4635 = vmatpush1.msra.mxu0 0.0
        %4636 = vmatprep.subr.mxu0 0.0
        %4637 = vmatpush1.msra.mxu0 0.0
        %4638 = vmatprep.subr.mxu0 0.0
        %4639 = vmatpush1.msra.mxu0 0.0
        %4640 = vmatprep.subr.mxu0 0.0
        %4641 = vmatpush1.msra.mxu0 0.0
        %4642 = vmatprep.subr.mxu0 0.0
        %4643 = vmatpush1.msra.mxu0 0.0
        %4644 = vmatprep.subr.mxu0 0.0
        %4645 = vmatpush1.msra.mxu0 0.0
        %4646 = vmatprep.subr.mxu0 0.0
        %4647 = vmatpush1.msra.mxu0 0.0
        %4648 = vmatprep.subr.mxu0 0.0
        %4649 = vmatpush1.msra.mxu0 0.0
        %4650 = vmatprep.subr.mxu0 0.0
        %4651 = vmatpush1.msra.mxu0 0.0
        %4652 = vmatprep.subr.mxu0 0.0
        %4653 = vmatpush1.msra.mxu0 0.0
        %4654 = vmatprep.subr.mxu0 0.0
        %4655 = vmatpush1.msra.mxu0 0.0
        %4656 = vmatprep.subr.mxu0 0.0
        %4657 = vmatpush1.msra.mxu0 0.0
        %4658 = vmatprep.subr.mxu0 0.0
        %4659 = vmatpush1.msra.mxu0 0.0
        %4660 = vmatprep.subr.mxu0 0.0
        %4661 = vmatpush1.msra.mxu0 0.0
        %4662 = vmatprep.subr.mxu0 0.0
        %4663 = vmatpush1.msra.mxu0 0.0
        %4664 = vmatprep.subr.mxu0 0.0
        %4665 = vmatpush1.msra.mxu0 0.0
        %4666 = vmatprep.subr.mxu0 0.0
        %4667 = vmatpush1.msra.mxu0 0.0
        %4668 = vmatprep.subr.mxu0 0.0
        %4669 = vmatpush1.msra.mxu0 0.0
        %4670 = vmatprep.subr.mxu0 0.0
        %4671 = vmatpush1.msra.mxu0 0.0
        %4672 = vmatprep.subr.mxu0 0.0
        %4673 = vmatpush1.msra.mxu0 0.0
        %4674 = vmatprep.subr.mxu0 0.0
        %4675 = vmatpush1.msra.mxu0 0.0
        %4676 = vmatprep.subr.mxu0 0.0
        %4677 = vmatpush1.msra.mxu0 0.0
        %4678 = vmatprep.subr.mxu0 0.0
        %4679 = vmatpush1.msra.mxu0 0.0
        %4680 = vmatprep.mubr.f32.mxu0 0.0
        %v4681 = vand.u32 %v4610, 4294901760
        %v4682 = vsub.f32 %v4610, %v4681
        %v4683 = vand.u32 %v4682, 4294901760
        %v4684 = vsub.f32 %v4682, %v4683
        %v4685 = vand.u32 %v4684, 4294901760
        %4686 = vmatmul.mubr.f32.gmra.mrb[0].mxu0 %v4685
        %v4687 = vpop.f32.mrb[0].mxu0
        %v4688 = vadd.f32 0.0, %v4687
        %v4689 = vpop.f32.mrb[0].mxu0
        %4690 = vmatprep.mubr.f32.mxu0 0.0
        %v4691 = vand.u32 %v4613, 4294901760
        %v4692 = vsub.f32 %v4613, %v4691
        %v4693 = vand.u32 %v4692, 4294901760
        %v4694 = vsub.f32 %v4692, %v4693
        %v4695 = vand.u32 %v4694, 4294901760
        %4696 = vmatmul.mubr.f32.gmra.mrb[0].mxu0 %v4695
        %v4697 = vpop.f32.mrb[0].mxu0
        %v4698 = vadd.f32 0.0, %v4697
        %v4699 = vpop.f32.mrb[0].mxu0
        %4700 = vdwg.mxu0
        %4701 = vmatprep.subr.mxu0 0.0
        %v4702 = vand.u32 %v4607, 4294901760
        %v4703 = vsub.f32 %v4607, %v4702
        %v4704 = vand.u32 %v4703, 4294901760
        %v4705 = vsub.f32 %v4703, %v4704
        %v4706 = vand.u32 %v4705, 4294901760
        %4707 = vmatpush1.msra.mxu0 %v4706
        %4708 = vmatprep.subr.mxu0 0.0
        %4709 = vmatpush1.msra.mxu0 0.0
        %4710 = vmatprep.subr.mxu0 0.0
        %4711 = vmatpush1.msra.mxu0 0.0
        %4712 = vmatprep.subr.mxu0 0.0
        %4713 = vmatpush1.msra.mxu0 0.0
        %4714 = vmatprep.subr.mxu0 0.0
        %4715 = vmatpush1.msra.mxu0 0.0
        %4716 = vmatprep.subr.mxu0 0.0
        %4717 = vmatpush1.msra.mxu0 0.0
        %4718 = vmatprep.subr.mxu0 0.0
        %4719 = vmatpush1.msra.mxu0 0.0
        %4720 = vmatprep.subr.mxu0 0.0
        %4721 = vmatpush1.msra.mxu0 0.0
        %4722 = vmatprep.subr.mxu0 0.0
        %4723 = vmatpush1.msra.mxu0 0.0
        %4724 = vmatprep.subr.mxu0 0.0
        %4725 = vmatpush1.msra.mxu0 0.0
        %4726 = vmatprep.subr.mxu0 0.0
        %4727 = vmatpush1.msra.mxu0 0.0
        %4728 = vmatprep.subr.mxu0 0.0
        %4729 = vmatpush1.msra.mxu0 0.0
        %4730 = vmatprep.subr.mxu0 0.0
        %4731 = vmatpush1.msra.mxu0 0.0
        %4732 = vmatprep.subr.mxu0 0.0
        %4733 = vmatpush1.msra.mxu0 0.0
        %4734 = vmatprep.subr.mxu0 0.0
        %4735 = vmatpush1.msra.mxu0 0.0
        %4736 = vmatprep.subr.mxu0 0.0
        %4737 = vmatpush1.msra.mxu0 0.0
        %4738 = vmatprep.subr.mxu0 0.0
        %4739 = vmatpush1.msra.mxu0 0.0
        %4740 = vmatprep.subr.mxu0 0.0
        %4741 = vmatpush1.msra.mxu0 0.0
        %4742 = vmatprep.subr.mxu0 0.0
        %4743 = vmatpush1.msra.mxu0 0.0
        %4744 = vmatprep.subr.mxu0 0.0
        %4745 = vmatpush1.msra.mxu0 0.0
        %4746 = vmatprep.subr.mxu0 0.0
        %4747 = vmatpush1.msra.mxu0 0.0
        %4748 = vmatprep.subr.mxu0 0.0
        %4749 = vmatpush1.msra.mxu0 0.0
        %4750 = vmatprep.subr.mxu0 0.0
        %4751 = vmatpush1.msra.mxu0 0.0
        %4752 = vmatprep.subr.mxu0 0.0
        %4753 = vmatpush1.msra.mxu0 0.0
        %4754 = vmatprep.subr.mxu0 0.0
        %4755 = vmatpush1.msra.mxu0 0.0
        %4756 = vmatprep.subr.mxu0 0.0
        %4757 = vmatpush1.msra.mxu0 0.0
        %4758 = vmatprep.subr.mxu0 0.0
        %4759 = vmatpush1.msra.mxu0 0.0
        %4760 = vmatprep.subr.mxu0 0.0
        %4761 = vmatpush1.msra.mxu0 0.0
        %4762 = vmatprep.subr.mxu0 0.0
        %4763 = vmatpush1.msra.mxu0 0.0
        %4764 = vmatprep.subr.mxu0 0.0
        %4765 = vmatpush1.msra.mxu0 0.0
        %4766 = vmatprep.subr.mxu0 0.0
        %4767 = vmatpush1.msra.mxu0 0.0
        %4768 = vmatprep.subr.mxu0 0.0
        %4769 = vmatpush1.msra.mxu0 0.0
        %4770 = vmatprep.mubr.f32.mxu0 0.0
        %v4771 = vand.u32 %v4610, 4294901760
        %4772 = vmatmul.mubr.f32.gmra.mrb[0].mxu0 %v4771
        %v4773 = vpop.f32.mrb[0].mxu0
        %v4774 = vadd.f32 %v4688, %v4773
        %v4775 = vpop.f32.mrb[0].mxu0
        %4776 = vmatprep.mubr.f32.mxu0 0.0
        %v4777 = vand.u32 %v4613, 4294901760
        %4778 = vmatmul.mubr.f32.gmra.mrb[0].mxu0 %v4777
        %v4779 = vpop.f32.mrb[0].mxu0
        %v4780 = vadd.f32 %v4698, %v4779
        %v4781 = vpop.f32.mrb[0].mxu0
        %4782 = vdwg.mxu0
        %4783 = vmatprep.subr.mxu0 0.0
        %v4784 = vand.u32 %v4607, 4294901760
        %v4785 = vsub.f32 %v4607, %v4784
        %4786 = vmatpush1.msra.mxu0 %v4785
        %4787 = vmatprep.subr.mxu0 0.0
        %4788 = vmatpush1.msra.mxu0 0.0
        %4789 = vmatprep.subr.mxu0 0.0
        %4790 = vmatpush1.msra.mxu0 0.0
        %4791 = vmatprep.subr.mxu0 0.0
        %4792 = vmatpush1.msra.mxu0 0.0
        %4793 = vmatprep.subr.mxu0 0.0
        %4794 = vmatpush1.msra.mxu0 0.0
        %4795 = vmatprep.subr.mxu0 0.0
        %4796 = vmatpush1.msra.mxu0 0.0
        %4797 = vmatprep.subr.mxu0 0.0
        %4798 = vmatpush1.msra.mxu0 0.0
        %4799 = vmatprep.subr.mxu0 0.0
        %4800 = vmatpush1.msra.mxu0 0.0
        %4801 = vmatprep.subr.mxu0 0.0
        %4802 = vmatpush1.msra.mxu0 0.0
        %4803 = vmatprep.subr.mxu0 0.0
        %4804 = vmatpush1.msra.mxu0 0.0
        %4805 = vmatprep.subr.mxu0 0.0
        %4806 = vmatpush1.msra.mxu0 0.0
        %4807 = vmatprep.subr.mxu0 0.0
        %4808 = vmatpush1.msra.mxu0 0.0
        %4809 = vmatprep.subr.mxu0 0.0
        %4810 = vmatpush1.msra.mxu0 0.0
        %4811 = vmatprep.subr.mxu0 0.0
        %4812 = vmatpush1.msra.mxu0 0.0
        %4813 = vmatprep.subr.mxu0 0.0
        %4814 = vmatpush1.msra.mxu0 0.0
        %4815 = vmatprep.subr.mxu0 0.0
        %4816 = vmatpush1.msra.mxu0 0.0
        %4817 = vmatprep.subr.mxu0 0.0
        %4818 = vmatpush1.msra.mxu0 0.0
        %4819 = vmatprep.subr.mxu0 0.0
        %4820 = vmatpush1.msra.mxu0 0.0
        %4821 = vmatprep.subr.mxu0 0.0
        %4822 = vmatpush1.msra.mxu0 0.0
        %4823 = vmatprep.subr.mxu0 0.0
        %4824 = vmatpush1.msra.mxu0 0.0
        %4825 = vmatprep.subr.mxu0 0.0
        %4826 = vmatpush1.msra.mxu0 0.0
        %4827 = vmatprep.subr.mxu0 0.0
        %4828 = vmatpush1.msra.mxu0 0.0
        %4829 = vmatprep.subr.mxu0 0.0
        %4830 = vmatpush1.msra.mxu0 0.0
        %4831 = vmatprep.subr.mxu0 0.0
        %4832 = vmatpush1.msra.mxu0 0.0
        %4833 = vmatprep.subr.mxu0 0.0
        %4834 = vmatpush1.msra.mxu0 0.0
        %4835 = vmatprep.subr.mxu0 0.0
        %4836 = vmatpush1.msra.mxu0 0.0
        %4837 = vmatprep.subr.mxu0 0.0
        %4838 = vmatpush1.msra.mxu0 0.0
        %4839 = vmatprep.subr.mxu0 0.0
        %4840 = vmatpush1.msra.mxu0 0.0
        %4841 = vmatprep.subr.mxu0 0.0
        %4842 = vmatpush1.msra.mxu0 0.0
        %4843 = vmatprep.subr.mxu0 0.0
        %4844 = vmatpush1.msra.mxu0 0.0
        %4845 = vmatprep.subr.mxu0 0.0
        %4846 = vmatpush1.msra.mxu0 0.0
        %4847 = vmatprep.subr.mxu0 0.0
        %4848 = vmatpush1.msra.mxu0 0.0
        %4849 = vmatprep.mubr.f32.mxu0 0.0
        %v4850 = vand.u32 %v4610, 4294901760
        %v4851 = vsub.f32 %v4610, %v4850
        %4852 = vmatmul.mubr.f32.gmra.mrb[0].mxu0 %v4851
        %v4853 = vpop.f32.mrb[0].mxu0
        %v4854 = vadd.f32 %v4774, %v4853
        %v4855 = vpop.f32.mrb[0].mxu0
        %4856 = vmatprep.mubr.f32.mxu0 0.0
        %v4857 = vand.u32 %v4613, 4294901760
        %v4858 = vsub.f32 %v4613, %v4857
        %4859 = vmatmul.mubr.f32.gmra.mrb[0].mxu0 %v4858
        %v4860 = vpop.f32.mrb[0].mxu0
        %v4861 = vadd.f32 %v4780, %v4860
        %v4862 = vpop.f32.mrb[0].mxu0
        %4863 = vdwg.mxu0
        %4864 = vmatprep.subr.mxu0 0.0
        %v4865 = vand.u32 %v4607, 4294901760
        %4866 = vmatpush1.msra.mxu0 %v4865
        %4867 = vmatprep.subr.mxu0 0.0
        %4868 = vmatpush1.msra.mxu0 0.0
        %4869 = vmatprep.subr.mxu0 0.0
        %4870 = vmatpush1.msra.mxu0 0.0
        %4871 = vmatprep.subr.mxu0 0.0
        %4872 = vmatpush1.msra.mxu0 0.0
        %4873 = vmatprep.subr.mxu0 0.0
        %4874 = vmatpush1.msra.mxu0 0.0
        %4875 = vmatprep.subr.mxu0 0.0
        %4876 = vmatpush1.msra.mxu0 0.0
        %4877 = vmatprep.subr.mxu0 0.0
        %4878 = vmatpush1.msra.mxu0 0.0
        %4879 = vmatprep.subr.mxu0 0.0
        %4880 = vmatpush1.msra.mxu0 0.0
        %4881 = vmatprep.subr.mxu0 0.0
        %4882 = vmatpush1.msra.mxu0 0.0
        %4883 = vmatprep.subr.mxu0 0.0
        %4884 = vmatpush1.msra.mxu0 0.0
        %4885 = vmatprep.subr.mxu0 0.0
        %4886 = vmatpush1.msra.mxu0 0.0
        %4887 = vmatprep.subr.mxu0 0.0
        %4888 = vmatpush1.msra.mxu0 0.0
        %4889 = vmatprep.subr.mxu0 0.0
        %4890 = vmatpush1.msra.mxu0 0.0
        %4891 = vmatprep.subr.mxu0 0.0
        %4892 = vmatpush1.msra.mxu0 0.0
        %4893 = vmatprep.subr.mxu0 0.0
        %4894 = vmatpush1.msra.mxu0 0.0
        %4895 = vmatprep.subr.mxu0 0.0
        %4896 = vmatpush1.msra.mxu0 0.0
        %4897 = vmatprep.subr.mxu0 0.0
        %4898 = vmatpush1.msra.mxu0 0.0
        %4899 = vmatprep.subr.mxu0 0.0
        %4900 = vmatpush1.msra.mxu0 0.0
        %4901 = vmatprep.subr.mxu0 0.0
        %4902 = vmatpush1.msra.mxu0 0.0
        %4903 = vmatprep.subr.mxu0 0.0
        %4904 = vmatpush1.msra.mxu0 0.0
        %4905 = vmatprep.subr.mxu0 0.0
        %4906 = vmatpush1.msra.mxu0 0.0
        %4907 = vmatprep.subr.mxu0 0.0
        %4908 = vmatpush1.msra.mxu0 0.0
        %4909 = vmatprep.subr.mxu0 0.0
        %4910 = vmatpush1.msra.mxu0 0.0
        %4911 = vmatprep.subr.mxu0 0.0
        %4912 = vmatpush1.msra.mxu0 0.0
        %4913 = vmatprep.subr.mxu0 0.0
        %4914 = vmatpush1.msra.mxu0 0.0
        %4915 = vmatprep.subr.mxu0 0.0
        %4916 = vmatpush1.msra.mxu0 0.0
        %4917 = vmatprep.subr.mxu0 0.0
        %4918 = vmatpush1.msra.mxu0 0.0
        %4919 = vmatprep.subr.mxu0 0.0
        %4920 = vmatpush1.msra.mxu0 0.0
        %4921 = vmatprep.subr.mxu0 0.0
        %4922 = vmatpush1.msra.mxu0 0.0
        %4923 = vmatprep.subr.mxu0 0.0
        %4924 = vmatpush1.msra.mxu0 0.0
        %4925 = vmatprep.subr.mxu0 0.0
        %4926 = vmatpush1.msra.mxu0 0.0
        %4927 = vmatprep.subr.mxu0 0.0
        %4928 = vmatpush1.msra.mxu0 0.0
        %4929 = vmatprep.mubr.f32.mxu0 0.0
        %v4930 = vand.u32 %v4610, 4294901760
        %v4931 = vsub.f32 %v4610, %v4930
        %v4932 = vand.u32 %v4931, 4294901760
        %4933 = vmatmul.mubr.f32.gmra.mrb[0].mxu0 %v4932
        %v4934 = vpop.f32.mrb[0].mxu0
        %v4935 = vadd.f32 %v4854, %v4934
        %v4936 = vpop.f32.mrb[0].mxu0
        %4937 = vmatprep.mubr.f32.mxu0 0.0
        %v4938 = vand.u32 %v4613, 4294901760
        %v4939 = vsub.f32 %v4613, %v4938
        %v4940 = vand.u32 %v4939, 4294901760
        %4941 = vmatmul.mubr.f32.gmra.mrb[0].mxu0 %v4940
        %v4942 = vpop.f32.mrb[0].mxu0
        %v4943 = vadd.f32 %v4861, %v4942
        %v4944 = vpop.f32.mrb[0].mxu0
        %4945 = vdwg.mxu0
        %4946 = vmatprep.subr.mxu0 0.0
        %v4947 = vand.u32 %v4607, 4294901760
        %v4948 = vsub.f32 %v4607, %v4947
        %v4949 = vand.u32 %v4948, 4294901760
        %4950 = vmatpush1.msra.mxu0 %v4949
        %4951 = vmatprep.subr.mxu0 0.0
        %4952 = vmatpush1.msra.mxu0 0.0
        %4953 = vmatprep.subr.mxu0 0.0
        %4954 = vmatpush1.msra.mxu0 0.0
        %4955 = vmatprep.subr.mxu0 0.0
        %4956 = vmatpush1.msra.mxu0 0.0
        %4957 = vmatprep.subr.mxu0 0.0
        %4958 = vmatpush1.msra.mxu0 0.0
        %4959 = vmatprep.subr.mxu0 0.0
        %4960 = vmatpush1.msra.mxu0 0.0
        %4961 = vmatprep.subr.mxu0 0.0
        %4962 = vmatpush1.msra.mxu0 0.0
        %4963 = vmatprep.subr.mxu0 0.0
        %4964 = vmatpush1.msra.mxu0 0.0
        %4965 = vmatprep.subr.mxu0 0.0
        %4966 = vmatpush1.msra.mxu0 0.0
        %4967 = vmatprep.subr.mxu0 0.0
        %4968 = vmatpush1.msra.mxu0 0.0
        %4969 = vmatprep.subr.mxu0 0.0
        %4970 = vmatpush1.msra.mxu0 0.0
        %4971 = vmatprep.subr.mxu0 0.0
        %4972 = vmatpush1.msra.mxu0 0.0
        %4973 = vmatprep.subr.mxu0 0.0
        %4974 = vmatpush1.msra.mxu0 0.0
        %4975 = vmatprep.subr.mxu0 0.0
        %4976 = vmatpush1.msra.mxu0 0.0
        %4977 = vmatprep.subr.mxu0 0.0
        %4978 = vmatpush1.msra.mxu0 0.0
        %4979 = vmatprep.subr.mxu0 0.0
        %4980 = vmatpush1.msra.mxu0 0.0
        %4981 = vmatprep.subr.mxu0 0.0
        %4982 = vmatpush1.msra.mxu0 0.0
        %4983 = vmatprep.subr.mxu0 0.0
        %4984 = vmatpush1.msra.mxu0 0.0
        %4985 = vmatprep.subr.mxu0 0.0
        %4986 = vmatpush1.msra.mxu0 0.0
        %4987 = vmatprep.subr.mxu0 0.0
        %4988 = vmatpush1.msra.mxu0 0.0
        %4989 = vmatprep.subr.mxu0 0.0
        %4990 = vmatpush1.msra.mxu0 0.0
        %4991 = vmatprep.subr.mxu0 0.0
        %4992 = vmatpush1.msra.mxu0 0.0
        %4993 = vmatprep.subr.mxu0 0.0
        %4994 = vmatpush1.msra.mxu0 0.0
        %4995 = vmatprep.subr.mxu0 0.0
        %4996 = vmatpush1.msra.mxu0 0.0
        %4997 = vmatprep.subr.mxu0 0.0
        %4998 = vmatpush1.msra.mxu0 0.0
        %4999 = vmatprep.subr.mxu0 0.0
        %5000 = vmatpush1.msra.mxu0 0.0
        %5001 = vmatprep.subr.mxu0 0.0
        %5002 = vmatpush1.msra.mxu0 0.0
        %5003 = vmatprep.subr.mxu0 0.0
        %5004 = vmatpush1.msra.mxu0 0.0
        %5005 = vmatprep.subr.mxu0 0.0
        %5006 = vmatpush1.msra.mxu0 0.0
        %5007 = vmatprep.subr.mxu0 0.0
        %5008 = vmatpush1.msra.mxu0 0.0
        %5009 = vmatprep.subr.mxu0 0.0
        %5010 = vmatpush1.msra.mxu0 0.0
        %5011 = vmatprep.subr.mxu0 0.0
        %5012 = vmatpush1.msra.mxu0 0.0
        %5013 = vmatprep.mubr.f32.mxu0 0.0
        %v5014 = vand.u32 %v4610, 4294901760
        %5015 = vmatmul.mubr.f32.gmra.mrb[0].mxu0 %v5014
        %v5016 = vpop.f32.mrb[0].mxu0
        %v5017 = vadd.f32 %v4935, %v5016
        %v5018 = vpop.f32.mrb[0].mxu0
        %5019 = vmatprep.mubr.f32.mxu0 0.0
        %v5020 = vand.u32 %v4613, 4294901760
        %5021 = vmatmul.mubr.f32.gmra.mrb[0].mxu0 %v5020
        %v5022 = vpop.f32.mrb[0].mxu0
        %v5023 = vadd.f32 %v4943, %v5022
        %v5024 = vpop.f32.mrb[0].mxu0
        %5025 = vdwg.mxu0
        %5026 = vmatprep.subr.mxu0 0.0
        %v5027 = vand.u32 %v4607, 4294901760
        %5028 = vmatpush1.msra.mxu0 %v5027
        %5029 = vmatprep.subr.mxu0 0.0
        %5030 = vmatpush1.msra.mxu0 0.0
        %5031 = vmatprep.subr.mxu0 0.0
        %5032 = vmatpush1.msra.mxu0 0.0
        %5033 = vmatprep.subr.mxu0 0.0
        %5034 = vmatpush1.msra.mxu0 0.0
        %5035 = vmatprep.subr.mxu0 0.0
        %5036 = vmatpush1.msra.mxu0 0.0
        %5037 = vmatprep.subr.mxu0 0.0
        %5038 = vmatpush1.msra.mxu0 0.0
        %5039 = vmatprep.subr.mxu0 0.0
        %5040 = vmatpush1.msra.mxu0 0.0
        %5041 = vmatprep.subr.mxu0 0.0
        %5042 = vmatpush1.msra.mxu0 0.0
        %5043 = vmatprep.subr.mxu0 0.0
        %5044 = vmatpush1.msra.mxu0 0.0
        %5045 = vmatprep.subr.mxu0 0.0
        %5046 = vmatpush1.msra.mxu0 0.0
        %5047 = vmatprep.subr.mxu0 0.0
        %5048 = vmatpush1.msra.mxu0 0.0
        %5049 = vmatprep.subr.mxu0 0.0
        %5050 = vmatpush1.msra.mxu0 0.0
        %5051 = vmatprep.subr.mxu0 0.0
        %5052 = vmatpush1.msra.mxu0 0.0
        %5053 = vmatprep.subr.mxu0 0.0
        %5054 = vmatpush1.msra.mxu0 0.0
        %5055 = vmatprep.subr.mxu0 0.0
        %5056 = vmatpush1.msra.mxu0 0.0
        %5057 = vmatprep.subr.mxu0 0.0
        %5058 = vmatpush1.msra.mxu0 0.0
        %5059 = vmatprep.subr.mxu0 0.0
        %5060 = vmatpush1.msra.mxu0 0.0
        %5061 = vmatprep.subr.mxu0 0.0
        %5062 = vmatpush1.msra.mxu0 0.0
        %5063 = vmatprep.subr.mxu0 0.0
        %5064 = vmatpush1.msra.mxu0 0.0
        %5065 = vmatprep.subr.mxu0 0.0
        %5066 = vmatpush1.msra.mxu0 0.0
        %5067 = vmatprep.subr.mxu0 0.0
        %5068 = vmatpush1.msra.mxu0 0.0
        %5069 = vmatprep.subr.mxu0 0.0
        %5070 = vmatpush1.msra.mxu0 0.0
        %5071 = vmatprep.subr.mxu0 0.0
        %5072 = vmatpush1.msra.mxu0 0.0
        %5073 = vmatprep.subr.mxu0 0.0
        %5074 = vmatpush1.msra.mxu0 0.0
        %5075 = vmatprep.subr.mxu0 0.0
        %5076 = vmatpush1.msra.mxu0 0.0
        %5077 = vmatprep.subr.mxu0 0.0
        %5078 = vmatpush1.msra.mxu0 0.0
        %5079 = vmatprep.subr.mxu0 0.0
        %5080 = vmatpush1.msra.mxu0 0.0
        %5081 = vmatprep.subr.mxu0 0.0
        %5082 = vmatpush1.msra.mxu0 0.0
        %5083 = vmatprep.subr.mxu0 0.0
        %5084 = vmatpush1.msra.mxu0 0.0
        %5085 = vmatprep.subr.mxu0 0.0
        %5086 = vmatpush1.msra.mxu0 0.0
        %5087 = vmatprep.subr.mxu0 0.0
        %5088 = vmatpush1.msra.mxu0 0.0
        %5089 = vmatprep.subr.mxu0 0.0
        %5090 = vmatpush1.msra.mxu0 0.0
        %5091 = vmatprep.mubr.f32.mxu0 0.0
        %v5092 = vand.u32 %v4610, 4294901760
        %5093 = vmatmul.mubr.f32.gmra.mrb[0].mxu0 %v5092
        %v5094 = vpop.f32.mrb[0].mxu0
        %v5095 = vadd.f32 %v5017, %v5094
        %v5096 = vpop.f32.mrb[0].mxu0
        %5097 = vmatprep.mubr.f32.mxu0 0.0
        %v5098 = vand.u32 %v4613, 4294901760
        %5099 = vmatmul.mubr.f32.gmra.mrb[0].mxu0 %v5098
        %v5100 = vpop.f32.mrb[0].mxu0
        %v5101 = vadd.f32 %v5023, %v5100
        %v5102 = vpop.f32.mrb[0].mxu0
        %5103 = vdwg.mxu0
        %5104 = vrot.lane.b32.xlu0 %v1130, 32
        %v5105 = vpop.permute.xlu0 %5104
        %5106 = vrot.lane.b32.xlu0 %v1136, 32
        %v5107 = vpop.permute.xlu0 %5106
        %5108 = vrot.lane.b32.xlu0 %v2034, 32
        %v5109 = vpop.permute.xlu0 %5108
        %v5110 = vsel %vm2038, %v5105, 0
        %v5112 = vsel %vm2038, %v5107, 0
        %v5114 = vsel %vm2038, %v5109, 0
        %5116 = vmatprep.subr.mxu0 0.0
        %v5117 = vand.u32 %v5114, 4294901760
        %5118 = vmatpush1.xpose.msra.mxu0 %v5117
        %5119 = vmatprep.subr.mxu0 0.0
        %5120 = vmatpush1.xpose.msra.mxu0 0.0
        %5121 = vmatprep.subr.mxu0 0.0
        %5122 = vmatpush1.xpose.msra.mxu0 0.0
        %5123 = vmatprep.subr.mxu0 0.0
        %5124 = vmatpush1.xpose.msra.mxu0 0.0
        %5125 = vmatprep.subr.mxu0 0.0
        %5126 = vmatpush1.xpose.msra.mxu0 0.0
        %5127 = vmatprep.subr.mxu0 0.0
        %5128 = vmatpush1.xpose.msra.mxu0 0.0
        %5129 = vmatprep.subr.mxu0 0.0
        %5130 = vmatpush1.xpose.msra.mxu0 0.0
        %5131 = vmatprep.subr.mxu0 0.0
        %5132 = vmatpush1.xpose.msra.mxu0 0.0
        %5133 = vmatprep.subr.mxu0 0.0
        %5134 = vmatpush1.xpose.msra.mxu0 0.0
        %5135 = vmatprep.subr.mxu0 0.0
        %5136 = vmatpush1.xpose.msra.mxu0 0.0
        %5137 = vmatprep.subr.mxu0 0.0
        %5138 = vmatpush1.xpose.msra.mxu0 0.0
        %5139 = vmatprep.subr.mxu0 0.0
        %5140 = vmatpush1.xpose.msra.mxu0 0.0
        %5141 = vmatprep.subr.mxu0 0.0
        %5142 = vmatpush1.xpose.msra.mxu0 0.0
        %5143 = vmatprep.subr.mxu0 0.0
        %5144 = vmatpush1.xpose.msra.mxu0 0.0
        %5145 = vmatprep.subr.mxu0 0.0
        %5146 = vmatpush1.xpose.msra.mxu0 0.0
        %5147 = vmatprep.subr.mxu0 0.0
        %5148 = vmatpush1.xpose.msra.mxu0 0.0
        %5149 = vmatprep.subr.mxu0 0.0
        %5150 = vmatpush1.xpose.msra.mxu0 0.0
        %5151 = vmatprep.subr.mxu0 0.0
        %5152 = vmatpush1.xpose.msra.mxu0 0.0
        %5153 = vmatprep.subr.mxu0 0.0
        %5154 = vmatpush1.xpose.msra.mxu0 0.0
        %5155 = vmatprep.subr.mxu0 0.0
        %5156 = vmatpush1.xpose.msra.mxu0 0.0
        %5157 = vmatprep.subr.mxu0 0.0
        %5158 = vmatpush1.xpose.msra.mxu0 0.0
        %5159 = vmatprep.subr.mxu0 0.0
        %5160 = vmatpush1.xpose.msra.mxu0 0.0
        %5161 = vmatprep.subr.mxu0 0.0
        %5162 = vmatpush1.xpose.msra.mxu0 0.0
        %5163 = vmatprep.subr.mxu0 0.0
        %5164 = vmatpush1.xpose.msra.mxu0 0.0
        %5165 = vmatprep.subr.mxu0 0.0
        %5166 = vmatpush1.xpose.msra.mxu0 0.0
        %5167 = vmatprep.subr.mxu0 0.0
        %5168 = vmatpush1.xpose.msra.mxu0 0.0
        %5169 = vmatprep.subr.mxu0 0.0
        %5170 = vmatpush1.xpose.msra.mxu0 0.0
        %5171 = vmatprep.subr.mxu0 0.0
        %5172 = vmatpush1.xpose.msra.mxu0 0.0
        %5173 = vmatprep.subr.mxu0 0.0
        %5174 = vmatpush1.xpose.msra.mxu0 0.0
        %5175 = vmatprep.subr.mxu0 0.0
        %5176 = vmatpush1.xpose.msra.mxu0 0.0
        %5177 = vmatprep.subr.mxu0 0.0
        %5178 = vmatpush1.xpose.msra.mxu0 0.0
        %5179 = vmatprep.subr.mxu0 0.0
        %5180 = vmatpush1.xpose.msra.mxu0 0.0
        %5181 = vmatprep.mubr.f32.mxu0 0.0
        %v5182 = vand.u32 %v5110, 4294901760
        %v5183 = vsub.f32 %v5110, %v5182
        %v5184 = vand.u32 %v5183, 4294901760
        %v5185 = vsub.f32 %v5183, %v5184
        %v5186 = vand.u32 %v5185, 4294901760
        %5187 = vmatmul.mubr.f32.gmra.mrb[0].mxu0 %v5186
        %v5188 = vpop.f32.mrb[0].mxu0
        %v5189 = vadd.f32 0.0, %v5188
        %v5190 = vpop.f32.mrb[0].mxu0
        %5191 = vmatprep.mubr.f32.mxu0 0.0
        %v5192 = vand.u32 %v5112, 4294901760
        %v5193 = vsub.f32 %v5112, %v5192
        %v5194 = vand.u32 %v5193, 4294901760
        %v5195 = vsub.f32 %v5193, %v5194
        %v5196 = vand.u32 %v5195, 4294901760
        %5197 = vmatmul.mubr.f32.gmra.mrb[0].mxu0 %v5196
        %v5198 = vpop.f32.mrb[0].mxu0
        %v5199 = vadd.f32 0.0, %v5198
        %v5200 = vpop.f32.mrb[0].mxu0
        %5201 = vdwg.mxu0
        %5202 = vmatprep.subr.mxu0 0.0
        %v5203 = vand.u32 %v5114, 4294901760
        %v5204 = vsub.f32 %v5114, %v5203
        %v5205 = vand.u32 %v5204, 4294901760
        %v5206 = vsub.f32 %v5204, %v5205
        %v5207 = vand.u32 %v5206, 4294901760
        %5208 = vmatpush1.xpose.msra.mxu0 %v5207
        %5209 = vmatprep.subr.mxu0 0.0
        %5210 = vmatpush1.xpose.msra.mxu0 0.0
        %5211 = vmatprep.subr.mxu0 0.0
        %5212 = vmatpush1.xpose.msra.mxu0 0.0
        %5213 = vmatprep.subr.mxu0 0.0
        %5214 = vmatpush1.xpose.msra.mxu0 0.0
        %5215 = vmatprep.subr.mxu0 0.0
        %5216 = vmatpush1.xpose.msra.mxu0 0.0
        %5217 = vmatprep.subr.mxu0 0.0
        %5218 = vmatpush1.xpose.msra.mxu0 0.0
        %5219 = vmatprep.subr.mxu0 0.0
        %5220 = vmatpush1.xpose.msra.mxu0 0.0
        %5221 = vmatprep.subr.mxu0 0.0
        %5222 = vmatpush1.xpose.msra.mxu0 0.0
        %5223 = vmatprep.subr.mxu0 0.0
        %5224 = vmatpush1.xpose.msra.mxu0 0.0
        %5225 = vmatprep.subr.mxu0 0.0
        %5226 = vmatpush1.xpose.msra.mxu0 0.0
        %5227 = vmatprep.subr.mxu0 0.0
        %5228 = vmatpush1.xpose.msra.mxu0 0.0
        %5229 = vmatprep.subr.mxu0 0.0
        %5230 = vmatpush1.xpose.msra.mxu0 0.0
        %5231 = vmatprep.subr.mxu0 0.0
        %5232 = vmatpush1.xpose.msra.mxu0 0.0
        %5233 = vmatprep.subr.mxu0 0.0
        %5234 = vmatpush1.xpose.msra.mxu0 0.0
        %5235 = vmatprep.subr.mxu0 0.0
        %5236 = vmatpush1.xpose.msra.mxu0 0.0
        %5237 = vmatprep.subr.mxu0 0.0
        %5238 = vmatpush1.xpose.msra.mxu0 0.0
        %5239 = vmatprep.subr.mxu0 0.0
        %5240 = vmatpush1.xpose.msra.mxu0 0.0
        %5241 = vmatprep.subr.mxu0 0.0
        %5242 = vmatpush1.xpose.msra.mxu0 0.0
        %5243 = vmatprep.subr.mxu0 0.0
        %5244 = vmatpush1.xpose.msra.mxu0 0.0
        %5245 = vmatprep.subr.mxu0 0.0
        %5246 = vmatpush1.xpose.msra.mxu0 0.0
        %5247 = vmatprep.subr.mxu0 0.0
        %5248 = vmatpush1.xpose.msra.mxu0 0.0
        %5249 = vmatprep.subr.mxu0 0.0
        %5250 = vmatpush1.xpose.msra.mxu0 0.0
        %5251 = vmatprep.subr.mxu0 0.0
        %5252 = vmatpush1.xpose.msra.mxu0 0.0
        %5253 = vmatprep.subr.mxu0 0.0
        %5254 = vmatpush1.xpose.msra.mxu0 0.0
        %5255 = vmatprep.subr.mxu0 0.0
        %5256 = vmatpush1.xpose.msra.mxu0 0.0
        %5257 = vmatprep.subr.mxu0 0.0
        %5258 = vmatpush1.xpose.msra.mxu0 0.0
        %5259 = vmatprep.subr.mxu0 0.0
        %5260 = vmatpush1.xpose.msra.mxu0 0.0
        %5261 = vmatprep.subr.mxu0 0.0
        %5262 = vmatpush1.xpose.msra.mxu0 0.0
        %5263 = vmatprep.subr.mxu0 0.0
        %5264 = vmatpush1.xpose.msra.mxu0 0.0
        %5265 = vmatprep.subr.mxu0 0.0
        %5266 = vmatpush1.xpose.msra.mxu0 0.0
        %5267 = vmatprep.subr.mxu0 0.0
        %5268 = vmatpush1.xpose.msra.mxu0 0.0
        %5269 = vmatprep.subr.mxu0 0.0
        %5270 = vmatpush1.xpose.msra.mxu0 0.0
        %5271 = vmatprep.mubr.f32.mxu0 0.0
        %v5272 = vand.u32 %v5110, 4294901760
        %5273 = vmatmul.mubr.f32.gmra.mrb[0].mxu0 %v5272
        %v5274 = vpop.f32.mrb[0].mxu0
        %v5275 = vadd.f32 %v5189, %v5274
        %v5276 = vpop.f32.mrb[0].mxu0
        %5277 = vmatprep.mubr.f32.mxu0 0.0
        %v5278 = vand.u32 %v5112, 4294901760
        %5279 = vmatmul.mubr.f32.gmra.mrb[0].mxu0 %v5278
        %v5280 = vpop.f32.mrb[0].mxu0
        %v5281 = vadd.f32 %v5199, %v5280
        %v5282 = vpop.f32.mrb[0].mxu0
        %5283 = vdwg.mxu0
        %5284 = vmatprep.subr.mxu0 0.0
        %v5285 = vand.u32 %v5114, 4294901760
        %v5286 = vsub.f32 %v5114, %v5285
        %5287 = vmatpush1.xpose.msra.mxu0 %v5286
        %5288 = vmatprep.subr.mxu0 0.0
        %5289 = vmatpush1.xpose.msra.mxu0 0.0
        %5290 = vmatprep.subr.mxu0 0.0
        %5291 = vmatpush1.xpose.msra.mxu0 0.0
        %5292 = vmatprep.subr.mxu0 0.0
        %5293 = vmatpush1.xpose.msra.mxu0 0.0
        %5294 = vmatprep.subr.mxu0 0.0
        %5295 = vmatpush1.xpose.msra.mxu0 0.0
        %5296 = vmatprep.subr.mxu0 0.0
        %5297 = vmatpush1.xpose.msra.mxu0 0.0
        %5298 = vmatprep.subr.mxu0 0.0
        %5299 = vmatpush1.xpose.msra.mxu0 0.0
        %5300 = vmatprep.subr.mxu0 0.0
        %5301 = vmatpush1.xpose.msra.mxu0 0.0
        %5302 = vmatprep.subr.mxu0 0.0
        %5303 = vmatpush1.xpose.msra.mxu0 0.0
        %5304 = vmatprep.subr.mxu0 0.0
        %5305 = vmatpush1.xpose.msra.mxu0 0.0
        %5306 = vmatprep.subr.mxu0 0.0
        %5307 = vmatpush1.xpose.msra.mxu0 0.0
        %5308 = vmatprep.subr.mxu0 0.0
        %5309 = vmatpush1.xpose.msra.mxu0 0.0
        %5310 = vmatprep.subr.mxu0 0.0
        %5311 = vmatpush1.xpose.msra.mxu0 0.0
        %5312 = vmatprep.subr.mxu0 0.0
        %5313 = vmatpush1.xpose.msra.mxu0 0.0
        %5314 = vmatprep.subr.mxu0 0.0
        %5315 = vmatpush1.xpose.msra.mxu0 0.0
        %5316 = vmatprep.subr.mxu0 0.0
        %5317 = vmatpush1.xpose.msra.mxu0 0.0
        %5318 = vmatprep.subr.mxu0 0.0
        %5319 = vmatpush1.xpose.msra.mxu0 0.0
        %5320 = vmatprep.subr.mxu0 0.0
        %5321 = vmatpush1.xpose.msra.mxu0 0.0
        %5322 = vmatprep.subr.mxu0 0.0
        %5323 = vmatpush1.xpose.msra.mxu0 0.0
        %5324 = vmatprep.subr.mxu0 0.0
        %5325 = vmatpush1.xpose.msra.mxu0 0.0
        %5326 = vmatprep.subr.mxu0 0.0
        %5327 = vmatpush1.xpose.msra.mxu0 0.0
        %5328 = vmatprep.subr.mxu0 0.0
        %5329 = vmatpush1.xpose.msra.mxu0 0.0
        %5330 = vmatprep.subr.mxu0 0.0
        %5331 = vmatpush1.xpose.msra.mxu0 0.0
        %5332 = vmatprep.subr.mxu0 0.0
        %5333 = vmatpush1.xpose.msra.mxu0 0.0
        %5334 = vmatprep.subr.mxu0 0.0
        %5335 = vmatpush1.xpose.msra.mxu0 0.0
        %5336 = vmatprep.subr.mxu0 0.0
        %5337 = vmatpush1.xpose.msra.mxu0 0.0
        %5338 = vmatprep.subr.mxu0 0.0
        %5339 = vmatpush1.xpose.msra.mxu0 0.0
        %5340 = vmatprep.subr.mxu0 0.0
        %5341 = vmatpush1.xpose.msra.mxu0 0.0
        %5342 = vmatprep.subr.mxu0 0.0
        %5343 = vmatpush1.xpose.msra.mxu0 0.0
        %5344 = vmatprep.subr.mxu0 0.0
        %5345 = vmatpush1.xpose.msra.mxu0 0.0
        %5346 = vmatprep.subr.mxu0 0.0
        %5347 = vmatpush1.xpose.msra.mxu0 0.0
        %5348 = vmatprep.subr.mxu0 0.0
        %5349 = vmatpush1.xpose.msra.mxu0 0.0
        %5350 = vmatprep.mubr.f32.mxu0 0.0
        %v5351 = vand.u32 %v5110, 4294901760
        %v5352 = vsub.f32 %v5110, %v5351
        %5353 = vmatmul.mubr.f32.gmra.mrb[0].mxu0 %v5352
        %v5354 = vpop.f32.mrb[0].mxu0
        %v5355 = vadd.f32 %v5275, %v5354
        %v5356 = vpop.f32.mrb[0].mxu0
        %5357 = vmatprep.mubr.f32.mxu0 0.0
        %v5358 = vand.u32 %v5112, 4294901760
        %v5359 = vsub.f32 %v5112, %v5358
        %5360 = vmatmul.mubr.f32.gmra.mrb[0].mxu0 %v5359
        %v5361 = vpop.f32.mrb[0].mxu0
        %v5362 = vadd.f32 %v5281, %v5361
        %v5363 = vpop.f32.mrb[0].mxu0
        %5364 = vdwg.mxu0
        %5365 = vmatprep.subr.mxu0 0.0
        %v5366 = vand.u32 %v5114, 4294901760
        %5367 = vmatpush1.xpose.msra.mxu0 %v5366
        %5368 = vmatprep.subr.mxu0 0.0
        %5369 = vmatpush1.xpose.msra.mxu0 0.0
        %5370 = vmatprep.subr.mxu0 0.0
        %5371 = vmatpush1.xpose.msra.mxu0 0.0
        %5372 = vmatprep.subr.mxu0 0.0
        %5373 = vmatpush1.xpose.msra.mxu0 0.0
        %5374 = vmatprep.subr.mxu0 0.0
        %5375 = vmatpush1.xpose.msra.mxu0 0.0
        %5376 = vmatprep.subr.mxu0 0.0
        %5377 = vmatpush1.xpose.msra.mxu0 0.0
        %5378 = vmatprep.subr.mxu0 0.0
        %5379 = vmatpush1.xpose.msra.mxu0 0.0
        %5380 = vmatprep.subr.mxu0 0.0
        %5381 = vmatpush1.xpose.msra.mxu0 0.0
        %5382 = vmatprep.subr.mxu0 0.0
        %5383 = vmatpush1.xpose.msra.mxu0 0.0
        %5384 = vmatprep.subr.mxu0 0.0
        %5385 = vmatpush1.xpose.msra.mxu0 0.0
        %5386 = vmatprep.subr.mxu0 0.0
        %5387 = vmatpush1.xpose.msra.mxu0 0.0
        %5388 = vmatprep.subr.mxu0 0.0
        %5389 = vmatpush1.xpose.msra.mxu0 0.0
        %5390 = vmatprep.subr.mxu0 0.0
        %5391 = vmatpush1.xpose.msra.mxu0 0.0
        %5392 = vmatprep.subr.mxu0 0.0
        %5393 = vmatpush1.xpose.msra.mxu0 0.0
        %5394 = vmatprep.subr.mxu0 0.0
        %5395 = vmatpush1.xpose.msra.mxu0 0.0
        %5396 = vmatprep.subr.mxu0 0.0
        %5397 = vmatpush1.xpose.msra.mxu0 0.0
        %5398 = vmatprep.subr.mxu0 0.0
        %5399 = vmatpush1.xpose.msra.mxu0 0.0
        %5400 = vmatprep.subr.mxu0 0.0
        %5401 = vmatpush1.xpose.msra.mxu0 0.0
        %5402 = vmatprep.subr.mxu0 0.0
        %5403 = vmatpush1.xpose.msra.mxu0 0.0
        %5404 = vmatprep.subr.mxu0 0.0
        %5405 = vmatpush1.xpose.msra.mxu0 0.0
        %5406 = vmatprep.subr.mxu0 0.0
        %5407 = vmatpush1.xpose.msra.mxu0 0.0
        %5408 = vmatprep.subr.mxu0 0.0
        %5409 = vmatpush1.xpose.msra.mxu0 0.0
        %5410 = vmatprep.subr.mxu0 0.0
        %5411 = vmatpush1.xpose.msra.mxu0 0.0
        %5412 = vmatprep.subr.mxu0 0.0
        %5413 = vmatpush1.xpose.msra.mxu0 0.0
        %5414 = vmatprep.subr.mxu0 0.0
        %5415 = vmatpush1.xpose.msra.mxu0 0.0
        %5416 = vmatprep.subr.mxu0 0.0
        %5417 = vmatpush1.xpose.msra.mxu0 0.0
        %5418 = vmatprep.subr.mxu0 0.0
        %5419 = vmatpush1.xpose.msra.mxu0 0.0
        %5420 = vmatprep.subr.mxu0 0.0
        %5421 = vmatpush1.xpose.msra.mxu0 0.0
        %5422 = vmatprep.subr.mxu0 0.0
        %5423 = vmatpush1.xpose.msra.mxu0 0.0
        %5424 = vmatprep.subr.mxu0 0.0
        %5425 = vmatpush1.xpose.msra.mxu0 0.0
        %5426 = vmatprep.subr.mxu0 0.0
        %5427 = vmatpush1.xpose.msra.mxu0 0.0
        %5428 = vmatprep.subr.mxu0 0.0
        %5429 = vmatpush1.xpose.msra.mxu0 0.0
        %5430 = vmatprep.mubr.f32.mxu0 0.0
        %v5431 = vand.u32 %v5110, 4294901760
        %v5432 = vsub.f32 %v5110, %v5431
        %v5433 = vand.u32 %v5432, 4294901760
        %5434 = vmatmul.mubr.f32.gmra.mrb[0].mxu0 %v5433
        %v5435 = vpop.f32.mrb[0].mxu0
        %v5436 = vadd.f32 %v5355, %v5435
        %v5437 = vpop.f32.mrb[0].mxu0
        %5438 = vmatprep.mubr.f32.mxu0 0.0
        %v5439 = vand.u32 %v5112, 4294901760
        %v5440 = vsub.f32 %v5112, %v5439
        %v5441 = vand.u32 %v5440, 4294901760
        %5442 = vmatmul.mubr.f32.gmra.mrb[0].mxu0 %v5441
        %v5443 = vpop.f32.mrb[0].mxu0
        %v5444 = vadd.f32 %v5362, %v5443
        %v5445 = vpop.f32.mrb[0].mxu0
        %5446 = vdwg.mxu0
        %5447 = vmatprep.subr.mxu0 0.0
        %v5448 = vand.u32 %v5114, 4294901760
        %v5449 = vsub.f32 %v5114, %v5448
        %v5450 = vand.u32 %v5449, 4294901760
        %5451 = vmatpush1.xpose.msra.mxu0 %v5450
        %5452 = vmatprep.subr.mxu0 0.0
        %5453 = vmatpush1.xpose.msra.mxu0 0.0
        %5454 = vmatprep.subr.mxu0 0.0
        %5455 = vmatpush1.xpose.msra.mxu0 0.0
        %5456 = vmatprep.subr.mxu0 0.0
        %5457 = vmatpush1.xpose.msra.mxu0 0.0
        %5458 = vmatprep.subr.mxu0 0.0
        %5459 = vmatpush1.xpose.msra.mxu0 0.0
        %5460 = vmatprep.subr.mxu0 0.0
        %5461 = vmatpush1.xpose.msra.mxu0 0.0
        %5462 = vmatprep.subr.mxu0 0.0
        %5463 = vmatpush1.xpose.msra.mxu0 0.0
        %5464 = vmatprep.subr.mxu0 0.0
        %5465 = vmatpush1.xpose.msra.mxu0 0.0
        %5466 = vmatprep.subr.mxu0 0.0
        %5467 = vmatpush1.xpose.msra.mxu0 0.0
        %5468 = vmatprep.subr.mxu0 0.0
        %5469 = vmatpush1.xpose.msra.mxu0 0.0
        %5470 = vmatprep.subr.mxu0 0.0
        %5471 = vmatpush1.xpose.msra.mxu0 0.0
        %5472 = vmatprep.subr.mxu0 0.0
        %5473 = vmatpush1.xpose.msra.mxu0 0.0
        %5474 = vmatprep.subr.mxu0 0.0
        %5475 = vmatpush1.xpose.msra.mxu0 0.0
        %5476 = vmatprep.subr.mxu0 0.0
        %5477 = vmatpush1.xpose.msra.mxu0 0.0
        %5478 = vmatprep.subr.mxu0 0.0
        %5479 = vmatpush1.xpose.msra.mxu0 0.0
        %5480 = vmatprep.subr.mxu0 0.0
        %5481 = vmatpush1.xpose.msra.mxu0 0.0
        %5482 = vmatprep.subr.mxu0 0.0
        %5483 = vmatpush1.xpose.msra.mxu0 0.0
        %5484 = vmatprep.subr.mxu0 0.0
        %5485 = vmatpush1.xpose.msra.mxu0 0.0
        %5486 = vmatprep.subr.mxu0 0.0
        %5487 = vmatpush1.xpose.msra.mxu0 0.0
        %5488 = vmatprep.subr.mxu0 0.0
        %5489 = vmatpush1.xpose.msra.mxu0 0.0
        %5490 = vmatprep.subr.mxu0 0.0
        %5491 = vmatpush1.xpose.msra.mxu0 0.0
        %5492 = vmatprep.subr.mxu0 0.0
        %5493 = vmatpush1.xpose.msra.mxu0 0.0
        %5494 = vmatprep.subr.mxu0 0.0
        %5495 = vmatpush1.xpose.msra.mxu0 0.0
        %5496 = vmatprep.subr.mxu0 0.0
        %5497 = vmatpush1.xpose.msra.mxu0 0.0
        %5498 = vmatprep.subr.mxu0 0.0
        %5499 = vmatpush1.xpose.msra.mxu0 0.0
        %5500 = vmatprep.subr.mxu0 0.0
        %5501 = vmatpush1.xpose.msra.mxu0 0.0
        %5502 = vmatprep.subr.mxu0 0.0
        %5503 = vmatpush1.xpose.msra.mxu0 0.0
        %5504 = vmatprep.subr.mxu0 0.0
        %5505 = vmatpush1.xpose.msra.mxu0 0.0
        %5506 = vmatprep.subr.mxu0 0.0
        %5507 = vmatpush1.xpose.msra.mxu0 0.0
        %5508 = vmatprep.subr.mxu0 0.0
        %5509 = vmatpush1.xpose.msra.mxu0 0.0
        %5510 = vmatprep.subr.mxu0 0.0
        %5511 = vmatpush1.xpose.msra.mxu0 0.0
        %5512 = vmatprep.subr.mxu0 0.0
        %5513 = vmatpush1.xpose.msra.mxu0 0.0
        %5514 = vmatprep.mubr.f32.mxu0 0.0
        %v5515 = vand.u32 %v5110, 4294901760
        %5516 = vmatmul.mubr.f32.gmra.mrb[0].mxu0 %v5515
        %v5517 = vpop.f32.mrb[0].mxu0
        %v5518 = vadd.f32 %v5436, %v5517
        %v5519 = vpop.f32.mrb[0].mxu0
        %5520 = vmatprep.mubr.f32.mxu0 0.0
        %v5521 = vand.u32 %v5112, 4294901760
        %5522 = vmatmul.mubr.f32.gmra.mrb[0].mxu0 %v5521
        %v5523 = vpop.f32.mrb[0].mxu0
        %v5524 = vadd.f32 %v5444, %v5523
        %v5525 = vpop.f32.mrb[0].mxu0
        %5526 = vdwg.mxu0
        %5527 = vmatprep.subr.mxu0 0.0
        %v5528 = vand.u32 %v5114, 4294901760
        %5529 = vmatpush1.xpose.msra.mxu0 %v5528
        %5530 = vmatprep.subr.mxu0 0.0
        %5531 = vmatpush1.xpose.msra.mxu0 0.0
        %5532 = vmatprep.subr.mxu0 0.0
        %5533 = vmatpush1.xpose.msra.mxu0 0.0
        %5534 = vmatprep.subr.mxu0 0.0
        %5535 = vmatpush1.xpose.msra.mxu0 0.0
        %5536 = vmatprep.subr.mxu0 0.0
        %5537 = vmatpush1.xpose.msra.mxu0 0.0
        %5538 = vmatprep.subr.mxu0 0.0
        %5539 = vmatpush1.xpose.msra.mxu0 0.0
        %5540 = vmatprep.subr.mxu0 0.0
        %5541 = vmatpush1.xpose.msra.mxu0 0.0
        %5542 = vmatprep.subr.mxu0 0.0
        %5543 = vmatpush1.xpose.msra.mxu0 0.0
        %5544 = vmatprep.subr.mxu0 0.0
        %5545 = vmatpush1.xpose.msra.mxu0 0.0
        %5546 = vmatprep.subr.mxu0 0.0
        %5547 = vmatpush1.xpose.msra.mxu0 0.0
        %5548 = vmatprep.subr.mxu0 0.0
        %5549 = vmatpush1.xpose.msra.mxu0 0.0
        %5550 = vmatprep.subr.mxu0 0.0
        %5551 = vmatpush1.xpose.msra.mxu0 0.0
        %5552 = vmatprep.subr.mxu0 0.0
        %5553 = vmatpush1.xpose.msra.mxu0 0.0
        %5554 = vmatprep.subr.mxu0 0.0
        %5555 = vmatpush1.xpose.msra.mxu0 0.0
        %5556 = vmatprep.subr.mxu0 0.0
        %5557 = vmatpush1.xpose.msra.mxu0 0.0
        %5558 = vmatprep.subr.mxu0 0.0
        %5559 = vmatpush1.xpose.msra.mxu0 0.0
        %5560 = vmatprep.subr.mxu0 0.0
        %5561 = vmatpush1.xpose.msra.mxu0 0.0
        %5562 = vmatprep.subr.mxu0 0.0
        %5563 = vmatpush1.xpose.msra.mxu0 0.0
        %5564 = vmatprep.subr.mxu0 0.0
        %5565 = vmatpush1.xpose.msra.mxu0 0.0
        %5566 = vmatprep.subr.mxu0 0.0
        %5567 = vmatpush1.xpose.msra.mxu0 0.0
        %5568 = vmatprep.subr.mxu0 0.0
        %5569 = vmatpush1.xpose.msra.mxu0 0.0
        %5570 = vmatprep.subr.mxu0 0.0
        %5571 = vmatpush1.xpose.msra.mxu0 0.0
        %5572 = vmatprep.subr.mxu0 0.0
        %5573 = vmatpush1.xpose.msra.mxu0 0.0
        %5574 = vmatprep.subr.mxu0 0.0
        %5575 = vmatpush1.xpose.msra.mxu0 0.0
        %5576 = vmatprep.subr.mxu0 0.0
        %5577 = vmatpush1.xpose.msra.mxu0 0.0
        %5578 = vmatprep.subr.mxu0 0.0
        %5579 = vmatpush1.xpose.msra.mxu0 0.0
        %5580 = vmatprep.subr.mxu0 0.0
        %5581 = vmatpush1.xpose.msra.mxu0 0.0
        %5582 = vmatprep.subr.mxu0 0.0
        %5583 = vmatpush1.xpose.msra.mxu0 0.0
        %5584 = vmatprep.subr.mxu0 0.0
        %5585 = vmatpush1.xpose.msra.mxu0 0.0
        %5586 = vmatprep.subr.mxu0 0.0
        %5587 = vmatpush1.xpose.msra.mxu0 0.0
        %5588 = vmatprep.subr.mxu0 0.0
        %5589 = vmatpush1.xpose.msra.mxu0 0.0
        %5590 = vmatprep.subr.mxu0 0.0
        %5591 = vmatpush1.xpose.msra.mxu0 0.0
        %5592 = vmatprep.mubr.f32.mxu0 0.0
        %v5593 = vand.u32 %v5110, 4294901760
        %5594 = vmatmul.mubr.f32.gmra.mrb[0].mxu0 %v5593
        %v5595 = vpop.f32.mrb[0].mxu0
        %v5596 = vadd.f32 %v5518, %v5595
        %v5597 = vpop.f32.mrb[0].mxu0
        %5598 = vmatprep.mubr.f32.mxu0 0.0
        %v5599 = vand.u32 %v5112, 4294901760
        %5600 = vmatmul.mubr.f32.gmra.mrb[0].mxu0 %v5599
        %v5601 = vpop.f32.mrb[0].mxu0
        %v5602 = vadd.f32 %v5524, %v5601
        %v5603 = vpop.f32.mrb[0].mxu0
        %5604 = vdwg.mxu0
        %v5605 = vmul.f32 %v5596, 0.088388346
        %v5606 = vmul.f32 %v5602, 0.088388346
        %v5607 = vsel %vm2539, %v5605, -inf
        %5608 = vmax.xlane.f32.xlu0 %v5607
        %v5609 = vpop.xlane.xlu0 %5608
        %v5610 = vsel %vm2539, %v5606, -inf
        %5611 = vmax.xlane.f32.xlu0 %v5610
        %v5612 = vpop.xlane.xlu0 %5611
        %v5613 = vsub.f32 %v5605, %v5609
        %v5614 = vsub.f32 %v5606, %v5612
        %v5615 = vmul.f32 %v5613, 1.442695
        %v5616 = vpow.pop %v5615
        %v5617 = vmul.f32 %v5614, 1.442695
        %v5618 = vpow.pop %v5617
        %v5619 = vsel %vm2539, %v5616, 0.0
        %5620 = vadd.xlane.f32.xlu0 %v5619
        %v5621 = vpop.xlane.xlu0 %5620
        %v5622 = vsel %vm2539, %v5618, 0.0
        %5623 = vadd.xlane.f32.xlu0 %v5622
        %v5624 = vpop.xlane.xlu0 %5623
        %v5625 = vrcp.pop %v5621
        %v5626 = vmul.f32 %v5616, %v5625
        %v5627 = vrcp.pop %v5624
        %v5628 = vmul.f32 %v5618, %v5627
        %5629 = vrot.lane.b32.xlu0 %v2036, 32
        %v5630 = vpop.permute.xlu0 %5629
        %v5633 = vsel %vm2539, %v5626, 0
        %v5636 = vsel %vm2539, %v5628, 0
        %5638 = vmatprep.subr.mxu0 0.0
        %v5639 = vand.u32 %v5630, 4294901760
        %5640 = vmatpush1.msra.mxu0 %v5639
        %5641 = vmatprep.subr.mxu0 0.0
        %5642 = vmatpush1.msra.mxu0 0.0
        %5643 = vmatprep.subr.mxu0 0.0
        %5644 = vmatpush1.msra.mxu0 0.0
        %5645 = vmatprep.subr.mxu0 0.0
        %5646 = vmatpush1.msra.mxu0 0.0
        %5647 = vmatprep.subr.mxu0 0.0
        %5648 = vmatpush1.msra.mxu0 0.0
        %5649 = vmatprep.subr.mxu0 0.0
        %5650 = vmatpush1.msra.mxu0 0.0
        %5651 = vmatprep.subr.mxu0 0.0
        %5652 = vmatpush1.msra.mxu0 0.0
        %5653 = vmatprep.subr.mxu0 0.0
        %5654 = vmatpush1.msra.mxu0 0.0
        %5655 = vmatprep.subr.mxu0 0.0
        %5656 = vmatpush1.msra.mxu0 0.0
        %5657 = vmatprep.subr.mxu0 0.0
        %5658 = vmatpush1.msra.mxu0 0.0
        %5659 = vmatprep.subr.mxu0 0.0
        %5660 = vmatpush1.msra.mxu0 0.0
        %5661 = vmatprep.subr.mxu0 0.0
        %5662 = vmatpush1.msra.mxu0 0.0
        %5663 = vmatprep.subr.mxu0 0.0
        %5664 = vmatpush1.msra.mxu0 0.0
        %5665 = vmatprep.subr.mxu0 0.0
        %5666 = vmatpush1.msra.mxu0 0.0
        %5667 = vmatprep.subr.mxu0 0.0
        %5668 = vmatpush1.msra.mxu0 0.0
        %5669 = vmatprep.subr.mxu0 0.0
        %5670 = vmatpush1.msra.mxu0 0.0
        %5671 = vmatprep.subr.mxu0 0.0
        %5672 = vmatpush1.msra.mxu0 0.0
        %5673 = vmatprep.subr.mxu0 0.0
        %5674 = vmatpush1.msra.mxu0 0.0
        %5675 = vmatprep.subr.mxu0 0.0
        %5676 = vmatpush1.msra.mxu0 0.0
        %5677 = vmatprep.subr.mxu0 0.0
        %5678 = vmatpush1.msra.mxu0 0.0
        %5679 = vmatprep.subr.mxu0 0.0
        %5680 = vmatpush1.msra.mxu0 0.0
        %5681 = vmatprep.subr.mxu0 0.0
        %5682 = vmatpush1.msra.mxu0 0.0
        %5683 = vmatprep.subr.mxu0 0.0
        %5684 = vmatpush1.msra.mxu0 0.0
        %5685 = vmatprep.subr.mxu0 0.0
        %5686 = vmatpush1.msra.mxu0 0.0
        %5687 = vmatprep.subr.mxu0 0.0
        %5688 = vmatpush1.msra.mxu0 0.0
        %5689 = vmatprep.subr.mxu0 0.0
        %5690 = vmatpush1.msra.mxu0 0.0
        %5691 = vmatprep.subr.mxu0 0.0
        %5692 = vmatpush1.msra.mxu0 0.0
        %5693 = vmatprep.subr.mxu0 0.0
        %5694 = vmatpush1.msra.mxu0 0.0
        %5695 = vmatprep.subr.mxu0 0.0
        %5696 = vmatpush1.msra.mxu0 0.0
        %5697 = vmatprep.subr.mxu0 0.0
        %5698 = vmatpush1.msra.mxu0 0.0
        %5699 = vmatprep.subr.mxu0 0.0
        %5700 = vmatpush1.msra.mxu0 0.0
        %5701 = vmatprep.subr.mxu0 0.0
        %5702 = vmatpush1.msra.mxu0 0.0
        %5703 = vmatprep.mubr.f32.mxu0 0.0
        %v5704 = vand.u32 %v5633, 4294901760
        %v5705 = vsub.f32 %v5633, %v5704
        %v5706 = vand.u32 %v5705, 4294901760
        %v5707 = vsub.f32 %v5705, %v5706
        %v5708 = vand.u32 %v5707, 4294901760
        %5709 = vmatmul.mubr.f32.gmra.mrb[0].mxu0 %v5708
        %v5710 = vpop.f32.mrb[0].mxu0
        %v5711 = vadd.f32 0.0, %v5710
        %v5712 = vpop.f32.mrb[0].mxu0
        %5713 = vmatprep.mubr.f32.mxu0 0.0
        %v5714 = vand.u32 %v5636, 4294901760
        %v5715 = vsub.f32 %v5636, %v5714
        %v5716 = vand.u32 %v5715, 4294901760
        %v5717 = vsub.f32 %v5715, %v5716
        %v5718 = vand.u32 %v5717, 4294901760
        %5719 = vmatmul.mubr.f32.gmra.mrb[0].mxu0 %v5718
        %v5720 = vpop.f32.mrb[0].mxu0
        %v5721 = vadd.f32 0.0, %v5720
        %v5722 = vpop.f32.mrb[0].mxu0
        %5723 = vdwg.mxu0
        %5724 = vmatprep.subr.mxu0 0.0
        %v5725 = vand.u32 %v5630, 4294901760
        %v5726 = vsub.f32 %v5630, %v5725
        %v5727 = vand.u32 %v5726, 4294901760
        %v5728 = vsub.f32 %v5726, %v5727
        %v5729 = vand.u32 %v5728, 4294901760
        %5730 = vmatpush1.msra.mxu0 %v5729
        %5731 = vmatprep.subr.mxu0 0.0
        %5732 = vmatpush1.msra.mxu0 0.0
        %5733 = vmatprep.subr.mxu0 0.0
        %5734 = vmatpush1.msra.mxu0 0.0
        %5735 = vmatprep.subr.mxu0 0.0
        %5736 = vmatpush1.msra.mxu0 0.0
        %5737 = vmatprep.subr.mxu0 0.0
        %5738 = vmatpush1.msra.mxu0 0.0
        %5739 = vmatprep.subr.mxu0 0.0
        %5740 = vmatpush1.msra.mxu0 0.0
        %5741 = vmatprep.subr.mxu0 0.0
        %5742 = vmatpush1.msra.mxu0 0.0
        %5743 = vmatprep.subr.mxu0 0.0
        %5744 = vmatpush1.msra.mxu0 0.0
        %5745 = vmatprep.subr.mxu0 0.0
        %5746 = vmatpush1.msra.mxu0 0.0
        %5747 = vmatprep.subr.mxu0 0.0
        %5748 = vmatpush1.msra.mxu0 0.0
        %5749 = vmatprep.subr.mxu0 0.0
        %5750 = vmatpush1.msra.mxu0 0.0
        %5751 = vmatprep.subr.mxu0 0.0
        %5752 = vmatpush1.msra.mxu0 0.0
        %5753 = vmatprep.subr.mxu0 0.0
        %5754 = vmatpush1.msra.mxu0 0.0
        %5755 = vmatprep.subr.mxu0 0.0
        %5756 = vmatpush1.msra.mxu0 0.0
        %5757 = vmatprep.subr.mxu0 0.0
        %5758 = vmatpush1.msra.mxu0 0.0
        %5759 = vmatprep.subr.mxu0 0.0
        %5760 = vmatpush1.msra.mxu0 0.0
        %5761 = vmatprep.subr.mxu0 0.0
        %5762 = vmatpush1.msra.mxu0 0.0
        %5763 = vmatprep.subr.mxu0 0.0
        %5764 = vmatpush1.msra.mxu0 0.0
        %5765 = vmatprep.subr.mxu0 0.0
        %5766 = vmatpush1.msra.mxu0 0.0
        %5767 = vmatprep.subr.mxu0 0.0
        %5768 = vmatpush1.msra.mxu0 0.0
        %5769 = vmatprep.subr.mxu0 0.0
        %5770 = vmatpush1.msra.mxu0 0.0
        %5771 = vmatprep.subr.mxu0 0.0
        %5772 = vmatpush1.msra.mxu0 0.0
        %5773 = vmatprep.subr.mxu0 0.0
        %5774 = vmatpush1.msra.mxu0 0.0
        %5775 = vmatprep.subr.mxu0 0.0
        %5776 = vmatpush1.msra.mxu0 0.0
        %5777 = vmatprep.subr.mxu0 0.0
        %5778 = vmatpush1.msra.mxu0 0.0
        %5779 = vmatprep.subr.mxu0 0.0
        %5780 = vmatpush1.msra.mxu0 0.0
        %5781 = vmatprep.subr.mxu0 0.0
        %5782 = vmatpush1.msra.mxu0 0.0
        %5783 = vmatprep.subr.mxu0 0.0
        %5784 = vmatpush1.msra.mxu0 0.0
        %5785 = vmatprep.subr.mxu0 0.0
        %5786 = vmatpush1.msra.mxu0 0.0
        %5787 = vmatprep.subr.mxu0 0.0
        %5788 = vmatpush1.msra.mxu0 0.0
        %5789 = vmatprep.subr.mxu0 0.0
        %5790 = vmatpush1.msra.mxu0 0.0
        %5791 = vmatprep.subr.mxu0 0.0
        %5792 = vmatpush1.msra.mxu0 0.0
        %5793 = vmatprep.mubr.f32.mxu0 0.0
        %v5794 = vand.u32 %v5633, 4294901760
        %5795 = vmatmul.mubr.f32.gmra.mrb[0].mxu0 %v5794
        %v5796 = vpop.f32.mrb[0].mxu0
        %v5797 = vadd.f32 %v5711, %v5796
        %v5798 = vpop.f32.mrb[0].mxu0
        %5799 = vmatprep.mubr.f32.mxu0 0.0
        %v5800 = vand.u32 %v5636, 4294901760
        %5801 = vmatmul.mubr.f32.gmra.mrb[0].mxu0 %v5800
        %v5802 = vpop.f32.mrb[0].mxu0
        %v5803 = vadd.f32 %v5721, %v5802
        %v5804 = vpop.f32.mrb[0].mxu0
        %5805 = vdwg.mxu0
        %5806 = vmatprep.subr.mxu0 0.0
        %v5807 = vand.u32 %v5630, 4294901760
        %v5808 = vsub.f32 %v5630, %v5807
        %5809 = vmatpush1.msra.mxu0 %v5808
        %5810 = vmatprep.subr.mxu0 0.0
        %5811 = vmatpush1.msra.mxu0 0.0
        %5812 = vmatprep.subr.mxu0 0.0
        %5813 = vmatpush1.msra.mxu0 0.0
        %5814 = vmatprep.subr.mxu0 0.0
        %5815 = vmatpush1.msra.mxu0 0.0
        %5816 = vmatprep.subr.mxu0 0.0
        %5817 = vmatpush1.msra.mxu0 0.0
        %5818 = vmatprep.subr.mxu0 0.0
        %5819 = vmatpush1.msra.mxu0 0.0
        %5820 = vmatprep.subr.mxu0 0.0
        %5821 = vmatpush1.msra.mxu0 0.0
        %5822 = vmatprep.subr.mxu0 0.0
        %5823 = vmatpush1.msra.mxu0 0.0
        %5824 = vmatprep.subr.mxu0 0.0
        %5825 = vmatpush1.msra.mxu0 0.0
        %5826 = vmatprep.subr.mxu0 0.0
        %5827 = vmatpush1.msra.mxu0 0.0
        %5828 = vmatprep.subr.mxu0 0.0
        %5829 = vmatpush1.msra.mxu0 0.0
        %5830 = vmatprep.subr.mxu0 0.0
        %5831 = vmatpush1.msra.mxu0 0.0
        %5832 = vmatprep.subr.mxu0 0.0
        %5833 = vmatpush1.msra.mxu0 0.0
        %5834 = vmatprep.subr.mxu0 0.0
        %5835 = vmatpush1.msra.mxu0 0.0
        %5836 = vmatprep.subr.mxu0 0.0
        %5837 = vmatpush1.msra.mxu0 0.0
        %5838 = vmatprep.subr.mxu0 0.0
        %5839 = vmatpush1.msra.mxu0 0.0
        %5840 = vmatprep.subr.mxu0 0.0
        %5841 = vmatpush1.msra.mxu0 0.0
        %5842 = vmatprep.subr.mxu0 0.0
        %5843 = vmatpush1.msra.mxu0 0.0
        %5844 = vmatprep.subr.mxu0 0.0
        %5845 = vmatpush1.msra.mxu0 0.0
        %5846 = vmatprep.subr.mxu0 0.0
        %5847 = vmatpush1.msra.mxu0 0.0
        %5848 = vmatprep.subr.mxu0 0.0
        %5849 = vmatpush1.msra.mxu0 0.0
        %5850 = vmatprep.subr.mxu0 0.0
        %5851 = vmatpush1.msra.mxu0 0.0
        %5852 = vmatprep.subr.mxu0 0.0
        %5853 = vmatpush1.msra.mxu0 0.0
        %5854 = vmatprep.subr.mxu0 0.0
        %5855 = vmatpush1.msra.mxu0 0.0
        %5856 = vmatprep.subr.mxu0 0.0
        %5857 = vmatpush1.msra.mxu0 0.0
        %5858 = vmatprep.subr.mxu0 0.0
        %5859 = vmatpush1.msra.mxu0 0.0
        %5860 = vmatprep.subr.mxu0 0.0
        %5861 = vmatpush1.msra.mxu0 0.0
        %5862 = vmatprep.subr.mxu0 0.0
        %5863 = vmatpush1.msra.mxu0 0.0
        %5864 = vmatprep.subr.mxu0 0.0
        %5865 = vmatpush1.msra.mxu0 0.0
        %5866 = vmatprep.subr.mxu0 0.0
        %5867 = vmatpush1.msra.mxu0 0.0
        %5868 = vmatprep.subr.mxu0 0.0
        %5869 = vmatpush1.msra.mxu0 0.0
        %5870 = vmatprep.subr.mxu0 0.0
        %5871 = vmatpush1.msra.mxu0 0.0
        %5872 = vmatprep.mubr.f32.mxu0 0.0
        %v5873 = vand.u32 %v5633, 4294901760
        %v5874 = vsub.f32 %v5633, %v5873
        %5875 = vmatmul.mubr.f32.gmra.mrb[0].mxu0 %v5874
        %v5876 = vpop.f32.mrb[0].mxu0
        %v5877 = vadd.f32 %v5797, %v5876
        %v5878 = vpop.f32.mrb[0].mxu0
        %5879 = vmatprep.mubr.f32.mxu0 0.0
        %v5880 = vand.u32 %v5636, 4294901760
        %v5881 = vsub.f32 %v5636, %v5880
        %5882 = vmatmul.mubr.f32.gmra.mrb[0].mxu0 %v5881
        %v5883 = vpop.f32.mrb[0].mxu0
        %v5884 = vadd.f32 %v5803, %v5883
        %v5885 = vpop.f32.mrb[0].mxu0
        %5886 = vdwg.mxu0
        %5887 = vmatprep.subr.mxu0 0.0
        %v5888 = vand.u32 %v5630, 4294901760
        %5889 = vmatpush1.msra.mxu0 %v5888
        %5890 = vmatprep.subr.mxu0 0.0
        %5891 = vmatpush1.msra.mxu0 0.0
        %5892 = vmatprep.subr.mxu0 0.0
        %5893 = vmatpush1.msra.mxu0 0.0
        %5894 = vmatprep.subr.mxu0 0.0
        %5895 = vmatpush1.msra.mxu0 0.0
        %5896 = vmatprep.subr.mxu0 0.0
        %5897 = vmatpush1.msra.mxu0 0.0
        %5898 = vmatprep.subr.mxu0 0.0
        %5899 = vmatpush1.msra.mxu0 0.0
        %5900 = vmatprep.subr.mxu0 0.0
        %5901 = vmatpush1.msra.mxu0 0.0
        %5902 = vmatprep.subr.mxu0 0.0
        %5903 = vmatpush1.msra.mxu0 0.0
        %5904 = vmatprep.subr.mxu0 0.0
        %5905 = vmatpush1.msra.mxu0 0.0
        %5906 = vmatprep.subr.mxu0 0.0
        %5907 = vmatpush1.msra.mxu0 0.0
        %5908 = vmatprep.subr.mxu0 0.0
        %5909 = vmatpush1.msra.mxu0 0.0
        %5910 = vmatprep.subr.mxu0 0.0
        %5911 = vmatpush1.msra.mxu0 0.0
        %5912 = vmatprep.subr.mxu0 0.0
        %5913 = vmatpush1.msra.mxu0 0.0
        %5914 = vmatprep.subr.mxu0 0.0
        %5915 = vmatpush1.msra.mxu0 0.0
        %5916 = vmatprep.subr.mxu0 0.0
        %5917 = vmatpush1.msra.mxu0 0.0
        %5918 = vmatprep.subr.mxu0 0.0
        %5919 = vmatpush1.msra.mxu0 0.0
        %5920 = vmatprep.subr.mxu0 0.0
        %5921 = vmatpush1.msra.mxu0 0.0
        %5922 = vmatprep.subr.mxu0 0.0
        %5923 = vmatpush1.msra.mxu0 0.0
        %5924 = vmatprep.subr.mxu0 0.0
        %5925 = vmatpush1.msra.mxu0 0.0
        %5926 = vmatprep.subr.mxu0 0.0
        %5927 = vmatpush1.msra.mxu0 0.0
        %5928 = vmatprep.subr.mxu0 0.0
        %5929 = vmatpush1.msra.mxu0 0.0
        %5930 = vmatprep.subr.mxu0 0.0
        %5931 = vmatpush1.msra.mxu0 0.0
        %5932 = vmatprep.subr.mxu0 0.0
        %5933 = vmatpush1.msra.mxu0 0.0
        %5934 = vmatprep.subr.mxu0 0.0
        %5935 = vmatpush1.msra.mxu0 0.0
        %5936 = vmatprep.subr.mxu0 0.0
        %5937 = vmatpush1.msra.mxu0 0.0
        %5938 = vmatprep.subr.mxu0 0.0
        %5939 = vmatpush1.msra.mxu0 0.0
        %5940 = vmatprep.subr.mxu0 0.0
        %5941 = vmatpush1.msra.mxu0 0.0
        %5942 = vmatprep.subr.mxu0 0.0
        %5943 = vmatpush1.msra.mxu0 0.0
        %5944 = vmatprep.subr.mxu0 0.0
        %5945 = vmatpush1.msra.mxu0 0.0
        %5946 = vmatprep.subr.mxu0 0.0
        %5947 = vmatpush1.msra.mxu0 0.0
        %5948 = vmatprep.subr.mxu0 0.0
        %5949 = vmatpush1.msra.mxu0 0.0
        %5950 = vmatprep.subr.mxu0 0.0
        %5951 = vmatpush1.msra.mxu0 0.0
        %5952 = vmatprep.mubr.f32.mxu0 0.0
        %v5953 = vand.u32 %v5633, 4294901760
        %v5954 = vsub.f32 %v5633, %v5953
        %v5955 = vand.u32 %v5954, 4294901760
        %5956 = vmatmul.mubr.f32.gmra.mrb[0].mxu0 %v5955
        %v5957 = vpop.f32.mrb[0].mxu0
        %v5958 = vadd.f32 %v5877, %v5957
        %v5959 = vpop.f32.mrb[0].mxu0
        %5960 = vmatprep.mubr.f32.mxu0 0.0
        %v5961 = vand.u32 %v5636, 4294901760
        %v5962 = vsub.f32 %v5636, %v5961
        %v5963 = vand.u32 %v5962, 4294901760
        %5964 = vmatmul.mubr.f32.gmra.mrb[0].mxu0 %v5963
        %v5965 = vpop.f32.mrb[0].mxu0
        %v5966 = vadd.f32 %v5884, %v5965
        %v5967 = vpop.f32.mrb[0].mxu0
        %5968 = vdwg.mxu0
        %5969 = vmatprep.subr.mxu0 0.0
        %v5970 = vand.u32 %v5630, 4294901760
        %v5971 = vsub.f32 %v5630, %v5970
        %v5972 = vand.u32 %v5971, 4294901760
        %5973 = vmatpush1.msra.mxu0 %v5972
        %5974 = vmatprep.subr.mxu0 0.0
        %5975 = vmatpush1.msra.mxu0 0.0
        %5976 = vmatprep.subr.mxu0 0.0
        %5977 = vmatpush1.msra.mxu0 0.0
        %5978 = vmatprep.subr.mxu0 0.0
        %5979 = vmatpush1.msra.mxu0 0.0
        %5980 = vmatprep.subr.mxu0 0.0
        %5981 = vmatpush1.msra.mxu0 0.0
        %5982 = vmatprep.subr.mxu0 0.0
        %5983 = vmatpush1.msra.mxu0 0.0
        %5984 = vmatprep.subr.mxu0 0.0
        %5985 = vmatpush1.msra.mxu0 0.0
        %5986 = vmatprep.subr.mxu0 0.0
        %5987 = vmatpush1.msra.mxu0 0.0
        %5988 = vmatprep.subr.mxu0 0.0
        %5989 = vmatpush1.msra.mxu0 0.0
        %5990 = vmatprep.subr.mxu0 0.0
        %5991 = vmatpush1.msra.mxu0 0.0
        %5992 = vmatprep.subr.mxu0 0.0
        %5993 = vmatpush1.msra.mxu0 0.0
        %5994 = vmatprep.subr.mxu0 0.0
        %5995 = vmatpush1.msra.mxu0 0.0
        %5996 = vmatprep.subr.mxu0 0.0
        %5997 = vmatpush1.msra.mxu0 0.0
        %5998 = vmatprep.subr.mxu0 0.0
        %5999 = vmatpush1.msra.mxu0 0.0
        %6000 = vmatprep.subr.mxu0 0.0
        %6001 = vmatpush1.msra.mxu0 0.0
        %6002 = vmatprep.subr.mxu0 0.0
        %6003 = vmatpush1.msra.mxu0 0.0
        %6004 = vmatprep.subr.mxu0 0.0
        %6005 = vmatpush1.msra.mxu0 0.0
        %6006 = vmatprep.subr.mxu0 0.0
        %6007 = vmatpush1.msra.mxu0 0.0
        %6008 = vmatprep.subr.mxu0 0.0
        %6009 = vmatpush1.msra.mxu0 0.0
        %6010 = vmatprep.subr.mxu0 0.0
        %6011 = vmatpush1.msra.mxu0 0.0
        %6012 = vmatprep.subr.mxu0 0.0
        %6013 = vmatpush1.msra.mxu0 0.0
        %6014 = vmatprep.subr.mxu0 0.0
        %6015 = vmatpush1.msra.mxu0 0.0
        %6016 = vmatprep.subr.mxu0 0.0
        %6017 = vmatpush1.msra.mxu0 0.0
        %6018 = vmatprep.subr.mxu0 0.0
        %6019 = vmatpush1.msra.mxu0 0.0
        %6020 = vmatprep.subr.mxu0 0.0
        %6021 = vmatpush1.msra.mxu0 0.0
        %6022 = vmatprep.subr.mxu0 0.0
        %6023 = vmatpush1.msra.mxu0 0.0
        %6024 = vmatprep.subr.mxu0 0.0
        %6025 = vmatpush1.msra.mxu0 0.0
        %6026 = vmatprep.subr.mxu0 0.0
        %6027 = vmatpush1.msra.mxu0 0.0
        %6028 = vmatprep.subr.mxu0 0.0
        %6029 = vmatpush1.msra.mxu0 0.0
        %6030 = vmatprep.subr.mxu0 0.0
        %6031 = vmatpush1.msra.mxu0 0.0
        %6032 = vmatprep.subr.mxu0 0.0
        %6033 = vmatpush1.msra.mxu0 0.0
        %6034 = vmatprep.subr.mxu0 0.0
        %6035 = vmatpush1.msra.mxu0 0.0
        %6036 = vmatprep.mubr.f32.mxu0 0.0
        %v6037 = vand.u32 %v5633, 4294901760
        %6038 = vmatmul.mubr.f32.gmra.mrb[0].mxu0 %v6037
        %v6039 = vpop.f32.mrb[0].mxu0
        %v6040 = vadd.f32 %v5958, %v6039
        %v6041 = vpop.f32.mrb[0].mxu0
        %6042 = vmatprep.mubr.f32.mxu0 0.0
        %v6043 = vand.u32 %v5636, 4294901760
        %6044 = vmatmul.mubr.f32.gmra.mrb[0].mxu0 %v6043
        %v6045 = vpop.f32.mrb[0].mxu0
        %v6046 = vadd.f32 %v5966, %v6045
        %v6047 = vpop.f32.mrb[0].mxu0
        %6048 = vdwg.mxu0
        %6049 = vmatprep.subr.mxu0 0.0
        %v6050 = vand.u32 %v5630, 4294901760
        %6051 = vmatpush1.msra.mxu0 %v6050
        %6052 = vmatprep.subr.mxu0 0.0
        %6053 = vmatpush1.msra.mxu0 0.0
        %6054 = vmatprep.subr.mxu0 0.0
        %6055 = vmatpush1.msra.mxu0 0.0
        %6056 = vmatprep.subr.mxu0 0.0
        %6057 = vmatpush1.msra.mxu0 0.0
        %6058 = vmatprep.subr.mxu0 0.0
        %6059 = vmatpush1.msra.mxu0 0.0
        %6060 = vmatprep.subr.mxu0 0.0
        %6061 = vmatpush1.msra.mxu0 0.0
        %6062 = vmatprep.subr.mxu0 0.0
        %6063 = vmatpush1.msra.mxu0 0.0
        %6064 = vmatprep.subr.mxu0 0.0
        %6065 = vmatpush1.msra.mxu0 0.0
        %6066 = vmatprep.subr.mxu0 0.0
        %6067 = vmatpush1.msra.mxu0 0.0
        %6068 = vmatprep.subr.mxu0 0.0
        %6069 = vmatpush1.msra.mxu0 0.0
        %6070 = vmatprep.subr.mxu0 0.0
        %6071 = vmatpush1.msra.mxu0 0.0
        %6072 = vmatprep.subr.mxu0 0.0
        %6073 = vmatpush1.msra.mxu0 0.0
        %6074 = vmatprep.subr.mxu0 0.0
        %6075 = vmatpush1.msra.mxu0 0.0
        %6076 = vmatprep.subr.mxu0 0.0
        %6077 = vmatpush1.msra.mxu0 0.0
        %6078 = vmatprep.subr.mxu0 0.0
        %6079 = vmatpush1.msra.mxu0 0.0
        %6080 = vmatprep.subr.mxu0 0.0
        %6081 = vmatpush1.msra.mxu0 0.0
        %6082 = vmatprep.subr.mxu0 0.0
        %6083 = vmatpush1.msra.mxu0 0.0
        %6084 = vmatprep.subr.mxu0 0.0
        %6085 = vmatpush1.msra.mxu0 0.0
        %6086 = vmatprep.subr.mxu0 0.0
        %6087 = vmatpush1.msra.mxu0 0.0
        %6088 = vmatprep.subr.mxu0 0.0
        %6089 = vmatpush1.msra.mxu0 0.0
        %6090 = vmatprep.subr.mxu0 0.0
        %6091 = vmatpush1.msra.mxu0 0.0
        %6092 = vmatprep.subr.mxu0 0.0
        %6093 = vmatpush1.msra.mxu0 0.0
        %6094 = vmatprep.subr.mxu0 0.0
        %6095 = vmatpush1.msra.mxu0 0.0
        %6096 = vmatprep.subr.mxu0 0.0
        %6097 = vmatpush1.msra.mxu0 0.0
        %6098 = vmatprep.subr.mxu0 0.0
        %6099 = vmatpush1.msra.mxu0 0.0
        %6100 = vmatprep.subr.mxu0 0.0
        %6101 = vmatpush1.msra.mxu0 0.0
        %6102 = vmatprep.subr.mxu0 0.0
        %6103 = vmatpush1.msra.mxu0 0.0
        %6104 = vmatprep.subr.mxu0 0.0
        %6105 = vmatpush1.msra.mxu0 0.0
        %6106 = vmatprep.subr.mxu0 0.0
        %6107 = vmatpush1.msra.mxu0 0.0
        %6108 = vmatprep.subr.mxu0 0.0
        %6109 = vmatpush1.msra.mxu0 0.0
        %6110 = vmatprep.subr.mxu0 0.0
        %6111 = vmatpush1.msra.mxu0 0.0
        %6112 = vmatprep.subr.mxu0 0.0
        %6113 = vmatpush1.msra.mxu0 0.0
        %6114 = vmatprep.mubr.f32.mxu0 0.0
        %v6115 = vand.u32 %v5633, 4294901760
        %6116 = vmatmul.mubr.f32.gmra.mrb[0].mxu0 %v6115
        %v6117 = vpop.f32.mrb[0].mxu0
        %v6118 = vadd.f32 %v6040, %v6117
        %v6119 = vpop.f32.mrb[0].mxu0
        %6120 = vmatprep.mubr.f32.mxu0 0.0
        %v6121 = vand.u32 %v5636, 4294901760
        %6122 = vmatmul.mubr.f32.gmra.mrb[0].mxu0 %v6121
        %v6123 = vpop.f32.mrb[0].mxu0
        %v6124 = vadd.f32 %v6046, %v6123
        %v6125 = vpop.f32.mrb[0].mxu0
        %6126 = vdwg.mxu0
        %6129 = vrot.lane.b32.xlu0 %v4072, 32
        %v6130 = vpop.permute.xlu0 %6129
        %6131 = vrot.lane.b32.xlu0 %v4078, 32
        %v6132 = vpop.permute.xlu0 %6131
        %6137 = vrot.lane.b32.xlu0 %v5095, 64
        %v6138 = vpop.permute.xlu0 %6137
        %6139 = vrot.lane.b32.xlu0 %v5101, 64
        %v6140 = vpop.permute.xlu0 %6139
        %6145 = vrot.lane.b32.xlu0 %v6118, 96
        %v6146 = vpop.permute.xlu0 %6145
        %6147 = vrot.lane.b32.xlu0 %v6124, 96
        %v6148 = vpop.permute.xlu0 %6147
        %v6151 = vsel %vm2038, %v3048, %v6130
        %v6152 = vsel %vm2038, %v3054, %v6132
        %vm6153 = vcmask 523264
        %v6154 = vsel %vm6153, %v6151, %v6138
        %v6155 = vsel %vm6153, %v6152, %v6140
        %vm6156 = vcmask 785408
        %v6157 = vsel %vm6156, %v6154, %v6146
        %v6158 = vsel %vm6156, %v6155, %v6148
        %v6159 = vld [vmem:[%s6] sm:$0xff]
        %v6160 = vld [vmem:[%s6 + $0x8] sm:$0xff]
        %v6161 = vld [vmem:[%s6 + $0x10] sm:$0xff]
        %v6162 = vld [vmem:[%s6 + $0x18] sm:$0xff]
        %v6163 = vld [vmem:[%s6 + $0x20] sm:$0xff]
        %v6164 = vld [vmem:[%s6 + $0x28] sm:$0xff]
        %v6165 = vld [vmem:[%s6 + $0x30] sm:$0xff]
        %v6166 = vld [vmem:[%s6 + $0x38] sm:$0xff]
        %v6167 = vld [vmem:[%s6 + $0x40] sm:$0xff]
        %v6168 = vld [vmem:[%s6 + $0x48] sm:$0xff]
        %v6169 = vld [vmem:[%s6 + $0x50] sm:$0xff]
        %v6170 = vld [vmem:[%s6 + $0x58] sm:$0xff]
        %v6171 = vld [vmem:[%s6 + $0x60] sm:$0xff]
        %v6172 = vld [vmem:[%s6 + $0x68] sm:$0xff]
        %v6173 = vld [vmem:[%s6 + $0x70] sm:$0xff]
        %v6174 = vld [vmem:[%s6 + $0x78] sm:$0xff]
        %v6175 = vld [vmem:[%s7] sm:$0x1]
        %v6177 = vlaneseq
        %v6178 = vshrl.u32 %v6177, 7
        %v6179 = vsub.s32 0, %v6178
        %v6180 = vrot.slane %v6175, %v6179
        %6182 = vmatprep.subr.mxu0 0.0
        %v6183 = vand.u32 %v6159, 4294901760
        %6184 = vmatpush1.msra.mxu0 %v6183
        %6185 = vmatprep.subr.mxu0 0.0
        %v6186 = vand.u32 %v6160, 4294901760
        %6187 = vmatpush1.msra.mxu0 %v6186
        %6188 = vmatprep.subr.mxu0 0.0
        %v6189 = vand.u32 %v6161, 4294901760
        %6190 = vmatpush1.msra.mxu0 %v6189
        %6191 = vmatprep.subr.mxu0 0.0
        %v6192 = vand.u32 %v6162, 4294901760
        %6193 = vmatpush1.msra.mxu0 %v6192
        %6194 = vmatprep.subr.mxu0 0.0
        %v6195 = vand.u32 %v6163, 4294901760
        %6196 = vmatpush1.msra.mxu0 %v6195
        %6197 = vmatprep.subr.mxu0 0.0
        %v6198 = vand.u32 %v6164, 4294901760
        %6199 = vmatpush1.msra.mxu0 %v6198
        %6200 = vmatprep.subr.mxu0 0.0
        %v6201 = vand.u32 %v6165, 4294901760
        %6202 = vmatpush1.msra.mxu0 %v6201
        %6203 = vmatprep.subr.mxu0 0.0
        %v6204 = vand.u32 %v6166, 4294901760
        %6205 = vmatpush1.msra.mxu0 %v6204
        %6206 = vmatprep.subr.mxu0 0.0
        %v6207 = vand.u32 %v6167, 4294901760
        %6208 = vmatpush1.msra.mxu0 %v6207
        %6209 = vmatprep.subr.mxu0 0.0
        %v6210 = vand.u32 %v6168, 4294901760
        %6211 = vmatpush1.msra.mxu0 %v6210
        %6212 = vmatprep.subr.mxu0 0.0
        %v6213 = vand.u32 %v6169, 4294901760
        %6214 = vmatpush1.msra.mxu0 %v6213
        %6215 = vmatprep.subr.mxu0 0.0
        %v6216 = vand.u32 %v6170, 4294901760
        %6217 = vmatpush1.msra.mxu0 %v6216
        %6218 = vmatprep.subr.mxu0 0.0
        %v6219 = vand.u32 %v6171, 4294901760
        %6220 = vmatpush1.msra.mxu0 %v6219
        %6221 = vmatprep.subr.mxu0 0.0
        %v6222 = vand.u32 %v6172, 4294901760
        %6223 = vmatpush1.msra.mxu0 %v6222
        %6224 = vmatprep.subr.mxu0 0.0
        %v6225 = vand.u32 %v6173, 4294901760
        %6226 = vmatpush1.msra.mxu0 %v6225
        %6227 = vmatprep.subr.mxu0 0.0
        %v6228 = vand.u32 %v6174, 4294901760
        %6229 = vmatpush1.msra.mxu0 %v6228
        %6230 = vmatprep.subr.mxu0 0.0
        %6231 = vmatpush1.msra.mxu0 0.0
        %6232 = vmatprep.subr.mxu0 0.0
        %6233 = vmatpush1.msra.mxu0 0.0
        %6234 = vmatprep.subr.mxu0 0.0
        %6235 = vmatpush1.msra.mxu0 0.0
        %6236 = vmatprep.subr.mxu0 0.0
        %6237 = vmatpush1.msra.mxu0 0.0
        %6238 = vmatprep.subr.mxu0 0.0
        %6239 = vmatpush1.msra.mxu0 0.0
        %6240 = vmatprep.subr.mxu0 0.0
        %6241 = vmatpush1.msra.mxu0 0.0
        %6242 = vmatprep.subr.mxu0 0.0
        %6243 = vmatpush1.msra.mxu0 0.0
        %6244 = vmatprep.subr.mxu0 0.0
        %6245 = vmatpush1.msra.mxu0 0.0
        %6246 = vmatprep.subr.mxu0 0.0
        %6247 = vmatpush1.msra.mxu0 0.0
        %6248 = vmatprep.subr.mxu0 0.0
        %6249 = vmatpush1.msra.mxu0 0.0
        %6250 = vmatprep.subr.mxu0 0.0
        %6251 = vmatpush1.msra.mxu0 0.0
        %6252 = vmatprep.subr.mxu0 0.0
        %6253 = vmatpush1.msra.mxu0 0.0
        %6254 = vmatprep.subr.mxu0 0.0
        %6255 = vmatpush1.msra.mxu0 0.0
        %6256 = vmatprep.subr.mxu0 0.0
        %6257 = vmatpush1.msra.mxu0 0.0
        %6258 = vmatprep.subr.mxu0 0.0
        %6259 = vmatpush1.msra.mxu0 0.0
        %6260 = vmatprep.subr.mxu0 0.0
        %6261 = vmatpush1.msra.mxu0 0.0
        %6262 = vmatprep.mubr.f32.mxu0 0.0
        %v6263 = vand.u32 %v6157, 4294901760
        %v6264 = vsub.f32 %v6157, %v6263
        %v6265 = vand.u32 %v6264, 4294901760
        %v6266 = vsub.f32 %v6264, %v6265
        %v6267 = vand.u32 %v6266, 4294901760
        %6268 = vmatmul.mubr.f32.gmra.mrb[0].mxu0 %v6267
        %v6269 = vpop.f32.mrb[0].mxu0
        %v6270 = vadd.f32 %v6180, %v6269
        %v6271 = vpop.f32.mrb[0].mxu0
        %6272 = vmatprep.mubr.f32.mxu0 0.0
        %v6273 = vand.u32 %v6158, 4294901760
        %v6274 = vsub.f32 %v6158, %v6273
        %v6275 = vand.u32 %v6274, 4294901760
        %v6276 = vsub.f32 %v6274, %v6275
        %v6277 = vand.u32 %v6276, 4294901760
        %6278 = vmatmul.mubr.f32.gmra.mrb[0].mxu0 %v6277
        %v6279 = vpop.f32.mrb[0].mxu0
        %v6280 = vadd.f32 %v6180, %v6279
        %v6281 = vpop.f32.mrb[0].mxu0
        %6282 = vdwg.mxu0
        %6283 = vmatprep.subr.mxu0 0.0
        %v6284 = vand.u32 %v6159, 4294901760
        %v6285 = vsub.f32 %v6159, %v6284
        %v6286 = vand.u32 %v6285, 4294901760
        %v6287 = vsub.f32 %v6285, %v6286
        %v6288 = vand.u32 %v6287, 4294901760
        %6289 = vmatpush1.msra.mxu0 %v6288
        %6290 = vmatprep.subr.mxu0 0.0
        %v6291 = vand.u32 %v6160, 4294901760
        %v6292 = vsub.f32 %v6160, %v6291
        %v6293 = vand.u32 %v6292, 4294901760
        %v6294 = vsub.f32 %v6292, %v6293
        %v6295 = vand.u32 %v6294, 4294901760
        %6296 = vmatpush1.msra.mxu0 %v6295
        %6297 = vmatprep.subr.mxu0 0.0
        %v6298 = vand.u32 %v6161, 4294901760
        %v6299 = vsub.f32 %v6161, %v6298
        %v6300 = vand.u32 %v6299, 4294901760
        %v6301 = vsub.f32 %v6299, %v6300
        %v6302 = vand.u32 %v6301, 4294901760
        %6303 = vmatpush1.msra.mxu0 %v6302
        %6304 = vmatprep.subr.mxu0 0.0
        %v6305 = vand.u32 %v6162, 4294901760
        %v6306 = vsub.f32 %v6162, %v6305
        %v6307 = vand.u32 %v6306, 4294901760
        %v6308 = vsub.f32 %v6306, %v6307
        %v6309 = vand.u32 %v6308, 4294901760
        %6310 = vmatpush1.msra.mxu0 %v6309
        %6311 = vmatprep.subr.mxu0 0.0
        %v6312 = vand.u32 %v6163, 4294901760
        %v6313 = vsub.f32 %v6163, %v6312
        %v6314 = vand.u32 %v6313, 4294901760
        %v6315 = vsub.f32 %v6313, %v6314
        %v6316 = vand.u32 %v6315, 4294901760
        %6317 = vmatpush1.msra.mxu0 %v6316
        %6318 = vmatprep.subr.mxu0 0.0
        %v6319 = vand.u32 %v6164, 4294901760
        %v6320 = vsub.f32 %v6164, %v6319
        %v6321 = vand.u32 %v6320, 4294901760
        %v6322 = vsub.f32 %v6320, %v6321
        %v6323 = vand.u32 %v6322, 4294901760
        %6324 = vmatpush1.msra.mxu0 %v6323
        %6325 = vmatprep.subr.mxu0 0.0
        %v6326 = vand.u32 %v6165, 4294901760
        %v6327 = vsub.f32 %v6165, %v6326
        %v6328 = vand.u32 %v6327, 4294901760
        %v6329 = vsub.f32 %v6327, %v6328
        %v6330 = vand.u32 %v6329, 4294901760
        %6331 = vmatpush1.msra.mxu0 %v6330
        %6332 = vmatprep.subr.mxu0 0.0
        %v6333 = vand.u32 %v6166, 4294901760
        %v6334 = vsub.f32 %v6166, %v6333
        %v6335 = vand.u32 %v6334, 4294901760
        %v6336 = vsub.f32 %v6334, %v6335
        %v6337 = vand.u32 %v6336, 4294901760
        %6338 = vmatpush1.msra.mxu0 %v6337
        %6339 = vmatprep.subr.mxu0 0.0
        %v6340 = vand.u32 %v6167, 4294901760
        %v6341 = vsub.f32 %v6167, %v6340
        %v6342 = vand.u32 %v6341, 4294901760
        %v6343 = vsub.f32 %v6341, %v6342
        %v6344 = vand.u32 %v6343, 4294901760
        %6345 = vmatpush1.msra.mxu0 %v6344
        %6346 = vmatprep.subr.mxu0 0.0
        %v6347 = vand.u32 %v6168, 4294901760
        %v6348 = vsub.f32 %v6168, %v6347
        %v6349 = vand.u32 %v6348, 4294901760
        %v6350 = vsub.f32 %v6348, %v6349
        %v6351 = vand.u32 %v6350, 4294901760
        %6352 = vmatpush1.msra.mxu0 %v6351
        %6353 = vmatprep.subr.mxu0 0.0
        %v6354 = vand.u32 %v6169, 4294901760
        %v6355 = vsub.f32 %v6169, %v6354
        %v6356 = vand.u32 %v6355, 4294901760
        %v6357 = vsub.f32 %v6355, %v6356
        %v6358 = vand.u32 %v6357, 4294901760
        %6359 = vmatpush1.msra.mxu0 %v6358
        %6360 = vmatprep.subr.mxu0 0.0
        %v6361 = vand.u32 %v6170, 4294901760
        %v6362 = vsub.f32 %v6170, %v6361
        %v6363 = vand.u32 %v6362, 4294901760
        %v6364 = vsub.f32 %v6362, %v6363
        %v6365 = vand.u32 %v6364, 4294901760
        %6366 = vmatpush1.msra.mxu0 %v6365
        %6367 = vmatprep.subr.mxu0 0.0
        %v6368 = vand.u32 %v6171, 4294901760
        %v6369 = vsub.f32 %v6171, %v6368
        %v6370 = vand.u32 %v6369, 4294901760
        %v6371 = vsub.f32 %v6369, %v6370
        %v6372 = vand.u32 %v6371, 4294901760
        %6373 = vmatpush1.msra.mxu0 %v6372
        %6374 = vmatprep.subr.mxu0 0.0
        %v6375 = vand.u32 %v6172, 4294901760
        %v6376 = vsub.f32 %v6172, %v6375
        %v6377 = vand.u32 %v6376, 4294901760
        %v6378 = vsub.f32 %v6376, %v6377
        %v6379 = vand.u32 %v6378, 4294901760
        %6380 = vmatpush1.msra.mxu0 %v6379
        %6381 = vmatprep.subr.mxu0 0.0
        %v6382 = vand.u32 %v6173, 4294901760
        %v6383 = vsub.f32 %v6173, %v6382
        %v6384 = vand.u32 %v6383, 4294901760
        %v6385 = vsub.f32 %v6383, %v6384
        %v6386 = vand.u32 %v6385, 4294901760
        %6387 = vmatpush1.msra.mxu0 %v6386
        %6388 = vmatprep.subr.mxu0 0.0
        %v6389 = vand.u32 %v6174, 4294901760
        %v6390 = vsub.f32 %v6174, %v6389
        %v6391 = vand.u32 %v6390, 4294901760
        %v6392 = vsub.f32 %v6390, %v6391
        %v6393 = vand.u32 %v6392, 4294901760
        %6394 = vmatpush1.msra.mxu0 %v6393
        %6395 = vmatprep.subr.mxu0 0.0
        %6396 = vmatpush1.msra.mxu0 0.0
        %6397 = vmatprep.subr.mxu0 0.0
        %6398 = vmatpush1.msra.mxu0 0.0
        %6399 = vmatprep.subr.mxu0 0.0
        %6400 = vmatpush1.msra.mxu0 0.0
        %6401 = vmatprep.subr.mxu0 0.0
        %6402 = vmatpush1.msra.mxu0 0.0
        %6403 = vmatprep.subr.mxu0 0.0
        %6404 = vmatpush1.msra.mxu0 0.0
        %6405 = vmatprep.subr.mxu0 0.0
        %6406 = vmatpush1.msra.mxu0 0.0
        %6407 = vmatprep.subr.mxu0 0.0
        %6408 = vmatpush1.msra.mxu0 0.0
        %6409 = vmatprep.subr.mxu0 0.0
        %6410 = vmatpush1.msra.mxu0 0.0
        %6411 = vmatprep.subr.mxu0 0.0
        %6412 = vmatpush1.msra.mxu0 0.0
        %6413 = vmatprep.subr.mxu0 0.0
        %6414 = vmatpush1.msra.mxu0 0.0
        %6415 = vmatprep.subr.mxu0 0.0
        %6416 = vmatpush1.msra.mxu0 0.0
        %6417 = vmatprep.subr.mxu0 0.0
        %6418 = vmatpush1.msra.mxu0 0.0
        %6419 = vmatprep.subr.mxu0 0.0
        %6420 = vmatpush1.msra.mxu0 0.0
        %6421 = vmatprep.subr.mxu0 0.0
        %6422 = vmatpush1.msra.mxu0 0.0
        %6423 = vmatprep.subr.mxu0 0.0
        %6424 = vmatpush1.msra.mxu0 0.0
        %6425 = vmatprep.subr.mxu0 0.0
        %6426 = vmatpush1.msra.mxu0 0.0
        %6427 = vmatprep.mubr.f32.mxu0 0.0
        %v6428 = vand.u32 %v6157, 4294901760
        %6429 = vmatmul.mubr.f32.gmra.mrb[0].mxu0 %v6428
        %v6430 = vpop.f32.mrb[0].mxu0
        %v6431 = vadd.f32 %v6270, %v6430
        %v6432 = vpop.f32.mrb[0].mxu0
        %6433 = vmatprep.mubr.f32.mxu0 0.0
        %v6434 = vand.u32 %v6158, 4294901760
        %6435 = vmatmul.mubr.f32.gmra.mrb[0].mxu0 %v6434
        %v6436 = vpop.f32.mrb[0].mxu0
        %v6437 = vadd.f32 %v6280, %v6436
        %v6438 = vpop.f32.mrb[0].mxu0
        %6439 = vdwg.mxu0
        %6440 = vmatprep.subr.mxu0 0.0
        %v6441 = vand.u32 %v6159, 4294901760
        %v6442 = vsub.f32 %v6159, %v6441
        %6443 = vmatpush1.msra.mxu0 %v6442
        %6444 = vmatprep.subr.mxu0 0.0
        %v6445 = vand.u32 %v6160, 4294901760
        %v6446 = vsub.f32 %v6160, %v6445
        %6447 = vmatpush1.msra.mxu0 %v6446
        %6448 = vmatprep.subr.mxu0 0.0
        %v6449 = vand.u32 %v6161, 4294901760
        %v6450 = vsub.f32 %v6161, %v6449
        %6451 = vmatpush1.msra.mxu0 %v6450
        %6452 = vmatprep.subr.mxu0 0.0
        %v6453 = vand.u32 %v6162, 4294901760
        %v6454 = vsub.f32 %v6162, %v6453
        %6455 = vmatpush1.msra.mxu0 %v6454
        %6456 = vmatprep.subr.mxu0 0.0
        %v6457 = vand.u32 %v6163, 4294901760
        %v6458 = vsub.f32 %v6163, %v6457
        %6459 = vmatpush1.msra.mxu0 %v6458
        %6460 = vmatprep.subr.mxu0 0.0
        %v6461 = vand.u32 %v6164, 4294901760
        %v6462 = vsub.f32 %v6164, %v6461
        %6463 = vmatpush1.msra.mxu0 %v6462
        %6464 = vmatprep.subr.mxu0 0.0
        %v6465 = vand.u32 %v6165, 4294901760
        %v6466 = vsub.f32 %v6165, %v6465
        %6467 = vmatpush1.msra.mxu0 %v6466
        %6468 = vmatprep.subr.mxu0 0.0
        %v6469 = vand.u32 %v6166, 4294901760
        %v6470 = vsub.f32 %v6166, %v6469
        %6471 = vmatpush1.msra.mxu0 %v6470
        %6472 = vmatprep.subr.mxu0 0.0
        %v6473 = vand.u32 %v6167, 4294901760
        %v6474 = vsub.f32 %v6167, %v6473
        %6475 = vmatpush1.msra.mxu0 %v6474
        %6476 = vmatprep.subr.mxu0 0.0
        %v6477 = vand.u32 %v6168, 4294901760
        %v6478 = vsub.f32 %v6168, %v6477
        %6479 = vmatpush1.msra.mxu0 %v6478
        %6480 = vmatprep.subr.mxu0 0.0
        %v6481 = vand.u32 %v6169, 4294901760
        %v6482 = vsub.f32 %v6169, %v6481
        %6483 = vmatpush1.msra.mxu0 %v6482
        %6484 = vmatprep.subr.mxu0 0.0
        %v6485 = vand.u32 %v6170, 4294901760
        %v6486 = vsub.f32 %v6170, %v6485
        %6487 = vmatpush1.msra.mxu0 %v6486
        %6488 = vmatprep.subr.mxu0 0.0
        %v6489 = vand.u32 %v6171, 4294901760
        %v6490 = vsub.f32 %v6171, %v6489
        %6491 = vmatpush1.msra.mxu0 %v6490
        %6492 = vmatprep.subr.mxu0 0.0
        %v6493 = vand.u32 %v6172, 4294901760
        %v6494 = vsub.f32 %v6172, %v6493
        %6495 = vmatpush1.msra.mxu0 %v6494
        %6496 = vmatprep.subr.mxu0 0.0
        %v6497 = vand.u32 %v6173, 4294901760
        %v6498 = vsub.f32 %v6173, %v6497
        %6499 = vmatpush1.msra.mxu0 %v6498
        %6500 = vmatprep.subr.mxu0 0.0
        %v6501 = vand.u32 %v6174, 4294901760
        %v6502 = vsub.f32 %v6174, %v6501
        %6503 = vmatpush1.msra.mxu0 %v6502
        %6504 = vmatprep.subr.mxu0 0.0
        %6505 = vmatpush1.msra.mxu0 0.0
        %6506 = vmatprep.subr.mxu0 0.0
        %6507 = vmatpush1.msra.mxu0 0.0
        %6508 = vmatprep.subr.mxu0 0.0
        %6509 = vmatpush1.msra.mxu0 0.0
        %6510 = vmatprep.subr.mxu0 0.0
        %6511 = vmatpush1.msra.mxu0 0.0
        %6512 = vmatprep.subr.mxu0 0.0
        %6513 = vmatpush1.msra.mxu0 0.0
        %6514 = vmatprep.subr.mxu0 0.0
        %6515 = vmatpush1.msra.mxu0 0.0
        %6516 = vmatprep.subr.mxu0 0.0
        %6517 = vmatpush1.msra.mxu0 0.0
        %6518 = vmatprep.subr.mxu0 0.0
        %6519 = vmatpush1.msra.mxu0 0.0
        %6520 = vmatprep.subr.mxu0 0.0
        %6521 = vmatpush1.msra.mxu0 0.0
        %6522 = vmatprep.subr.mxu0 0.0
        %6523 = vmatpush1.msra.mxu0 0.0
        %6524 = vmatprep.subr.mxu0 0.0
        %6525 = vmatpush1.msra.mxu0 0.0
        %6526 = vmatprep.subr.mxu0 0.0
        %6527 = vmatpush1.msra.mxu0 0.0
        %6528 = vmatprep.subr.mxu0 0.0
        %6529 = vmatpush1.msra.mxu0 0.0
        %6530 = vmatprep.subr.mxu0 0.0
        %6531 = vmatpush1.msra.mxu0 0.0
        %6532 = vmatprep.subr.mxu0 0.0
        %6533 = vmatpush1.msra.mxu0 0.0
        %6534 = vmatprep.subr.mxu0 0.0
        %6535 = vmatpush1.msra.mxu0 0.0
        %6536 = vmatprep.mubr.f32.mxu0 0.0
        %v6537 = vand.u32 %v6157, 4294901760
        %v6538 = vsub.f32 %v6157, %v6537
        %6539 = vmatmul.mubr.f32.gmra.mrb[0].mxu0 %v6538
        %v6540 = vpop.f32.mrb[0].mxu0
        %v6541 = vadd.f32 %v6431, %v6540
        %v6542 = vpop.f32.mrb[0].mxu0
        %6543 = vmatprep.mubr.f32.mxu0 0.0
        %v6544 = vand.u32 %v6158, 4294901760
        %v6545 = vsub.f32 %v6158, %v6544
        %6546 = vmatmul.mubr.f32.gmra.mrb[0].mxu0 %v6545
        %v6547 = vpop.f32.mrb[0].mxu0
        %v6548 = vadd.f32 %v6437, %v6547
        %v6549 = vpop.f32.mrb[0].mxu0
        %6550 = vdwg.mxu0
        %6551 = vmatprep.subr.mxu0 0.0
        %v6552 = vand.u32 %v6159, 4294901760
        %6553 = vmatpush1.msra.mxu0 %v6552
        %6554 = vmatprep.subr.mxu0 0.0
        %v6555 = vand.u32 %v6160, 4294901760
        %6556 = vmatpush1.msra.mxu0 %v6555
        %6557 = vmatprep.subr.mxu0 0.0
        %v6558 = vand.u32 %v6161, 4294901760
        %6559 = vmatpush1.msra.mxu0 %v6558
        %6560 = vmatprep.subr.mxu0 0.0
        %v6561 = vand.u32 %v6162, 4294901760
        %6562 = vmatpush1.msra.mxu0 %v6561
        %6563 = vmatprep.subr.mxu0 0.0
        %v6564 = vand.u32 %v6163, 4294901760
        %6565 = vmatpush1.msra.mxu0 %v6564
        %6566 = vmatprep.subr.mxu0 0.0
        %v6567 = vand.u32 %v6164, 4294901760
        %6568 = vmatpush1.msra.mxu0 %v6567
        %6569 = vmatprep.subr.mxu0 0.0
        %v6570 = vand.u32 %v6165, 4294901760
        %6571 = vmatpush1.msra.mxu0 %v6570
        %6572 = vmatprep.subr.mxu0 0.0
        %v6573 = vand.u32 %v6166, 4294901760
        %6574 = vmatpush1.msra.mxu0 %v6573
        %6575 = vmatprep.subr.mxu0 0.0
        %v6576 = vand.u32 %v6167, 4294901760
        %6577 = vmatpush1.msra.mxu0 %v6576
        %6578 = vmatprep.subr.mxu0 0.0
        %v6579 = vand.u32 %v6168, 4294901760
        %6580 = vmatpush1.msra.mxu0 %v6579
        %6581 = vmatprep.subr.mxu0 0.0
        %v6582 = vand.u32 %v6169, 4294901760
        %6583 = vmatpush1.msra.mxu0 %v6582
        %6584 = vmatprep.subr.mxu0 0.0
        %v6585 = vand.u32 %v6170, 4294901760
        %6586 = vmatpush1.msra.mxu0 %v6585
        %6587 = vmatprep.subr.mxu0 0.0
        %v6588 = vand.u32 %v6171, 4294901760
        %6589 = vmatpush1.msra.mxu0 %v6588
        %6590 = vmatprep.subr.mxu0 0.0
        %v6591 = vand.u32 %v6172, 4294901760
        %6592 = vmatpush1.msra.mxu0 %v6591
        %6593 = vmatprep.subr.mxu0 0.0
        %v6594 = vand.u32 %v6173, 4294901760
        %6595 = vmatpush1.msra.mxu0 %v6594
        %6596 = vmatprep.subr.mxu0 0.0
        %v6597 = vand.u32 %v6174, 4294901760
        %6598 = vmatpush1.msra.mxu0 %v6597
        %6599 = vmatprep.subr.mxu0 0.0
        %6600 = vmatpush1.msra.mxu0 0.0
        %6601 = vmatprep.subr.mxu0 0.0
        %6602 = vmatpush1.msra.mxu0 0.0
        %6603 = vmatprep.subr.mxu0 0.0
        %6604 = vmatpush1.msra.mxu0 0.0
        %6605 = vmatprep.subr.mxu0 0.0
        %6606 = vmatpush1.msra.mxu0 0.0
        %6607 = vmatprep.subr.mxu0 0.0
        %6608 = vmatpush1.msra.mxu0 0.0
        %6609 = vmatprep.subr.mxu0 0.0
        %6610 = vmatpush1.msra.mxu0 0.0
        %6611 = vmatprep.subr.mxu0 0.0
        %6612 = vmatpush1.msra.mxu0 0.0
        %6613 = vmatprep.subr.mxu0 0.0
        %6614 = vmatpush1.msra.mxu0 0.0
        %6615 = vmatprep.subr.mxu0 0.0
        %6616 = vmatpush1.msra.mxu0 0.0
        %6617 = vmatprep.subr.mxu0 0.0
        %6618 = vmatpush1.msra.mxu0 0.0
        %6619 = vmatprep.subr.mxu0 0.0
        %6620 = vmatpush1.msra.mxu0 0.0
        %6621 = vmatprep.subr.mxu0 0.0
        %6622 = vmatpush1.msra.mxu0 0.0
        %6623 = vmatprep.subr.mxu0 0.0
        %6624 = vmatpush1.msra.mxu0 0.0
        %6625 = vmatprep.subr.mxu0 0.0
        %6626 = vmatpush1.msra.mxu0 0.0
        %6627 = vmatprep.subr.mxu0 0.0
        %6628 = vmatpush1.msra.mxu0 0.0
        %6629 = vmatprep.subr.mxu0 0.0
        %6630 = vmatpush1.msra.mxu0 0.0
        %6631 = vmatprep.mubr.f32.mxu0 0.0
        %v6632 = vand.u32 %v6157, 4294901760
        %v6633 = vsub.f32 %v6157, %v6632
        %v6634 = vand.u32 %v6633, 4294901760
        %6635 = vmatmul.mubr.f32.gmra.mrb[0].mxu0 %v6634
        %v6636 = vpop.f32.mrb[0].mxu0
        %v6637 = vadd.f32 %v6541, %v6636
        %v6638 = vpop.f32.mrb[0].mxu0
        %6639 = vmatprep.mubr.f32.mxu0 0.0
        %v6640 = vand.u32 %v6158, 4294901760
        %v6641 = vsub.f32 %v6158, %v6640
        %v6642 = vand.u32 %v6641, 4294901760
        %6643 = vmatmul.mubr.f32.gmra.mrb[0].mxu0 %v6642
        %v6644 = vpop.f32.mrb[0].mxu0
        %v6645 = vadd.f32 %v6548, %v6644
        %v6646 = vpop.f32.mrb[0].mxu0
        %6647 = vdwg.mxu0
        %6648 = vmatprep.subr.mxu0 0.0
        %v6649 = vand.u32 %v6159, 4294901760
        %v6650 = vsub.f32 %v6159, %v6649
        %v6651 = vand.u32 %v6650, 4294901760
        %6652 = vmatpush1.msra.mxu0 %v6651
        %6653 = vmatprep.subr.mxu0 0.0
        %v6654 = vand.u32 %v6160, 4294901760
        %v6655 = vsub.f32 %v6160, %v6654
        %v6656 = vand.u32 %v6655, 4294901760
        %6657 = vmatpush1.msra.mxu0 %v6656
        %6658 = vmatprep.subr.mxu0 0.0
        %v6659 = vand.u32 %v6161, 4294901760
        %v6660 = vsub.f32 %v6161, %v6659
        %v6661 = vand.u32 %v6660, 4294901760
        %6662 = vmatpush1.msra.mxu0 %v6661
        %6663 = vmatprep.subr.mxu0 0.0
        %v6664 = vand.u32 %v6162, 4294901760
        %v6665 = vsub.f32 %v6162, %v6664
        %v6666 = vand.u32 %v6665, 4294901760
        %6667 = vmatpush1.msra.mxu0 %v6666
        %6668 = vmatprep.subr.mxu0 0.0
        %v6669 = vand.u32 %v6163, 4294901760
        %v6670 = vsub.f32 %v6163, %v6669
        %v6671 = vand.u32 %v6670, 4294901760
        %6672 = vmatpush1.msra.mxu0 %v6671
        %6673 = vmatprep.subr.mxu0 0.0
        %v6674 = vand.u32 %v6164, 4294901760
        %v6675 = vsub.f32 %v6164, %v6674
        %v6676 = vand.u32 %v6675, 4294901760
        %6677 = vmatpush1.msra.mxu0 %v6676
        %6678 = vmatprep.subr.mxu0 0.0
        %v6679 = vand.u32 %v6165, 4294901760
        %v6680 = vsub.f32 %v6165, %v6679
        %v6681 = vand.u32 %v6680, 4294901760
        %6682 = vmatpush1.msra.mxu0 %v6681
        %6683 = vmatprep.subr.mxu0 0.0
        %v6684 = vand.u32 %v6166, 4294901760
        %v6685 = vsub.f32 %v6166, %v6684
        %v6686 = vand.u32 %v6685, 4294901760
        %6687 = vmatpush1.msra.mxu0 %v6686
        %6688 = vmatprep.subr.mxu0 0.0
        %v6689 = vand.u32 %v6167, 4294901760
        %v6690 = vsub.f32 %v6167, %v6689
        %v6691 = vand.u32 %v6690, 4294901760
        %6692 = vmatpush1.msra.mxu0 %v6691
        %6693 = vmatprep.subr.mxu0 0.0
        %v6694 = vand.u32 %v6168, 4294901760
        %v6695 = vsub.f32 %v6168, %v6694
        %v6696 = vand.u32 %v6695, 4294901760
        %6697 = vmatpush1.msra.mxu0 %v6696
        %6698 = vmatprep.subr.mxu0 0.0
        %v6699 = vand.u32 %v6169, 4294901760
        %v6700 = vsub.f32 %v6169, %v6699
        %v6701 = vand.u32 %v6700, 4294901760
        %6702 = vmatpush1.msra.mxu0 %v6701
        %6703 = vmatprep.subr.mxu0 0.0
        %v6704 = vand.u32 %v6170, 4294901760
        %v6705 = vsub.f32 %v6170, %v6704
        %v6706 = vand.u32 %v6705, 4294901760
        %6707 = vmatpush1.msra.mxu0 %v6706
        %6708 = vmatprep.subr.mxu0 0.0
        %v6709 = vand.u32 %v6171, 4294901760
        %v6710 = vsub.f32 %v6171, %v6709
        %v6711 = vand.u32 %v6710, 4294901760
        %6712 = vmatpush1.msra.mxu0 %v6711
        %6713 = vmatprep.subr.mxu0 0.0
        %v6714 = vand.u32 %v6172, 4294901760
        %v6715 = vsub.f32 %v6172, %v6714
        %v6716 = vand.u32 %v6715, 4294901760
        %6717 = vmatpush1.msra.mxu0 %v6716
        %6718 = vmatprep.subr.mxu0 0.0
        %v6719 = vand.u32 %v6173, 4294901760
        %v6720 = vsub.f32 %v6173, %v6719
        %v6721 = vand.u32 %v6720, 4294901760
        %6722 = vmatpush1.msra.mxu0 %v6721
        %6723 = vmatprep.subr.mxu0 0.0
        %v6724 = vand.u32 %v6174, 4294901760
        %v6725 = vsub.f32 %v6174, %v6724
        %v6726 = vand.u32 %v6725, 4294901760
        %6727 = vmatpush1.msra.mxu0 %v6726
        %6728 = vmatprep.subr.mxu0 0.0
        %6729 = vmatpush1.msra.mxu0 0.0
        %6730 = vmatprep.subr.mxu0 0.0
        %6731 = vmatpush1.msra.mxu0 0.0
        %6732 = vmatprep.subr.mxu0 0.0
        %6733 = vmatpush1.msra.mxu0 0.0
        %6734 = vmatprep.subr.mxu0 0.0
        %6735 = vmatpush1.msra.mxu0 0.0
        %6736 = vmatprep.subr.mxu0 0.0
        %6737 = vmatpush1.msra.mxu0 0.0
        %6738 = vmatprep.subr.mxu0 0.0
        %6739 = vmatpush1.msra.mxu0 0.0
        %6740 = vmatprep.subr.mxu0 0.0
        %6741 = vmatpush1.msra.mxu0 0.0
        %6742 = vmatprep.subr.mxu0 0.0
        %6743 = vmatpush1.msra.mxu0 0.0
        %6744 = vmatprep.subr.mxu0 0.0
        %6745 = vmatpush1.msra.mxu0 0.0
        %6746 = vmatprep.subr.mxu0 0.0
        %6747 = vmatpush1.msra.mxu0 0.0
        %6748 = vmatprep.subr.mxu0 0.0
        %6749 = vmatpush1.msra.mxu0 0.0
        %6750 = vmatprep.subr.mxu0 0.0
        %6751 = vmatpush1.msra.mxu0 0.0
        %6752 = vmatprep.subr.mxu0 0.0
        %6753 = vmatpush1.msra.mxu0 0.0
        %6754 = vmatprep.subr.mxu0 0.0
        %6755 = vmatpush1.msra.mxu0 0.0
        %6756 = vmatprep.subr.mxu0 0.0
        %6757 = vmatpush1.msra.mxu0 0.0
        %6758 = vmatprep.subr.mxu0 0.0
        %6759 = vmatpush1.msra.mxu0 0.0
        %6760 = vmatprep.mubr.f32.mxu0 0.0
        %v6761 = vand.u32 %v6157, 4294901760
        %6762 = vmatmul.mubr.f32.gmra.mrb[0].mxu0 %v6761
        %v6763 = vpop.f32.mrb[0].mxu0
        %v6764 = vadd.f32 %v6637, %v6763
        %v6765 = vpop.f32.mrb[0].mxu0
        %6766 = vmatprep.mubr.f32.mxu0 0.0
        %v6767 = vand.u32 %v6158, 4294901760
        %6768 = vmatmul.mubr.f32.gmra.mrb[0].mxu0 %v6767
        %v6769 = vpop.f32.mrb[0].mxu0
        %v6770 = vadd.f32 %v6645, %v6769
        %v6771 = vpop.f32.mrb[0].mxu0
        %6772 = vdwg.mxu0
        %6773 = vmatprep.subr.mxu0 0.0
        %v6774 = vand.u32 %v6159, 4294901760
        %6775 = vmatpush1.msra.mxu0 %v6774
        %6776 = vmatprep.subr.mxu0 0.0
        %v6777 = vand.u32 %v6160, 4294901760
        %6778 = vmatpush1.msra.mxu0 %v6777
        %6779 = vmatprep.subr.mxu0 0.0
        %v6780 = vand.u32 %v6161, 4294901760
        %6781 = vmatpush1.msra.mxu0 %v6780
        %6782 = vmatprep.subr.mxu0 0.0
        %v6783 = vand.u32 %v6162, 4294901760
        %6784 = vmatpush1.msra.mxu0 %v6783
        %6785 = vmatprep.subr.mxu0 0.0
        %v6786 = vand.u32 %v6163, 4294901760
        %6787 = vmatpush1.msra.mxu0 %v6786
        %6788 = vmatprep.subr.mxu0 0.0
        %v6789 = vand.u32 %v6164, 4294901760
        %6790 = vmatpush1.msra.mxu0 %v6789
        %6791 = vmatprep.subr.mxu0 0.0
        %v6792 = vand.u32 %v6165, 4294901760
        %6793 = vmatpush1.msra.mxu0 %v6792
        %6794 = vmatprep.subr.mxu0 0.0
        %v6795 = vand.u32 %v6166, 4294901760
        %6796 = vmatpush1.msra.mxu0 %v6795
        %6797 = vmatprep.subr.mxu0 0.0
        %v6798 = vand.u32 %v6167, 4294901760
        %6799 = vmatpush1.msra.mxu0 %v6798
        %6800 = vmatprep.subr.mxu0 0.0
        %v6801 = vand.u32 %v6168, 4294901760
        %6802 = vmatpush1.msra.mxu0 %v6801
        %6803 = vmatprep.subr.mxu0 0.0
        %v6804 = vand.u32 %v6169, 4294901760
        %6805 = vmatpush1.msra.mxu0 %v6804
        %6806 = vmatprep.subr.mxu0 0.0
        %v6807 = vand.u32 %v6170, 4294901760
        %6808 = vmatpush1.msra.mxu0 %v6807
        %6809 = vmatprep.subr.mxu0 0.0
        %v6810 = vand.u32 %v6171, 4294901760
        %6811 = vmatpush1.msra.mxu0 %v6810
        %6812 = vmatprep.subr.mxu0 0.0
        %v6813 = vand.u32 %v6172, 4294901760
        %6814 = vmatpush1.msra.mxu0 %v6813
        %6815 = vmatprep.subr.mxu0 0.0
        %v6816 = vand.u32 %v6173, 4294901760
        %6817 = vmatpush1.msra.mxu0 %v6816
        %6818 = vmatprep.subr.mxu0 0.0
        %v6819 = vand.u32 %v6174, 4294901760
        %6820 = vmatpush1.msra.mxu0 %v6819
        %6821 = vmatprep.subr.mxu0 0.0
        %6822 = vmatpush1.msra.mxu0 0.0
        %6823 = vmatprep.subr.mxu0 0.0
        %6824 = vmatpush1.msra.mxu0 0.0
        %6825 = vmatprep.subr.mxu0 0.0
        %6826 = vmatpush1.msra.mxu0 0.0
        %6827 = vmatprep.subr.mxu0 0.0
        %6828 = vmatpush1.msra.mxu0 0.0
        %6829 = vmatprep.subr.mxu0 0.0
        %6830 = vmatpush1.msra.mxu0 0.0
        %6831 = vmatprep.subr.mxu0 0.0
        %6832 = vmatpush1.msra.mxu0 0.0
        %6833 = vmatprep.subr.mxu0 0.0
        %6834 = vmatpush1.msra.mxu0 0.0
        %6835 = vmatprep.subr.mxu0 0.0
        %6836 = vmatpush1.msra.mxu0 0.0
        %6837 = vmatprep.subr.mxu0 0.0
        %6838 = vmatpush1.msra.mxu0 0.0
        %6839 = vmatprep.subr.mxu0 0.0
        %6840 = vmatpush1.msra.mxu0 0.0
        %6841 = vmatprep.subr.mxu0 0.0
        %6842 = vmatpush1.msra.mxu0 0.0
        %6843 = vmatprep.subr.mxu0 0.0
        %6844 = vmatpush1.msra.mxu0 0.0
        %6845 = vmatprep.subr.mxu0 0.0
        %6846 = vmatpush1.msra.mxu0 0.0
        %6847 = vmatprep.subr.mxu0 0.0
        %6848 = vmatpush1.msra.mxu0 0.0
        %6849 = vmatprep.subr.mxu0 0.0
        %6850 = vmatpush1.msra.mxu0 0.0
        %6851 = vmatprep.subr.mxu0 0.0
        %6852 = vmatpush1.msra.mxu0 0.0
        %6853 = vmatprep.mubr.f32.mxu0 0.0
        %v6854 = vand.u32 %v6157, 4294901760
        %6855 = vmatmul.mubr.f32.gmra.mrb[0].mxu0 %v6854
        %v6856 = vpop.f32.mrb[0].mxu0
        %v6857 = vadd.f32 %v6764, %v6856
        %v6858 = vpop.f32.mrb[0].mxu0
        %6859 = vmatprep.mubr.f32.mxu0 0.0
        %v6860 = vand.u32 %v6158, 4294901760
        %6861 = vmatmul.mubr.f32.gmra.mrb[0].mxu0 %v6860
        %v6862 = vpop.f32.mrb[0].mxu0
        %v6863 = vadd.f32 %v6770, %v6862
        %v6864 = vpop.f32.mrb[0].mxu0
        %6865 = vdwg.mxu0
        %v6866 = vadd.f32 %v429, %v6857
        %v6867 = vadd.f32 %v430, %v6863
        %v6868 = vld [vmem:[%s8] sm:$0xff]
        %v6869 = vld [vmem:[%s8 + $0x8] sm:$0xff]
        %v6870 = vld [vmem:[%s8 + $0x10] sm:$0xff]
        %v6871 = vld [vmem:[%s8 + $0x18] sm:$0xff]
        %v6872 = vld [vmem:[%s8 + $0x20] sm:$0xff]
        %v6873 = vld [vmem:[%s8 + $0x28] sm:$0xff]
        %v6874 = vld [vmem:[%s8 + $0x30] sm:$0xff]
        %v6875 = vld [vmem:[%s8 + $0x38] sm:$0xff]
        %v6876 = vld [vmem:[%s8 + $0x40] sm:$0xff]
        %v6877 = vld [vmem:[%s8 + $0x48] sm:$0xff]
        %v6878 = vld [vmem:[%s8 + $0x50] sm:$0xff]
        %v6879 = vld [vmem:[%s8 + $0x58] sm:$0xff]
        %v6880 = vld [vmem:[%s8 + $0x60] sm:$0xff]
        %v6881 = vld [vmem:[%s8 + $0x68] sm:$0xff]
        %v6882 = vld [vmem:[%s8 + $0x70] sm:$0xff]
        %v6883 = vld [vmem:[%s8 + $0x78] sm:$0xff]
        %v6884 = vld [vmem:[%s9] sm:$0x1]
        %v6886 = vlaneseq
        %v6887 = vshrl.u32 %v6886, 7
        %v6888 = vsub.s32 0, %v6887
        %v6889 = vrot.slane %v6884, %v6888
        %6891 = vmatprep.subr.mxu0 0.0
        %v6892 = vand.u32 %v6868, 4294901760
        %6893 = vmatpush1.msra.mxu0 %v6892
        %6894 = vmatprep.subr.mxu0 0.0
        %v6895 = vand.u32 %v6869, 4294901760
        %6896 = vmatpush1.msra.mxu0 %v6895
        %6897 = vmatprep.subr.mxu0 0.0
        %v6898 = vand.u32 %v6870, 4294901760
        %6899 = vmatpush1.msra.mxu0 %v6898
        %6900 = vmatprep.subr.mxu0 0.0
        %v6901 = vand.u32 %v6871, 4294901760
        %6902 = vmatpush1.msra.mxu0 %v6901
        %6903 = vmatprep.subr.mxu0 0.0
        %v6904 = vand.u32 %v6872, 4294901760
        %6905 = vmatpush1.msra.mxu0 %v6904
        %6906 = vmatprep.subr.mxu0 0.0
        %v6907 = vand.u32 %v6873, 4294901760
        %6908 = vmatpush1.msra.mxu0 %v6907
        %6909 = vmatprep.subr.mxu0 0.0
        %v6910 = vand.u32 %v6874, 4294901760
        %6911 = vmatpush1.msra.mxu0 %v6910
        %6912 = vmatprep.subr.mxu0 0.0
        %v6913 = vand.u32 %v6875, 4294901760
        %6914 = vmatpush1.msra.mxu0 %v6913
        %6915 = vmatprep.subr.mxu0 0.0
        %v6916 = vand.u32 %v6876, 4294901760
        %6917 = vmatpush1.msra.mxu0 %v6916
        %6918 = vmatprep.subr.mxu0 0.0
        %v6919 = vand.u32 %v6877, 4294901760
        %6920 = vmatpush1.msra.mxu0 %v6919
        %6921 = vmatprep.subr.mxu0 0.0
        %v6922 = vand.u32 %v6878, 4294901760
        %6923 = vmatpush1.msra.mxu0 %v6922
        %6924 = vmatprep.subr.mxu0 0.0
        %v6925 = vand.u32 %v6879, 4294901760
        %6926 = vmatpush1.msra.mxu0 %v6925
        %6927 = vmatprep.subr.mxu0 0.0
        %v6928 = vand.u32 %v6880, 4294901760
        %6929 = vmatpush1.msra.mxu0 %v6928
        %6930 = vmatprep.subr.mxu0 0.0
        %v6931 = vand.u32 %v6881, 4294901760
        %6932 = vmatpush1.msra.mxu0 %v6931
        %6933 = vmatprep.subr.mxu0 0.0
        %v6934 = vand.u32 %v6882, 4294901760
        %6935 = vmatpush1.msra.mxu0 %v6934
        %6936 = vmatprep.subr.mxu0 0.0
        %v6937 = vand.u32 %v6883, 4294901760
        %6938 = vmatpush1.msra.mxu0 %v6937
        %6939 = vmatprep.subr.mxu0 0.0
        %6940 = vmatpush1.msra.mxu0 0.0
        %6941 = vmatprep.subr.mxu0 0.0
        %6942 = vmatpush1.msra.mxu0 0.0
        %6943 = vmatprep.subr.mxu0 0.0
        %6944 = vmatpush1.msra.mxu0 0.0
        %6945 = vmatprep.subr.mxu0 0.0
        %6946 = vmatpush1.msra.mxu0 0.0
        %6947 = vmatprep.subr.mxu0 0.0
        %6948 = vmatpush1.msra.mxu0 0.0
        %6949 = vmatprep.subr.mxu0 0.0
        %6950 = vmatpush1.msra.mxu0 0.0
        %6951 = vmatprep.subr.mxu0 0.0
        %6952 = vmatpush1.msra.mxu0 0.0
        %6953 = vmatprep.subr.mxu0 0.0
        %6954 = vmatpush1.msra.mxu0 0.0
        %6955 = vmatprep.subr.mxu0 0.0
        %6956 = vmatpush1.msra.mxu0 0.0
        %6957 = vmatprep.subr.mxu0 0.0
        %6958 = vmatpush1.msra.mxu0 0.0
        %6959 = vmatprep.subr.mxu0 0.0
        %6960 = vmatpush1.msra.mxu0 0.0
        %6961 = vmatprep.subr.mxu0 0.0
        %6962 = vmatpush1.msra.mxu0 0.0
        %6963 = vmatprep.subr.mxu0 0.0
        %6964 = vmatpush1.msra.mxu0 0.0
        %6965 = vmatprep.subr.mxu0 0.0
        %6966 = vmatpush1.msra.mxu0 0.0
        %6967 = vmatprep.subr.mxu0 0.0
        %6968 = vmatpush1.msra.mxu0 0.0
        %6969 = vmatprep.subr.mxu0 0.0
        %6970 = vmatpush1.msra.mxu0 0.0
        %6971 = vmatprep.mubr.f32.mxu0 0.0
        %v6972 = vand.u32 %v6866, 4294901760
        %v6973 = vsub.f32 %v6866, %v6972
        %v6974 = vand.u32 %v6973, 4294901760
        %v6975 = vsub.f32 %v6973, %v6974
        %v6976 = vand.u32 %v6975, 4294901760
        %6977 = vmatmul.mubr.f32.gmra.mrb[0].mxu0 %v6976
        %v6978 = vpop.f32.mrb[0].mxu0
        %v6979 = vadd.f32 %v6889, %v6978
        %v6980 = vpop.f32.mrb[0].mxu0
        %6981 = vmatprep.mubr.f32.mxu0 0.0
        %v6982 = vand.u32 %v6867, 4294901760
        %v6983 = vsub.f32 %v6867, %v6982
        %v6984 = vand.u32 %v6983, 4294901760
        %v6985 = vsub.f32 %v6983, %v6984
        %v6986 = vand.u32 %v6985, 4294901760
        %6987 = vmatmul.mubr.f32.gmra.mrb[0].mxu0 %v6986
        %v6988 = vpop.f32.mrb[0].mxu0
        %v6989 = vadd.f32 %v6889, %v6988
        %v6990 = vpop.f32.mrb[0].mxu0
        %6991 = vdwg.mxu0
        %6992 = vmatprep.subr.mxu0 0.0
        %v6993 = vand.u32 %v6868, 4294901760
        %v6994 = vsub.f32 %v6868, %v6993
        %v6995 = vand.u32 %v6994, 4294901760
        %v6996 = vsub.f32 %v6994, %v6995
        %v6997 = vand.u32 %v6996, 4294901760
        %6998 = vmatpush1.msra.mxu0 %v6997
        %6999 = vmatprep.subr.mxu0 0.0
        %v7000 = vand.u32 %v6869, 4294901760
        %v7001 = vsub.f32 %v6869, %v7000
        %v7002 = vand.u32 %v7001, 4294901760
        %v7003 = vsub.f32 %v7001, %v7002
        %v7004 = vand.u32 %v7003, 4294901760
        %7005 = vmatpush1.msra.mxu0 %v7004
        %7006 = vmatprep.subr.mxu0 0.0
        %v7007 = vand.u32 %v6870, 4294901760
        %v7008 = vsub.f32 %v6870, %v7007
        %v7009 = vand.u32 %v7008, 4294901760
        %v7010 = vsub.f32 %v7008, %v7009
        %v7011 = vand.u32 %v7010, 4294901760
        %7012 = vmatpush1.msra.mxu0 %v7011
        %7013 = vmatprep.subr.mxu0 0.0
        %v7014 = vand.u32 %v6871, 4294901760
        %v7015 = vsub.f32 %v6871, %v7014
        %v7016 = vand.u32 %v7015, 4294901760
        %v7017 = vsub.f32 %v7015, %v7016
        %v7018 = vand.u32 %v7017, 4294901760
        %7019 = vmatpush1.msra.mxu0 %v7018
        %7020 = vmatprep.subr.mxu0 0.0
        %v7021 = vand.u32 %v6872, 4294901760
        %v7022 = vsub.f32 %v6872, %v7021
        %v7023 = vand.u32 %v7022, 4294901760
        %v7024 = vsub.f32 %v7022, %v7023
        %v7025 = vand.u32 %v7024, 4294901760
        %7026 = vmatpush1.msra.mxu0 %v7025
        %7027 = vmatprep.subr.mxu0 0.0
        %v7028 = vand.u32 %v6873, 4294901760
        %v7029 = vsub.f32 %v6873, %v7028
        %v7030 = vand.u32 %v7029, 4294901760
        %v7031 = vsub.f32 %v7029, %v7030
        %v7032 = vand.u32 %v7031, 4294901760
        %7033 = vmatpush1.msra.mxu0 %v7032
        %7034 = vmatprep.subr.mxu0 0.0
        %v7035 = vand.u32 %v6874, 4294901760
        %v7036 = vsub.f32 %v6874, %v7035
        %v7037 = vand.u32 %v7036, 4294901760
        %v7038 = vsub.f32 %v7036, %v7037
        %v7039 = vand.u32 %v7038, 4294901760
        %7040 = vmatpush1.msra.mxu0 %v7039
        %7041 = vmatprep.subr.mxu0 0.0
        %v7042 = vand.u32 %v6875, 4294901760
        %v7043 = vsub.f32 %v6875, %v7042
        %v7044 = vand.u32 %v7043, 4294901760
        %v7045 = vsub.f32 %v7043, %v7044
        %v7046 = vand.u32 %v7045, 4294901760
        %7047 = vmatpush1.msra.mxu0 %v7046
        %7048 = vmatprep.subr.mxu0 0.0
        %v7049 = vand.u32 %v6876, 4294901760
        %v7050 = vsub.f32 %v6876, %v7049
        %v7051 = vand.u32 %v7050, 4294901760
        %v7052 = vsub.f32 %v7050, %v7051
        %v7053 = vand.u32 %v7052, 4294901760
        %7054 = vmatpush1.msra.mxu0 %v7053
        %7055 = vmatprep.subr.mxu0 0.0
        %v7056 = vand.u32 %v6877, 4294901760
        %v7057 = vsub.f32 %v6877, %v7056
        %v7058 = vand.u32 %v7057, 4294901760
        %v7059 = vsub.f32 %v7057, %v7058
        %v7060 = vand.u32 %v7059, 4294901760
        %7061 = vmatpush1.msra.mxu0 %v7060
        %7062 = vmatprep.subr.mxu0 0.0
        %v7063 = vand.u32 %v6878, 4294901760
        %v7064 = vsub.f32 %v6878, %v7063
        %v7065 = vand.u32 %v7064, 4294901760
        %v7066 = vsub.f32 %v7064, %v7065
        %v7067 = vand.u32 %v7066, 4294901760
        %7068 = vmatpush1.msra.mxu0 %v7067
        %7069 = vmatprep.subr.mxu0 0.0
        %v7070 = vand.u32 %v6879, 4294901760
        %v7071 = vsub.f32 %v6879, %v7070
        %v7072 = vand.u32 %v7071, 4294901760
        %v7073 = vsub.f32 %v7071, %v7072
        %v7074 = vand.u32 %v7073, 4294901760
        %7075 = vmatpush1.msra.mxu0 %v7074
        %7076 = vmatprep.subr.mxu0 0.0
        %v7077 = vand.u32 %v6880, 4294901760
        %v7078 = vsub.f32 %v6880, %v7077
        %v7079 = vand.u32 %v7078, 4294901760
        %v7080 = vsub.f32 %v7078, %v7079
        %v7081 = vand.u32 %v7080, 4294901760
        %7082 = vmatpush1.msra.mxu0 %v7081
        %7083 = vmatprep.subr.mxu0 0.0
        %v7084 = vand.u32 %v6881, 4294901760
        %v7085 = vsub.f32 %v6881, %v7084
        %v7086 = vand.u32 %v7085, 4294901760
        %v7087 = vsub.f32 %v7085, %v7086
        %v7088 = vand.u32 %v7087, 4294901760
        %7089 = vmatpush1.msra.mxu0 %v7088
        %7090 = vmatprep.subr.mxu0 0.0
        %v7091 = vand.u32 %v6882, 4294901760
        %v7092 = vsub.f32 %v6882, %v7091
        %v7093 = vand.u32 %v7092, 4294901760
        %v7094 = vsub.f32 %v7092, %v7093
        %v7095 = vand.u32 %v7094, 4294901760
        %7096 = vmatpush1.msra.mxu0 %v7095
        %7097 = vmatprep.subr.mxu0 0.0
        %v7098 = vand.u32 %v6883, 4294901760
        %v7099 = vsub.f32 %v6883, %v7098
        %v7100 = vand.u32 %v7099, 4294901760
        %v7101 = vsub.f32 %v7099, %v7100
        %v7102 = vand.u32 %v7101, 4294901760
        %7103 = vmatpush1.msra.mxu0 %v7102
        %7104 = vmatprep.subr.mxu0 0.0
        %7105 = vmatpush1.msra.mxu0 0.0
        %7106 = vmatprep.subr.mxu0 0.0
        %7107 = vmatpush1.msra.mxu0 0.0
        %7108 = vmatprep.subr.mxu0 0.0
        %7109 = vmatpush1.msra.mxu0 0.0
        %7110 = vmatprep.subr.mxu0 0.0
        %7111 = vmatpush1.msra.mxu0 0.0
        %7112 = vmatprep.subr.mxu0 0.0
        %7113 = vmatpush1.msra.mxu0 0.0
        %7114 = vmatprep.subr.mxu0 0.0
        %7115 = vmatpush1.msra.mxu0 0.0
        %7116 = vmatprep.subr.mxu0 0.0
        %7117 = vmatpush1.msra.mxu0 0.0
        %7118 = vmatprep.subr.mxu0 0.0
        %7119 = vmatpush1.msra.mxu0 0.0
        %7120 = vmatprep.subr.mxu0 0.0
        %7121 = vmatpush1.msra.mxu0 0.0
        %7122 = vmatprep.subr.mxu0 0.0
        %7123 = vmatpush1.msra.mxu0 0.0
        %7124 = vmatprep.subr.mxu0 0.0
        %7125 = vmatpush1.msra.mxu0 0.0
        %7126 = vmatprep.subr.mxu0 0.0
        %7127 = vmatpush1.msra.mxu0 0.0
        %7128 = vmatprep.subr.mxu0 0.0
        %7129 = vmatpush1.msra.mxu0 0.0
        %7130 = vmatprep.subr.mxu0 0.0
        %7131 = vmatpush1.msra.mxu0 0.0
        %7132 = vmatprep.subr.mxu0 0.0
        %7133 = vmatpush1.msra.mxu0 0.0
        %7134 = vmatprep.subr.mxu0 0.0
        %7135 = vmatpush1.msra.mxu0 0.0
        %7136 = vmatprep.mubr.f32.mxu0 0.0
        %v7137 = vand.u32 %v6866, 4294901760
        %7138 = vmatmul.mubr.f32.gmra.mrb[0].mxu0 %v7137
        %v7139 = vpop.f32.mrb[0].mxu0
        %v7140 = vadd.f32 %v6979, %v7139
        %v7141 = vpop.f32.mrb[0].mxu0
        %7142 = vmatprep.mubr.f32.mxu0 0.0
        %v7143 = vand.u32 %v6867, 4294901760
        %7144 = vmatmul.mubr.f32.gmra.mrb[0].mxu0 %v7143
        %v7145 = vpop.f32.mrb[0].mxu0
        %v7146 = vadd.f32 %v6989, %v7145
        %v7147 = vpop.f32.mrb[0].mxu0
        %7148 = vdwg.mxu0
        %7149 = vmatprep.subr.mxu0 0.0
        %v7150 = vand.u32 %v6868, 4294901760
        %v7151 = vsub.f32 %v6868, %v7150
        %7152 = vmatpush1.msra.mxu0 %v7151
        %7153 = vmatprep.subr.mxu0 0.0
        %v7154 = vand.u32 %v6869, 4294901760
        %v7155 = vsub.f32 %v6869, %v7154
        %7156 = vmatpush1.msra.mxu0 %v7155
        %7157 = vmatprep.subr.mxu0 0.0
        %v7158 = vand.u32 %v6870, 4294901760
        %v7159 = vsub.f32 %v6870, %v7158
        %7160 = vmatpush1.msra.mxu0 %v7159
        %7161 = vmatprep.subr.mxu0 0.0
        %v7162 = vand.u32 %v6871, 4294901760
        %v7163 = vsub.f32 %v6871, %v7162
        %7164 = vmatpush1.msra.mxu0 %v7163
        %7165 = vmatprep.subr.mxu0 0.0
        %v7166 = vand.u32 %v6872, 4294901760
        %v7167 = vsub.f32 %v6872, %v7166
        %7168 = vmatpush1.msra.mxu0 %v7167
        %7169 = vmatprep.subr.mxu0 0.0
        %v7170 = vand.u32 %v6873, 4294901760
        %v7171 = vsub.f32 %v6873, %v7170
        %7172 = vmatpush1.msra.mxu0 %v7171
        %7173 = vmatprep.subr.mxu0 0.0
        %v7174 = vand.u32 %v6874, 4294901760
        %v7175 = vsub.f32 %v6874, %v7174
        %7176 = vmatpush1.msra.mxu0 %v7175
        %7177 = vmatprep.subr.mxu0 0.0
        %v7178 = vand.u32 %v6875, 4294901760
        %v7179 = vsub.f32 %v6875, %v7178
        %7180 = vmatpush1.msra.mxu0 %v7179
        %7181 = vmatprep.subr.mxu0 0.0
        %v7182 = vand.u32 %v6876, 4294901760
        %v7183 = vsub.f32 %v6876, %v7182
        %7184 = vmatpush1.msra.mxu0 %v7183
        %7185 = vmatprep.subr.mxu0 0.0
        %v7186 = vand.u32 %v6877, 4294901760
        %v7187 = vsub.f32 %v6877, %v7186
        %7188 = vmatpush1.msra.mxu0 %v7187
        %7189 = vmatprep.subr.mxu0 0.0
        %v7190 = vand.u32 %v6878, 4294901760
        %v7191 = vsub.f32 %v6878, %v7190
        %7192 = vmatpush1.msra.mxu0 %v7191
        %7193 = vmatprep.subr.mxu0 0.0
        %v7194 = vand.u32 %v6879, 4294901760
        %v7195 = vsub.f32 %v6879, %v7194
        %7196 = vmatpush1.msra.mxu0 %v7195
        %7197 = vmatprep.subr.mxu0 0.0
        %v7198 = vand.u32 %v6880, 4294901760
        %v7199 = vsub.f32 %v6880, %v7198
        %7200 = vmatpush1.msra.mxu0 %v7199
        %7201 = vmatprep.subr.mxu0 0.0
        %v7202 = vand.u32 %v6881, 4294901760
        %v7203 = vsub.f32 %v6881, %v7202
        %7204 = vmatpush1.msra.mxu0 %v7203
        %7205 = vmatprep.subr.mxu0 0.0
        %v7206 = vand.u32 %v6882, 4294901760
        %v7207 = vsub.f32 %v6882, %v7206
        %7208 = vmatpush1.msra.mxu0 %v7207
        %7209 = vmatprep.subr.mxu0 0.0
        %v7210 = vand.u32 %v6883, 4294901760
        %v7211 = vsub.f32 %v6883, %v7210
        %7212 = vmatpush1.msra.mxu0 %v7211
        %7213 = vmatprep.subr.mxu0 0.0
        %7214 = vmatpush1.msra.mxu0 0.0
        %7215 = vmatprep.subr.mxu0 0.0
        %7216 = vmatpush1.msra.mxu0 0.0
        %7217 = vmatprep.subr.mxu0 0.0
        %7218 = vmatpush1.msra.mxu0 0.0
        %7219 = vmatprep.subr.mxu0 0.0
        %7220 = vmatpush1.msra.mxu0 0.0
        %7221 = vmatprep.subr.mxu0 0.0
        %7222 = vmatpush1.msra.mxu0 0.0
        %7223 = vmatprep.subr.mxu0 0.0
        %7224 = vmatpush1.msra.mxu0 0.0
        %7225 = vmatprep.subr.mxu0 0.0
        %7226 = vmatpush1.msra.mxu0 0.0
        %7227 = vmatprep.subr.mxu0 0.0
        %7228 = vmatpush1.msra.mxu0 0.0
        %7229 = vmatprep.subr.mxu0 0.0
        %7230 = vmatpush1.msra.mxu0 0.0
        %7231 = vmatprep.subr.mxu0 0.0
        %7232 = vmatpush1.msra.mxu0 0.0
        %7233 = vmatprep.subr.mxu0 0.0
        %7234 = vmatpush1.msra.mxu0 0.0
        %7235 = vmatprep.subr.mxu0 0.0
        %7236 = vmatpush1.msra.mxu0 0.0
        %7237 = vmatprep.subr.mxu0 0.0
        %7238 = vmatpush1.msra.mxu0 0.0
        %7239 = vmatprep.subr.mxu0 0.0
        %7240 = vmatpush1.msra.mxu0 0.0
        %7241 = vmatprep.subr.mxu0 0.0
        %7242 = vmatpush1.msra.mxu0 0.0
        %7243 = vmatprep.subr.mxu0 0.0
        %7244 = vmatpush1.msra.mxu0 0.0
        %7245 = vmatprep.mubr.f32.mxu0 0.0
        %v7246 = vand.u32 %v6866, 4294901760
        %v7247 = vsub.f32 %v6866, %v7246
        %7248 = vmatmul.mubr.f32.gmra.mrb[0].mxu0 %v7247
        %v7249 = vpop.f32.mrb[0].mxu0
        %v7250 = vadd.f32 %v7140, %v7249
        %v7251 = vpop.f32.mrb[0].mxu0
        %7252 = vmatprep.mubr.f32.mxu0 0.0
        %v7253 = vand.u32 %v6867, 4294901760
        %v7254 = vsub.f32 %v6867, %v7253
        %7255 = vmatmul.mubr.f32.gmra.mrb[0].mxu0 %v7254
        %v7256 = vpop.f32.mrb[0].mxu0
        %v7257 = vadd.f32 %v7146, %v7256
        %v7258 = vpop.f32.mrb[0].mxu0
        %7259 = vdwg.mxu0
        %7260 = vmatprep.subr.mxu0 0.0
        %v7261 = vand.u32 %v6868, 4294901760
        %7262 = vmatpush1.msra.mxu0 %v7261
        %7263 = vmatprep.subr.mxu0 0.0
        %v7264 = vand.u32 %v6869, 4294901760
        %7265 = vmatpush1.msra.mxu0 %v7264
        %7266 = vmatprep.subr.mxu0 0.0
        %v7267 = vand.u32 %v6870, 4294901760
        %7268 = vmatpush1.msra.mxu0 %v7267
        %7269 = vmatprep.subr.mxu0 0.0
        %v7270 = vand.u32 %v6871, 4294901760
        %7271 = vmatpush1.msra.mxu0 %v7270
        %7272 = vmatprep.subr.mxu0 0.0
        %v7273 = vand.u32 %v6872, 4294901760
        %7274 = vmatpush1.msra.mxu0 %v7273
        %7275 = vmatprep.subr.mxu0 0.0
        %v7276 = vand.u32 %v6873, 4294901760
        %7277 = vmatpush1.msra.mxu0 %v7276
        %7278 = vmatprep.subr.mxu0 0.0
        %v7279 = vand.u32 %v6874, 4294901760
        %7280 = vmatpush1.msra.mxu0 %v7279
        %7281 = vmatprep.subr.mxu0 0.0
        %v7282 = vand.u32 %v6875, 4294901760
        %7283 = vmatpush1.msra.mxu0 %v7282
        %7284 = vmatprep.subr.mxu0 0.0
        %v7285 = vand.u32 %v6876, 4294901760
        %7286 = vmatpush1.msra.mxu0 %v7285
        %7287 = vmatprep.subr.mxu0 0.0
        %v7288 = vand.u32 %v6877, 4294901760
        %7289 = vmatpush1.msra.mxu0 %v7288
        %7290 = vmatprep.subr.mxu0 0.0
        %v7291 = vand.u32 %v6878, 4294901760
        %7292 = vmatpush1.msra.mxu0 %v7291
        %7293 = vmatprep.subr.mxu0 0.0
        %v7294 = vand.u32 %v6879, 4294901760
        %7295 = vmatpush1.msra.mxu0 %v7294
        %7296 = vmatprep.subr.mxu0 0.0
        %v7297 = vand.u32 %v6880, 4294901760
        %7298 = vmatpush1.msra.mxu0 %v7297
        %7299 = vmatprep.subr.mxu0 0.0
        %v7300 = vand.u32 %v6881, 4294901760
        %7301 = vmatpush1.msra.mxu0 %v7300
        %7302 = vmatprep.subr.mxu0 0.0
        %v7303 = vand.u32 %v6882, 4294901760
        %7304 = vmatpush1.msra.mxu0 %v7303
        %7305 = vmatprep.subr.mxu0 0.0
        %v7306 = vand.u32 %v6883, 4294901760
        %7307 = vmatpush1.msra.mxu0 %v7306
        %7308 = vmatprep.subr.mxu0 0.0
        %7309 = vmatpush1.msra.mxu0 0.0
        %7310 = vmatprep.subr.mxu0 0.0
        %7311 = vmatpush1.msra.mxu0 0.0
        %7312 = vmatprep.subr.mxu0 0.0
        %7313 = vmatpush1.msra.mxu0 0.0
        %7314 = vmatprep.subr.mxu0 0.0
        %7315 = vmatpush1.msra.mxu0 0.0
        %7316 = vmatprep.subr.mxu0 0.0
        %7317 = vmatpush1.msra.mxu0 0.0
        %7318 = vmatprep.subr.mxu0 0.0
        %7319 = vmatpush1.msra.mxu0 0.0
        %7320 = vmatprep.subr.mxu0 0.0
        %7321 = vmatpush1.msra.mxu0 0.0
        %7322 = vmatprep.subr.mxu0 0.0
        %7323 = vmatpush1.msra.mxu0 0.0
        %7324 = vmatprep.subr.mxu0 0.0
        %7325 = vmatpush1.msra.mxu0 0.0
        %7326 = vmatprep.subr.mxu0 0.0
        %7327 = vmatpush1.msra.mxu0 0.0
        %7328 = vmatprep.subr.mxu0 0.0
        %7329 = vmatpush1.msra.mxu0 0.0
        %7330 = vmatprep.subr.mxu0 0.0
        %7331 = vmatpush1.msra.mxu0 0.0
        %7332 = vmatprep.subr.mxu0 0.0
        %7333 = vmatpush1.msra.mxu0 0.0
        %7334 = vmatprep.subr.mxu0 0.0
        %7335 = vmatpush1.msra.mxu0 0.0
        %7336 = vmatprep.subr.mxu0 0.0
        %7337 = vmatpush1.msra.mxu0 0.0
        %7338 = vmatprep.subr.mxu0 0.0
        %7339 = vmatpush1.msra.mxu0 0.0
        %7340 = vmatprep.mubr.f32.mxu0 0.0
        %v7341 = vand.u32 %v6866, 4294901760
        %v7342 = vsub.f32 %v6866, %v7341
        %v7343 = vand.u32 %v7342, 4294901760
        %7344 = vmatmul.mubr.f32.gmra.mrb[0].mxu0 %v7343
        %v7345 = vpop.f32.mrb[0].mxu0
        %v7346 = vadd.f32 %v7250, %v7345
        %v7347 = vpop.f32.mrb[0].mxu0
        %7348 = vmatprep.mubr.f32.mxu0 0.0
        %v7349 = vand.u32 %v6867, 4294901760
        %v7350 = vsub.f32 %v6867, %v7349
        %v7351 = vand.u32 %v7350, 4294901760
        %7352 = vmatmul.mubr.f32.gmra.mrb[0].mxu0 %v7351
        %v7353 = vpop.f32.mrb[0].mxu0
        %v7354 = vadd.f32 %v7257, %v7353
        %v7355 = vpop.f32.mrb[0].mxu0
        %7356 = vdwg.mxu0
        %7357 = vmatprep.subr.mxu0 0.0
        %v7358 = vand.u32 %v6868, 4294901760
        %v7359 = vsub.f32 %v6868, %v7358
        %v7360 = vand.u32 %v7359, 4294901760
        %7361 = vmatpush1.msra.mxu0 %v7360
        %7362 = vmatprep.subr.mxu0 0.0
        %v7363 = vand.u32 %v6869, 4294901760
        %v7364 = vsub.f32 %v6869, %v7363
        %v7365 = vand.u32 %v7364, 4294901760
        %7366 = vmatpush1.msra.mxu0 %v7365
        %7367 = vmatprep.subr.mxu0 0.0
        %v7368 = vand.u32 %v6870, 4294901760
        %v7369 = vsub.f32 %v6870, %v7368
        %v7370 = vand.u32 %v7369, 4294901760
        %7371 = vmatpush1.msra.mxu0 %v7370
        %7372 = vmatprep.subr.mxu0 0.0
        %v7373 = vand.u32 %v6871, 4294901760
        %v7374 = vsub.f32 %v6871, %v7373
        %v7375 = vand.u32 %v7374, 4294901760
        %7376 = vmatpush1.msra.mxu0 %v7375
        %7377 = vmatprep.subr.mxu0 0.0
        %v7378 = vand.u32 %v6872, 4294901760
        %v7379 = vsub.f32 %v6872, %v7378
        %v7380 = vand.u32 %v7379, 4294901760
        %7381 = vmatpush1.msra.mxu0 %v7380
        %7382 = vmatprep.subr.mxu0 0.0
        %v7383 = vand.u32 %v6873, 4294901760
        %v7384 = vsub.f32 %v6873, %v7383
        %v7385 = vand.u32 %v7384, 4294901760
        %7386 = vmatpush1.msra.mxu0 %v7385
        %7387 = vmatprep.subr.mxu0 0.0
        %v7388 = vand.u32 %v6874, 4294901760
        %v7389 = vsub.f32 %v6874, %v7388
        %v7390 = vand.u32 %v7389, 4294901760
        %7391 = vmatpush1.msra.mxu0 %v7390
        %7392 = vmatprep.subr.mxu0 0.0
        %v7393 = vand.u32 %v6875, 4294901760
        %v7394 = vsub.f32 %v6875, %v7393
        %v7395 = vand.u32 %v7394, 4294901760
        %7396 = vmatpush1.msra.mxu0 %v7395
        %7397 = vmatprep.subr.mxu0 0.0
        %v7398 = vand.u32 %v6876, 4294901760
        %v7399 = vsub.f32 %v6876, %v7398
        %v7400 = vand.u32 %v7399, 4294901760
        %7401 = vmatpush1.msra.mxu0 %v7400
        %7402 = vmatprep.subr.mxu0 0.0
        %v7403 = vand.u32 %v6877, 4294901760
        %v7404 = vsub.f32 %v6877, %v7403
        %v7405 = vand.u32 %v7404, 4294901760
        %7406 = vmatpush1.msra.mxu0 %v7405
        %7407 = vmatprep.subr.mxu0 0.0
        %v7408 = vand.u32 %v6878, 4294901760
        %v7409 = vsub.f32 %v6878, %v7408
        %v7410 = vand.u32 %v7409, 4294901760
        %7411 = vmatpush1.msra.mxu0 %v7410
        %7412 = vmatprep.subr.mxu0 0.0
        %v7413 = vand.u32 %v6879, 4294901760
        %v7414 = vsub.f32 %v6879, %v7413
        %v7415 = vand.u32 %v7414, 4294901760
        %7416 = vmatpush1.msra.mxu0 %v7415
        %7417 = vmatprep.subr.mxu0 0.0
        %v7418 = vand.u32 %v6880, 4294901760
        %v7419 = vsub.f32 %v6880, %v7418
        %v7420 = vand.u32 %v7419, 4294901760
        %7421 = vmatpush1.msra.mxu0 %v7420
        %7422 = vmatprep.subr.mxu0 0.0
        %v7423 = vand.u32 %v6881, 4294901760
        %v7424 = vsub.f32 %v6881, %v7423
        %v7425 = vand.u32 %v7424, 4294901760
        %7426 = vmatpush1.msra.mxu0 %v7425
        %7427 = vmatprep.subr.mxu0 0.0
        %v7428 = vand.u32 %v6882, 4294901760
        %v7429 = vsub.f32 %v6882, %v7428
        %v7430 = vand.u32 %v7429, 4294901760
        %7431 = vmatpush1.msra.mxu0 %v7430
        %7432 = vmatprep.subr.mxu0 0.0
        %v7433 = vand.u32 %v6883, 4294901760
        %v7434 = vsub.f32 %v6883, %v7433
        %v7435 = vand.u32 %v7434, 4294901760
        %7436 = vmatpush1.msra.mxu0 %v7435
        %7437 = vmatprep.subr.mxu0 0.0
        %7438 = vmatpush1.msra.mxu0 0.0
        %7439 = vmatprep.subr.mxu0 0.0
        %7440 = vmatpush1.msra.mxu0 0.0
        %7441 = vmatprep.subr.mxu0 0.0
        %7442 = vmatpush1.msra.mxu0 0.0
        %7443 = vmatprep.subr.mxu0 0.0
        %7444 = vmatpush1.msra.mxu0 0.0
        %7445 = vmatprep.subr.mxu0 0.0
        %7446 = vmatpush1.msra.mxu0 0.0
        %7447 = vmatprep.subr.mxu0 0.0
        %7448 = vmatpush1.msra.mxu0 0.0
        %7449 = vmatprep.subr.mxu0 0.0
        %7450 = vmatpush1.msra.mxu0 0.0
        %7451 = vmatprep.subr.mxu0 0.0
        %7452 = vmatpush1.msra.mxu0 0.0
        %7453 = vmatprep.subr.mxu0 0.0
        %7454 = vmatpush1.msra.mxu0 0.0
        %7455 = vmatprep.subr.mxu0 0.0
        %7456 = vmatpush1.msra.mxu0 0.0
        %7457 = vmatprep.subr.mxu0 0.0
        %7458 = vmatpush1.msra.mxu0 0.0
        %7459 = vmatprep.subr.mxu0 0.0
        %7460 = vmatpush1.msra.mxu0 0.0
        %7461 = vmatprep.subr.mxu0 0.0
        %7462 = vmatpush1.msra.mxu0 0.0
        %7463 = vmatprep.subr.mxu0 0.0
        %7464 = vmatpush1.msra.mxu0 0.0
        %7465 = vmatprep.subr.mxu0 0.0
        %7466 = vmatpush1.msra.mxu0 0.0
        %7467 = vmatprep.subr.mxu0 0.0
        %7468 = vmatpush1.msra.mxu0 0.0
        %7469 = vmatprep.mubr.f32.mxu0 0.0
        %v7470 = vand.u32 %v6866, 4294901760
        %7471 = vmatmul.mubr.f32.gmra.mrb[0].mxu0 %v7470
        %v7472 = vpop.f32.mrb[0].mxu0
        %v7473 = vadd.f32 %v7346, %v7472
        %v7474 = vpop.f32.mrb[0].mxu0
        %7475 = vmatprep.mubr.f32.mxu0 0.0
        %v7476 = vand.u32 %v6867, 4294901760
        %7477 = vmatmul.mubr.f32.gmra.mrb[0].mxu0 %v7476
        %v7478 = vpop.f32.mrb[0].mxu0
        %v7479 = vadd.f32 %v7354, %v7478
        %v7480 = vpop.f32.mrb[0].mxu0
        %7481 = vdwg.mxu0
        %7482 = vmatprep.subr.mxu0 0.0
        %v7483 = vand.u32 %v6868, 4294901760
        %7484 = vmatpush1.msra.mxu0 %v7483
        %7485 = vmatprep.subr.mxu0 0.0
        %v7486 = vand.u32 %v6869, 4294901760
        %7487 = vmatpush1.msra.mxu0 %v7486
        %7488 = vmatprep.subr.mxu0 0.0
        %v7489 = vand.u32 %v6870, 4294901760
        %7490 = vmatpush1.msra.mxu0 %v7489
        %7491 = vmatprep.subr.mxu0 0.0
        %v7492 = vand.u32 %v6871, 4294901760
        %7493 = vmatpush1.msra.mxu0 %v7492
        %7494 = vmatprep.subr.mxu0 0.0
        %v7495 = vand.u32 %v6872, 4294901760
        %7496 = vmatpush1.msra.mxu0 %v7495
        %7497 = vmatprep.subr.mxu0 0.0
        %v7498 = vand.u32 %v6873, 4294901760
        %7499 = vmatpush1.msra.mxu0 %v7498
        %7500 = vmatprep.subr.mxu0 0.0
        %v7501 = vand.u32 %v6874, 4294901760
        %7502 = vmatpush1.msra.mxu0 %v7501
        %7503 = vmatprep.subr.mxu0 0.0
        %v7504 = vand.u32 %v6875, 4294901760
        %7505 = vmatpush1.msra.mxu0 %v7504
        %7506 = vmatprep.subr.mxu0 0.0
        %v7507 = vand.u32 %v6876, 4294901760
        %7508 = vmatpush1.msra.mxu0 %v7507
        %7509 = vmatprep.subr.mxu0 0.0
        %v7510 = vand.u32 %v6877, 4294901760
        %7511 = vmatpush1.msra.mxu0 %v7510
        %7512 = vmatprep.subr.mxu0 0.0
        %v7513 = vand.u32 %v6878, 4294901760
        %7514 = vmatpush1.msra.mxu0 %v7513
        %7515 = vmatprep.subr.mxu0 0.0
        %v7516 = vand.u32 %v6879, 4294901760
        %7517 = vmatpush1.msra.mxu0 %v7516
        %7518 = vmatprep.subr.mxu0 0.0
        %v7519 = vand.u32 %v6880, 4294901760
        %7520 = vmatpush1.msra.mxu0 %v7519
        %7521 = vmatprep.subr.mxu0 0.0
        %v7522 = vand.u32 %v6881, 4294901760
        %7523 = vmatpush1.msra.mxu0 %v7522
        %7524 = vmatprep.subr.mxu0 0.0
        %v7525 = vand.u32 %v6882, 4294901760
        %7526 = vmatpush1.msra.mxu0 %v7525
        %7527 = vmatprep.subr.mxu0 0.0
        %v7528 = vand.u32 %v6883, 4294901760
        %7529 = vmatpush1.msra.mxu0 %v7528
        %7530 = vmatprep.subr.mxu0 0.0
        %7531 = vmatpush1.msra.mxu0 0.0
        %7532 = vmatprep.subr.mxu0 0.0
        %7533 = vmatpush1.msra.mxu0 0.0
        %7534 = vmatprep.subr.mxu0 0.0
        %7535 = vmatpush1.msra.mxu0 0.0
        %7536 = vmatprep.subr.mxu0 0.0
        %7537 = vmatpush1.msra.mxu0 0.0
        %7538 = vmatprep.subr.mxu0 0.0
        %7539 = vmatpush1.msra.mxu0 0.0
        %7540 = vmatprep.subr.mxu0 0.0
        %7541 = vmatpush1.msra.mxu0 0.0
        %7542 = vmatprep.subr.mxu0 0.0
        %7543 = vmatpush1.msra.mxu0 0.0
        %7544 = vmatprep.subr.mxu0 0.0
        %7545 = vmatpush1.msra.mxu0 0.0
        %7546 = vmatprep.subr.mxu0 0.0
        %7547 = vmatpush1.msra.mxu0 0.0
        %7548 = vmatprep.subr.mxu0 0.0
        %7549 = vmatpush1.msra.mxu0 0.0
        %7550 = vmatprep.subr.mxu0 0.0
        %7551 = vmatpush1.msra.mxu0 0.0
        %7552 = vmatprep.subr.mxu0 0.0
        %7553 = vmatpush1.msra.mxu0 0.0
        %7554 = vmatprep.subr.mxu0 0.0
        %7555 = vmatpush1.msra.mxu0 0.0
        %7556 = vmatprep.subr.mxu0 0.0
        %7557 = vmatpush1.msra.mxu0 0.0
        %7558 = vmatprep.subr.mxu0 0.0
        %7559 = vmatpush1.msra.mxu0 0.0
        %7560 = vmatprep.subr.mxu0 0.0
        %7561 = vmatpush1.msra.mxu0 0.0
        %7562 = vmatprep.mubr.f32.mxu0 0.0
        %v7563 = vand.u32 %v6866, 4294901760
        %7564 = vmatmul.mubr.f32.gmra.mrb[0].mxu0 %v7563
        %v7565 = vpop.f32.mrb[0].mxu0
        %v7566 = vadd.f32 %v7473, %v7565
        %v7567 = vpop.f32.mrb[0].mxu0
        %7568 = vmatprep.mubr.f32.mxu0 0.0
        %v7569 = vand.u32 %v6867, 4294901760
        %7570 = vmatmul.mubr.f32.gmra.mrb[0].mxu0 %v7569
        %v7571 = vpop.f32.mrb[0].mxu0
        %v7572 = vadd.f32 %v7479, %v7571
        %v7573 = vpop.f32.mrb[0].mxu0
        %7574 = vdwg.mxu0
        %v7575 = vmax.f32 %v7566, 0.0
        %v7576 = vmax.f32 %v7572, 0.0
        %v7577 = vld [vmem:[%s10] sm:$0xff]
        %v7578 = vld [vmem:[%s10 + $0x8] sm:$0xff]
        %v7579 = vld [vmem:[%s10 + $0x10] sm:$0xff]
        %v7580 = vld [vmem:[%s10 + $0x18] sm:$0xff]
        %v7581 = vld [vmem:[%s10 + $0x20] sm:$0xff]
        %v7582 = vld [vmem:[%s10 + $0x28] sm:$0xff]
        %v7583 = vld [vmem:[%s10 + $0x30] sm:$0xff]
        %v7584 = vld [vmem:[%s10 + $0x38] sm:$0xff]
        %v7585 = vld [vmem:[%s10 + $0x40] sm:$0xff]
        %v7586 = vld [vmem:[%s10 + $0x48] sm:$0xff]
        %v7587 = vld [vmem:[%s10 + $0x50] sm:$0xff]
        %v7588 = vld [vmem:[%s10 + $0x58] sm:$0xff]
        %v7589 = vld [vmem:[%s10 + $0x60] sm:$0xff]
        %v7590 = vld [vmem:[%s10 + $0x68] sm:$0xff]
        %v7591 = vld [vmem:[%s10 + $0x70] sm:$0xff]
        %v7592 = vld [vmem:[%s10 + $0x78] sm:$0xff]
        %7593 = vmatprep.subr.mxu0 0.0
        %v7594 = vand.u32 %v7577, 4294901760
        %7595 = vmatpush1.msra.mxu0 %v7594
        %7596 = vmatprep.subr.mxu0 0.0
        %v7597 = vand.u32 %v7578, 4294901760
        %7598 = vmatpush1.msra.mxu0 %v7597
        %7599 = vmatprep.subr.mxu0 0.0
        %v7600 = vand.u32 %v7579, 4294901760
        %7601 = vmatpush1.msra.mxu0 %v7600
        %7602 = vmatprep.subr.mxu0 0.0
        %v7603 = vand.u32 %v7580, 4294901760
        %7604 = vmatpush1.msra.mxu0 %v7603
        %7605 = vmatprep.subr.mxu0 0.0
        %v7606 = vand.u32 %v7581, 4294901760
        %7607 = vmatpush1.msra.mxu0 %v7606
        %7608 = vmatprep.subr.mxu0 0.0
        %v7609 = vand.u32 %v7582, 4294901760
        %7610 = vmatpush1.msra.mxu0 %v7609
        %7611 = vmatprep.subr.mxu0 0.0
        %v7612 = vand.u32 %v7583, 4294901760
        %7613 = vmatpush1.msra.mxu0 %v7612
        %7614 = vmatprep.subr.mxu0 0.0
        %v7615 = vand.u32 %v7584, 4294901760
        %7616 = vmatpush1.msra.mxu0 %v7615
        %7617 = vmatprep.subr.mxu0 0.0
        %v7618 = vand.u32 %v7585, 4294901760
        %7619 = vmatpush1.msra.mxu0 %v7618
        %7620 = vmatprep.subr.mxu0 0.0
        %v7621 = vand.u32 %v7586, 4294901760
        %7622 = vmatpush1.msra.mxu0 %v7621
        %7623 = vmatprep.subr.mxu0 0.0
        %v7624 = vand.u32 %v7587, 4294901760
        %7625 = vmatpush1.msra.mxu0 %v7624
        %7626 = vmatprep.subr.mxu0 0.0
        %v7627 = vand.u32 %v7588, 4294901760
        %7628 = vmatpush1.msra.mxu0 %v7627
        %7629 = vmatprep.subr.mxu0 0.0
        %v7630 = vand.u32 %v7589, 4294901760
        %7631 = vmatpush1.msra.mxu0 %v7630
        %7632 = vmatprep.subr.mxu0 0.0
        %v7633 = vand.u32 %v7590, 4294901760
        %7634 = vmatpush1.msra.mxu0 %v7633
        %7635 = vmatprep.subr.mxu0 0.0
        %v7636 = vand.u32 %v7591, 4294901760
        %7637 = vmatpush1.msra.mxu0 %v7636
        %7638 = vmatprep.subr.mxu0 0.0
        %v7639 = vand.u32 %v7592, 4294901760
        %7640 = vmatpush1.msra.mxu0 %v7639
        %7641 = vmatprep.subr.mxu0 0.0
        %7642 = vmatpush1.msra.mxu0 0.0
        %7643 = vmatprep.subr.mxu0 0.0
        %7644 = vmatpush1.msra.mxu0 0.0
        %7645 = vmatprep.subr.mxu0 0.0
        %7646 = vmatpush1.msra.mxu0 0.0
        %7647 = vmatprep.subr.mxu0 0.0
        %7648 = vmatpush1.msra.mxu0 0.0
        %7649 = vmatprep.subr.mxu0 0.0
        %7650 = vmatpush1.msra.mxu0 0.0
        %7651 = vmatprep.subr.mxu0 0.0
        %7652 = vmatpush1.msra.mxu0 0.0
        %7653 = vmatprep.subr.mxu0 0.0
        %7654 = vmatpush1.msra.mxu0 0.0
        %7655 = vmatprep.subr.mxu0 0.0
        %7656 = vmatpush1.msra.mxu0 0.0
        %7657 = vmatprep.subr.mxu0 0.0
        %7658 = vmatpush1.msra.mxu0 0.0
        %7659 = vmatprep.subr.mxu0 0.0
        %7660 = vmatpush1.msra.mxu0 0.0
        %7661 = vmatprep.subr.mxu0 0.0
        %7662 = vmatpush1.msra.mxu0 0.0
        %7663 = vmatprep.subr.mxu0 0.0
        %7664 = vmatpush1.msra.mxu0 0.0
        %7665 = vmatprep.subr.mxu0 0.0
        %7666 = vmatpush1.msra.mxu0 0.0
        %7667 = vmatprep.subr.mxu0 0.0
        %7668 = vmatpush1.msra.mxu0 0.0
        %7669 = vmatprep.subr.mxu0 0.0
        %7670 = vmatpush1.msra.mxu0 0.0
        %7671 = vmatprep.subr.mxu0 0.0
        %7672 = vmatpush1.msra.mxu0 0.0
        %7673 = vmatprep.mubr.f32.mxu0 0.0
        %v7674 = vand.u32 %v7575, 4294901760
        %v7675 = vsub.f32 %v7575, %v7674
        %v7676 = vand.u32 %v7675, 4294901760
        %v7677 = vsub.f32 %v7675, %v7676
        %v7678 = vand.u32 %v7677, 4294901760
        %7679 = vmatmul.mubr.f32.gmra.mrb[0].mxu0 %v7678
        %v7680 = vpop.f32.mrb[0].mxu0
        %v7681 = vadd.f32 0.0, %v7680
        %v7682 = vpop.f32.mrb[0].mxu0
        %7683 = vmatprep.mubr.f32.mxu0 0.0
        %v7684 = vand.u32 %v7576, 4294901760
        %v7685 = vsub.f32 %v7576, %v7684
        %v7686 = vand.u32 %v7685, 4294901760
        %v7687 = vsub.f32 %v7685, %v7686
        %v7688 = vand.u32 %v7687, 4294901760
        %7689 = vmatmul.mubr.f32.gmra.mrb[0].mxu0 %v7688
        %v7690 = vpop.f32.mrb[0].mxu0
        %v7691 = vadd.f32 0.0, %v7690
        %v7692 = vpop.f32.mrb[0].mxu0
        %7693 = vdwg.mxu0
        %7694 = vmatprep.subr.mxu0 0.0
        %v7695 = vand.u32 %v7577, 4294901760
        %v7696 = vsub.f32 %v7577, %v7695
        %v7697 = vand.u32 %v7696, 4294901760
        %v7698 = vsub.f32 %v7696, %v7697
        %v7699 = vand.u32 %v7698, 4294901760
        %7700 = vmatpush1.msra.mxu0 %v7699
        %7701 = vmatprep.subr.mxu0 0.0
        %v7702 = vand.u32 %v7578, 4294901760
        %v7703 = vsub.f32 %v7578, %v7702
        %v7704 = vand.u32 %v7703, 4294901760
        %v7705 = vsub.f32 %v7703, %v7704
        %v7706 = vand.u32 %v7705, 4294901760
        %7707 = vmatpush1.msra.mxu0 %v7706
        %7708 = vmatprep.subr.mxu0 0.0
        %v7709 = vand.u32 %v7579, 4294901760
        %v7710 = vsub.f32 %v7579, %v7709
        %v7711 = vand.u32 %v7710, 4294901760
        %v7712 = vsub.f32 %v7710, %v7711
        %v7713 = vand.u32 %v7712, 4294901760
        %7714 = vmatpush1.msra.mxu0 %v7713
        %7715 = vmatprep.subr.mxu0 0.0
        %v7716 = vand.u32 %v7580, 4294901760
        %v7717 = vsub.f32 %v7580, %v7716
        %v7718 = vand.u32 %v7717, 4294901760
        %v7719 = vsub.f32 %v7717, %v7718
        %v7720 = vand.u32 %v7719, 4294901760
        %7721 = vmatpush1.msra.mxu0 %v7720
        %7722 = vmatprep.subr.mxu0 0.0
        %v7723 = vand.u32 %v7581, 4294901760
        %v7724 = vsub.f32 %v7581, %v7723
        %v7725 = vand.u32 %v7724, 4294901760
        %v7726 = vsub.f32 %v7724, %v7725
        %v7727 = vand.u32 %v7726, 4294901760
        %7728 = vmatpush1.msra.mxu0 %v7727
        %7729 = vmatprep.subr.mxu0 0.0
        %v7730 = vand.u32 %v7582, 4294901760
        %v7731 = vsub.f32 %v7582, %v7730
        %v7732 = vand.u32 %v7731, 4294901760
        %v7733 = vsub.f32 %v7731, %v7732
        %v7734 = vand.u32 %v7733, 4294901760
        %7735 = vmatpush1.msra.mxu0 %v7734
        %7736 = vmatprep.subr.mxu0 0.0
        %v7737 = vand.u32 %v7583, 4294901760
        %v7738 = vsub.f32 %v7583, %v7737
        %v7739 = vand.u32 %v7738, 4294901760
        %v7740 = vsub.f32 %v7738, %v7739
        %v7741 = vand.u32 %v7740, 4294901760
        %7742 = vmatpush1.msra.mxu0 %v7741
        %7743 = vmatprep.subr.mxu0 0.0
        %v7744 = vand.u32 %v7584, 4294901760
        %v7745 = vsub.f32 %v7584, %v7744
        %v7746 = vand.u32 %v7745, 4294901760
        %v7747 = vsub.f32 %v7745, %v7746
        %v7748 = vand.u32 %v7747, 4294901760
        %7749 = vmatpush1.msra.mxu0 %v7748
        %7750 = vmatprep.subr.mxu0 0.0
        %v7751 = vand.u32 %v7585, 4294901760
        %v7752 = vsub.f32 %v7585, %v7751
        %v7753 = vand.u32 %v7752, 4294901760
        %v7754 = vsub.f32 %v7752, %v7753
        %v7755 = vand.u32 %v7754, 4294901760
        %7756 = vmatpush1.msra.mxu0 %v7755
        %7757 = vmatprep.subr.mxu0 0.0
        %v7758 = vand.u32 %v7586, 4294901760
        %v7759 = vsub.f32 %v7586, %v7758
        %v7760 = vand.u32 %v7759, 4294901760
        %v7761 = vsub.f32 %v7759, %v7760
        %v7762 = vand.u32 %v7761, 4294901760
        %7763 = vmatpush1.msra.mxu0 %v7762
        %7764 = vmatprep.subr.mxu0 0.0
        %v7765 = vand.u32 %v7587, 4294901760
        %v7766 = vsub.f32 %v7587, %v7765
        %v7767 = vand.u32 %v7766, 4294901760
        %v7768 = vsub.f32 %v7766, %v7767
        %v7769 = vand.u32 %v7768, 4294901760
        %7770 = vmatpush1.msra.mxu0 %v7769
        %7771 = vmatprep.subr.mxu0 0.0
        %v7772 = vand.u32 %v7588, 4294901760
        %v7773 = vsub.f32 %v7588, %v7772
        %v7774 = vand.u32 %v7773, 4294901760
        %v7775 = vsub.f32 %v7773, %v7774
        %v7776 = vand.u32 %v7775, 4294901760
        %7777 = vmatpush1.msra.mxu0 %v7776
        %7778 = vmatprep.subr.mxu0 0.0
        %v7779 = vand.u32 %v7589, 4294901760
        %v7780 = vsub.f32 %v7589, %v7779
        %v7781 = vand.u32 %v7780, 4294901760
        %v7782 = vsub.f32 %v7780, %v7781
        %v7783 = vand.u32 %v7782, 4294901760
        %7784 = vmatpush1.msra.mxu0 %v7783
        %7785 = vmatprep.subr.mxu0 0.0
        %v7786 = vand.u32 %v7590, 4294901760
        %v7787 = vsub.f32 %v7590, %v7786
        %v7788 = vand.u32 %v7787, 4294901760
        %v7789 = vsub.f32 %v7787, %v7788
        %v7790 = vand.u32 %v7789, 4294901760
        %7791 = vmatpush1.msra.mxu0 %v7790
        %7792 = vmatprep.subr.mxu0 0.0
        %v7793 = vand.u32 %v7591, 4294901760
        %v7794 = vsub.f32 %v7591, %v7793
        %v7795 = vand.u32 %v7794, 4294901760
        %v7796 = vsub.f32 %v7794, %v7795
        %v7797 = vand.u32 %v7796, 4294901760
        %7798 = vmatpush1.msra.mxu0 %v7797
        %7799 = vmatprep.subr.mxu0 0.0
        %v7800 = vand.u32 %v7592, 4294901760
        %v7801 = vsub.f32 %v7592, %v7800
        %v7802 = vand.u32 %v7801, 4294901760
        %v7803 = vsub.f32 %v7801, %v7802
        %v7804 = vand.u32 %v7803, 4294901760
        %7805 = vmatpush1.msra.mxu0 %v7804
        %7806 = vmatprep.subr.mxu0 0.0
        %7807 = vmatpush1.msra.mxu0 0.0
        %7808 = vmatprep.subr.mxu0 0.0
        %7809 = vmatpush1.msra.mxu0 0.0
        %7810 = vmatprep.subr.mxu0 0.0
        %7811 = vmatpush1.msra.mxu0 0.0
        %7812 = vmatprep.subr.mxu0 0.0
        %7813 = vmatpush1.msra.mxu0 0.0
        %7814 = vmatprep.subr.mxu0 0.0
        %7815 = vmatpush1.msra.mxu0 0.0
        %7816 = vmatprep.subr.mxu0 0.0
        %7817 = vmatpush1.msra.mxu0 0.0
        %7818 = vmatprep.subr.mxu0 0.0
        %7819 = vmatpush1.msra.mxu0 0.0
        %7820 = vmatprep.subr.mxu0 0.0
        %7821 = vmatpush1.msra.mxu0 0.0
        %7822 = vmatprep.subr.mxu0 0.0
        %7823 = vmatpush1.msra.mxu0 0.0
        %7824 = vmatprep.subr.mxu0 0.0
        %7825 = vmatpush1.msra.mxu0 0.0
        %7826 = vmatprep.subr.mxu0 0.0
        %7827 = vmatpush1.msra.mxu0 0.0
        %7828 = vmatprep.subr.mxu0 0.0
        %7829 = vmatpush1.msra.mxu0 0.0
        %7830 = vmatprep.subr.mxu0 0.0
        %7831 = vmatpush1.msra.mxu0 0.0
        %7832 = vmatprep.subr.mxu0 0.0
        %7833 = vmatpush1.msra.mxu0 0.0
        %7834 = vmatprep.subr.mxu0 0.0
        %7835 = vmatpush1.msra.mxu0 0.0
        %7836 = vmatprep.subr.mxu0 0.0
        %7837 = vmatpush1.msra.mxu0 0.0
        %7838 = vmatprep.mubr.f32.mxu0 0.0
        %v7839 = vand.u32 %v7575, 4294901760
        %7840 = vmatmul.mubr.f32.gmra.mrb[0].mxu0 %v7839
        %v7841 = vpop.f32.mrb[0].mxu0
        %v7842 = vadd.f32 %v7681, %v7841
        %v7843 = vpop.f32.mrb[0].mxu0
        %7844 = vmatprep.mubr.f32.mxu0 0.0
        %v7845 = vand.u32 %v7576, 4294901760
        %7846 = vmatmul.mubr.f32.gmra.mrb[0].mxu0 %v7845
        %v7847 = vpop.f32.mrb[0].mxu0
        %v7848 = vadd.f32 %v7691, %v7847
        %v7849 = vpop.f32.mrb[0].mxu0
        %7850 = vdwg.mxu0
        %7851 = vmatprep.subr.mxu0 0.0
        %v7852 = vand.u32 %v7577, 4294901760
        %v7853 = vsub.f32 %v7577, %v7852
        %7854 = vmatpush1.msra.mxu0 %v7853
        %7855 = vmatprep.subr.mxu0 0.0
        %v7856 = vand.u32 %v7578, 4294901760
        %v7857 = vsub.f32 %v7578, %v7856
        %7858 = vmatpush1.msra.mxu0 %v7857
        %7859 = vmatprep.subr.mxu0 0.0
        %v7860 = vand.u32 %v7579, 4294901760
        %v7861 = vsub.f32 %v7579, %v7860
        %7862 = vmatpush1.msra.mxu0 %v7861
        %7863 = vmatprep.subr.mxu0 0.0
        %v7864 = vand.u32 %v7580, 4294901760
        %v7865 = vsub.f32 %v7580, %v7864
        %7866 = vmatpush1.msra.mxu0 %v7865
        %7867 = vmatprep.subr.mxu0 0.0
        %v7868 = vand.u32 %v7581, 4294901760
        %v7869 = vsub.f32 %v7581, %v7868
        %7870 = vmatpush1.msra.mxu0 %v7869
        %7871 = vmatprep.subr.mxu0 0.0
        %v7872 = vand.u32 %v7582, 4294901760
        %v7873 = vsub.f32 %v7582, %v7872
        %7874 = vmatpush1.msra.mxu0 %v7873
        %7875 = vmatprep.subr.mxu0 0.0
        %v7876 = vand.u32 %v7583, 4294901760
        %v7877 = vsub.f32 %v7583, %v7876
        %7878 = vmatpush1.msra.mxu0 %v7877
        %7879 = vmatprep.subr.mxu0 0.0
        %v7880 = vand.u32 %v7584, 4294901760
        %v7881 = vsub.f32 %v7584, %v7880
        %7882 = vmatpush1.msra.mxu0 %v7881
        %7883 = vmatprep.subr.mxu0 0.0
        %v7884 = vand.u32 %v7585, 4294901760
        %v7885 = vsub.f32 %v7585, %v7884
        %7886 = vmatpush1.msra.mxu0 %v7885
        %7887 = vmatprep.subr.mxu0 0.0
        %v7888 = vand.u32 %v7586, 4294901760
        %v7889 = vsub.f32 %v7586, %v7888
        %7890 = vmatpush1.msra.mxu0 %v7889
        %7891 = vmatprep.subr.mxu0 0.0
        %v7892 = vand.u32 %v7587, 4294901760
        %v7893 = vsub.f32 %v7587, %v7892
        %7894 = vmatpush1.msra.mxu0 %v7893
        %7895 = vmatprep.subr.mxu0 0.0
        %v7896 = vand.u32 %v7588, 4294901760
        %v7897 = vsub.f32 %v7588, %v7896
        %7898 = vmatpush1.msra.mxu0 %v7897
        %7899 = vmatprep.subr.mxu0 0.0
        %v7900 = vand.u32 %v7589, 4294901760
        %v7901 = vsub.f32 %v7589, %v7900
        %7902 = vmatpush1.msra.mxu0 %v7901
        %7903 = vmatprep.subr.mxu0 0.0
        %v7904 = vand.u32 %v7590, 4294901760
        %v7905 = vsub.f32 %v7590, %v7904
        %7906 = vmatpush1.msra.mxu0 %v7905
        %7907 = vmatprep.subr.mxu0 0.0
        %v7908 = vand.u32 %v7591, 4294901760
        %v7909 = vsub.f32 %v7591, %v7908
        %7910 = vmatpush1.msra.mxu0 %v7909
        %7911 = vmatprep.subr.mxu0 0.0
        %v7912 = vand.u32 %v7592, 4294901760
        %v7913 = vsub.f32 %v7592, %v7912
        %7914 = vmatpush1.msra.mxu0 %v7913
        %7915 = vmatprep.subr.mxu0 0.0
        %7916 = vmatpush1.msra.mxu0 0.0
        %7917 = vmatprep.subr.mxu0 0.0
        %7918 = vmatpush1.msra.mxu0 0.0
        %7919 = vmatprep.subr.mxu0 0.0
        %7920 = vmatpush1.msra.mxu0 0.0
        %7921 = vmatprep.subr.mxu0 0.0
        %7922 = vmatpush1.msra.mxu0 0.0
        %7923 = vmatprep.subr.mxu0 0.0
        %7924 = vmatpush1.msra.mxu0 0.0
        %7925 = vmatprep.subr.mxu0 0.0
        %7926 = vmatpush1.msra.mxu0 0.0
        %7927 = vmatprep.subr.mxu0 0.0
        %7928 = vmatpush1.msra.mxu0 0.0
        %7929 = vmatprep.subr.mxu0 0.0
        %7930 = vmatpush1.msra.mxu0 0.0
        %7931 = vmatprep.subr.mxu0 0.0
        %7932 = vmatpush1.msra.mxu0 0.0
        %7933 = vmatprep.subr.mxu0 0.0
        %7934 = vmatpush1.msra.mxu0 0.0
        %7935 = vmatprep.subr.mxu0 0.0
        %7936 = vmatpush1.msra.mxu0 0.0
        %7937 = vmatprep.subr.mxu0 0.0
        %7938 = vmatpush1.msra.mxu0 0.0
        %7939 = vmatprep.subr.mxu0 0.0
        %7940 = vmatpush1.msra.mxu0 0.0
        %7941 = vmatprep.subr.mxu0 0.0
        %7942 = vmatpush1.msra.mxu0 0.0
        %7943 = vmatprep.subr.mxu0 0.0
        %7944 = vmatpush1.msra.mxu0 0.0
        %7945 = vmatprep.subr.mxu0 0.0
        %7946 = vmatpush1.msra.mxu0 0.0
        %7947 = vmatprep.mubr.f32.mxu0 0.0
        %v7948 = vand.u32 %v7575, 4294901760
        %v7949 = vsub.f32 %v7575, %v7948
        %7950 = vmatmul.mubr.f32.gmra.mrb[0].mxu0 %v7949
        %v7951 = vpop.f32.mrb[0].mxu0
        %v7952 = vadd.f32 %v7842, %v7951
        %v7953 = vpop.f32.mrb[0].mxu0
        %7954 = vmatprep.mubr.f32.mxu0 0.0
        %v7955 = vand.u32 %v7576, 4294901760
        %v7956 = vsub.f32 %v7576, %v7955
        %7957 = vmatmul.mubr.f32.gmra.mrb[0].mxu0 %v7956
        %v7958 = vpop.f32.mrb[0].mxu0
        %v7959 = vadd.f32 %v7848, %v7958
        %v7960 = vpop.f32.mrb[0].mxu0
        %7961 = vdwg.mxu0
        %7962 = vmatprep.subr.mxu0 0.0
        %v7963 = vand.u32 %v7577, 4294901760
        %7964 = vmatpush1.msra.mxu0 %v7963
        %7965 = vmatprep.subr.mxu0 0.0
        %v7966 = vand.u32 %v7578, 4294901760
        %7967 = vmatpush1.msra.mxu0 %v7966
        %7968 = vmatprep.subr.mxu0 0.0
        %v7969 = vand.u32 %v7579, 4294901760
        %7970 = vmatpush1.msra.mxu0 %v7969
        %7971 = vmatprep.subr.mxu0 0.0
        %v7972 = vand.u32 %v7580, 4294901760
        %7973 = vmatpush1.msra.mxu0 %v7972
        %7974 = vmatprep.subr.mxu0 0.0
        %v7975 = vand.u32 %v7581, 4294901760
        %7976 = vmatpush1.msra.mxu0 %v7975
        %7977 = vmatprep.subr.mxu0 0.0
        %v7978 = vand.u32 %v7582, 4294901760
        %7979 = vmatpush1.msra.mxu0 %v7978
        %7980 = vmatprep.subr.mxu0 0.0
        %v7981 = vand.u32 %v7583, 4294901760
        %7982 = vmatpush1.msra.mxu0 %v7981
        %7983 = vmatprep.subr.mxu0 0.0
        %v7984 = vand.u32 %v7584, 4294901760
        %7985 = vmatpush1.msra.mxu0 %v7984
        %7986 = vmatprep.subr.mxu0 0.0
        %v7987 = vand.u32 %v7585, 4294901760
        %7988 = vmatpush1.msra.mxu0 %v7987
        %7989 = vmatprep.subr.mxu0 0.0
        %v7990 = vand.u32 %v7586, 4294901760
        %7991 = vmatpush1.msra.mxu0 %v7990
        %7992 = vmatprep.subr.mxu0 0.0
        %v7993 = vand.u32 %v7587, 4294901760
        %7994 = vmatpush1.msra.mxu0 %v7993
        %7995 = vmatprep.subr.mxu0 0.0
        %v7996 = vand.u32 %v7588, 4294901760
        %7997 = vmatpush1.msra.mxu0 %v7996
        %7998 = vmatprep.subr.mxu0 0.0
        %v7999 = vand.u32 %v7589, 4294901760
        %8000 = vmatpush1.msra.mxu0 %v7999
        %8001 = vmatprep.subr.mxu0 0.0
        %v8002 = vand.u32 %v7590, 4294901760
        %8003 = vmatpush1.msra.mxu0 %v8002
        %8004 = vmatprep.subr.mxu0 0.0
        %v8005 = vand.u32 %v7591, 4294901760
        %8006 = vmatpush1.msra.mxu0 %v8005
        %8007 = vmatprep.subr.mxu0 0.0
        %v8008 = vand.u32 %v7592, 4294901760
        %8009 = vmatpush1.msra.mxu0 %v8008
        %8010 = vmatprep.subr.mxu0 0.0
        %8011 = vmatpush1.msra.mxu0 0.0
        %8012 = vmatprep.subr.mxu0 0.0
        %8013 = vmatpush1.msra.mxu0 0.0
        %8014 = vmatprep.subr.mxu0 0.0
        %8015 = vmatpush1.msra.mxu0 0.0
        %8016 = vmatprep.subr.mxu0 0.0
        %8017 = vmatpush1.msra.mxu0 0.0
        %8018 = vmatprep.subr.mxu0 0.0
        %8019 = vmatpush1.msra.mxu0 0.0
        %8020 = vmatprep.subr.mxu0 0.0
        %8021 = vmatpush1.msra.mxu0 0.0
        %8022 = vmatprep.subr.mxu0 0.0
        %8023 = vmatpush1.msra.mxu0 0.0
        %8024 = vmatprep.subr.mxu0 0.0
        %8025 = vmatpush1.msra.mxu0 0.0
        %8026 = vmatprep.subr.mxu0 0.0
        %8027 = vmatpush1.msra.mxu0 0.0
        %8028 = vmatprep.subr.mxu0 0.0
        %8029 = vmatpush1.msra.mxu0 0.0
        %8030 = vmatprep.subr.mxu0 0.0
        %8031 = vmatpush1.msra.mxu0 0.0
        %8032 = vmatprep.subr.mxu0 0.0
        %8033 = vmatpush1.msra.mxu0 0.0
        %8034 = vmatprep.subr.mxu0 0.0
        %8035 = vmatpush1.msra.mxu0 0.0
        %8036 = vmatprep.subr.mxu0 0.0
        %8037 = vmatpush1.msra.mxu0 0.0
        %8038 = vmatprep.subr.mxu0 0.0
        %8039 = vmatpush1.msra.mxu0 0.0
        %8040 = vmatprep.subr.mxu0 0.0
        %8041 = vmatpush1.msra.mxu0 0.0
        %8042 = vmatprep.mubr.f32.mxu0 0.0
        %v8043 = vand.u32 %v7575, 4294901760
        %v8044 = vsub.f32 %v7575, %v8043
        %v8045 = vand.u32 %v8044, 4294901760
        %8046 = vmatmul.mubr.f32.gmra.mrb[0].mxu0 %v8045
        %v8047 = vpop.f32.mrb[0].mxu0
        %v8048 = vadd.f32 %v7952, %v8047
        %v8049 = vpop.f32.mrb[0].mxu0
        %8050 = vmatprep.mubr.f32.mxu0 0.0
        %v8051 = vand.u32 %v7576, 4294901760
        %v8052 = vsub.f32 %v7576, %v8051
        %v8053 = vand.u32 %v8052, 4294901760
        %8054 = vmatmul.mubr.f32.gmra.mrb[0].mxu0 %v8053
        %v8055 = vpop.f32.mrb[0].mxu0
        %v8056 = vadd.f32 %v7959, %v8055
        %v8057 = vpop.f32.mrb[0].mxu0
        %8058 = vdwg.mxu0
        %8059 = vmatprep.subr.mxu0 0.0
        %v8060 = vand.u32 %v7577, 4294901760
        %v8061 = vsub.f32 %v7577, %v8060
        %v8062 = vand.u32 %v8061, 4294901760
        %8063 = vmatpush1.msra.mxu0 %v8062
        %8064 = vmatprep.subr.mxu0 0.0
        %v8065 = vand.u32 %v7578, 4294901760
        %v8066 = vsub.f32 %v7578, %v8065
        %v8067 = vand.u32 %v8066, 4294901760
        %8068 = vmatpush1.msra.mxu0 %v8067
        %8069 = vmatprep.subr.mxu0 0.0
        %v8070 = vand.u32 %v7579, 4294901760
        %v8071 = vsub.f32 %v7579, %v8070
        %v8072 = vand.u32 %v8071, 4294901760
        %8073 = vmatpush1.msra.mxu0 %v8072
        %8074 = vmatprep.subr.mxu0 0.0
        %v8075 = vand.u32 %v7580, 4294901760
        %v8076 = vsub.f32 %v7580, %v8075
        %v8077 = vand.u32 %v8076, 4294901760
        %8078 = vmatpush1.msra.mxu0 %v8077
        %8079 = vmatprep.subr.mxu0 0.0
        %v8080 = vand.u32 %v7581, 4294901760
        %v8081 = vsub.f32 %v7581, %v8080
        %v8082 = vand.u32 %v8081, 4294901760
        %8083 = vmatpush1.msra.mxu0 %v8082
        %8084 = vmatprep.subr.mxu0 0.0
        %v8085 = vand.u32 %v7582, 4294901760
        %v8086 = vsub.f32 %v7582, %v8085
        %v8087 = vand.u32 %v8086, 4294901760
        %8088 = vmatpush1.msra.mxu0 %v8087
        %8089 = vmatprep.subr.mxu0 0.0
        %v8090 = vand.u32 %v7583, 4294901760
        %v8091 = vsub.f32 %v7583, %v8090
        %v8092 = vand.u32 %v8091, 4294901760
        %8093 = vmatpush1.msra.mxu0 %v8092
        %8094 = vmatprep.subr.mxu0 0.0
        %v8095 = vand.u32 %v7584, 4294901760
        %v8096 = vsub.f32 %v7584, %v8095
        %v8097 = vand.u32 %v8096, 4294901760
        %8098 = vmatpush1.msra.mxu0 %v8097
        %8099 = vmatprep.subr.mxu0 0.0
        %v8100 = vand.u32 %v7585, 4294901760
        %v8101 = vsub.f32 %v7585, %v8100
        %v8102 = vand.u32 %v8101, 4294901760
        %8103 = vmatpush1.msra.mxu0 %v8102
        %8104 = vmatprep.subr.mxu0 0.0
        %v8105 = vand.u32 %v7586, 4294901760
        %v8106 = vsub.f32 %v7586, %v8105
        %v8107 = vand.u32 %v8106, 4294901760
        %8108 = vmatpush1.msra.mxu0 %v8107
        %8109 = vmatprep.subr.mxu0 0.0
        %v8110 = vand.u32 %v7587, 4294901760
        %v8111 = vsub.f32 %v7587, %v8110
        %v8112 = vand.u32 %v8111, 4294901760
        %8113 = vmatpush1.msra.mxu0 %v8112
        %8114 = vmatprep.subr.mxu0 0.0
        %v8115 = vand.u32 %v7588, 4294901760
        %v8116 = vsub.f32 %v7588, %v8115
        %v8117 = vand.u32 %v8116, 4294901760
        %8118 = vmatpush1.msra.mxu0 %v8117
        %8119 = vmatprep.subr.mxu0 0.0
        %v8120 = vand.u32 %v7589, 4294901760
        %v8121 = vsub.f32 %v7589, %v8120
        %v8122 = vand.u32 %v8121, 4294901760
        %8123 = vmatpush1.msra.mxu0 %v8122
        %8124 = vmatprep.subr.mxu0 0.0
        %v8125 = vand.u32 %v7590, 4294901760
        %v8126 = vsub.f32 %v7590, %v8125
        %v8127 = vand.u32 %v8126, 4294901760
        %8128 = vmatpush1.msra.mxu0 %v8127
        %8129 = vmatprep.subr.mxu0 0.0
        %v8130 = vand.u32 %v7591, 4294901760
        %v8131 = vsub.f32 %v7591, %v8130
        %v8132 = vand.u32 %v8131, 4294901760
        %8133 = vmatpush1.msra.mxu0 %v8132
        %8134 = vmatprep.subr.mxu0 0.0
        %v8135 = vand.u32 %v7592, 4294901760
        %v8136 = vsub.f32 %v7592, %v8135
        %v8137 = vand.u32 %v8136, 4294901760
        %8138 = vmatpush1.msra.mxu0 %v8137
        %8139 = vmatprep.subr.mxu0 0.0
        %8140 = vmatpush1.msra.mxu0 0.0
        %8141 = vmatprep.subr.mxu0 0.0
        %8142 = vmatpush1.msra.mxu0 0.0
        %8143 = vmatprep.subr.mxu0 0.0
        %8144 = vmatpush1.msra.mxu0 0.0
        %8145 = vmatprep.subr.mxu0 0.0
        %8146 = vmatpush1.msra.mxu0 0.0
        %8147 = vmatprep.subr.mxu0 0.0
        %8148 = vmatpush1.msra.mxu0 0.0
        %8149 = vmatprep.subr.mxu0 0.0
        %8150 = vmatpush1.msra.mxu0 0.0
        %8151 = vmatprep.subr.mxu0 0.0
        %8152 = vmatpush1.msra.mxu0 0.0
        %8153 = vmatprep.subr.mxu0 0.0
        %8154 = vmatpush1.msra.mxu0 0.0
        %8155 = vmatprep.subr.mxu0 0.0
        %8156 = vmatpush1.msra.mxu0 0.0
        %8157 = vmatprep.subr.mxu0 0.0
        %8158 = vmatpush1.msra.mxu0 0.0
        %8159 = vmatprep.subr.mxu0 0.0
        %8160 = vmatpush1.msra.mxu0 0.0
        %8161 = vmatprep.subr.mxu0 0.0
        %8162 = vmatpush1.msra.mxu0 0.0
        %8163 = vmatprep.subr.mxu0 0.0
        %8164 = vmatpush1.msra.mxu0 0.0
        %8165 = vmatprep.subr.mxu0 0.0
        %8166 = vmatpush1.msra.mxu0 0.0
        %8167 = vmatprep.subr.mxu0 0.0
        %8168 = vmatpush1.msra.mxu0 0.0
        %8169 = vmatprep.subr.mxu0 0.0
        %8170 = vmatpush1.msra.mxu0 0.0
        %8171 = vmatprep.mubr.f32.mxu0 0.0
        %v8172 = vand.u32 %v7575, 4294901760
        %8173 = vmatmul.mubr.f32.gmra.mrb[0].mxu0 %v8172
        %v8174 = vpop.f32.mrb[0].mxu0
        %v8175 = vadd.f32 %v8048, %v8174
        %v8176 = vpop.f32.mrb[0].mxu0
        %8177 = vmatprep.mubr.f32.mxu0 0.0
        %v8178 = vand.u32 %v7576, 4294901760
        %8179 = vmatmul.mubr.f32.gmra.mrb[0].mxu0 %v8178
        %v8180 = vpop.f32.mrb[0].mxu0
        %v8181 = vadd.f32 %v8056, %v8180
        %v8182 = vpop.f32.mrb[0].mxu0
        %8183 = vdwg.mxu0
        %8184 = vmatprep.subr.mxu0 0.0
        %v8185 = vand.u32 %v7577, 4294901760
        %8186 = vmatpush1.msra.mxu0 %v8185
        %8187 = vmatprep.subr.mxu0 0.0
        %v8188 = vand.u32 %v7578, 4294901760
        %8189 = vmatpush1.msra.mxu0 %v8188
        %8190 = vmatprep.subr.mxu0 0.0
        %v8191 = vand.u32 %v7579, 4294901760
        %8192 = vmatpush1.msra.mxu0 %v8191
        %8193 = vmatprep.subr.mxu0 0.0
        %v8194 = vand.u32 %v7580, 4294901760
        %8195 = vmatpush1.msra.mxu0 %v8194
        %8196 = vmatprep.subr.mxu0 0.0
        %v8197 = vand.u32 %v7581, 4294901760
        %8198 = vmatpush1.msra.mxu0 %v8197
        %8199 = vmatprep.subr.mxu0 0.0
        %v8200 = vand.u32 %v7582, 4294901760
        %8201 = vmatpush1.msra.mxu0 %v8200
        %8202 = vmatprep.subr.mxu0 0.0
        %v8203 = vand.u32 %v7583, 4294901760
        %8204 = vmatpush1.msra.mxu0 %v8203
        %8205 = vmatprep.subr.mxu0 0.0
        %v8206 = vand.u32 %v7584, 4294901760
        %8207 = vmatpush1.msra.mxu0 %v8206
        %8208 = vmatprep.subr.mxu0 0.0
        %v8209 = vand.u32 %v7585, 4294901760
        %8210 = vmatpush1.msra.mxu0 %v8209
        %8211 = vmatprep.subr.mxu0 0.0
        %v8212 = vand.u32 %v7586, 4294901760
        %8213 = vmatpush1.msra.mxu0 %v8212
        %8214 = vmatprep.subr.mxu0 0.0
        %v8215 = vand.u32 %v7587, 4294901760
        %8216 = vmatpush1.msra.mxu0 %v8215
        %8217 = vmatprep.subr.mxu0 0.0
        %v8218 = vand.u32 %v7588, 4294901760
        %8219 = vmatpush1.msra.mxu0 %v8218
        %8220 = vmatprep.subr.mxu0 0.0
        %v8221 = vand.u32 %v7589, 4294901760
        %8222 = vmatpush1.msra.mxu0 %v8221
        %8223 = vmatprep.subr.mxu0 0.0
        %v8224 = vand.u32 %v7590, 4294901760
        %8225 = vmatpush1.msra.mxu0 %v8224
        %8226 = vmatprep.subr.mxu0 0.0
        %v8227 = vand.u32 %v7591, 4294901760
        %8228 = vmatpush1.msra.mxu0 %v8227
        %8229 = vmatprep.subr.mxu0 0.0
        %v8230 = vand.u32 %v7592, 4294901760
        %8231 = vmatpush1.msra.mxu0 %v8230
        %8232 = vmatprep.subr.mxu0 0.0
        %8233 = vmatpush1.msra.mxu0 0.0
        %8234 = vmatprep.subr.mxu0 0.0
        %8235 = vmatpush1.msra.mxu0 0.0
        %8236 = vmatprep.subr.mxu0 0.0
        %8237 = vmatpush1.msra.mxu0 0.0
        %8238 = vmatprep.subr.mxu0 0.0
        %8239 = vmatpush1.msra.mxu0 0.0
        %8240 = vmatprep.subr.mxu0 0.0
        %8241 = vmatpush1.msra.mxu0 0.0
        %8242 = vmatprep.subr.mxu0 0.0
        %8243 = vmatpush1.msra.mxu0 0.0
        %8244 = vmatprep.subr.mxu0 0.0
        %8245 = vmatpush1.msra.mxu0 0.0
        %8246 = vmatprep.subr.mxu0 0.0
        %8247 = vmatpush1.msra.mxu0 0.0
        %8248 = vmatprep.subr.mxu0 0.0
        %8249 = vmatpush1.msra.mxu0 0.0
        %8250 = vmatprep.subr.mxu0 0.0
        %8251 = vmatpush1.msra.mxu0 0.0
        %8252 = vmatprep.subr.mxu0 0.0
        %8253 = vmatpush1.msra.mxu0 0.0
        %8254 = vmatprep.subr.mxu0 0.0
        %8255 = vmatpush1.msra.mxu0 0.0
        %8256 = vmatprep.subr.mxu0 0.0
        %8257 = vmatpush1.msra.mxu0 0.0
        %8258 = vmatprep.subr.mxu0 0.0
        %8259 = vmatpush1.msra.mxu0 0.0
        %8260 = vmatprep.subr.mxu0 0.0
        %8261 = vmatpush1.msra.mxu0 0.0
        %8262 = vmatprep.subr.mxu0 0.0
        %8263 = vmatpush1.msra.mxu0 0.0
        %8264 = vmatprep.mubr.f32.mxu0 0.0
        %v8265 = vand.u32 %v7575, 4294901760
        %8266 = vmatmul.mubr.f32.gmra.mrb[0].mxu0 %v8265
        %v8267 = vpop.f32.mrb[0].mxu0
        %v8268 = vadd.f32 %v8175, %v8267
        %v8269 = vpop.f32.mrb[0].mxu0
        %8270 = vmatprep.mubr.f32.mxu0 0.0
        %v8271 = vand.u32 %v7576, 4294901760
        %8272 = vmatmul.mubr.f32.gmra.mrb[0].mxu0 %v8271
        %v8273 = vpop.f32.mrb[0].mxu0
        %v8274 = vadd.f32 %v8181, %v8273
        %v8275 = vpop.f32.mrb[0].mxu0
        %8276 = vdwg.mxu0
        %v8277 = vadd.f32 %v6866, %v8268
        %v8278 = vadd.f32 %v6867, %v8274
        %v8279 = vld [vmem:[%s11] sm:$0x1]
        %v8281 = vlaneseq
        %v8282 = vshrl.u32 %v8281, 7
        %v8283 = vsub.s32 0, %v8282
        %v8284 = vrot.slane %v8279, %v8283
        %v8286 = vadd.f32 %v8277, %v8284
        %v8287 = vadd.f32 %v8278, %v8284
        %8288 = vst [vmem:[%s419] sm:$0xff] %v8286
        %8289 = vst [vmem:[%s419 + $0x8] sm:$0xff] %v8287
        %s8290 = sand.u32 %s296, 1
        %s8291 = scalar_lea.sflag [#allocation3], %s8290
        %s8292 = sand.u32 %s296, 1
        %s8293 = smul.addr %s8292, 16
        %s8294 = scalar_lea.vmem [#allocation2], %s8293
        // Predicated region
        $region69: #{_lambda_.1} parent=67 // pred_check
          %p8295 = pneg %p306
        $region70: #{_lambda_.1} parent=67 // pred_check_branch
          %8297 = sbr.rel (%p8295) target = $region72
        $region71: #{_lambda_.1} parent=67 // pred_region
          %s8299 = ssub.s32 256, 256
          %8300 = vsyncadd %s8291, %s8299
          %s8301 = smul.addr %s26, 2
          %s8302 = smul.addr %s8301, 128
          %s8303 = scalar_lea.hbm %s12, %s8302
          %s8304 = sshll.u32 %s8294, 4
          %s8305 = int_to_ptr.vmem [resolvable:$true] %s8304
          %8310 = dma.vmem_to_hbm [thread:$0]  %s8305, 256, %s8303, %s8291, 128, 128, 8
        $region72: #{_lambda_.1} parent=67 // pred_fallthru
          _
      $region68: #{_lambda_.1} parent=5 // pred_fallthru
        _
      %p8311 = scmp.le.s32.totalorder 2, %s21
      // Predicated region
      $region73: #{_lambda_.1} parent=5 // pred_check
        %p8312 = pneg %p8311
      $region74: #{_lambda_.1} parent=5 // pred_check_branch
        %8314 = sbr.rel (%p8312) target = $region76
      $region75: #{_lambda_.1} parent=5 // pred_region
        %s8315 = ssub.s32 %s21, 2
        // Predicated region
        $region77: #{_lambda_.1} parent=75 // pred_check
          %p8316 = pneg %p312
        $region78: #{_lambda_.1} parent=75 // pred_check_branch
          %8318 = sbr.rel (%p8316) target = $region80
        $region79: #{_lambda_.1} parent=75 // pred_region
          %s8319 = sand.u32 %s297, 1
          %s8320 = scalar_lea.sflag [#allocation3], %s8319
          %s8321 = sand.u32 %s297, 1
          %s8322 = smul.addr %s8321, 16
          %s8323 = scalar_lea.vmem [#allocation2], %s8322
          %8324 = dma.done %s8320, 256
        $region80: #{_lambda_.1} parent=75 // pred_fallthru
          _
      $region76: #{_lambda_.1} parent=5 // pred_fallthru
        _
    $region6: #{_lambda_.1} parent=1 // loop_footer
      %s25 = sadd.s32 1, %s21
    $region7: #{_lambda_.1} parent=1 // loop_footer_branch
      %20 = sbr.rel target = $region3
    $region8: #{_lambda_.1} parent=1 // loop_exit
      _
    %8325 = vsyncpa [#allocation3], 1
    %s8326 = scalar_lea.sflag [#allocation3], 1
    %8327 = vsyncpa %s8326, 1

</llo_original>
